<compile_context>
chip_gen: v7x
topology: tpu7x:2x2x1
jax: 0.10.0
libtpu: 0.0.40
codegen_flags: <defaults>
</compile_context>

<pallas_src>
import functools

import jax
import jax.numpy as jnp
import numpy as np
from jax.experimental import pallas as pl
from jax.experimental.pallas import tpu as pltpu

NEG_SLOPE = 0.01  # F.leaky_relu default negative_slope


def _leaky_relu(x):
    return jnp.where(x >= 0, x, NEG_SLOPE * x)


def _pick_row_tile(n, requested=32):
    # tile must divide n; it must be a multiple of 8 (or equal n) so the
    # (tile, 32) output block satisfies the (8,128)/full-dim rule.
    for cand in (min(requested, n), 32, 16, 8):
        if cand >= 1 and n % cand == 0 and cand % 8 == 0:
            return cand
    return n  # single tile: block dims equal the full array dims


# ----------------------------- fused Pallas kernel ------------------------------

def _make_fused_kernel(n_out_rows, tr):
    """n_out_rows = OH (conv output rows), tr = samples per tile."""

    def kernel(x_ref, wd_ref, bexp_ref, w1_ref, b1_ref,
               w2_ref, b2_ref, w3_ref, b3_ref, o_ref):
        f32 = jnp.float32
        # x_ref block: (1, H_in*tr, C*W_in); row (h*tr + j) = input row h of sample j.
        x = x_ref[0]                                          # (H_in*tr, 54) f32
        n_rows = n_out_rows * tr

        # conv stage: 3 shifted lane-dense matmuls, summed (one per kernel row kh).
        pre = jnp.dot(x[0:n_rows, :], wd_ref[0], preferred_element_type=f32)
        for kh in range(1, 3):
            pre = pre + jnp.dot(x[kh * tr:kh * tr + n_rows, :], wd_ref[kh],
                                preferred_element_type=f32)
        # bias broadcast hoisted: added once per tile, outside the oh loop.
        y = _leaky_relu(pre + bexp_ref[...])                  # (OH*tr, OW*OC) in VMEM only

        # fc1: contract over conv output rows; w1 rows pre-permuted to (oh, ow, oc).
        # w1 stored bf16 in HBM/VMEM, widened to f32 so all elementwise math is f32.
        acc = jnp.dot(y[0:tr, :], w1_ref[0].astype(f32), preferred_element_type=f32)
        for oh in range(1, n_out_rows):                       # static unroll (23 iters)
            acc = acc + jnp.dot(y[oh * tr:(oh + 1) * tr, :],
                                w1_ref[oh].astype(f32),
                                preferred_element_type=f32)
        h = _leaky_relu(acc + b1_ref[...])                    # (tr, 128)
        h = _leaky_relu(jnp.dot(h, w2_ref[...], preferred_element_type=f32)
                        + b2_ref[...])                        # (tr, 32)
        # TODO(synk): `self.out` is undefined in the PyTorch __init__; mapped to fc3
        #             (Linear(32,32), no activation).
        o_ref[...] = jnp.dot(h, w3_ref[...], preferred_element_type=f32) + b3_ref[...]

    return kernel


# ------------------------------- forward wrapper --------------------------------

@functools.partial(jax.jit, static_argnames=("row_tile",))
def critic_forward(params, s, a, row_tile=32):
    # `a` is unused by the PyTorch forward (lstm/fc4/q_out are dead code).
    del a
    B, T = s.shape[0], s.shape[1]
    W_in, H_in, C_in = s.shape[2], s.shape[3], s.shape[4]     # 18, 25, 3
    N = B * T
    OH, OW = H_in - 2, W_in - 2                               # 23, 16
    F = C_in * W_in                                           # 54
    OC = params["wd"].shape[2] // OW                          # 6
    HID1 = params["w1p"].shape[2]                             # 128
    H2 = params["w2"].shape[1]                                # 32
    H3 = params["w3"].shape[1]                                # 32

    tr = _pick_row_tile(N, row_tile)
    nt = N // tr

    # Layout prep (cheap XLA pass over the small raw input only; replaces the
    # torch permute).  Result row (h*tr + j) of tile t holds input row h of
    # sample n = t*tr + j, features flattened as c*W_in + w.
    x = s.reshape(N, W_in, H_in, C_in)                        # (n, w, h, c)
    x = jnp.transpose(x, (2, 0, 3, 1))                        # (h, n, c, w)
    x = x.reshape(H_in, nt, tr, F)
    x = jnp.transpose(x, (1, 0, 2, 3)).reshape(nt, H_in * tr, F)

    kernel = _make_fused_kernel(OH, tr)
    out = pl.pallas_call(
        kernel,
        out_shape=jax.ShapeDtypeStruct((N, H3), jnp.float32),
        grid=(nt,),
        in_specs=[
            pl.BlockSpec((1, H_in * tr, F), lambda i: (i, 0, 0)),     # x tile (streamed)
            pl.BlockSpec((3, F, OW * OC), lambda i: (0, 0, 0)),       # Wd (resident)
            pl.BlockSpec((1, OW * OC), lambda i: (0, 0)),             # conv bias (expanded)
            pl.BlockSpec((OH, OW * OC, HID1), lambda i: (0, 0, 0)),   # fc1 (bf16, resident)
            pl.BlockSpec((1, HID1), lambda i: (0, 0)),                # b1
            pl.BlockSpec((HID1, H2), lambda i: (0, 0)),               # fc2
            pl.BlockSpec((1, H2), lambda i: (0, 0)),                  # b2
            pl.BlockSpec((H2, H3), lambda i: (0, 0)),                 # fc3 (= self.out)
            pl.BlockSpec((1, H3), lambda i: (0, 0)),                  # b3
        ],
        out_specs=pl.BlockSpec((tr, H3), lambda i: (i, 0)),
        compiler_params=pltpu.CompilerParams(
            dimension_semantics=("parallel",),       # shard row tiles across TCs on v7x
            vmem_limit_bytes=32 * 1024 * 1024,
        ),
    )(x, params["wd"], params["bexp"], params["w1p"], params["b1"],
      params["w2"], params["b2"], params["w3"], params["b3"])
    return out.reshape(B, T, H3)


# ------------------------------- pure-JAX reference ------------------------------

def critic_forward_ref(params, s, a):
    del a
    B, T = s.shape[0], s.shape[1]
    W_in, H_in, C_in = s.shape[2], s.shape[3], s.shape[4]
    x = jnp.transpose(s, (0, 1, 4, 3, 2)).reshape(B * T, C_in, H_in, W_in)
    y = jax.lax.conv_general_dilated(
        x, params["wc"], (1, 1), "VALID",
        dimension_numbers=("NCHW", "OIHW", "NCHW"))
    y = _leaky_relu(y + params["bc"].reshape(1, -1, 1, 1))
    y = y.reshape(B, T, -1)                                   # torch NCHW flatten order
    h = _leaky_relu(y @ params["w1"] + params["b1"])
    h = _leaky_relu(h @ params["w2"] + params["b2"])
    return h @ params["w3"] + params["b3"]


# ----------------------------------- params --------------------------------------

def init_params(key, H_in=25, W_in=18, C_in=3, OC=6, hid1=128, hid2=32, out_dim=32):
    OH, OW = H_in - 2, W_in - 2
    feat = OC * OH * OW                                       # 2208 (non-Harvest)
    ks = jax.random.split(key, 8)
    wc = (jax.random.normal(ks[0], (OC, C_in, 3, 3)) * 0.1).astype(jnp.float32)
    bc = (jax.random.normal(ks[1], (OC,)) * 0.05).astype(jnp.float32)
    # fc1 weights are stored at bf16 precision; the canonical f32 value is the
    # bf16-rounded one so the f32 reference and the bf16-storing kernel use
    # bit-identical weights.
    w1 = (jax.random.normal(ks[2], (feat, hid1)) * 0.1).astype(jnp.bfloat16).astype(jnp.float32)
    b1 = (jax.random.normal(ks[3], (hid1,)) * 0.05).astype(jnp.float32)
    w2 = (jax.random.normal(ks[4], (hid1, hid2)) * 0.1).astype(jnp.float32)
    b2 = (jax.random.normal(ks[5], (hid2,)) * 0.05).astype(jnp.float32)
    w3 = (jax.random.normal(ks[6], (hid2, out_dim)) * 0.1).astype(jnp.float32)
    b3 = (jax.random.normal(ks[7], (out_dim,)) * 0.05).astype(jnp.float32)

    # ---- one-time host-side re-layouts for the fused kernel ----
    wc_np, bc_np = np.asarray(wc), np.asarray(bc)
    # Wd[kh, c*W_in + w_in, ow*OC + oc] = wc[oc, c, kh, w_in - ow]  (Toeplitz along width)
    wd = np.zeros((3, C_in * W_in, OW * OC), np.float32)
    for kh in range(3):
        for c in range(C_in):
            for kw in range(3):
                for ow in range(OW):
                    wd[kh, c * W_in + ow + kw, ow * OC:(ow + 1) * OC] = wc_np[:, c, kh, kw]
    bexp = np.tile(bc_np, OW).reshape(1, OW * OC)             # bias per (ow, oc) column
    # fc1 rows permuted from torch (oc, oh, ow) flatten order to kernel (oh, ow, oc).
    w1p = (np.asarray(w1).reshape(OC, OH, OW, hid1)
           .transpose(1, 2, 0, 3).reshape(OH, OW * OC, hid1))

    return dict(
        # torch-layout parameters (reference path)
        wc=wc, bc=bc, w1=w1, w2=w2, w3=w3,
        b1=b1.reshape(1, hid1), b2=b2.reshape(1, hid2), b3=b3.reshape(1, out_dim),
        # kernel-layout parameters
        wd=jnp.asarray(wd),
        bexp=jnp.asarray(bexp),
        w1p=jnp.asarray(w1p, dtype=jnp.bfloat16),   # bf16 storage; widened in-kernel
    )


if __name__ == "__main__":
    key = jax.random.PRNGKey(0)
    k_s, k_a, k_p = jax.random.split(key, 3)

    B, T = 4, 16
    # non-Harvest env: conv input (3, 25, 18) -> conv out (6, 23, 16) -> 2208 feats
    s = jax.random.normal(k_s, (B, T, 18, 25, 3), dtype=jnp.float32)
    a = jax.random.normal(k_a, (B, T, 10), dtype=jnp.float32)   # unused by forward

    params = init_params(k_p)

    out = jax.block_until_ready(critic_forward(params, s, a))
    ref = jax.block_until_ready(critic_forward_ref(params, s, a))

    assert out.shape == (B, T, 32), out.shape
    assert np.all(np.isfinite(np.asarray(out)))
    assert np.allclose(np.asarray(out), np.asarray(ref), rtol=1e-2, atol=1e-2)

    print("KERNEL_OK")
</pallas_src>

<mosaic_0001>
module attributes {stable_mosaic.version = 11 : i64} {
  func.func @kernel(%arg0: i32, %arg1: memref<1x800x54xf32, #tpu.memory_space<vmem>>, %arg2: memref<3x54x96xf32, #tpu.memory_space<vmem>>, %arg3: memref<1x96xf32, #tpu.memory_space<vmem>>, %arg4: memref<23x96x128xbf16, #tpu.memory_space<vmem>>, %arg5: memref<1x128xf32, #tpu.memory_space<vmem>>, %arg6: memref<128x32xf32, #tpu.memory_space<vmem>>, %arg7: memref<1x32xf32, #tpu.memory_space<vmem>>, %arg8: memref<32x32xf32, #tpu.memory_space<vmem>>, %arg9: memref<1x32xf32, #tpu.memory_space<vmem>>, %arg10: memref<32x32xf32, #tpu.memory_space<vmem>>) attributes {dimension_semantics = [#tpu.dimension_semantics<parallel>], iteration_bounds = array<i64: 2>, scalar_prefetch = 0 : i64, scratch_operands = 0 : i64, tpu.core_type = #tpu.core_type<tc>, window_params = [{transform_indices = @transform_0, window_bounds = array<i64: 1, 800, 54>}, {pipeline_mode = #tpu.pipeline_mode<synchronous>, transform_indices = @transform_1, window_bounds = array<i64: 3, 54, 96>}, {pipeline_mode = #tpu.pipeline_mode<synchronous>, transform_indices = @transform_2, window_bounds = array<i64: 1, 96>}, {pipeline_mode = #tpu.pipeline_mode<synchronous>, transform_indices = @transform_3, window_bounds = array<i64: 23, 96, 128>}, {pipeline_mode = #tpu.pipeline_mode<synchronous>, transform_indices = @transform_4, window_bounds = array<i64: 1, 128>}, {pipeline_mode = #tpu.pipeline_mode<synchronous>, transform_indices = @transform_5, window_bounds = array<i64: 128, 32>}, {pipeline_mode = #tpu.pipeline_mode<synchronous>, transform_indices = @transform_6, window_bounds = array<i64: 1, 32>}, {pipeline_mode = #tpu.pipeline_mode<synchronous>, transform_indices = @transform_7, window_bounds = array<i64: 32, 32>}, {pipeline_mode = #tpu.pipeline_mode<synchronous>, transform_indices = @transform_8, window_bounds = array<i64: 1, 32>}, {transform_indices = @transform_9, window_bounds = array<i64: 32, 32>}]} {
    %c0 = arith.constant 0 : index
    %c0_0 = arith.constant 0 : index
    %c0_1 = arith.constant 0 : index
    %0 = vector.load %arg1[%c0, %c0_0, %c0_1] : memref<1x800x54xf32, #tpu.memory_space<vmem>>, vector<1x800x54xf32>
    %1 = vector.shape_cast %0 : vector<1x800x54xf32> to vector<800x54xf32>
    %2 = vector.extract_strided_slice %1 {offsets = [0, 0], sizes = [736, 54], strides = [1, 1]} : vector<800x54xf32> to vector<736x54xf32>
    %c0_2 = arith.constant 0 : index
    %c0_3 = arith.constant 0 : index
    %c0_4 = arith.constant 0 : index
    %3 = vector.load %arg2[%c0_2, %c0_3, %c0_4] : memref<3x54x96xf32, #tpu.memory_space<vmem>>, vector<1x54x96xf32>
    %4 = vector.shape_cast %3 : vector<1x54x96xf32> to vector<54x96xf32>
    %cst = arith.constant dense<0.000000e+00> : vector<736x96xf32>
    %5 = tpu.matmul %2, %4, %cst {dimension_numbers = #tpu.dot_dimension_numbers<[1], [0], [0], [1], [0, 0, 1, 1], [], []>} : vector<736x54xf32>, vector<54x96xf32>, vector<736x96xf32> -> vector<736x96xf32>
    %6 = vector.extract_strided_slice %1 {offsets = [32, 0], sizes = [736, 54], strides = [1, 1]} : vector<800x54xf32> to vector<736x54xf32>
    %c1 = arith.constant 1 : index
    %c0_5 = arith.constant 0 : index
    %c0_6 = arith.constant 0 : index
    %7 = vector.load %arg2[%c1, %c0_5, %c0_6] : memref<3x54x96xf32, #tpu.memory_space<vmem>>, vector<1x54x96xf32>
    %8 = vector.shape_cast %7 : vector<1x54x96xf32> to vector<54x96xf32>
    %cst_7 = arith.constant dense<0.000000e+00> : vector<736x96xf32>
    %9 = tpu.matmul %6, %8, %cst_7 {dimension_numbers = #tpu.dot_dimension_numbers<[1], [0], [0], [1], [0, 0, 1, 1], [], []>} : vector<736x54xf32>, vector<54x96xf32>, vector<736x96xf32> -> vector<736x96xf32>
    %10 = arith.addf %5, %9 : vector<736x96xf32>
    %11 = vector.extract_strided_slice %1 {offsets = [64, 0], sizes = [736, 54], strides = [1, 1]} : vector<800x54xf32> to vector<736x54xf32>
    %c2 = arith.constant 2 : index
    %c0_8 = arith.constant 0 : index
    %c0_9 = arith.constant 0 : index
    %12 = vector.load %arg2[%c2, %c0_8, %c0_9] : memref<3x54x96xf32, #tpu.memory_space<vmem>>, vector<1x54x96xf32>
    %13 = vector.shape_cast %12 : vector<1x54x96xf32> to vector<54x96xf32>
    %cst_10 = arith.constant dense<0.000000e+00> : vector<736x96xf32>
    %14 = tpu.matmul %11, %13, %cst_10 {dimension_numbers = #tpu.dot_dimension_numbers<[1], [0], [0], [1], [0, 0, 1, 1], [], []>} : vector<736x54xf32>, vector<54x96xf32>, vector<736x96xf32> -> vector<736x96xf32>
    %15 = arith.addf %10, %14 : vector<736x96xf32>
    %c0_11 = arith.constant 0 : index
    %c0_12 = arith.constant 0 : index
    %16 = vector.load %arg3[%c0_11, %c0_12] : memref<1x96xf32, #tpu.memory_space<vmem>>, vector<1x96xf32>
    %17 = vector.broadcast %16 : vector<1x96xf32> to vector<736x96xf32>
    %18 = arith.addf %15, %17 : vector<736x96xf32>
    %cst_13 = arith.constant 0.000000e+00 : f32
    %19 = vector.broadcast %cst_13 : f32 to vector<736x96xf32>
    %20 = arith.cmpf oge, %18, %19 : vector<736x96xf32>
    %cst_14 = arith.constant 0.00999999977 : f32
    %21 = vector.broadcast %cst_14 : f32 to vector<736x96xf32>
    %22 = arith.mulf %21, %18 : vector<736x96xf32>
    %23 = arith.select %20, %18, %22 : vector<736x96xi1>, vector<736x96xf32>
    %24 = vector.extract_strided_slice %23 {offsets = [0, 0], sizes = [32, 96], strides = [1, 1]} : vector<736x96xf32> to vector<32x96xf32>
    %c0_15 = arith.constant 0 : index
    %c0_16 = arith.constant 0 : index
    %c0_17 = arith.constant 0 : index
    %25 = vector.load %arg4[%c0_15, %c0_16, %c0_17] : memref<23x96x128xbf16, #tpu.memory_space<vmem>>, vector<1x96x128xbf16>
    %26 = vector.shape_cast %25 : vector<1x96x128xbf16> to vector<96x128xbf16>
    %27 = arith.extf %26 : vector<96x128xbf16> to vector<96x128xf32>
    %cst_18 = arith.constant dense<0.000000e+00> : vector<32x128xf32>
    %28 = tpu.matmul %24, %27, %cst_18 {dimension_numbers = #tpu.dot_dimension_numbers<[1], [0], [0], [1], [0, 0, 1, 1], [], []>} : vector<32x96xf32>, vector<96x128xf32>, vector<32x128xf32> -> vector<32x128xf32>
    %29 = vector.extract_strided_slice %23 {offsets = [32, 0], sizes = [32, 96], strides = [1, 1]} : vector<736x96xf32> to vector<32x96xf32>
    %c1_19 = arith.constant 1 : index
    %c0_20 = arith.constant 0 : index
    %c0_21 = arith.constant 0 : index
    %30 = vector.load %arg4[%c1_19, %c0_20, %c0_21] : memref<23x96x128xbf16, #tpu.memory_space<vmem>>, vector<1x96x128xbf16>
    %31 = vector.shape_cast %30 : vector<1x96x128xbf16> to vector<96x128xbf16>
    %32 = arith.extf %31 : vector<96x128xbf16> to vector<96x128xf32>
    %cst_22 = arith.constant dense<0.000000e+00> : vector<32x128xf32>
    %33 = tpu.matmul %29, %32, %cst_22 {dimension_numbers = #tpu.dot_dimension_numbers<[1], [0], [0], [1], [0, 0, 1, 1], [], []>} : vector<32x96xf32>, vector<96x128xf32>, vector<32x128xf32> -> vector<32x128xf32>
    %34 = arith.addf %28, %33 : vector<32x128xf32>
    %35 = vector.extract_strided_slice %23 {offsets = [64, 0], sizes = [32, 96], strides = [1, 1]} : vector<736x96xf32> to vector<32x96xf32>
    %c2_23 = arith.constant 2 : index
    %c0_24 = arith.constant 0 : index
    %c0_25 = arith.constant 0 : index
    %36 = vector.load %arg4[%c2_23, %c0_24, %c0_25] : memref<23x96x128xbf16, #tpu.memory_space<vmem>>, vector<1x96x128xbf16>
    %37 = vector.shape_cast %36 : vector<1x96x128xbf16> to vector<96x128xbf16>
    %38 = arith.extf %37 : vector<96x128xbf16> to vector<96x128xf32>
    %cst_26 = arith.constant dense<0.000000e+00> : vector<32x128xf32>
    %39 = tpu.matmul %35, %38, %cst_26 {dimension_numbers = #tpu.dot_dimension_numbers<[1], [0], [0], [1], [0, 0, 1, 1], [], []>} : vector<32x96xf32>, vector<96x128xf32>, vector<32x128xf32> -> vector<32x128xf32>
    %40 = arith.addf %34, %39 : vector<32x128xf32>
    %41 = vector.extract_strided_slice %23 {offsets = [96, 0], sizes = [32, 96], strides = [1, 1]} : vector<736x96xf32> to vector<32x96xf32>
    %c3 = arith.constant 3 : index
    %c0_27 = arith.constant 0 : index
    %c0_28 = arith.constant 0 : index
    %42 = vector.load %arg4[%c3, %c0_27, %c0_28] : memref<23x96x128xbf16, #tpu.memory_space<vmem>>, vector<1x96x128xbf16>
    %43 = vector.shape_cast %42 : vector<1x96x128xbf16> to vector<96x128xbf16>
    %44 = arith.extf %43 : vector<96x128xbf16> to vector<96x128xf32>
    %cst_29 = arith.constant dense<0.000000e+00> : vector<32x128xf32>
    %45 = tpu.matmul %41, %44, %cst_29 {dimension_numbers = #tpu.dot_dimension_numbers<[1], [0], [0], [1], [0, 0, 1, 1], [], []>} : vector<32x96xf32>, vector<96x128xf32>, vector<32x128xf32> -> vector<32x128xf32>
    %46 = arith.addf %40, %45 : vector<32x128xf32>
    %47 = vector.extract_strided_slice %23 {offsets = [128, 0], sizes = [32, 96], strides = [1, 1]} : vector<736x96xf32> to vector<32x96xf32>
    %c4 = arith.constant 4 : index
    %c0_30 = arith.constant 0 : index
    %c0_31 = arith.constant 0 : index
    %48 = vector.load %arg4[%c4, %c0_30, %c0_31] : memref<23x96x128xbf16, #tpu.memory_space<vmem>>, vector<1x96x128xbf16>
    %49 = vector.shape_cast %48 : vector<1x96x128xbf16> to vector<96x128xbf16>
    %50 = arith.extf %49 : vector<96x128xbf16> to vector<96x128xf32>
    %cst_32 = arith.constant dense<0.000000e+00> : vector<32x128xf32>
    %51 = tpu.matmul %47, %50, %cst_32 {dimension_numbers = #tpu.dot_dimension_numbers<[1], [0], [0], [1], [0, 0, 1, 1], [], []>} : vector<32x96xf32>, vector<96x128xf32>, vector<32x128xf32> -> vector<32x128xf32>
    %52 = arith.addf %46, %51 : vector<32x128xf32>
    %53 = vector.extract_strided_slice %23 {offsets = [160, 0], sizes = [32, 96], strides = [1, 1]} : vector<736x96xf32> to vector<32x96xf32>
    %c5 = arith.constant 5 : index
    %c0_33 = arith.constant 0 : index
    %c0_34 = arith.constant 0 : index
    %54 = vector.load %arg4[%c5, %c0_33, %c0_34] : memref<23x96x128xbf16, #tpu.memory_space<vmem>>, vector<1x96x128xbf16>
    %55 = vector.shape_cast %54 : vector<1x96x128xbf16> to vector<96x128xbf16>
    %56 = arith.extf %55 : vector<96x128xbf16> to vector<96x128xf32>
    %cst_35 = arith.constant dense<0.000000e+00> : vector<32x128xf32>
    %57 = tpu.matmul %53, %56, %cst_35 {dimension_numbers = #tpu.dot_dimension_numbers<[1], [0], [0], [1], [0, 0, 1, 1], [], []>} : vector<32x96xf32>, vector<96x128xf32>, vector<32x128xf32> -> vector<32x128xf32>
    %58 = arith.addf %52, %57 : vector<32x128xf32>
    %59 = vector.extract_strided_slice %23 {offsets = [192, 0], sizes = [32, 96], strides = [1, 1]} : vector<736x96xf32> to vector<32x96xf32>
    %c6 = arith.constant 6 : index
    %c0_36 = arith.constant 0 : index
    %c0_37 = arith.constant 0 : index
    %60 = vector.load %arg4[%c6, %c0_36, %c0_37] : memref<23x96x128xbf16, #tpu.memory_space<vmem>>, vector<1x96x128xbf16>
    %61 = vector.shape_cast %60 : vector<1x96x128xbf16> to vector<96x128xbf16>
    %62 = arith.extf %61 : vector<96x128xbf16> to vector<96x128xf32>
    %cst_38 = arith.constant dense<0.000000e+00> : vector<32x128xf32>
    %63 = tpu.matmul %59, %62, %cst_38 {dimension_numbers = #tpu.dot_dimension_numbers<[1], [0], [0], [1], [0, 0, 1, 1], [], []>} : vector<32x96xf32>, vector<96x128xf32>, vector<32x128xf32> -> vector<32x128xf32>
    %64 = arith.addf %58, %63 : vector<32x128xf32>
    %65 = vector.extract_strided_slice %23 {offsets = [224, 0], sizes = [32, 96], strides = [1, 1]} : vector<736x96xf32> to vector<32x96xf32>
    %c7 = arith.constant 7 : index
    %c0_39 = arith.constant 0 : index
    %c0_40 = arith.constant 0 : index
    %66 = vector.load %arg4[%c7, %c0_39, %c0_40] : memref<23x96x128xbf16, #tpu.memory_space<vmem>>, vector<1x96x128xbf16>
    %67 = vector.shape_cast %66 : vector<1x96x128xbf16> to vector<96x128xbf16>
    %68 = arith.extf %67 : vector<96x128xbf16> to vector<96x128xf32>
    %cst_41 = arith.constant dense<0.000000e+00> : vector<32x128xf32>
    %69 = tpu.matmul %65, %68, %cst_41 {dimension_numbers = #tpu.dot_dimension_numbers<[1], [0], [0], [1], [0, 0, 1, 1], [], []>} : vector<32x96xf32>, vector<96x128xf32>, vector<32x128xf32> -> vector<32x128xf32>
    %70 = arith.addf %64, %69 : vector<32x128xf32>
    %71 = vector.extract_strided_slice %23 {offsets = [256, 0], sizes = [32, 96], strides = [1, 1]} : vector<736x96xf32> to vector<32x96xf32>
    %c8 = arith.constant 8 : index
    %c0_42 = arith.constant 0 : index
    %c0_43 = arith.constant 0 : index
    %72 = vector.load %arg4[%c8, %c0_42, %c0_43] : memref<23x96x128xbf16, #tpu.memory_space<vmem>>, vector<1x96x128xbf16>
    %73 = vector.shape_cast %72 : vector<1x96x128xbf16> to vector<96x128xbf16>
    %74 = arith.extf %73 : vector<96x128xbf16> to vector<96x128xf32>
    %cst_44 = arith.constant dense<0.000000e+00> : vector<32x128xf32>
    %75 = tpu.matmul %71, %74, %cst_44 {dimension_numbers = #tpu.dot_dimension_numbers<[1], [0], [0], [1], [0, 0, 1, 1], [], []>} : vector<32x96xf32>, vector<96x128xf32>, vector<32x128xf32> -> vector<32x128xf32>
    %76 = arith.addf %70, %75 : vector<32x128xf32>
    %77 = vector.extract_strided_slice %23 {offsets = [288, 0], sizes = [32, 96], strides = [1, 1]} : vector<736x96xf32> to vector<32x96xf32>
    %c9 = arith.constant 9 : index
    %c0_45 = arith.constant 0 : index
    %c0_46 = arith.constant 0 : index
    %78 = vector.load %arg4[%c9, %c0_45, %c0_46] : memref<23x96x128xbf16, #tpu.memory_space<vmem>>, vector<1x96x128xbf16>
    %79 = vector.shape_cast %78 : vector<1x96x128xbf16> to vector<96x128xbf16>
    %80 = arith.extf %79 : vector<96x128xbf16> to vector<96x128xf32>
    %cst_47 = arith.constant dense<0.000000e+00> : vector<32x128xf32>
    %81 = tpu.matmul %77, %80, %cst_47 {dimension_numbers = #tpu.dot_dimension_numbers<[1], [0], [0], [1], [0, 0, 1, 1], [], []>} : vector<32x96xf32>, vector<96x128xf32>, vector<32x128xf32> -> vector<32x128xf32>
    %82 = arith.addf %76, %81 : vector<32x128xf32>
    %83 = vector.extract_strided_slice %23 {offsets = [320, 0], sizes = [32, 96], strides = [1, 1]} : vector<736x96xf32> to vector<32x96xf32>
    %c10 = arith.constant 10 : index
    %c0_48 = arith.constant 0 : index
    %c0_49 = arith.constant 0 : index
    %84 = vector.load %arg4[%c10, %c0_48, %c0_49] : memref<23x96x128xbf16, #tpu.memory_space<vmem>>, vector<1x96x128xbf16>
    %85 = vector.shape_cast %84 : vector<1x96x128xbf16> to vector<96x128xbf16>
    %86 = arith.extf %85 : vector<96x128xbf16> to vector<96x128xf32>
    %cst_50 = arith.constant dense<0.000000e+00> : vector<32x128xf32>
    %87 = tpu.matmul %83, %86, %cst_50 {dimension_numbers = #tpu.dot_dimension_numbers<[1], [0], [0], [1], [0, 0, 1, 1], [], []>} : vector<32x96xf32>, vector<96x128xf32>, vector<32x128xf32> -> vector<32x128xf32>
    %88 = arith.addf %82, %87 : vector<32x128xf32>
    %89 = vector.extract_strided_slice %23 {offsets = [352, 0], sizes = [32, 96], strides = [1, 1]} : vector<736x96xf32> to vector<32x96xf32>
    %c11 = arith.constant 11 : index
    %c0_51 = arith.constant 0 : index
    %c0_52 = arith.constant 0 : index
    %90 = vector.load %arg4[%c11, %c0_51, %c0_52] : memref<23x96x128xbf16, #tpu.memory_space<vmem>>, vector<1x96x128xbf16>
    %91 = vector.shape_cast %90 : vector<1x96x128xbf16> to vector<96x128xbf16>
    %92 = arith.extf %91 : vector<96x128xbf16> to vector<96x128xf32>
    %cst_53 = arith.constant dense<0.000000e+00> : vector<32x128xf32>
    %93 = tpu.matmul %89, %92, %cst_53 {dimension_numbers = #tpu.dot_dimension_numbers<[1], [0], [0], [1], [0, 0, 1, 1], [], []>} : vector<32x96xf32>, vector<96x128xf32>, vector<32x128xf32> -> vector<32x128xf32>
    %94 = arith.addf %88, %93 : vector<32x128xf32>
    %95 = vector.extract_strided_slice %23 {offsets = [384, 0], sizes = [32, 96], strides = [1, 1]} : vector<736x96xf32> to vector<32x96xf32>
    %c12 = arith.constant 12 : index
    %c0_54 = arith.constant 0 : index
    %c0_55 = arith.constant 0 : index
    %96 = vector.load %arg4[%c12, %c0_54, %c0_55] : memref<23x96x128xbf16, #tpu.memory_space<vmem>>, vector<1x96x128xbf16>
    %97 = vector.shape_cast %96 : vector<1x96x128xbf16> to vector<96x128xbf16>
    %98 = arith.extf %97 : vector<96x128xbf16> to vector<96x128xf32>
    %cst_56 = arith.constant dense<0.000000e+00> : vector<32x128xf32>
    %99 = tpu.matmul %95, %98, %cst_56 {dimension_numbers = #tpu.dot_dimension_numbers<[1], [0], [0], [1], [0, 0, 1, 1], [], []>} : vector<32x96xf32>, vector<96x128xf32>, vector<32x128xf32> -> vector<32x128xf32>
    %100 = arith.addf %94, %99 : vector<32x128xf32>
    %101 = vector.extract_strided_slice %23 {offsets = [416, 0], sizes = [32, 96], strides = [1, 1]} : vector<736x96xf32> to vector<32x96xf32>
    %c13 = arith.constant 13 : index
    %c0_57 = arith.constant 0 : index
    %c0_58 = arith.constant 0 : index
    %102 = vector.load %arg4[%c13, %c0_57, %c0_58] : memref<23x96x128xbf16, #tpu.memory_space<vmem>>, vector<1x96x128xbf16>
    %103 = vector.shape_cast %102 : vector<1x96x128xbf16> to vector<96x128xbf16>
    %104 = arith.extf %103 : vector<96x128xbf16> to vector<96x128xf32>
    %cst_59 = arith.constant dense<0.000000e+00> : vector<32x128xf32>
    %105 = tpu.matmul %101, %104, %cst_59 {dimension_numbers = #tpu.dot_dimension_numbers<[1], [0], [0], [1], [0, 0, 1, 1], [], []>} : vector<32x96xf32>, vector<96x128xf32>, vector<32x128xf32> -> vector<32x128xf32>
    %106 = arith.addf %100, %105 : vector<32x128xf32>
    %107 = vector.extract_strided_slice %23 {offsets = [448, 0], sizes = [32, 96], strides = [1, 1]} : vector<736x96xf32> to vector<32x96xf32>
    %c14 = arith.constant 14 : index
    %c0_60 = arith.constant 0 : index
    %c0_61 = arith.constant 0 : index
    %108 = vector.load %arg4[%c14, %c0_60, %c0_61] : memref<23x96x128xbf16, #tpu.memory_space<vmem>>, vector<1x96x128xbf16>
    %109 = vector.shape_cast %108 : vector<1x96x128xbf16> to vector<96x128xbf16>
    %110 = arith.extf %109 : vector<96x128xbf16> to vector<96x128xf32>
    %cst_62 = arith.constant dense<0.000000e+00> : vector<32x128xf32>
    %111 = tpu.matmul %107, %110, %cst_62 {dimension_numbers = #tpu.dot_dimension_numbers<[1], [0], [0], [1], [0, 0, 1, 1], [], []>} : vector<32x96xf32>, vector<96x128xf32>, vector<32x128xf32> -> vector<32x128xf32>
    %112 = arith.addf %106, %111 : vector<32x128xf32>
    %113 = vector.extract_strided_slice %23 {offsets = [480, 0], sizes = [32, 96], strides = [1, 1]} : vector<736x96xf32> to vector<32x96xf32>
    %c15 = arith.constant 15 : index
    %c0_63 = arith.constant 0 : index
    %c0_64 = arith.constant 0 : index
    %114 = vector.load %arg4[%c15, %c0_63, %c0_64] : memref<23x96x128xbf16, #tpu.memory_space<vmem>>, vector<1x96x128xbf16>
    %115 = vector.shape_cast %114 : vector<1x96x128xbf16> to vector<96x128xbf16>
    %116 = arith.extf %115 : vector<96x128xbf16> to vector<96x128xf32>
    %cst_65 = arith.constant dense<0.000000e+00> : vector<32x128xf32>
    %117 = tpu.matmul %113, %116, %cst_65 {dimension_numbers = #tpu.dot_dimension_numbers<[1], [0], [0], [1], [0, 0, 1, 1], [], []>} : vector<32x96xf32>, vector<96x128xf32>, vector<32x128xf32> -> vector<32x128xf32>
    %118 = arith.addf %112, %117 : vector<32x128xf32>
    %119 = vector.extract_strided_slice %23 {offsets = [512, 0], sizes = [32, 96], strides = [1, 1]} : vector<736x96xf32> to vector<32x96xf32>
    %c16 = arith.constant 16 : index
    %c0_66 = arith.constant 0 : index
    %c0_67 = arith.constant 0 : index
    %120 = vector.load %arg4[%c16, %c0_66, %c0_67] : memref<23x96x128xbf16, #tpu.memory_space<vmem>>, vector<1x96x128xbf16>
    %121 = vector.shape_cast %120 : vector<1x96x128xbf16> to vector<96x128xbf16>
    %122 = arith.extf %121 : vector<96x128xbf16> to vector<96x128xf32>
    %cst_68 = arith.constant dense<0.000000e+00> : vector<32x128xf32>
    %123 = tpu.matmul %119, %122, %cst_68 {dimension_numbers = #tpu.dot_dimension_numbers<[1], [0], [0], [1], [0, 0, 1, 1], [], []>} : vector<32x96xf32>, vector<96x128xf32>, vector<32x128xf32> -> vector<32x128xf32>
    %124 = arith.addf %118, %123 : vector<32x128xf32>
    %125 = vector.extract_strided_slice %23 {offsets = [544, 0], sizes = [32, 96], strides = [1, 1]} : vector<736x96xf32> to vector<32x96xf32>
    %c17 = arith.constant 17 : index
    %c0_69 = arith.constant 0 : index
    %c0_70 = arith.constant 0 : index
    %126 = vector.load %arg4[%c17, %c0_69, %c0_70] : memref<23x96x128xbf16, #tpu.memory_space<vmem>>, vector<1x96x128xbf16>
    %127 = vector.shape_cast %126 : vector<1x96x128xbf16> to vector<96x128xbf16>
    %128 = arith.extf %127 : vector<96x128xbf16> to vector<96x128xf32>
    %cst_71 = arith.constant dense<0.000000e+00> : vector<32x128xf32>
    %129 = tpu.matmul %125, %128, %cst_71 {dimension_numbers = #tpu.dot_dimension_numbers<[1], [0], [0], [1], [0, 0, 1, 1], [], []>} : vector<32x96xf32>, vector<96x128xf32>, vector<32x128xf32> -> vector<32x128xf32>
    %130 = arith.addf %124, %129 : vector<32x128xf32>
    %131 = vector.extract_strided_slice %23 {offsets = [576, 0], sizes = [32, 96], strides = [1, 1]} : vector<736x96xf32> to vector<32x96xf32>
    %c18 = arith.constant 18 : index
    %c0_72 = arith.constant 0 : index
    %c0_73 = arith.constant 0 : index
    %132 = vector.load %arg4[%c18, %c0_72, %c0_73] : memref<23x96x128xbf16, #tpu.memory_space<vmem>>, vector<1x96x128xbf16>
    %133 = vector.shape_cast %132 : vector<1x96x128xbf16> to vector<96x128xbf16>
    %134 = arith.extf %133 : vector<96x128xbf16> to vector<96x128xf32>
    %cst_74 = arith.constant dense<0.000000e+00> : vector<32x128xf32>
    %135 = tpu.matmul %131, %134, %cst_74 {dimension_numbers = #tpu.dot_dimension_numbers<[1], [0], [0], [1], [0, 0, 1, 1], [], []>} : vector<32x96xf32>, vector<96x128xf32>, vector<32x128xf32> -> vector<32x128xf32>
    %136 = arith.addf %130, %135 : vector<32x128xf32>
    %137 = vector.extract_strided_slice %23 {offsets = [608, 0], sizes = [32, 96], strides = [1, 1]} : vector<736x96xf32> to vector<32x96xf32>
    %c19 = arith.constant 19 : index
    %c0_75 = arith.constant 0 : index
    %c0_76 = arith.constant 0 : index
    %138 = vector.load %arg4[%c19, %c0_75, %c0_76] : memref<23x96x128xbf16, #tpu.memory_space<vmem>>, vector<1x96x128xbf16>
    %139 = vector.shape_cast %138 : vector<1x96x128xbf16> to vector<96x128xbf16>
    %140 = arith.extf %139 : vector<96x128xbf16> to vector<96x128xf32>
    %cst_77 = arith.constant dense<0.000000e+00> : vector<32x128xf32>
    %141 = tpu.matmul %137, %140, %cst_77 {dimension_numbers = #tpu.dot_dimension_numbers<[1], [0], [0], [1], [0, 0, 1, 1], [], []>} : vector<32x96xf32>, vector<96x128xf32>, vector<32x128xf32> -> vector<32x128xf32>
    %142 = arith.addf %136, %141 : vector<32x128xf32>
    %143 = vector.extract_strided_slice %23 {offsets = [640, 0], sizes = [32, 96], strides = [1, 1]} : vector<736x96xf32> to vector<32x96xf32>
    %c20 = arith.constant 20 : index
    %c0_78 = arith.constant 0 : index
    %c0_79 = arith.constant 0 : index
    %144 = vector.load %arg4[%c20, %c0_78, %c0_79] : memref<23x96x128xbf16, #tpu.memory_space<vmem>>, vector<1x96x128xbf16>
    %145 = vector.shape_cast %144 : vector<1x96x128xbf16> to vector<96x128xbf16>
    %146 = arith.extf %145 : vector<96x128xbf16> to vector<96x128xf32>
    %cst_80 = arith.constant dense<0.000000e+00> : vector<32x128xf32>
    %147 = tpu.matmul %143, %146, %cst_80 {dimension_numbers = #tpu.dot_dimension_numbers<[1], [0], [0], [1], [0, 0, 1, 1], [], []>} : vector<32x96xf32>, vector<96x128xf32>, vector<32x128xf32> -> vector<32x128xf32>
    %148 = arith.addf %142, %147 : vector<32x128xf32>
    %149 = vector.extract_strided_slice %23 {offsets = [672, 0], sizes = [32, 96], strides = [1, 1]} : vector<736x96xf32> to vector<32x96xf32>
    %c21 = arith.constant 21 : index
    %c0_81 = arith.constant 0 : index
    %c0_82 = arith.constant 0 : index
    %150 = vector.load %arg4[%c21, %c0_81, %c0_82] : memref<23x96x128xbf16, #tpu.memory_space<vmem>>, vector<1x96x128xbf16>
    %151 = vector.shape_cast %150 : vector<1x96x128xbf16> to vector<96x128xbf16>
    %152 = arith.extf %151 : vector<96x128xbf16> to vector<96x128xf32>
    %cst_83 = arith.constant dense<0.000000e+00> : vector<32x128xf32>
    %153 = tpu.matmul %149, %152, %cst_83 {dimension_numbers = #tpu.dot_dimension_numbers<[1], [0], [0], [1], [0, 0, 1, 1], [], []>} : vector<32x96xf32>, vector<96x128xf32>, vector<32x128xf32> -> vector<32x128xf32>
    %154 = arith.addf %148, %153 : vector<32x128xf32>
    %155 = vector.extract_strided_slice %23 {offsets = [704, 0], sizes = [32, 96], strides = [1, 1]} : vector<736x96xf32> to vector<32x96xf32>
    %c22 = arith.constant 22 : index
    %c0_84 = arith.constant 0 : index
    %c0_85 = arith.constant 0 : index
    %156 = vector.load %arg4[%c22, %c0_84, %c0_85] : memref<23x96x128xbf16, #tpu.memory_space<vmem>>, vector<1x96x128xbf16>
    %157 = vector.shape_cast %156 : vector<1x96x128xbf16> to vector<96x128xbf16>
    %158 = arith.extf %157 : vector<96x128xbf16> to vector<96x128xf32>
    %cst_86 = arith.constant dense<0.000000e+00> : vector<32x128xf32>
    %159 = tpu.matmul %155, %158, %cst_86 {dimension_numbers = #tpu.dot_dimension_numbers<[1], [0], [0], [1], [0, 0, 1, 1], [], []>} : vector<32x96xf32>, vector<96x128xf32>, vector<32x128xf32> -> vector<32x128xf32>
    %160 = arith.addf %154, %159 : vector<32x128xf32>
    %c0_87 = arith.constant 0 : index
    %c0_88 = arith.constant 0 : index
    %161 = vector.load %arg5[%c0_87, %c0_88] : memref<1x128xf32, #tpu.memory_space<vmem>>, vector<1x128xf32>
    %162 = vector.broadcast %161 : vector<1x128xf32> to vector<32x128xf32>
    %163 = arith.addf %160, %162 : vector<32x128xf32>
    %cst_89 = arith.constant 0.000000e+00 : f32
    %164 = vector.broadcast %cst_89 : f32 to vector<32x128xf32>
    %165 = arith.cmpf oge, %163, %164 : vector<32x128xf32>
    %cst_90 = arith.constant 0.00999999977 : f32
    %166 = vector.broadcast %cst_90 : f32 to vector<32x128xf32>
    %167 = arith.mulf %166, %163 : vector<32x128xf32>
    %168 = arith.select %165, %163, %167 : vector<32x128xi1>, vector<32x128xf32>
    %c0_91 = arith.constant 0 : index
    %c0_92 = arith.constant 0 : index
    %169 = vector.load %arg6[%c0_91, %c0_92] : memref<128x32xf32, #tpu.memory_space<vmem>>, vector<128x32xf32>
    %cst_93 = arith.constant dense<0.000000e+00> : vector<32x32xf32>
    %170 = tpu.matmul %168, %169, %cst_93 {dimension_numbers = #tpu.dot_dimension_numbers<[1], [0], [0], [1], [0, 0, 1, 1], [], []>} : vector<32x128xf32>, vector<128x32xf32>, vector<32x32xf32> -> vector<32x32xf32>
    %c0_94 = arith.constant 0 : index
    %c0_95 = arith.constant 0 : index
    %171 = vector.load %arg7[%c0_94, %c0_95] : memref<1x32xf32, #tpu.memory_space<vmem>>, vector<1x32xf32>
    %172 = vector.broadcast %171 : vector<1x32xf32> to vector<32x32xf32>
    %173 = arith.addf %170, %172 : vector<32x32xf32>
    %cst_96 = arith.constant 0.000000e+00 : f32
    %174 = vector.broadcast %cst_96 : f32 to vector<32x32xf32>
    %175 = arith.cmpf oge, %173, %174 : vector<32x32xf32>
    %cst_97 = arith.constant 0.00999999977 : f32
    %176 = vector.broadcast %cst_97 : f32 to vector<32x32xf32>
    %177 = arith.mulf %176, %173 : vector<32x32xf32>
    %178 = arith.select %175, %173, %177 : vector<32x32xi1>, vector<32x32xf32>
    %c0_98 = arith.constant 0 : index
    %c0_99 = arith.constant 0 : index
    %179 = vector.load %arg8[%c0_98, %c0_99] : memref<32x32xf32, #tpu.memory_space<vmem>>, vector<32x32xf32>
    %cst_100 = arith.constant dense<0.000000e+00> : vector<32x32xf32>
    %180 = tpu.matmul %178, %179, %cst_100 {dimension_numbers = #tpu.dot_dimension_numbers<[1], [0], [0], [1], [0, 0, 1, 1], [], []>} : vector<32x32xf32>, vector<32x32xf32>, vector<32x32xf32> -> vector<32x32xf32>
    %c0_101 = arith.constant 0 : index
    %c0_102 = arith.constant 0 : index
    %181 = vector.load %arg9[%c0_101, %c0_102] : memref<1x32xf32, #tpu.memory_space<vmem>>, vector<1x32xf32>
    %182 = vector.broadcast %181 : vector<1x32xf32> to vector<32x32xf32>
    %183 = arith.addf %180, %182 : vector<32x32xf32>
    %c0_103 = arith.constant 0 : index
    %c0_104 = arith.constant 0 : index
    %184 = vector.load %arg10[%c0_103, %c0_104] : memref<32x32xf32, #tpu.memory_space<vmem>>, vector<32x32xf32>
    tpu.vector_store %arg10[%c0_103, %c0_104], %183 {strides = array<i32>} : memref<32x32xf32, #tpu.memory_space<vmem>>, vector<32x32xf32>,
    return
  }
  func.func @transform_0(%arg0: i32) -> (i32, i32, i32) {
    %c0_i32 = arith.constant 0 : i32
    %c0_i32_0 = arith.constant 0 : i32
    %c0_i32_1 = arith.constant 0 : i32
    return %arg0, %c0_i32, %c0_i32_0 : i32, i32, i32
  }
  func.func @transform_1(%arg0: i32) -> (i32, i32, i32) {
    %c0_i32 = arith.constant 0 : i32
    %c0_i32_0 = arith.constant 0 : i32
    %c0_i32_1 = arith.constant 0 : i32
    %c0_i32_2 = arith.constant 0 : i32
    return %c0_i32, %c0_i32_0, %c0_i32_1 : i32, i32, i32
  }
  func.func @transform_2(%arg0: i32) -> (i32, i32) {
    %c0_i32 = arith.constant 0 : i32
    %c0_i32_0 = arith.constant 0 : i32
    %c0_i32_1 = arith.constant 0 : i32
    return %c0_i32, %c0_i32_0 : i32, i32
  }
  func.func @transform_3(%arg0: i32) -> (i32, i32, i32) {
    %c0_i32 = arith.constant 0 : i32
    %c0_i32_0 = arith.constant 0 : i32
    %c0_i32_1 = arith.constant 0 : i32
    %c0_i32_2 = arith.constant 0 : i32
    return %c0_i32, %c0_i32_0, %c0_i32_1 : i32, i32, i32
  }
  func.func @transform_4(%arg0: i32) -> (i32, i32) {
    %c0_i32 = arith.constant 0 : i32
    %c0_i32_0 = arith.constant 0 : i32
    %c0_i32_1 = arith.constant 0 : i32
    return %c0_i32, %c0_i32_0 : i32, i32
  }
  func.func @transform_5(%arg0: i32) -> (i32, i32) {
    %c0_i32 = arith.constant 0 : i32
    %c0_i32_0 = arith.constant 0 : i32
    %c0_i32_1 = arith.constant 0 : i32
    return %c0_i32, %c0_i32_0 : i32, i32
  }
  func.func @transform_6(%arg0: i32) -> (i32, i32) {
    %c0_i32 = arith.constant 0 : i32
    %c0_i32_0 = arith.constant 0 : i32
    %c0_i32_1 = arith.constant 0 : i32
    return %c0_i32, %c0_i32_0 : i32, i32
  }
  func.func @transform_7(%arg0: i32) -> (i32, i32) {
    %c0_i32 = arith.constant 0 : i32
    %c0_i32_0 = arith.constant 0 : i32
    %c0_i32_1 = arith.constant 0 : i32
    return %c0_i32, %c0_i32_0 : i32, i32
  }
  func.func @transform_8(%arg0: i32) -> (i32, i32) {
    %c0_i32 = arith.constant 0 : i32
    %c0_i32_0 = arith.constant 0 : i32
    %c0_i32_1 = arith.constant 0 : i32
    return %c0_i32, %c0_i32_0 : i32, i32
  }
  func.func @transform_9(%arg0: i32) -> (i32, i32) {
    %c0_i32 = arith.constant 0 : i32
    %c0_i32_0 = arith.constant 0 : i32
    return %arg0, %c0_i32 : i32, i32
  }
}

</mosaic_0001>

<llo_original>
// kernel: critic_forward.1
$region0: #{critic_forward.1}
  #allocation0 [shape = 'u32[]', space=smem, size = 0x4, offset = 0x4, fixed_abs, tag = 'smem constant byte address 0x4 - core index']
  #allocation1 [shape = 'u32[144,128]{1,0:T(1,128)}', space=vmem, size = 0x12000, scoped, tag = 'internal scratch']
  %s0 = inlined_call_operand.vmem [shape: f32[2,800,54], index: 0, kind: input, shape index: {}]
  %s1 = inlined_call_operand.vmem [shape: f32[3,54,96], index: 1, kind: input, shape index: {}]
  %s2 = inlined_call_operand.vmem [shape: f32[1,96], index: 2, kind: input, shape index: {}]
  %s3 = inlined_call_operand.vmem [shape: bf16[23,96,128], index: 3, kind: input, shape index: {}]
  %s4 = inlined_call_operand.vmem [shape: f32[1,128], index: 4, kind: input, shape index: {}]
  %s5 = inlined_call_operand.vmem [shape: f32[128,32], index: 5, kind: input, shape index: {}]
  %s6 = inlined_call_operand.vmem [shape: f32[1,32], index: 6, kind: input, shape index: {}]
  %s7 = inlined_call_operand.vmem [shape: f32[32,32], index: 7, kind: input, shape index: {}]
  %s8 = inlined_call_operand.vmem [shape: f32[1,32], index: 8, kind: input, shape index: {}]
  %s9 = inlined_call_operand.hbm [shape: f32[64,32], index: 9, kind: output, shape index: {}]
  %s10 = sld [smem:[#allocation0]]
  $region69: #{critic_forward.1} parent=0
    _
  %s12 = ssub.s32 1, %s10
  %s13 = scalar_select 0, %s12, %s10
  $region1: #{critic_forward.1} parent=0
    #allocation2 [shape = 'u8[32768]{0}', space=vmem, size = 0x8000, scoped, tag = 'output window, operand 0']
    #allocation3 [shape = 's32[2]{0}', space=sflag, size = 0x8, scoped, tag = 'scoped memory for critic_forward.1']
    %14 = vsyncpa [#allocation3], 0
    %s15 = scalar_lea.sflag [#allocation3], 1
    %16 = vsyncpa %s15, 0
    loop: start=0, step=1, limit=4
    $region2: #{critic_forward.1} parent=1 // loop_pre_header
      _
    $region3: #{critic_forward.1} parent=1 // loop_header
      %s18 = sphi 0, %s22
      %p19 = scmp.ge.s32.totalorder %s18, 4
      %s28 = sphi 0, %s30
      %s31 = sphi 0, %s28
      %s32 = sphi 0, %s31
      %s48 = sphi 0, %s32
      %s52 = sphi 0, %s52
      %s54 = sphi 0, %s52
      %s55 = sphi 0, %s54
      %s69 = sphi 0, %s55
      %s73 = sphi 0, %s73
      %s75 = sphi 0, %s73
      %s76 = sphi 0, %s75
      %s90 = sphi 0, %s76
      %s94 = sphi 0, %s94
      %s96 = sphi 0, %s94
      %s97 = sphi 0, %s96
      %s111 = sphi 0, %s97
      %s115 = sphi 0, %s115
      %s117 = sphi 0, %s115
      %s118 = sphi 0, %s117
      %s132 = sphi 0, %s118
      %s136 = sphi 0, %s136
      %s138 = sphi 0, %s136
      %s139 = sphi 0, %s138
      %s153 = sphi 0, %s139
      %s157 = sphi 0, %s157
      %s159 = sphi 0, %s157
      %s160 = sphi 0, %s159
      %s174 = sphi 0, %s160
      %s178 = sphi 0, %s178
      %s180 = sphi 0, %s178
      %s181 = sphi 0, %s180
      %s195 = sphi 0, %s181
      %s199 = sphi 0, %s199
      %s201 = sphi 0, %s199
      %s202 = sphi 0, %s201
      %s216 = sphi 0, %s202
      %s222 = sphi 0, %s224
      %s225 = sphi 0, %s222
      %s226 = sphi 0, %s225
      %s242 = sphi 0, %s226
    $region4: #{critic_forward.1} parent=1 // loop_header_branch
      %21 = sbr.rel (%p19) target = $region8
    $region5: #{critic_forward.1} parent=1 // loop_body
      %s23 = ssub.s32 %s18, 1
      %s24 = ssub.s32 %s18, 2
      %s25 = sadd.s32 %s18, 1
      %s26 = ssub.s32 %s18, %s25
      %p27 = scmp.eq.s32.totalorder %s26, 0
      %s29 = sadd.s32 %s28, 1
      %s30 = scalar_select %p27, %s28, %s29
      %p33 = pneg %p27
      %p34 = scmp.eq.s32.totalorder %s18, 1
      %p35 = por %p33, %p34
      %p36 = scmp.ne.s32.totalorder %s28, %s31
      %p37 = scmp.eq.s32.totalorder %s18, 0
      %p38 = por %p36, %p37
      %p39 = scmp.ne.s32.totalorder %s28, %s31
      %p40 = scmp.eq.s32.totalorder %s23, 1
      %p41 = por %p39, %p40
      %p42 = scmp.ne.s32.totalorder %s31, %s32
      %p43 = scmp.eq.s32.totalorder %s23, 0
      %p44 = por %p42, %p43
      %p45 = scmp.ne.s32.totalorder %s31, %s32
      %p46 = scmp.eq.s32.totalorder %s24, 1
      %p47 = por %p45, %p46
      %p49 = scmp.ne.s32.totalorder %s32, %s48
      %p50 = scmp.eq.s32.totalorder %s24, 0
      %p51 = por %p49, %p50
      %s53 = sadd.s32 %s52, 1
      %p56 = scmp.eq.s32.totalorder %s18, 1
      %p57 = scmp.ne.s32.totalorder %s52, %s54
      %p58 = scmp.eq.s32.totalorder %s18, 0
      %p59 = por %p57, %p58
      %p60 = scmp.ne.s32.totalorder %s52, %s54
      %p61 = scmp.eq.s32.totalorder %s23, 1
      %p62 = por %p60, %p61
      %p63 = scmp.ne.s32.totalorder %s54, %s55
      %p64 = scmp.eq.s32.totalorder %s23, 0
      %p65 = por %p63, %p64
      %p66 = scmp.ne.s32.totalorder %s54, %s55
      %p67 = scmp.eq.s32.totalorder %s24, 1
      %p68 = por %p66, %p67
      %p70 = scmp.ne.s32.totalorder %s55, %s69
      %p71 = scmp.eq.s32.totalorder %s24, 0
      %p72 = por %p70, %p71
      %s74 = sadd.s32 %s73, 1
      %p77 = scmp.eq.s32.totalorder %s18, 1
      %p78 = scmp.ne.s32.totalorder %s73, %s75
      %p79 = scmp.eq.s32.totalorder %s18, 0
      %p80 = por %p78, %p79
      %p81 = scmp.ne.s32.totalorder %s73, %s75
      %p82 = scmp.eq.s32.totalorder %s23, 1
      %p83 = por %p81, %p82
      %p84 = scmp.ne.s32.totalorder %s75, %s76
      %p85 = scmp.eq.s32.totalorder %s23, 0
      %p86 = por %p84, %p85
      %p87 = scmp.ne.s32.totalorder %s75, %s76
      %p88 = scmp.eq.s32.totalorder %s24, 1
      %p89 = por %p87, %p88
      %p91 = scmp.ne.s32.totalorder %s76, %s90
      %p92 = scmp.eq.s32.totalorder %s24, 0
      %p93 = por %p91, %p92
      %s95 = sadd.s32 %s94, 1
      %p98 = scmp.eq.s32.totalorder %s18, 1
      %p99 = scmp.ne.s32.totalorder %s94, %s96
      %p100 = scmp.eq.s32.totalorder %s18, 0
      %p101 = por %p99, %p100
      %p102 = scmp.ne.s32.totalorder %s94, %s96
      %p103 = scmp.eq.s32.totalorder %s23, 1
      %p104 = por %p102, %p103
      %p105 = scmp.ne.s32.totalorder %s96, %s97
      %p106 = scmp.eq.s32.totalorder %s23, 0
      %p107 = por %p105, %p106
      %p108 = scmp.ne.s32.totalorder %s96, %s97
      %p109 = scmp.eq.s32.totalorder %s24, 1
      %p110 = por %p108, %p109
      %p112 = scmp.ne.s32.totalorder %s97, %s111
      %p113 = scmp.eq.s32.totalorder %s24, 0
      %p114 = por %p112, %p113
      %s116 = sadd.s32 %s115, 1
      %p119 = scmp.eq.s32.totalorder %s18, 1
      %p120 = scmp.ne.s32.totalorder %s115, %s117
      %p121 = scmp.eq.s32.totalorder %s18, 0
      %p122 = por %p120, %p121
      %p123 = scmp.ne.s32.totalorder %s115, %s117
      %p124 = scmp.eq.s32.totalorder %s23, 1
      %p125 = por %p123, %p124
      %p126 = scmp.ne.s32.totalorder %s117, %s118
      %p127 = scmp.eq.s32.totalorder %s23, 0
      %p128 = por %p126, %p127
      %p129 = scmp.ne.s32.totalorder %s117, %s118
      %p130 = scmp.eq.s32.totalorder %s24, 1
      %p131 = por %p129, %p130
      %p133 = scmp.ne.s32.totalorder %s118, %s132
      %p134 = scmp.eq.s32.totalorder %s24, 0
      %p135 = por %p133, %p134
      %s137 = sadd.s32 %s136, 1
      %p140 = scmp.eq.s32.totalorder %s18, 1
      %p141 = scmp.ne.s32.totalorder %s136, %s138
      %p142 = scmp.eq.s32.totalorder %s18, 0
      %p143 = por %p141, %p142
      %p144 = scmp.ne.s32.totalorder %s136, %s138
      %p145 = scmp.eq.s32.totalorder %s23, 1
      %p146 = por %p144, %p145
      %p147 = scmp.ne.s32.totalorder %s138, %s139
      %p148 = scmp.eq.s32.totalorder %s23, 0
      %p149 = por %p147, %p148
      %p150 = scmp.ne.s32.totalorder %s138, %s139
      %p151 = scmp.eq.s32.totalorder %s24, 1
      %p152 = por %p150, %p151
      %p154 = scmp.ne.s32.totalorder %s139, %s153
      %p155 = scmp.eq.s32.totalorder %s24, 0
      %p156 = por %p154, %p155
      %s158 = sadd.s32 %s157, 1
      %p161 = scmp.eq.s32.totalorder %s18, 1
      %p162 = scmp.ne.s32.totalorder %s157, %s159
      %p163 = scmp.eq.s32.totalorder %s18, 0
      %p164 = por %p162, %p163
      %p165 = scmp.ne.s32.totalorder %s157, %s159
      %p166 = scmp.eq.s32.totalorder %s23, 1
      %p167 = por %p165, %p166
      %p168 = scmp.ne.s32.totalorder %s159, %s160
      %p169 = scmp.eq.s32.totalorder %s23, 0
      %p170 = por %p168, %p169
      %p171 = scmp.ne.s32.totalorder %s159, %s160
      %p172 = scmp.eq.s32.totalorder %s24, 1
      %p173 = por %p171, %p172
      %p175 = scmp.ne.s32.totalorder %s160, %s174
      %p176 = scmp.eq.s32.totalorder %s24, 0
      %p177 = por %p175, %p176
      %s179 = sadd.s32 %s178, 1
      %p182 = scmp.eq.s32.totalorder %s18, 1
      %p183 = scmp.ne.s32.totalorder %s178, %s180
      %p184 = scmp.eq.s32.totalorder %s18, 0
      %p185 = por %p183, %p184
      %p186 = scmp.ne.s32.totalorder %s178, %s180
      %p187 = scmp.eq.s32.totalorder %s23, 1
      %p188 = por %p186, %p187
      %p189 = scmp.ne.s32.totalorder %s180, %s181
      %p190 = scmp.eq.s32.totalorder %s23, 0
      %p191 = por %p189, %p190
      %p192 = scmp.ne.s32.totalorder %s180, %s181
      %p193 = scmp.eq.s32.totalorder %s24, 1
      %p194 = por %p192, %p193
      %p196 = scmp.ne.s32.totalorder %s181, %s195
      %p197 = scmp.eq.s32.totalorder %s24, 0
      %p198 = por %p196, %p197
      %s200 = sadd.s32 %s199, 1
      %p203 = scmp.eq.s32.totalorder %s18, 1
      %p204 = scmp.ne.s32.totalorder %s199, %s201
      %p205 = scmp.eq.s32.totalorder %s18, 0
      %p206 = por %p204, %p205
      %p207 = scmp.ne.s32.totalorder %s199, %s201
      %p208 = scmp.eq.s32.totalorder %s23, 1
      %p209 = por %p207, %p208
      %p210 = scmp.ne.s32.totalorder %s201, %s202
      %p211 = scmp.eq.s32.totalorder %s23, 0
      %p212 = por %p210, %p211
      %p213 = scmp.ne.s32.totalorder %s201, %s202
      %p214 = scmp.eq.s32.totalorder %s24, 1
      %p215 = por %p213, %p214
      %p217 = scmp.ne.s32.totalorder %s202, %s216
      %p218 = scmp.eq.s32.totalorder %s24, 0
      %p219 = por %p217, %p218
      %s220 = ssub.s32 %s18, %s25
      %p221 = scmp.eq.s32.totalorder %s220, 0
      %s223 = sadd.s32 %s222, 1
      %s224 = scalar_select %p221, %s222, %s223
      %p227 = pneg %p221
      %p228 = scmp.eq.s32.totalorder %s18, 1
      %p229 = por %p227, %p228
      %p230 = scmp.ne.s32.totalorder %s222, %s225
      %p231 = scmp.eq.s32.totalorder %s18, 0
      %p232 = por %p230, %p231
      %p233 = scmp.ne.s32.totalorder %s222, %s225
      %p234 = scmp.eq.s32.totalorder %s23, 1
      %p235 = por %p233, %p234
      %p236 = scmp.ne.s32.totalorder %s225, %s226
      %p237 = scmp.eq.s32.totalorder %s23, 0
      %p238 = por %p236, %p237
      %p239 = scmp.ne.s32.totalorder %s225, %s226
      %p240 = scmp.eq.s32.totalorder %s24, 1
      %p241 = por %p239, %p240
      %p243 = scmp.ne.s32.totalorder %s226, %s242
      %p244 = scmp.eq.s32.totalorder %s24, 0
      %p245 = por %p243, %p244
      %p246 = scmp.le.s32.totalorder 1, %s18
      %p247 = scmp.lt.s32.totalorder %s18, 3
      %p248 = pnand %p246, %p247
      %p249 = pneg %p248
      // Predicated region
      $region9: #{critic_forward.1} parent=5 // pred_check
        _
      $region10: #{critic_forward.1} parent=5 // pred_check_branch
        %251 = sbr.rel (%p248) target = $region12
      $region11: #{critic_forward.1} parent=5 // pred_region
        %s252 = ssub.s32 %s18, 1
        // Predicated region
        $region13: #{critic_forward.1} parent=11 // pred_check
          %p253 = pneg %p65
        $region14: #{critic_forward.1} parent=11 // pred_check_branch
          %255 = sbr.rel (%p253) target = $region16
        $region15: #{critic_forward.1} parent=11 // pred_region
          _
        $region16: #{critic_forward.1} parent=11 // pred_fallthru
          _
        // Predicated region
        $region17: #{critic_forward.1} parent=11 // pred_check
          %p256 = pneg %p86
        $region18: #{critic_forward.1} parent=11 // pred_check_branch
          %258 = sbr.rel (%p256) target = $region20
        $region19: #{critic_forward.1} parent=11 // pred_region
          _
        $region20: #{critic_forward.1} parent=11 // pred_fallthru
          _
        // Predicated region
        $region21: #{critic_forward.1} parent=11 // pred_check
          %p259 = pneg %p107
        $region22: #{critic_forward.1} parent=11 // pred_check_branch
          %261 = sbr.rel (%p259) target = $region24
        $region23: #{critic_forward.1} parent=11 // pred_region
          _
        $region24: #{critic_forward.1} parent=11 // pred_fallthru
          _
        // Predicated region
        $region25: #{critic_forward.1} parent=11 // pred_check
          %p262 = pneg %p128
        $region26: #{critic_forward.1} parent=11 // pred_check_branch
          %264 = sbr.rel (%p262) target = $region28
        $region27: #{critic_forward.1} parent=11 // pred_region
          _
        $region28: #{critic_forward.1} parent=11 // pred_fallthru
          _
        // Predicated region
        $region29: #{critic_forward.1} parent=11 // pred_check
          %p265 = pneg %p149
        $region30: #{critic_forward.1} parent=11 // pred_check_branch
          %267 = sbr.rel (%p265) target = $region32
        $region31: #{critic_forward.1} parent=11 // pred_region
          _
        $region32: #{critic_forward.1} parent=11 // pred_fallthru
          _
        // Predicated region
        $region33: #{critic_forward.1} parent=11 // pred_check
          %p268 = pneg %p170
        $region34: #{critic_forward.1} parent=11 // pred_check_branch
          %270 = sbr.rel (%p268) target = $region36
        $region35: #{critic_forward.1} parent=11 // pred_region
          _
        $region36: #{critic_forward.1} parent=11 // pred_fallthru
          _
        // Predicated region
        $region37: #{critic_forward.1} parent=11 // pred_check
          %p271 = pneg %p191
        $region38: #{critic_forward.1} parent=11 // pred_check_branch
          %273 = sbr.rel (%p271) target = $region40
        $region39: #{critic_forward.1} parent=11 // pred_region
          _
        $region40: #{critic_forward.1} parent=11 // pred_fallthru
          _
        // Predicated region
        $region41: #{critic_forward.1} parent=11 // pred_check
          %p274 = pneg %p212
        $region42: #{critic_forward.1} parent=11 // pred_check_branch
          %276 = sbr.rel (%p274) target = $region44
        $region43: #{critic_forward.1} parent=11 // pred_region
          _
        $region44: #{critic_forward.1} parent=11 // pred_fallthru
          _
      $region12: #{critic_forward.1} parent=5 // pred_fallthru
        _
      %p277 = scmp.lt.s32.totalorder %s18, 2
      // Predicated region
      $region45: #{critic_forward.1} parent=5 // pred_check
        %p278 = pneg %p277
      $region46: #{critic_forward.1} parent=5 // pred_check_branch
        %280 = sbr.rel (%p278) target = $region48
      $region47: #{critic_forward.1} parent=5 // pred_region
        // Predicated region
        $region49: #{critic_forward.1} parent=47 // pred_check
          %p281 = pneg %p38
        $region50: #{critic_forward.1} parent=47 // pred_check_branch
          %283 = sbr.rel (%p281) target = $region52
        $region51: #{critic_forward.1} parent=47 // pred_region
          %p284 = scmp.lt.s32.totalorder %s18, 1
          %s285 = scalar_select %p284, %s18, 1
          %s286 = smul.addr %s285, 100
          %s287 = smul.addr %s286, 8
          %s288 = scalar_lea.vmem %s0, %s287
        $region52: #{critic_forward.1} parent=47 // pred_fallthru
          _
      $region48: #{critic_forward.1} parent=5 // pred_fallthru
        _
      %p289 = scmp.le.s32.totalorder 1, %s18
      %p290 = scmp.lt.s32.totalorder %s18, 3
      %p291 = pnand %p289, %p290
      %p292 = pneg %p291
      // Predicated region
      $region53: #{critic_forward.1} parent=5 // pred_check
        _
      $region54: #{critic_forward.1} parent=5 // pred_check_branch
        %294 = sbr.rel (%p291) target = $region56
      $region55: #{critic_forward.1} parent=5 // pred_region
        %s295 = ssub.s32 %s18, 1
        %p296 = scmp.lt.s32.totalorder %s23, 1
        %s297 = scalar_select %p296, %s23, 1
        %s298 = smul.addr %s297, 100
        %s299 = smul.addr %s298, 8
        %s300 = scalar_lea.vmem %s0, %s299
        %p301 = pneg %p44
        %p302 = pneg %p41
        %p303 = pneg %p65
        %p304 = pneg %p62
        %p305 = pneg %p86
        %p306 = pneg %p83
        %p307 = pneg %p107
        %p308 = pneg %p104
        %p309 = pneg %p128
        %p310 = pneg %p125
        %p311 = pneg %p149
        %p312 = pneg %p146
        %p313 = pneg %p170
        %p314 = pneg %p167
        %p315 = pneg %p191
        %p316 = pneg %p188
        %p317 = pneg %p212
        %p318 = pneg %p209
        %p319 = pneg %p238
        %p320 = pneg %p235
        %s321 = sand.u32 %s225, 1
        %s322 = scalar_lea.sflag [#allocation3], %s321
        %s323 = sand.u32 %s225, 1
        %s324 = smul.addr %s323, 32
        %s325 = scalar_lea.vmem [#allocation2], %s324
        %p326 = scmp.lt.s32.totalorder %s23, 1
        %s327 = scalar_select %p326, %s23, 1
        %s328 = smul.addr %s327, 100
        %s329 = smul.addr %s328, 8
        %s330 = scalar_lea.vmem %s0, %s329
        %s331 = smul.u32 4, %s23
        %v332 = vld [vmem:[%s330] sm:$0xff]
        %v333 = vld [vmem:[%s330 + $0x8] sm:$0xff]
        %v334 = vld [vmem:[%s330 + $0x10] sm:$0xff]
        %v335 = vld [vmem:[%s330 + $0x18] sm:$0xff]
        %v336 = vld [vmem:[%s330 + $0x20] sm:$0xff]
        %v337 = vld [vmem:[%s330 + $0x28] sm:$0xff]
        %v338 = vld [vmem:[%s330 + $0x30] sm:$0xff]
        %v339 = vld [vmem:[%s330 + $0x38] sm:$0xff]
        %v340 = vld [vmem:[%s330 + $0x40] sm:$0xff]
        %v341 = vld [vmem:[%s330 + $0x48] sm:$0xff]
        %v342 = vld [vmem:[%s330 + $0x50] sm:$0xff]
        %v343 = vld [vmem:[%s330 + $0x58] sm:$0xff]
        %v344 = vld [vmem:[%s330 + $0x60] sm:$0xff]
        %v345 = vld [vmem:[%s330 + $0x68] sm:$0xff]
        %v346 = vld [vmem:[%s330 + $0x70] sm:$0xff]
        %v347 = vld [vmem:[%s330 + $0x78] sm:$0xff]
        %v348 = vld [vmem:[%s330 + $0x80] sm:$0xff]
        %v349 = vld [vmem:[%s330 + $0x88] sm:$0xff]
        %v350 = vld [vmem:[%s330 + $0x90] sm:$0xff]
        %v351 = vld [vmem:[%s330 + $0x98] sm:$0xff]
        %v352 = vld [vmem:[%s330 + $0xa0] sm:$0xff]
        %v353 = vld [vmem:[%s330 + $0xa8] sm:$0xff]
        %v354 = vld [vmem:[%s330 + $0xb0] sm:$0xff]
        %v355 = vld [vmem:[%s330 + $0xb8] sm:$0xff]
        %v356 = vld [vmem:[%s330 + $0xc0] sm:$0xff]
        %v357 = vld [vmem:[%s330 + $0xc8] sm:$0xff]
        %v358 = vld [vmem:[%s330 + $0xd0] sm:$0xff]
        %v359 = vld [vmem:[%s330 + $0xd8] sm:$0xff]
        %v360 = vld [vmem:[%s330 + $0xe0] sm:$0xff]
        %v361 = vld [vmem:[%s330 + $0xe8] sm:$0xff]
        %v362 = vld [vmem:[%s330 + $0xf0] sm:$0xff]
        %v363 = vld [vmem:[%s330 + $0xf8] sm:$0xff]
        %v364 = vld [vmem:[%s330 + $0x100] sm:$0xff]
        %v365 = vld [vmem:[%s330 + $0x108] sm:$0xff]
        %v366 = vld [vmem:[%s330 + $0x110] sm:$0xff]
        %v367 = vld [vmem:[%s330 + $0x118] sm:$0xff]
        %v368 = vld [vmem:[%s330 + $0x120] sm:$0xff]
        %v369 = vld [vmem:[%s330 + $0x128] sm:$0xff]
        %v370 = vld [vmem:[%s330 + $0x130] sm:$0xff]
        %v371 = vld [vmem:[%s330 + $0x138] sm:$0xff]
        %v372 = vld [vmem:[%s330 + $0x140] sm:$0xff]
        %v373 = vld [vmem:[%s330 + $0x148] sm:$0xff]
        %v374 = vld [vmem:[%s330 + $0x150] sm:$0xff]
        %v375 = vld [vmem:[%s330 + $0x158] sm:$0xff]
        %v376 = vld [vmem:[%s330 + $0x160] sm:$0xff]
        %v377 = vld [vmem:[%s330 + $0x168] sm:$0xff]
        %v378 = vld [vmem:[%s330 + $0x170] sm:$0xff]
        %v379 = vld [vmem:[%s330 + $0x178] sm:$0xff]
        %v380 = vld [vmem:[%s330 + $0x180] sm:$0xff]
        %v381 = vld [vmem:[%s330 + $0x188] sm:$0xff]
        %v382 = vld [vmem:[%s330 + $0x190] sm:$0xff]
        %v383 = vld [vmem:[%s330 + $0x198] sm:$0xff]
        %v384 = vld [vmem:[%s330 + $0x1a0] sm:$0xff]
        %v385 = vld [vmem:[%s330 + $0x1a8] sm:$0xff]
        %v386 = vld [vmem:[%s330 + $0x1b0] sm:$0xff]
        %v387 = vld [vmem:[%s330 + $0x1b8] sm:$0xff]
        %v388 = vld [vmem:[%s330 + $0x1c0] sm:$0xff]
        %v389 = vld [vmem:[%s330 + $0x1c8] sm:$0xff]
        %v390 = vld [vmem:[%s330 + $0x1d0] sm:$0xff]
        %v391 = vld [vmem:[%s330 + $0x1d8] sm:$0xff]
        %v392 = vld [vmem:[%s330 + $0x1e0] sm:$0xff]
        %v393 = vld [vmem:[%s330 + $0x1e8] sm:$0xff]
        %v394 = vld [vmem:[%s330 + $0x1f0] sm:$0xff]
        %v395 = vld [vmem:[%s330 + $0x1f8] sm:$0xff]
        %v396 = vld [vmem:[%s330 + $0x200] sm:$0xff]
        %v397 = vld [vmem:[%s330 + $0x208] sm:$0xff]
        %v398 = vld [vmem:[%s330 + $0x210] sm:$0xff]
        %v399 = vld [vmem:[%s330 + $0x218] sm:$0xff]
        %v400 = vld [vmem:[%s330 + $0x220] sm:$0xff]
        %v401 = vld [vmem:[%s330 + $0x228] sm:$0xff]
        %v402 = vld [vmem:[%s330 + $0x230] sm:$0xff]
        %v403 = vld [vmem:[%s330 + $0x238] sm:$0xff]
        %v404 = vld [vmem:[%s330 + $0x240] sm:$0xff]
        %v405 = vld [vmem:[%s330 + $0x248] sm:$0xff]
        %v406 = vld [vmem:[%s330 + $0x250] sm:$0xff]
        %v407 = vld [vmem:[%s330 + $0x258] sm:$0xff]
        %v408 = vld [vmem:[%s330 + $0x260] sm:$0xff]
        %v409 = vld [vmem:[%s330 + $0x268] sm:$0xff]
        %v410 = vld [vmem:[%s330 + $0x270] sm:$0xff]
        %v411 = vld [vmem:[%s330 + $0x278] sm:$0xff]
        %v412 = vld [vmem:[%s330 + $0x280] sm:$0xff]
        %v413 = vld [vmem:[%s330 + $0x288] sm:$0xff]
        %v414 = vld [vmem:[%s330 + $0x290] sm:$0xff]
        %v415 = vld [vmem:[%s330 + $0x298] sm:$0xff]
        %v416 = vld [vmem:[%s330 + $0x2a0] sm:$0xff]
        %v417 = vld [vmem:[%s330 + $0x2a8] sm:$0xff]
        %v418 = vld [vmem:[%s330 + $0x2b0] sm:$0xff]
        %v419 = vld [vmem:[%s330 + $0x2b8] sm:$0xff]
        %v420 = vld [vmem:[%s330 + $0x2c0] sm:$0xff]
        %v421 = vld [vmem:[%s330 + $0x2c8] sm:$0xff]
        %v422 = vld [vmem:[%s330 + $0x2d0] sm:$0xff]
        %v423 = vld [vmem:[%s330 + $0x2d8] sm:$0xff]
        %v424 = vld [vmem:[%s330 + $0x2e0] sm:$0xff]
        %v425 = vld [vmem:[%s330 + $0x2e8] sm:$0xff]
        %v426 = vld [vmem:[%s330 + $0x2f0] sm:$0xff]
        %v427 = vld [vmem:[%s330 + $0x2f8] sm:$0xff]
        %v428 = vld [vmem:[%s330 + $0x300] sm:$0xff]
        %v429 = vld [vmem:[%s330 + $0x308] sm:$0xff]
        %v430 = vld [vmem:[%s330 + $0x310] sm:$0xff]
        %v431 = vld [vmem:[%s330 + $0x318] sm:$0xff]
        %v432 = vld [vmem:[%s1] sm:$0xff]
        %v433 = vld [vmem:[%s1 + $0x8] sm:$0xff]
        %v434 = vld [vmem:[%s1 + $0x10] sm:$0xff]
        %v435 = vld [vmem:[%s1 + $0x18] sm:$0xff]
        %v436 = vld [vmem:[%s1 + $0x20] sm:$0xff]
        %v437 = vld [vmem:[%s1 + $0x28] sm:$0xff]
        %v438 = vld [vmem:[%s1 + $0x30] sm:$0x3f]
        %s439 = scalar_lea.vmem %s1, 56
        %v440 = vld [vmem:[%s439] sm:$0xff]
        %v441 = vld [vmem:[%s439 + $0x8] sm:$0xff]
        %v442 = vld [vmem:[%s439 + $0x10] sm:$0xff]
        %v443 = vld [vmem:[%s439 + $0x18] sm:$0xff]
        %v444 = vld [vmem:[%s439 + $0x20] sm:$0xff]
        %v445 = vld [vmem:[%s439 + $0x28] sm:$0xff]
        %v446 = vld [vmem:[%s439 + $0x30] sm:$0x3f]
        %vm447 = vcmask 441344
        %v449 = vsel %vm447, %v336, 0
        %v452 = vsel %vm447, %v337, 0
        %v455 = vsel %vm447, %v338, 0
        %v458 = vsel %vm447, %v339, 0
        %v461 = vsel %vm447, %v340, 0
        %v464 = vsel %vm447, %v341, 0
        %v467 = vsel %vm447, %v342, 0
        %v470 = vsel %vm447, %v343, 0
        %v473 = vsel %vm447, %v344, 0
        %v476 = vsel %vm447, %v345, 0
        %v479 = vsel %vm447, %v346, 0
        %v482 = vsel %vm447, %v347, 0
        %v485 = vsel %vm447, %v348, 0
        %v488 = vsel %vm447, %v349, 0
        %v491 = vsel %vm447, %v350, 0
        %v494 = vsel %vm447, %v351, 0
        %v497 = vsel %vm447, %v352, 0
        %v500 = vsel %vm447, %v353, 0
        %v503 = vsel %vm447, %v354, 0
        %v506 = vsel %vm447, %v355, 0
        %v509 = vsel %vm447, %v356, 0
        %v512 = vsel %vm447, %v357, 0
        %v515 = vsel %vm447, %v358, 0
        %v518 = vsel %vm447, %v359, 0
        %v521 = vsel %vm447, %v360, 0
        %v524 = vsel %vm447, %v361, 0
        %v527 = vsel %vm447, %v362, 0
        %v530 = vsel %vm447, %v363, 0
        %v533 = vsel %vm447, %v364, 0
        %v536 = vsel %vm447, %v365, 0
        %v539 = vsel %vm447, %v366, 0
        %v542 = vsel %vm447, %v367, 0
        %v545 = vsel %vm447, %v368, 0
        %v548 = vsel %vm447, %v369, 0
        %v551 = vsel %vm447, %v370, 0
        %v554 = vsel %vm447, %v371, 0
        %v557 = vsel %vm447, %v372, 0
        %v560 = vsel %vm447, %v373, 0
        %v563 = vsel %vm447, %v374, 0
        %v566 = vsel %vm447, %v375, 0
        %v569 = vsel %vm447, %v376, 0
        %v572 = vsel %vm447, %v377, 0
        %v575 = vsel %vm447, %v378, 0
        %v578 = vsel %vm447, %v379, 0
        %v581 = vsel %vm447, %v380, 0
        %v584 = vsel %vm447, %v381, 0
        %v587 = vsel %vm447, %v382, 0
        %v590 = vsel %vm447, %v383, 0
        %v593 = vsel %vm447, %v384, 0
        %v596 = vsel %vm447, %v385, 0
        %v599 = vsel %vm447, %v386, 0
        %v602 = vsel %vm447, %v387, 0
        %v605 = vsel %vm447, %v388, 0
        %v608 = vsel %vm447, %v389, 0
        %v611 = vsel %vm447, %v390, 0
        %v614 = vsel %vm447, %v391, 0
        %v617 = vsel %vm447, %v392, 0
        %v620 = vsel %vm447, %v393, 0
        %v623 = vsel %vm447, %v394, 0
        %v626 = vsel %vm447, %v395, 0
        %v629 = vsel %vm447, %v396, 0
        %v632 = vsel %vm447, %v397, 0
        %v635 = vsel %vm447, %v398, 0
        %v638 = vsel %vm447, %v399, 0
        %v641 = vsel %vm447, %v400, 0
        %v644 = vsel %vm447, %v401, 0
        %v647 = vsel %vm447, %v402, 0
        %v650 = vsel %vm447, %v403, 0
        %v653 = vsel %vm447, %v404, 0
        %v656 = vsel %vm447, %v405, 0
        %v659 = vsel %vm447, %v406, 0
        %v662 = vsel %vm447, %v407, 0
        %v665 = vsel %vm447, %v408, 0
        %v668 = vsel %vm447, %v409, 0
        %v671 = vsel %vm447, %v410, 0
        %v674 = vsel %vm447, %v411, 0
        %v677 = vsel %vm447, %v412, 0
        %v680 = vsel %vm447, %v413, 0
        %v683 = vsel %vm447, %v414, 0
        %v686 = vsel %vm447, %v415, 0
        %v689 = vsel %vm447, %v416, 0
        %v692 = vsel %vm447, %v417, 0
        %v695 = vsel %vm447, %v418, 0
        %v698 = vsel %vm447, %v419, 0
        %v701 = vsel %vm447, %v420, 0
        %v704 = vsel %vm447, %v421, 0
        %v707 = vsel %vm447, %v422, 0
        %v710 = vsel %vm447, %v423, 0
        %v713 = vsel %vm447, %v424, 0
        %v716 = vsel %vm447, %v425, 0
        %v719 = vsel %vm447, %v426, 0
        %v722 = vsel %vm447, %v427, 0
        %vm724 = vcmask 1045504
        %v726 = vsel %vm724, %v446, 0
        %728 = vmatprep.subr.mxu0 0.0
        %729 = vmatpush1.msra.mxu0 %v440
        %730 = vmatprep.subr.mxu0 0.0
        %731 = vmatpush1.msra.mxu0 %v441
        %732 = vmatprep.subr.mxu0 0.0
        %733 = vmatpush1.msra.mxu0 %v442
        %734 = vmatprep.subr.mxu0 0.0
        %735 = vmatpush1.msra.mxu0 %v443
        %736 = vmatprep.subr.mxu0 0.0
        %737 = vmatpush1.msra.mxu0 %v444
        %738 = vmatprep.subr.mxu0 0.0
        %739 = vmatpush1.msra.mxu0 %v445
        %740 = vmatprep.subr.mxu0 0.0
        %741 = vmatpush1.msra.mxu0 %v726
        %742 = vmatprep.subr.mxu0 0.0
        %743 = vmatpush1.msra.mxu0 0.0
        %744 = vmatprep.subr.mxu0 0.0
        %745 = vmatpush1.msra.mxu0 0.0
        %746 = vmatprep.subr.mxu0 0.0
        %747 = vmatpush1.msra.mxu0 0.0
        %748 = vmatprep.subr.mxu0 0.0
        %749 = vmatpush1.msra.mxu0 0.0
        %750 = vmatprep.subr.mxu0 0.0
        %751 = vmatpush1.msra.mxu0 0.0
        %752 = vmatprep.subr.mxu0 0.0
        %753 = vmatpush1.msra.mxu0 0.0
        %754 = vmatprep.subr.mxu0 0.0
        %755 = vmatpush1.msra.mxu0 0.0
        %756 = vmatprep.subr.mxu0 0.0
        %757 = vmatpush1.msra.mxu0 0.0
        %758 = vmatprep.subr.mxu0 0.0
        %759 = vmatpush1.msra.mxu0 0.0
        %760 = vmatprep.subr.mxu0 0.0
        %761 = vmatpush1.msra.mxu0 0.0
        %762 = vmatprep.subr.mxu0 0.0
        %763 = vmatpush1.msra.mxu0 0.0
        %764 = vmatprep.subr.mxu0 0.0
        %765 = vmatpush1.msra.mxu0 0.0
        %766 = vmatprep.subr.mxu0 0.0
        %767 = vmatpush1.msra.mxu0 0.0
        %768 = vmatprep.subr.mxu0 0.0
        %769 = vmatpush1.msra.mxu0 0.0
        %770 = vmatprep.subr.mxu0 0.0
        %771 = vmatpush1.msra.mxu0 0.0
        %772 = vmatprep.subr.mxu0 0.0
        %773 = vmatpush1.msra.mxu0 0.0
        %774 = vmatprep.subr.mxu0 0.0
        %775 = vmatpush1.msra.mxu0 0.0
        %776 = vmatprep.subr.mxu0 0.0
        %777 = vmatpush1.msra.mxu0 0.0
        %778 = vmatprep.subr.mxu0 0.0
        %779 = vmatpush1.msra.mxu0 0.0
        %780 = vmatprep.subr.mxu0 0.0
        %781 = vmatpush1.msra.mxu0 0.0
        %782 = vmatprep.subr.mxu0 0.0
        %783 = vmatpush1.msra.mxu0 0.0
        %784 = vmatprep.subr.mxu0 0.0
        %785 = vmatpush1.msra.mxu0 0.0
        %786 = vmatprep.subr.mxu0 0.0
        %787 = vmatpush1.msra.mxu0 0.0
        %788 = vmatprep.subr.mxu0 0.0
        %789 = vmatpush1.msra.mxu0 0.0
        %790 = vmatprep.subr.mxu0 0.0
        %791 = vmatpush1.msra.mxu0 0.0
        %792 = vmatprep.mubr.f32.mxu0 0.0
        %793 = vmatmul.mubr.f32.gmra.mrb[0].mxu0 %v449
        %v794 = vpop.f32.mrb[0].mxu0
        %v795 = vadd.f32 0.0, %v794
        %v796 = vpop.f32.mrb[0].mxu0
        %797 = vmatprep.mubr.f32.mxu0 0.0
        %798 = vmatmul.mubr.f32.gmra.mrb[0].mxu0 %v452
        %v799 = vpop.f32.mrb[0].mxu0
        %v800 = vadd.f32 0.0, %v799
        %v801 = vpop.f32.mrb[0].mxu0
        %802 = vmatprep.mubr.f32.mxu0 0.0
        %803 = vmatmul.mubr.f32.gmra.mrb[0].mxu0 %v455
        %v804 = vpop.f32.mrb[0].mxu0
        %v805 = vadd.f32 0.0, %v804
        %v806 = vpop.f32.mrb[0].mxu0
        %807 = vmatprep.mubr.f32.mxu0 0.0
        %808 = vmatmul.mubr.f32.gmra.mrb[0].mxu0 %v458
        %v809 = vpop.f32.mrb[0].mxu0
        %v810 = vadd.f32 0.0, %v809
        %v811 = vpop.f32.mrb[0].mxu0
        %812 = vmatprep.mubr.f32.mxu0 0.0
        %813 = vmatmul.mubr.f32.gmra.mrb[0].mxu0 %v461
        %v814 = vpop.f32.mrb[0].mxu0
        %v815 = vadd.f32 0.0, %v814
        %v816 = vpop.f32.mrb[0].mxu0
        %817 = vmatprep.mubr.f32.mxu0 0.0
        %818 = vmatmul.mubr.f32.gmra.mrb[0].mxu0 %v464
        %v819 = vpop.f32.mrb[0].mxu0
        %v820 = vadd.f32 0.0, %v819
        %v821 = vpop.f32.mrb[0].mxu0
        %822 = vmatprep.mubr.f32.mxu0 0.0
        %823 = vmatmul.mubr.f32.gmra.mrb[0].mxu0 %v467
        %v824 = vpop.f32.mrb[0].mxu0
        %v825 = vadd.f32 0.0, %v824
        %v826 = vpop.f32.mrb[0].mxu0
        %827 = vmatprep.mubr.f32.mxu0 0.0
        %828 = vmatmul.mubr.f32.gmra.mrb[0].mxu0 %v470
        %v829 = vpop.f32.mrb[0].mxu0
        %v830 = vadd.f32 0.0, %v829
        %v831 = vpop.f32.mrb[0].mxu0
        %832 = vmatprep.mubr.f32.mxu0 0.0
        %833 = vmatmul.mubr.f32.gmra.mrb[0].mxu0 %v473
        %v834 = vpop.f32.mrb[0].mxu0
        %v835 = vadd.f32 0.0, %v834
        %v836 = vpop.f32.mrb[0].mxu0
        %837 = vmatprep.mubr.f32.mxu0 0.0
        %838 = vmatmul.mubr.f32.gmra.mrb[0].mxu0 %v476
        %v839 = vpop.f32.mrb[0].mxu0
        %v840 = vadd.f32 0.0, %v839
        %v841 = vpop.f32.mrb[0].mxu0
        %842 = vmatprep.mubr.f32.mxu0 0.0
        %843 = vmatmul.mubr.f32.gmra.mrb[0].mxu0 %v479
        %v844 = vpop.f32.mrb[0].mxu0
        %v845 = vadd.f32 0.0, %v844
        %v846 = vpop.f32.mrb[0].mxu0
        %847 = vmatprep.mubr.f32.mxu0 0.0
        %848 = vmatmul.mubr.f32.gmra.mrb[0].mxu0 %v482
        %v849 = vpop.f32.mrb[0].mxu0
        %v850 = vadd.f32 0.0, %v849
        %v851 = vpop.f32.mrb[0].mxu0
        %852 = vmatprep.mubr.f32.mxu0 0.0
        %853 = vmatmul.mubr.f32.gmra.mrb[0].mxu0 %v485
        %v854 = vpop.f32.mrb[0].mxu0
        %v855 = vadd.f32 0.0, %v854
        %v856 = vpop.f32.mrb[0].mxu0
        %857 = vmatprep.mubr.f32.mxu0 0.0
        %858 = vmatmul.mubr.f32.gmra.mrb[0].mxu0 %v488
        %v859 = vpop.f32.mrb[0].mxu0
        %v860 = vadd.f32 0.0, %v859
        %v861 = vpop.f32.mrb[0].mxu0
        %862 = vmatprep.mubr.f32.mxu0 0.0
        %863 = vmatmul.mubr.f32.gmra.mrb[0].mxu0 %v491
        %v864 = vpop.f32.mrb[0].mxu0
        %v865 = vadd.f32 0.0, %v864
        %v866 = vpop.f32.mrb[0].mxu0
        %867 = vmatprep.mubr.f32.mxu0 0.0
        %868 = vmatmul.mubr.f32.gmra.mrb[0].mxu0 %v494
        %v869 = vpop.f32.mrb[0].mxu0
        %v870 = vadd.f32 0.0, %v869
        %v871 = vpop.f32.mrb[0].mxu0
        %872 = vmatprep.mubr.f32.mxu0 0.0
        %873 = vmatmul.mubr.f32.gmra.mrb[0].mxu0 %v497
        %v874 = vpop.f32.mrb[0].mxu0
        %v875 = vadd.f32 0.0, %v874
        %v876 = vpop.f32.mrb[0].mxu0
        %877 = vmatprep.mubr.f32.mxu0 0.0
        %878 = vmatmul.mubr.f32.gmra.mrb[0].mxu0 %v500
        %v879 = vpop.f32.mrb[0].mxu0
        %v880 = vadd.f32 0.0, %v879
        %v881 = vpop.f32.mrb[0].mxu0
        %882 = vmatprep.mubr.f32.mxu0 0.0
        %883 = vmatmul.mubr.f32.gmra.mrb[0].mxu0 %v503
        %v884 = vpop.f32.mrb[0].mxu0
        %v885 = vadd.f32 0.0, %v884
        %v886 = vpop.f32.mrb[0].mxu0
        %887 = vmatprep.mubr.f32.mxu0 0.0
        %888 = vmatmul.mubr.f32.gmra.mrb[0].mxu0 %v506
        %v889 = vpop.f32.mrb[0].mxu0
        %v890 = vadd.f32 0.0, %v889
        %v891 = vpop.f32.mrb[0].mxu0
        %892 = vmatprep.mubr.f32.mxu0 0.0
        %893 = vmatmul.mubr.f32.gmra.mrb[0].mxu0 %v509
        %v894 = vpop.f32.mrb[0].mxu0
        %v895 = vadd.f32 0.0, %v894
        %v896 = vpop.f32.mrb[0].mxu0
        %897 = vmatprep.mubr.f32.mxu0 0.0
        %898 = vmatmul.mubr.f32.gmra.mrb[0].mxu0 %v512
        %v899 = vpop.f32.mrb[0].mxu0
        %v900 = vadd.f32 0.0, %v899
        %v901 = vpop.f32.mrb[0].mxu0
        %902 = vmatprep.mubr.f32.mxu0 0.0
        %903 = vmatmul.mubr.f32.gmra.mrb[0].mxu0 %v515
        %v904 = vpop.f32.mrb[0].mxu0
        %v905 = vadd.f32 0.0, %v904
        %v906 = vpop.f32.mrb[0].mxu0
        %907 = vmatprep.mubr.f32.mxu0 0.0
        %908 = vmatmul.mubr.f32.gmra.mrb[0].mxu0 %v518
        %v909 = vpop.f32.mrb[0].mxu0
        %v910 = vadd.f32 0.0, %v909
        %v911 = vpop.f32.mrb[0].mxu0
        %912 = vmatprep.mubr.f32.mxu0 0.0
        %913 = vmatmul.mubr.f32.gmra.mrb[0].mxu0 %v521
        %v914 = vpop.f32.mrb[0].mxu0
        %v915 = vadd.f32 0.0, %v914
        %v916 = vpop.f32.mrb[0].mxu0
        %917 = vmatprep.mubr.f32.mxu0 0.0
        %918 = vmatmul.mubr.f32.gmra.mrb[0].mxu0 %v524
        %v919 = vpop.f32.mrb[0].mxu0
        %v920 = vadd.f32 0.0, %v919
        %v921 = vpop.f32.mrb[0].mxu0
        %922 = vmatprep.mubr.f32.mxu0 0.0
        %923 = vmatmul.mubr.f32.gmra.mrb[0].mxu0 %v527
        %v924 = vpop.f32.mrb[0].mxu0
        %v925 = vadd.f32 0.0, %v924
        %v926 = vpop.f32.mrb[0].mxu0
        %927 = vmatprep.mubr.f32.mxu0 0.0
        %928 = vmatmul.mubr.f32.gmra.mrb[0].mxu0 %v530
        %v929 = vpop.f32.mrb[0].mxu0
        %v930 = vadd.f32 0.0, %v929
        %v931 = vpop.f32.mrb[0].mxu0
        %932 = vmatprep.mubr.f32.mxu0 0.0
        %933 = vmatmul.mubr.f32.gmra.mrb[0].mxu0 %v533
        %v934 = vpop.f32.mrb[0].mxu0
        %v935 = vadd.f32 0.0, %v934
        %v936 = vpop.f32.mrb[0].mxu0
        %937 = vmatprep.mubr.f32.mxu0 0.0
        %938 = vmatmul.mubr.f32.gmra.mrb[0].mxu0 %v536
        %v939 = vpop.f32.mrb[0].mxu0
        %v940 = vadd.f32 0.0, %v939
        %v941 = vpop.f32.mrb[0].mxu0
        %942 = vmatprep.mubr.f32.mxu0 0.0
        %943 = vmatmul.mubr.f32.gmra.mrb[0].mxu0 %v539
        %v944 = vpop.f32.mrb[0].mxu0
        %v945 = vadd.f32 0.0, %v944
        %v946 = vpop.f32.mrb[0].mxu0
        %947 = vmatprep.mubr.f32.mxu0 0.0
        %948 = vmatmul.mubr.f32.gmra.mrb[0].mxu0 %v542
        %v949 = vpop.f32.mrb[0].mxu0
        %v950 = vadd.f32 0.0, %v949
        %v951 = vpop.f32.mrb[0].mxu0
        %952 = vmatprep.mubr.f32.mxu0 0.0
        %953 = vmatmul.mubr.f32.gmra.mrb[0].mxu0 %v545
        %v954 = vpop.f32.mrb[0].mxu0
        %v955 = vadd.f32 0.0, %v954
        %v956 = vpop.f32.mrb[0].mxu0
        %957 = vmatprep.mubr.f32.mxu0 0.0
        %958 = vmatmul.mubr.f32.gmra.mrb[0].mxu0 %v548
        %v959 = vpop.f32.mrb[0].mxu0
        %v960 = vadd.f32 0.0, %v959
        %v961 = vpop.f32.mrb[0].mxu0
        %962 = vmatprep.mubr.f32.mxu0 0.0
        %963 = vmatmul.mubr.f32.gmra.mrb[0].mxu0 %v551
        %v964 = vpop.f32.mrb[0].mxu0
        %v965 = vadd.f32 0.0, %v964
        %v966 = vpop.f32.mrb[0].mxu0
        %967 = vmatprep.mubr.f32.mxu0 0.0
        %968 = vmatmul.mubr.f32.gmra.mrb[0].mxu0 %v554
        %v969 = vpop.f32.mrb[0].mxu0
        %v970 = vadd.f32 0.0, %v969
        %v971 = vpop.f32.mrb[0].mxu0
        %972 = vmatprep.mubr.f32.mxu0 0.0
        %973 = vmatmul.mubr.f32.gmra.mrb[0].mxu0 %v557
        %v974 = vpop.f32.mrb[0].mxu0
        %v975 = vadd.f32 0.0, %v974
        %v976 = vpop.f32.mrb[0].mxu0
        %977 = vmatprep.mubr.f32.mxu0 0.0
        %978 = vmatmul.mubr.f32.gmra.mrb[0].mxu0 %v560
        %v979 = vpop.f32.mrb[0].mxu0
        %v980 = vadd.f32 0.0, %v979
        %v981 = vpop.f32.mrb[0].mxu0
        %982 = vmatprep.mubr.f32.mxu0 0.0
        %983 = vmatmul.mubr.f32.gmra.mrb[0].mxu0 %v563
        %v984 = vpop.f32.mrb[0].mxu0
        %v985 = vadd.f32 0.0, %v984
        %v986 = vpop.f32.mrb[0].mxu0
        %987 = vmatprep.mubr.f32.mxu0 0.0
        %988 = vmatmul.mubr.f32.gmra.mrb[0].mxu0 %v566
        %v989 = vpop.f32.mrb[0].mxu0
        %v990 = vadd.f32 0.0, %v989
        %v991 = vpop.f32.mrb[0].mxu0
        %992 = vmatprep.mubr.f32.mxu0 0.0
        %993 = vmatmul.mubr.f32.gmra.mrb[0].mxu0 %v569
        %v994 = vpop.f32.mrb[0].mxu0
        %v995 = vadd.f32 0.0, %v994
        %v996 = vpop.f32.mrb[0].mxu0
        %997 = vmatprep.mubr.f32.mxu0 0.0
        %998 = vmatmul.mubr.f32.gmra.mrb[0].mxu0 %v572
        %v999 = vpop.f32.mrb[0].mxu0
        %v1000 = vadd.f32 0.0, %v999
        %v1001 = vpop.f32.mrb[0].mxu0
        %1002 = vmatprep.mubr.f32.mxu0 0.0
        %1003 = vmatmul.mubr.f32.gmra.mrb[0].mxu0 %v575
        %v1004 = vpop.f32.mrb[0].mxu0
        %v1005 = vadd.f32 0.0, %v1004
        %v1006 = vpop.f32.mrb[0].mxu0
        %1007 = vmatprep.mubr.f32.mxu0 0.0
        %1008 = vmatmul.mubr.f32.gmra.mrb[0].mxu0 %v578
        %v1009 = vpop.f32.mrb[0].mxu0
        %v1010 = vadd.f32 0.0, %v1009
        %v1011 = vpop.f32.mrb[0].mxu0
        %1012 = vmatprep.mubr.f32.mxu0 0.0
        %1013 = vmatmul.mubr.f32.gmra.mrb[0].mxu0 %v581
        %v1014 = vpop.f32.mrb[0].mxu0
        %v1015 = vadd.f32 0.0, %v1014
        %v1016 = vpop.f32.mrb[0].mxu0
        %1017 = vmatprep.mubr.f32.mxu0 0.0
        %1018 = vmatmul.mubr.f32.gmra.mrb[0].mxu0 %v584
        %v1019 = vpop.f32.mrb[0].mxu0
        %v1020 = vadd.f32 0.0, %v1019
        %v1021 = vpop.f32.mrb[0].mxu0
        %1022 = vmatprep.mubr.f32.mxu0 0.0
        %1023 = vmatmul.mubr.f32.gmra.mrb[0].mxu0 %v587
        %v1024 = vpop.f32.mrb[0].mxu0
        %v1025 = vadd.f32 0.0, %v1024
        %v1026 = vpop.f32.mrb[0].mxu0
        %1027 = vmatprep.mubr.f32.mxu0 0.0
        %1028 = vmatmul.mubr.f32.gmra.mrb[0].mxu0 %v590
        %v1029 = vpop.f32.mrb[0].mxu0
        %v1030 = vadd.f32 0.0, %v1029
        %v1031 = vpop.f32.mrb[0].mxu0
        %1032 = vmatprep.mubr.f32.mxu0 0.0
        %1033 = vmatmul.mubr.f32.gmra.mrb[0].mxu0 %v593
        %v1034 = vpop.f32.mrb[0].mxu0
        %v1035 = vadd.f32 0.0, %v1034
        %v1036 = vpop.f32.mrb[0].mxu0
        %1037 = vmatprep.mubr.f32.mxu0 0.0
        %1038 = vmatmul.mubr.f32.gmra.mrb[0].mxu0 %v596
        %v1039 = vpop.f32.mrb[0].mxu0
        %v1040 = vadd.f32 0.0, %v1039
        %v1041 = vpop.f32.mrb[0].mxu0
        %1042 = vmatprep.mubr.f32.mxu0 0.0
        %1043 = vmatmul.mubr.f32.gmra.mrb[0].mxu0 %v599
        %v1044 = vpop.f32.mrb[0].mxu0
        %v1045 = vadd.f32 0.0, %v1044
        %v1046 = vpop.f32.mrb[0].mxu0
        %1047 = vmatprep.mubr.f32.mxu0 0.0
        %1048 = vmatmul.mubr.f32.gmra.mrb[0].mxu0 %v602
        %v1049 = vpop.f32.mrb[0].mxu0
        %v1050 = vadd.f32 0.0, %v1049
        %v1051 = vpop.f32.mrb[0].mxu0
        %1052 = vmatprep.mubr.f32.mxu0 0.0
        %1053 = vmatmul.mubr.f32.gmra.mrb[0].mxu0 %v605
        %v1054 = vpop.f32.mrb[0].mxu0
        %v1055 = vadd.f32 0.0, %v1054
        %v1056 = vpop.f32.mrb[0].mxu0
        %1057 = vmatprep.mubr.f32.mxu0 0.0
        %1058 = vmatmul.mubr.f32.gmra.mrb[0].mxu0 %v608
        %v1059 = vpop.f32.mrb[0].mxu0
        %v1060 = vadd.f32 0.0, %v1059
        %v1061 = vpop.f32.mrb[0].mxu0
        %1062 = vmatprep.mubr.f32.mxu0 0.0
        %1063 = vmatmul.mubr.f32.gmra.mrb[0].mxu0 %v611
        %v1064 = vpop.f32.mrb[0].mxu0
        %v1065 = vadd.f32 0.0, %v1064
        %v1066 = vpop.f32.mrb[0].mxu0
        %1067 = vmatprep.mubr.f32.mxu0 0.0
        %1068 = vmatmul.mubr.f32.gmra.mrb[0].mxu0 %v614
        %v1069 = vpop.f32.mrb[0].mxu0
        %v1070 = vadd.f32 0.0, %v1069
        %v1071 = vpop.f32.mrb[0].mxu0
        %1072 = vmatprep.mubr.f32.mxu0 0.0
        %1073 = vmatmul.mubr.f32.gmra.mrb[0].mxu0 %v617
        %v1074 = vpop.f32.mrb[0].mxu0
        %v1075 = vadd.f32 0.0, %v1074
        %v1076 = vpop.f32.mrb[0].mxu0
        %1077 = vmatprep.mubr.f32.mxu0 0.0
        %1078 = vmatmul.mubr.f32.gmra.mrb[0].mxu0 %v620
        %v1079 = vpop.f32.mrb[0].mxu0
        %v1080 = vadd.f32 0.0, %v1079
        %v1081 = vpop.f32.mrb[0].mxu0
        %1082 = vmatprep.mubr.f32.mxu0 0.0
        %1083 = vmatmul.mubr.f32.gmra.mrb[0].mxu0 %v623
        %v1084 = vpop.f32.mrb[0].mxu0
        %v1085 = vadd.f32 0.0, %v1084
        %v1086 = vpop.f32.mrb[0].mxu0
        %1087 = vmatprep.mubr.f32.mxu0 0.0
        %1088 = vmatmul.mubr.f32.gmra.mrb[0].mxu0 %v626
        %v1089 = vpop.f32.mrb[0].mxu0
        %v1090 = vadd.f32 0.0, %v1089
        %v1091 = vpop.f32.mrb[0].mxu0
        %1092 = vmatprep.mubr.f32.mxu0 0.0
        %1093 = vmatmul.mubr.f32.gmra.mrb[0].mxu0 %v629
        %v1094 = vpop.f32.mrb[0].mxu0
        %v1095 = vadd.f32 0.0, %v1094
        %v1096 = vpop.f32.mrb[0].mxu0
        %1097 = vmatprep.mubr.f32.mxu0 0.0
        %1098 = vmatmul.mubr.f32.gmra.mrb[0].mxu0 %v632
        %v1099 = vpop.f32.mrb[0].mxu0
        %v1100 = vadd.f32 0.0, %v1099
        %v1101 = vpop.f32.mrb[0].mxu0
        %1102 = vmatprep.mubr.f32.mxu0 0.0
        %1103 = vmatmul.mubr.f32.gmra.mrb[0].mxu0 %v635
        %v1104 = vpop.f32.mrb[0].mxu0
        %v1105 = vadd.f32 0.0, %v1104
        %v1106 = vpop.f32.mrb[0].mxu0
        %1107 = vmatprep.mubr.f32.mxu0 0.0
        %1108 = vmatmul.mubr.f32.gmra.mrb[0].mxu0 %v638
        %v1109 = vpop.f32.mrb[0].mxu0
        %v1110 = vadd.f32 0.0, %v1109
        %v1111 = vpop.f32.mrb[0].mxu0
        %1112 = vmatprep.mubr.f32.mxu0 0.0
        %1113 = vmatmul.mubr.f32.gmra.mrb[0].mxu0 %v641
        %v1114 = vpop.f32.mrb[0].mxu0
        %v1115 = vadd.f32 0.0, %v1114
        %v1116 = vpop.f32.mrb[0].mxu0
        %1117 = vmatprep.mubr.f32.mxu0 0.0
        %1118 = vmatmul.mubr.f32.gmra.mrb[0].mxu0 %v644
        %v1119 = vpop.f32.mrb[0].mxu0
        %v1120 = vadd.f32 0.0, %v1119
        %v1121 = vpop.f32.mrb[0].mxu0
        %1122 = vmatprep.mubr.f32.mxu0 0.0
        %1123 = vmatmul.mubr.f32.gmra.mrb[0].mxu0 %v647
        %v1124 = vpop.f32.mrb[0].mxu0
        %v1125 = vadd.f32 0.0, %v1124
        %v1126 = vpop.f32.mrb[0].mxu0
        %1127 = vmatprep.mubr.f32.mxu0 0.0
        %1128 = vmatmul.mubr.f32.gmra.mrb[0].mxu0 %v650
        %v1129 = vpop.f32.mrb[0].mxu0
        %v1130 = vadd.f32 0.0, %v1129
        %v1131 = vpop.f32.mrb[0].mxu0
        %1132 = vmatprep.mubr.f32.mxu0 0.0
        %1133 = vmatmul.mubr.f32.gmra.mrb[0].mxu0 %v653
        %v1134 = vpop.f32.mrb[0].mxu0
        %v1135 = vadd.f32 0.0, %v1134
        %v1136 = vpop.f32.mrb[0].mxu0
        %1137 = vmatprep.mubr.f32.mxu0 0.0
        %1138 = vmatmul.mubr.f32.gmra.mrb[0].mxu0 %v656
        %v1139 = vpop.f32.mrb[0].mxu0
        %v1140 = vadd.f32 0.0, %v1139
        %v1141 = vpop.f32.mrb[0].mxu0
        %1142 = vmatprep.mubr.f32.mxu0 0.0
        %1143 = vmatmul.mubr.f32.gmra.mrb[0].mxu0 %v659
        %v1144 = vpop.f32.mrb[0].mxu0
        %v1145 = vadd.f32 0.0, %v1144
        %v1146 = vpop.f32.mrb[0].mxu0
        %1147 = vmatprep.mubr.f32.mxu0 0.0
        %1148 = vmatmul.mubr.f32.gmra.mrb[0].mxu0 %v662
        %v1149 = vpop.f32.mrb[0].mxu0
        %v1150 = vadd.f32 0.0, %v1149
        %v1151 = vpop.f32.mrb[0].mxu0
        %1152 = vmatprep.mubr.f32.mxu0 0.0
        %1153 = vmatmul.mubr.f32.gmra.mrb[0].mxu0 %v665
        %v1154 = vpop.f32.mrb[0].mxu0
        %v1155 = vadd.f32 0.0, %v1154
        %v1156 = vpop.f32.mrb[0].mxu0
        %1157 = vmatprep.mubr.f32.mxu0 0.0
        %1158 = vmatmul.mubr.f32.gmra.mrb[0].mxu0 %v668
        %v1159 = vpop.f32.mrb[0].mxu0
        %v1160 = vadd.f32 0.0, %v1159
        %v1161 = vpop.f32.mrb[0].mxu0
        %1162 = vmatprep.mubr.f32.mxu0 0.0
        %1163 = vmatmul.mubr.f32.gmra.mrb[0].mxu0 %v671
        %v1164 = vpop.f32.mrb[0].mxu0
        %v1165 = vadd.f32 0.0, %v1164
        %v1166 = vpop.f32.mrb[0].mxu0
        %1167 = vmatprep.mubr.f32.mxu0 0.0
        %1168 = vmatmul.mubr.f32.gmra.mrb[0].mxu0 %v674
        %v1169 = vpop.f32.mrb[0].mxu0
        %v1170 = vadd.f32 0.0, %v1169
        %v1171 = vpop.f32.mrb[0].mxu0
        %1172 = vmatprep.mubr.f32.mxu0 0.0
        %1173 = vmatmul.mubr.f32.gmra.mrb[0].mxu0 %v677
        %v1174 = vpop.f32.mrb[0].mxu0
        %v1175 = vadd.f32 0.0, %v1174
        %v1176 = vpop.f32.mrb[0].mxu0
        %1177 = vmatprep.mubr.f32.mxu0 0.0
        %1178 = vmatmul.mubr.f32.gmra.mrb[0].mxu0 %v680
        %v1179 = vpop.f32.mrb[0].mxu0
        %v1180 = vadd.f32 0.0, %v1179
        %v1181 = vpop.f32.mrb[0].mxu0
        %1182 = vmatprep.mubr.f32.mxu0 0.0
        %1183 = vmatmul.mubr.f32.gmra.mrb[0].mxu0 %v683
        %v1184 = vpop.f32.mrb[0].mxu0
        %v1185 = vadd.f32 0.0, %v1184
        %v1186 = vpop.f32.mrb[0].mxu0
        %1187 = vmatprep.mubr.f32.mxu0 0.0
        %1188 = vmatmul.mubr.f32.gmra.mrb[0].mxu0 %v686
        %v1189 = vpop.f32.mrb[0].mxu0
        %v1190 = vadd.f32 0.0, %v1189
        %v1191 = vpop.f32.mrb[0].mxu0
        %1192 = vmatprep.mubr.f32.mxu0 0.0
        %1193 = vmatmul.mubr.f32.gmra.mrb[0].mxu0 %v689
        %v1194 = vpop.f32.mrb[0].mxu0
        %v1195 = vadd.f32 0.0, %v1194
        %v1196 = vpop.f32.mrb[0].mxu0
        %1197 = vmatprep.mubr.f32.mxu0 0.0
        %1198 = vmatmul.mubr.f32.gmra.mrb[0].mxu0 %v692
        %v1199 = vpop.f32.mrb[0].mxu0
        %v1200 = vadd.f32 0.0, %v1199
        %v1201 = vpop.f32.mrb[0].mxu0
        %1202 = vmatprep.mubr.f32.mxu0 0.0
        %1203 = vmatmul.mubr.f32.gmra.mrb[0].mxu0 %v695
        %v1204 = vpop.f32.mrb[0].mxu0
        %v1205 = vadd.f32 0.0, %v1204
        %v1206 = vpop.f32.mrb[0].mxu0
        %1207 = vmatprep.mubr.f32.mxu0 0.0
        %1208 = vmatmul.mubr.f32.gmra.mrb[0].mxu0 %v698
        %v1209 = vpop.f32.mrb[0].mxu0
        %v1210 = vadd.f32 0.0, %v1209
        %v1211 = vpop.f32.mrb[0].mxu0
        %1212 = vmatprep.mubr.f32.mxu0 0.0
        %1213 = vmatmul.mubr.f32.gmra.mrb[0].mxu0 %v701
        %v1214 = vpop.f32.mrb[0].mxu0
        %v1215 = vadd.f32 0.0, %v1214
        %v1216 = vpop.f32.mrb[0].mxu0
        %1217 = vmatprep.mubr.f32.mxu0 0.0
        %1218 = vmatmul.mubr.f32.gmra.mrb[0].mxu0 %v704
        %v1219 = vpop.f32.mrb[0].mxu0
        %v1220 = vadd.f32 0.0, %v1219
        %v1221 = vpop.f32.mrb[0].mxu0
        %1222 = vmatprep.mubr.f32.mxu0 0.0
        %1223 = vmatmul.mubr.f32.gmra.mrb[0].mxu0 %v707
        %v1224 = vpop.f32.mrb[0].mxu0
        %v1225 = vadd.f32 0.0, %v1224
        %v1226 = vpop.f32.mrb[0].mxu0
        %1227 = vmatprep.mubr.f32.mxu0 0.0
        %1228 = vmatmul.mubr.f32.gmra.mrb[0].mxu0 %v710
        %v1229 = vpop.f32.mrb[0].mxu0
        %v1230 = vadd.f32 0.0, %v1229
        %v1231 = vpop.f32.mrb[0].mxu0
        %1232 = vmatprep.mubr.f32.mxu0 0.0
        %1233 = vmatmul.mubr.f32.gmra.mrb[0].mxu0 %v713
        %v1234 = vpop.f32.mrb[0].mxu0
        %v1235 = vadd.f32 0.0, %v1234
        %v1236 = vpop.f32.mrb[0].mxu0
        %1237 = vmatprep.mubr.f32.mxu0 0.0
        %1238 = vmatmul.mubr.f32.gmra.mrb[0].mxu0 %v716
        %v1239 = vpop.f32.mrb[0].mxu0
        %v1240 = vadd.f32 0.0, %v1239
        %v1241 = vpop.f32.mrb[0].mxu0
        %1242 = vmatprep.mubr.f32.mxu0 0.0
        %1243 = vmatmul.mubr.f32.gmra.mrb[0].mxu0 %v719
        %v1244 = vpop.f32.mrb[0].mxu0
        %v1245 = vadd.f32 0.0, %v1244
        %v1246 = vpop.f32.mrb[0].mxu0
        %1247 = vmatprep.mubr.f32.mxu0 0.0
        %1248 = vmatmul.mubr.f32.gmra.mrb[0].mxu0 %v722
        %v1249 = vpop.f32.mrb[0].mxu0
        %v1250 = vadd.f32 0.0, %v1249
        %v1251 = vpop.f32.mrb[0].mxu0
        %1252 = vdwg.mxu0
        %v1254 = vsel %vm447, %v332, 0
        %v1257 = vsel %vm447, %v333, 0
        %v1260 = vsel %vm447, %v334, 0
        %v1263 = vsel %vm447, %v335, 0
        %v1266 = vsel %vm724, %v438, 0
        %1268 = vmatprep.subr.mxu0 0.0
        %1269 = vmatpush1.msra.mxu0 %v432
        %1270 = vmatprep.subr.mxu0 0.0
        %1271 = vmatpush1.msra.mxu0 %v433
        %1272 = vmatprep.subr.mxu0 0.0
        %1273 = vmatpush1.msra.mxu0 %v434
        %1274 = vmatprep.subr.mxu0 0.0
        %1275 = vmatpush1.msra.mxu0 %v435
        %1276 = vmatprep.subr.mxu0 0.0
        %1277 = vmatpush1.msra.mxu0 %v436
        %1278 = vmatprep.subr.mxu0 0.0
        %1279 = vmatpush1.msra.mxu0 %v437
        %1280 = vmatprep.subr.mxu0 0.0
        %1281 = vmatpush1.msra.mxu0 %v1266
        %1282 = vmatprep.subr.mxu0 0.0
        %1283 = vmatpush1.msra.mxu0 0.0
        %1284 = vmatprep.subr.mxu0 0.0
        %1285 = vmatpush1.msra.mxu0 0.0
        %1286 = vmatprep.subr.mxu0 0.0
        %1287 = vmatpush1.msra.mxu0 0.0
        %1288 = vmatprep.subr.mxu0 0.0
        %1289 = vmatpush1.msra.mxu0 0.0
        %1290 = vmatprep.subr.mxu0 0.0
        %1291 = vmatpush1.msra.mxu0 0.0
        %1292 = vmatprep.subr.mxu0 0.0
        %1293 = vmatpush1.msra.mxu0 0.0
        %1294 = vmatprep.subr.mxu0 0.0
        %1295 = vmatpush1.msra.mxu0 0.0
        %1296 = vmatprep.subr.mxu0 0.0
        %1297 = vmatpush1.msra.mxu0 0.0
        %1298 = vmatprep.subr.mxu0 0.0
        %1299 = vmatpush1.msra.mxu0 0.0
        %1300 = vmatprep.subr.mxu0 0.0
        %1301 = vmatpush1.msra.mxu0 0.0
        %1302 = vmatprep.subr.mxu0 0.0
        %1303 = vmatpush1.msra.mxu0 0.0
        %1304 = vmatprep.subr.mxu0 0.0
        %1305 = vmatpush1.msra.mxu0 0.0
        %1306 = vmatprep.subr.mxu0 0.0
        %1307 = vmatpush1.msra.mxu0 0.0
        %1308 = vmatprep.subr.mxu0 0.0
        %1309 = vmatpush1.msra.mxu0 0.0
        %1310 = vmatprep.subr.mxu0 0.0
        %1311 = vmatpush1.msra.mxu0 0.0
        %1312 = vmatprep.subr.mxu0 0.0
        %1313 = vmatpush1.msra.mxu0 0.0
        %1314 = vmatprep.subr.mxu0 0.0
        %1315 = vmatpush1.msra.mxu0 0.0
        %1316 = vmatprep.subr.mxu0 0.0
        %1317 = vmatpush1.msra.mxu0 0.0
        %1318 = vmatprep.subr.mxu0 0.0
        %1319 = vmatpush1.msra.mxu0 0.0
        %1320 = vmatprep.subr.mxu0 0.0
        %1321 = vmatpush1.msra.mxu0 0.0
        %1322 = vmatprep.subr.mxu0 0.0
        %1323 = vmatpush1.msra.mxu0 0.0
        %1324 = vmatprep.subr.mxu0 0.0
        %1325 = vmatpush1.msra.mxu0 0.0
        %1326 = vmatprep.subr.mxu0 0.0
        %1327 = vmatpush1.msra.mxu0 0.0
        %1328 = vmatprep.subr.mxu0 0.0
        %1329 = vmatpush1.msra.mxu0 0.0
        %1330 = vmatprep.subr.mxu0 0.0
        %1331 = vmatpush1.msra.mxu0 0.0
        %1332 = vmatprep.mubr.f32.mxu0 0.0
        %1333 = vmatmul.mubr.f32.gmra.mrb[0].mxu0 %v1254
        %v1334 = vpop.f32.mrb[0].mxu0
        %v1335 = vadd.f32 %v795, %v1334
        %v1336 = vpop.f32.mrb[0].mxu0
        %1337 = vmatprep.mubr.f32.mxu0 0.0
        %1338 = vmatmul.mubr.f32.gmra.mrb[0].mxu0 %v1257
        %v1339 = vpop.f32.mrb[0].mxu0
        %v1340 = vadd.f32 %v800, %v1339
        %v1341 = vpop.f32.mrb[0].mxu0
        %1342 = vmatprep.mubr.f32.mxu0 0.0
        %1343 = vmatmul.mubr.f32.gmra.mrb[0].mxu0 %v1260
        %v1344 = vpop.f32.mrb[0].mxu0
        %v1345 = vadd.f32 %v805, %v1344
        %v1346 = vpop.f32.mrb[0].mxu0
        %1347 = vmatprep.mubr.f32.mxu0 0.0
        %1348 = vmatmul.mubr.f32.gmra.mrb[0].mxu0 %v1263
        %v1349 = vpop.f32.mrb[0].mxu0
        %v1350 = vadd.f32 %v810, %v1349
        %v1351 = vpop.f32.mrb[0].mxu0
        %1352 = vmatprep.mubr.f32.mxu0 0.0
        %1353 = vmatmul.mubr.f32.gmra.mrb[0].mxu0 %v449
        %v1354 = vpop.f32.mrb[0].mxu0
        %v1355 = vadd.f32 %v815, %v1354
        %v1356 = vpop.f32.mrb[0].mxu0
        %1357 = vmatprep.mubr.f32.mxu0 0.0
        %1358 = vmatmul.mubr.f32.gmra.mrb[0].mxu0 %v452
        %v1359 = vpop.f32.mrb[0].mxu0
        %v1360 = vadd.f32 %v820, %v1359
        %v1361 = vpop.f32.mrb[0].mxu0
        %1362 = vmatprep.mubr.f32.mxu0 0.0
        %1363 = vmatmul.mubr.f32.gmra.mrb[0].mxu0 %v455
        %v1364 = vpop.f32.mrb[0].mxu0
        %v1365 = vadd.f32 %v825, %v1364
        %v1366 = vpop.f32.mrb[0].mxu0
        %1367 = vmatprep.mubr.f32.mxu0 0.0
        %1368 = vmatmul.mubr.f32.gmra.mrb[0].mxu0 %v458
        %v1369 = vpop.f32.mrb[0].mxu0
        %v1370 = vadd.f32 %v830, %v1369
        %v1371 = vpop.f32.mrb[0].mxu0
        %1372 = vmatprep.mubr.f32.mxu0 0.0
        %1373 = vmatmul.mubr.f32.gmra.mrb[0].mxu0 %v461
        %v1374 = vpop.f32.mrb[0].mxu0
        %v1375 = vadd.f32 %v835, %v1374
        %v1376 = vpop.f32.mrb[0].mxu0
        %1377 = vmatprep.mubr.f32.mxu0 0.0
        %1378 = vmatmul.mubr.f32.gmra.mrb[0].mxu0 %v464
        %v1379 = vpop.f32.mrb[0].mxu0
        %v1380 = vadd.f32 %v840, %v1379
        %v1381 = vpop.f32.mrb[0].mxu0
        %1382 = vmatprep.mubr.f32.mxu0 0.0
        %1383 = vmatmul.mubr.f32.gmra.mrb[0].mxu0 %v467
        %v1384 = vpop.f32.mrb[0].mxu0
        %v1385 = vadd.f32 %v845, %v1384
        %v1386 = vpop.f32.mrb[0].mxu0
        %1387 = vmatprep.mubr.f32.mxu0 0.0
        %1388 = vmatmul.mubr.f32.gmra.mrb[0].mxu0 %v470
        %v1389 = vpop.f32.mrb[0].mxu0
        %v1390 = vadd.f32 %v850, %v1389
        %v1391 = vpop.f32.mrb[0].mxu0
        %1392 = vmatprep.mubr.f32.mxu0 0.0
        %1393 = vmatmul.mubr.f32.gmra.mrb[0].mxu0 %v473
        %v1394 = vpop.f32.mrb[0].mxu0
        %v1395 = vadd.f32 %v855, %v1394
        %v1396 = vpop.f32.mrb[0].mxu0
        %1397 = vmatprep.mubr.f32.mxu0 0.0
        %1398 = vmatmul.mubr.f32.gmra.mrb[0].mxu0 %v476
        %v1399 = vpop.f32.mrb[0].mxu0
        %v1400 = vadd.f32 %v860, %v1399
        %v1401 = vpop.f32.mrb[0].mxu0
        %1402 = vmatprep.mubr.f32.mxu0 0.0
        %1403 = vmatmul.mubr.f32.gmra.mrb[0].mxu0 %v479
        %v1404 = vpop.f32.mrb[0].mxu0
        %v1405 = vadd.f32 %v865, %v1404
        %v1406 = vpop.f32.mrb[0].mxu0
        %1407 = vmatprep.mubr.f32.mxu0 0.0
        %1408 = vmatmul.mubr.f32.gmra.mrb[0].mxu0 %v482
        %v1409 = vpop.f32.mrb[0].mxu0
        %v1410 = vadd.f32 %v870, %v1409
        %v1411 = vpop.f32.mrb[0].mxu0
        %1412 = vmatprep.mubr.f32.mxu0 0.0
        %1413 = vmatmul.mubr.f32.gmra.mrb[0].mxu0 %v485
        %v1414 = vpop.f32.mrb[0].mxu0
        %v1415 = vadd.f32 %v875, %v1414
        %v1416 = vpop.f32.mrb[0].mxu0
        %1417 = vmatprep.mubr.f32.mxu0 0.0
        %1418 = vmatmul.mubr.f32.gmra.mrb[0].mxu0 %v488
        %v1419 = vpop.f32.mrb[0].mxu0
        %v1420 = vadd.f32 %v880, %v1419
        %v1421 = vpop.f32.mrb[0].mxu0
        %1422 = vmatprep.mubr.f32.mxu0 0.0
        %1423 = vmatmul.mubr.f32.gmra.mrb[0].mxu0 %v491
        %v1424 = vpop.f32.mrb[0].mxu0
        %v1425 = vadd.f32 %v885, %v1424
        %v1426 = vpop.f32.mrb[0].mxu0
        %1427 = vmatprep.mubr.f32.mxu0 0.0
        %1428 = vmatmul.mubr.f32.gmra.mrb[0].mxu0 %v494
        %v1429 = vpop.f32.mrb[0].mxu0
        %v1430 = vadd.f32 %v890, %v1429
        %v1431 = vpop.f32.mrb[0].mxu0
        %1432 = vmatprep.mubr.f32.mxu0 0.0
        %1433 = vmatmul.mubr.f32.gmra.mrb[0].mxu0 %v497
        %v1434 = vpop.f32.mrb[0].mxu0
        %v1435 = vadd.f32 %v895, %v1434
        %v1436 = vpop.f32.mrb[0].mxu0
        %1437 = vmatprep.mubr.f32.mxu0 0.0
        %1438 = vmatmul.mubr.f32.gmra.mrb[0].mxu0 %v500
        %v1439 = vpop.f32.mrb[0].mxu0
        %v1440 = vadd.f32 %v900, %v1439
        %v1441 = vpop.f32.mrb[0].mxu0
        %1442 = vmatprep.mubr.f32.mxu0 0.0
        %1443 = vmatmul.mubr.f32.gmra.mrb[0].mxu0 %v503
        %v1444 = vpop.f32.mrb[0].mxu0
        %v1445 = vadd.f32 %v905, %v1444
        %v1446 = vpop.f32.mrb[0].mxu0
        %1447 = vmatprep.mubr.f32.mxu0 0.0
        %1448 = vmatmul.mubr.f32.gmra.mrb[0].mxu0 %v506
        %v1449 = vpop.f32.mrb[0].mxu0
        %v1450 = vadd.f32 %v910, %v1449
        %v1451 = vpop.f32.mrb[0].mxu0
        %1452 = vmatprep.mubr.f32.mxu0 0.0
        %1453 = vmatmul.mubr.f32.gmra.mrb[0].mxu0 %v509
        %v1454 = vpop.f32.mrb[0].mxu0
        %v1455 = vadd.f32 %v915, %v1454
        %v1456 = vpop.f32.mrb[0].mxu0
        %1457 = vmatprep.mubr.f32.mxu0 0.0
        %1458 = vmatmul.mubr.f32.gmra.mrb[0].mxu0 %v512
        %v1459 = vpop.f32.mrb[0].mxu0
        %v1460 = vadd.f32 %v920, %v1459
        %v1461 = vpop.f32.mrb[0].mxu0
        %1462 = vmatprep.mubr.f32.mxu0 0.0
        %1463 = vmatmul.mubr.f32.gmra.mrb[0].mxu0 %v515
        %v1464 = vpop.f32.mrb[0].mxu0
        %v1465 = vadd.f32 %v925, %v1464
        %v1466 = vpop.f32.mrb[0].mxu0
        %1467 = vmatprep.mubr.f32.mxu0 0.0
        %1468 = vmatmul.mubr.f32.gmra.mrb[0].mxu0 %v518
        %v1469 = vpop.f32.mrb[0].mxu0
        %v1470 = vadd.f32 %v930, %v1469
        %v1471 = vpop.f32.mrb[0].mxu0
        %1472 = vmatprep.mubr.f32.mxu0 0.0
        %1473 = vmatmul.mubr.f32.gmra.mrb[0].mxu0 %v521
        %v1474 = vpop.f32.mrb[0].mxu0
        %v1475 = vadd.f32 %v935, %v1474
        %v1476 = vpop.f32.mrb[0].mxu0
        %1477 = vmatprep.mubr.f32.mxu0 0.0
        %1478 = vmatmul.mubr.f32.gmra.mrb[0].mxu0 %v524
        %v1479 = vpop.f32.mrb[0].mxu0
        %v1480 = vadd.f32 %v940, %v1479
        %v1481 = vpop.f32.mrb[0].mxu0
        %1482 = vmatprep.mubr.f32.mxu0 0.0
        %1483 = vmatmul.mubr.f32.gmra.mrb[0].mxu0 %v527
        %v1484 = vpop.f32.mrb[0].mxu0
        %v1485 = vadd.f32 %v945, %v1484
        %v1486 = vpop.f32.mrb[0].mxu0
        %1487 = vmatprep.mubr.f32.mxu0 0.0
        %1488 = vmatmul.mubr.f32.gmra.mrb[0].mxu0 %v530
        %v1489 = vpop.f32.mrb[0].mxu0
        %v1490 = vadd.f32 %v950, %v1489
        %v1491 = vpop.f32.mrb[0].mxu0
        %1492 = vmatprep.mubr.f32.mxu0 0.0
        %1493 = vmatmul.mubr.f32.gmra.mrb[0].mxu0 %v533
        %v1494 = vpop.f32.mrb[0].mxu0
        %v1495 = vadd.f32 %v955, %v1494
        %v1496 = vpop.f32.mrb[0].mxu0
        %1497 = vmatprep.mubr.f32.mxu0 0.0
        %1498 = vmatmul.mubr.f32.gmra.mrb[0].mxu0 %v536
        %v1499 = vpop.f32.mrb[0].mxu0
        %v1500 = vadd.f32 %v960, %v1499
        %v1501 = vpop.f32.mrb[0].mxu0
        %1502 = vmatprep.mubr.f32.mxu0 0.0
        %1503 = vmatmul.mubr.f32.gmra.mrb[0].mxu0 %v539
        %v1504 = vpop.f32.mrb[0].mxu0
        %v1505 = vadd.f32 %v965, %v1504
        %v1506 = vpop.f32.mrb[0].mxu0
        %1507 = vmatprep.mubr.f32.mxu0 0.0
        %1508 = vmatmul.mubr.f32.gmra.mrb[0].mxu0 %v542
        %v1509 = vpop.f32.mrb[0].mxu0
        %v1510 = vadd.f32 %v970, %v1509
        %v1511 = vpop.f32.mrb[0].mxu0
        %1512 = vmatprep.mubr.f32.mxu0 0.0
        %1513 = vmatmul.mubr.f32.gmra.mrb[0].mxu0 %v545
        %v1514 = vpop.f32.mrb[0].mxu0
        %v1515 = vadd.f32 %v975, %v1514
        %v1516 = vpop.f32.mrb[0].mxu0
        %1517 = vmatprep.mubr.f32.mxu0 0.0
        %1518 = vmatmul.mubr.f32.gmra.mrb[0].mxu0 %v548
        %v1519 = vpop.f32.mrb[0].mxu0
        %v1520 = vadd.f32 %v980, %v1519
        %v1521 = vpop.f32.mrb[0].mxu0
        %1522 = vmatprep.mubr.f32.mxu0 0.0
        %1523 = vmatmul.mubr.f32.gmra.mrb[0].mxu0 %v551
        %v1524 = vpop.f32.mrb[0].mxu0
        %v1525 = vadd.f32 %v985, %v1524
        %v1526 = vpop.f32.mrb[0].mxu0
        %1527 = vmatprep.mubr.f32.mxu0 0.0
        %1528 = vmatmul.mubr.f32.gmra.mrb[0].mxu0 %v554
        %v1529 = vpop.f32.mrb[0].mxu0
        %v1530 = vadd.f32 %v990, %v1529
        %v1531 = vpop.f32.mrb[0].mxu0
        %1532 = vmatprep.mubr.f32.mxu0 0.0
        %1533 = vmatmul.mubr.f32.gmra.mrb[0].mxu0 %v557
        %v1534 = vpop.f32.mrb[0].mxu0
        %v1535 = vadd.f32 %v995, %v1534
        %v1536 = vpop.f32.mrb[0].mxu0
        %1537 = vmatprep.mubr.f32.mxu0 0.0
        %1538 = vmatmul.mubr.f32.gmra.mrb[0].mxu0 %v560
        %v1539 = vpop.f32.mrb[0].mxu0
        %v1540 = vadd.f32 %v1000, %v1539
        %v1541 = vpop.f32.mrb[0].mxu0
        %1542 = vmatprep.mubr.f32.mxu0 0.0
        %1543 = vmatmul.mubr.f32.gmra.mrb[0].mxu0 %v563
        %v1544 = vpop.f32.mrb[0].mxu0
        %v1545 = vadd.f32 %v1005, %v1544
        %v1546 = vpop.f32.mrb[0].mxu0
        %1547 = vmatprep.mubr.f32.mxu0 0.0
        %1548 = vmatmul.mubr.f32.gmra.mrb[0].mxu0 %v566
        %v1549 = vpop.f32.mrb[0].mxu0
        %v1550 = vadd.f32 %v1010, %v1549
        %v1551 = vpop.f32.mrb[0].mxu0
        %1552 = vmatprep.mubr.f32.mxu0 0.0
        %1553 = vmatmul.mubr.f32.gmra.mrb[0].mxu0 %v569
        %v1554 = vpop.f32.mrb[0].mxu0
        %v1555 = vadd.f32 %v1015, %v1554
        %v1556 = vpop.f32.mrb[0].mxu0
        %1557 = vmatprep.mubr.f32.mxu0 0.0
        %1558 = vmatmul.mubr.f32.gmra.mrb[0].mxu0 %v572
        %v1559 = vpop.f32.mrb[0].mxu0
        %v1560 = vadd.f32 %v1020, %v1559
        %v1561 = vpop.f32.mrb[0].mxu0
        %1562 = vmatprep.mubr.f32.mxu0 0.0
        %1563 = vmatmul.mubr.f32.gmra.mrb[0].mxu0 %v575
        %v1564 = vpop.f32.mrb[0].mxu0
        %v1565 = vadd.f32 %v1025, %v1564
        %v1566 = vpop.f32.mrb[0].mxu0
        %1567 = vmatprep.mubr.f32.mxu0 0.0
        %1568 = vmatmul.mubr.f32.gmra.mrb[0].mxu0 %v578
        %v1569 = vpop.f32.mrb[0].mxu0
        %v1570 = vadd.f32 %v1030, %v1569
        %v1571 = vpop.f32.mrb[0].mxu0
        %1572 = vmatprep.mubr.f32.mxu0 0.0
        %1573 = vmatmul.mubr.f32.gmra.mrb[0].mxu0 %v581
        %v1574 = vpop.f32.mrb[0].mxu0
        %v1575 = vadd.f32 %v1035, %v1574
        %v1576 = vpop.f32.mrb[0].mxu0
        %1577 = vmatprep.mubr.f32.mxu0 0.0
        %1578 = vmatmul.mubr.f32.gmra.mrb[0].mxu0 %v584
        %v1579 = vpop.f32.mrb[0].mxu0
        %v1580 = vadd.f32 %v1040, %v1579
        %v1581 = vpop.f32.mrb[0].mxu0
        %1582 = vmatprep.mubr.f32.mxu0 0.0
        %1583 = vmatmul.mubr.f32.gmra.mrb[0].mxu0 %v587
        %v1584 = vpop.f32.mrb[0].mxu0
        %v1585 = vadd.f32 %v1045, %v1584
        %v1586 = vpop.f32.mrb[0].mxu0
        %1587 = vmatprep.mubr.f32.mxu0 0.0
        %1588 = vmatmul.mubr.f32.gmra.mrb[0].mxu0 %v590
        %v1589 = vpop.f32.mrb[0].mxu0
        %v1590 = vadd.f32 %v1050, %v1589
        %v1591 = vpop.f32.mrb[0].mxu0
        %1592 = vmatprep.mubr.f32.mxu0 0.0
        %1593 = vmatmul.mubr.f32.gmra.mrb[0].mxu0 %v593
        %v1594 = vpop.f32.mrb[0].mxu0
        %v1595 = vadd.f32 %v1055, %v1594
        %v1596 = vpop.f32.mrb[0].mxu0
        %1597 = vmatprep.mubr.f32.mxu0 0.0
        %1598 = vmatmul.mubr.f32.gmra.mrb[0].mxu0 %v596
        %v1599 = vpop.f32.mrb[0].mxu0
        %v1600 = vadd.f32 %v1060, %v1599
        %v1601 = vpop.f32.mrb[0].mxu0
        %1602 = vmatprep.mubr.f32.mxu0 0.0
        %1603 = vmatmul.mubr.f32.gmra.mrb[0].mxu0 %v599
        %v1604 = vpop.f32.mrb[0].mxu0
        %v1605 = vadd.f32 %v1065, %v1604
        %v1606 = vpop.f32.mrb[0].mxu0
        %1607 = vmatprep.mubr.f32.mxu0 0.0
        %1608 = vmatmul.mubr.f32.gmra.mrb[0].mxu0 %v602
        %v1609 = vpop.f32.mrb[0].mxu0
        %v1610 = vadd.f32 %v1070, %v1609
        %v1611 = vpop.f32.mrb[0].mxu0
        %1612 = vmatprep.mubr.f32.mxu0 0.0
        %1613 = vmatmul.mubr.f32.gmra.mrb[0].mxu0 %v605
        %v1614 = vpop.f32.mrb[0].mxu0
        %v1615 = vadd.f32 %v1075, %v1614
        %v1616 = vpop.f32.mrb[0].mxu0
        %1617 = vmatprep.mubr.f32.mxu0 0.0
        %1618 = vmatmul.mubr.f32.gmra.mrb[0].mxu0 %v608
        %v1619 = vpop.f32.mrb[0].mxu0
        %v1620 = vadd.f32 %v1080, %v1619
        %v1621 = vpop.f32.mrb[0].mxu0
        %1622 = vmatprep.mubr.f32.mxu0 0.0
        %1623 = vmatmul.mubr.f32.gmra.mrb[0].mxu0 %v611
        %v1624 = vpop.f32.mrb[0].mxu0
        %v1625 = vadd.f32 %v1085, %v1624
        %v1626 = vpop.f32.mrb[0].mxu0
        %1627 = vmatprep.mubr.f32.mxu0 0.0
        %1628 = vmatmul.mubr.f32.gmra.mrb[0].mxu0 %v614
        %v1629 = vpop.f32.mrb[0].mxu0
        %v1630 = vadd.f32 %v1090, %v1629
        %v1631 = vpop.f32.mrb[0].mxu0
        %1632 = vmatprep.mubr.f32.mxu0 0.0
        %1633 = vmatmul.mubr.f32.gmra.mrb[0].mxu0 %v617
        %v1634 = vpop.f32.mrb[0].mxu0
        %v1635 = vadd.f32 %v1095, %v1634
        %v1636 = vpop.f32.mrb[0].mxu0
        %1637 = vmatprep.mubr.f32.mxu0 0.0
        %1638 = vmatmul.mubr.f32.gmra.mrb[0].mxu0 %v620
        %v1639 = vpop.f32.mrb[0].mxu0
        %v1640 = vadd.f32 %v1100, %v1639
        %v1641 = vpop.f32.mrb[0].mxu0
        %1642 = vmatprep.mubr.f32.mxu0 0.0
        %1643 = vmatmul.mubr.f32.gmra.mrb[0].mxu0 %v623
        %v1644 = vpop.f32.mrb[0].mxu0
        %v1645 = vadd.f32 %v1105, %v1644
        %v1646 = vpop.f32.mrb[0].mxu0
        %1647 = vmatprep.mubr.f32.mxu0 0.0
        %1648 = vmatmul.mubr.f32.gmra.mrb[0].mxu0 %v626
        %v1649 = vpop.f32.mrb[0].mxu0
        %v1650 = vadd.f32 %v1110, %v1649
        %v1651 = vpop.f32.mrb[0].mxu0
        %1652 = vmatprep.mubr.f32.mxu0 0.0
        %1653 = vmatmul.mubr.f32.gmra.mrb[0].mxu0 %v629
        %v1654 = vpop.f32.mrb[0].mxu0
        %v1655 = vadd.f32 %v1115, %v1654
        %v1656 = vpop.f32.mrb[0].mxu0
        %1657 = vmatprep.mubr.f32.mxu0 0.0
        %1658 = vmatmul.mubr.f32.gmra.mrb[0].mxu0 %v632
        %v1659 = vpop.f32.mrb[0].mxu0
        %v1660 = vadd.f32 %v1120, %v1659
        %v1661 = vpop.f32.mrb[0].mxu0
        %1662 = vmatprep.mubr.f32.mxu0 0.0
        %1663 = vmatmul.mubr.f32.gmra.mrb[0].mxu0 %v635
        %v1664 = vpop.f32.mrb[0].mxu0
        %v1665 = vadd.f32 %v1125, %v1664
        %v1666 = vpop.f32.mrb[0].mxu0
        %1667 = vmatprep.mubr.f32.mxu0 0.0
        %1668 = vmatmul.mubr.f32.gmra.mrb[0].mxu0 %v638
        %v1669 = vpop.f32.mrb[0].mxu0
        %v1670 = vadd.f32 %v1130, %v1669
        %v1671 = vpop.f32.mrb[0].mxu0
        %1672 = vmatprep.mubr.f32.mxu0 0.0
        %1673 = vmatmul.mubr.f32.gmra.mrb[0].mxu0 %v641
        %v1674 = vpop.f32.mrb[0].mxu0
        %v1675 = vadd.f32 %v1135, %v1674
        %v1676 = vpop.f32.mrb[0].mxu0
        %1677 = vmatprep.mubr.f32.mxu0 0.0
        %1678 = vmatmul.mubr.f32.gmra.mrb[0].mxu0 %v644
        %v1679 = vpop.f32.mrb[0].mxu0
        %v1680 = vadd.f32 %v1140, %v1679
        %v1681 = vpop.f32.mrb[0].mxu0
        %1682 = vmatprep.mubr.f32.mxu0 0.0
        %1683 = vmatmul.mubr.f32.gmra.mrb[0].mxu0 %v647
        %v1684 = vpop.f32.mrb[0].mxu0
        %v1685 = vadd.f32 %v1145, %v1684
        %v1686 = vpop.f32.mrb[0].mxu0
        %1687 = vmatprep.mubr.f32.mxu0 0.0
        %1688 = vmatmul.mubr.f32.gmra.mrb[0].mxu0 %v650
        %v1689 = vpop.f32.mrb[0].mxu0
        %v1690 = vadd.f32 %v1150, %v1689
        %v1691 = vpop.f32.mrb[0].mxu0
        %1692 = vmatprep.mubr.f32.mxu0 0.0
        %1693 = vmatmul.mubr.f32.gmra.mrb[0].mxu0 %v653
        %v1694 = vpop.f32.mrb[0].mxu0
        %v1695 = vadd.f32 %v1155, %v1694
        %v1696 = vpop.f32.mrb[0].mxu0
        %1697 = vmatprep.mubr.f32.mxu0 0.0
        %1698 = vmatmul.mubr.f32.gmra.mrb[0].mxu0 %v656
        %v1699 = vpop.f32.mrb[0].mxu0
        %v1700 = vadd.f32 %v1160, %v1699
        %v1701 = vpop.f32.mrb[0].mxu0
        %1702 = vmatprep.mubr.f32.mxu0 0.0
        %1703 = vmatmul.mubr.f32.gmra.mrb[0].mxu0 %v659
        %v1704 = vpop.f32.mrb[0].mxu0
        %v1705 = vadd.f32 %v1165, %v1704
        %v1706 = vpop.f32.mrb[0].mxu0
        %1707 = vmatprep.mubr.f32.mxu0 0.0
        %1708 = vmatmul.mubr.f32.gmra.mrb[0].mxu0 %v662
        %v1709 = vpop.f32.mrb[0].mxu0
        %v1710 = vadd.f32 %v1170, %v1709
        %v1711 = vpop.f32.mrb[0].mxu0
        %1712 = vmatprep.mubr.f32.mxu0 0.0
        %1713 = vmatmul.mubr.f32.gmra.mrb[0].mxu0 %v665
        %v1714 = vpop.f32.mrb[0].mxu0
        %v1715 = vadd.f32 %v1175, %v1714
        %v1716 = vpop.f32.mrb[0].mxu0
        %1717 = vmatprep.mubr.f32.mxu0 0.0
        %1718 = vmatmul.mubr.f32.gmra.mrb[0].mxu0 %v668
        %v1719 = vpop.f32.mrb[0].mxu0
        %v1720 = vadd.f32 %v1180, %v1719
        %v1721 = vpop.f32.mrb[0].mxu0
        %1722 = vmatprep.mubr.f32.mxu0 0.0
        %1723 = vmatmul.mubr.f32.gmra.mrb[0].mxu0 %v671
        %v1724 = vpop.f32.mrb[0].mxu0
        %v1725 = vadd.f32 %v1185, %v1724
        %v1726 = vpop.f32.mrb[0].mxu0
        %1727 = vmatprep.mubr.f32.mxu0 0.0
        %1728 = vmatmul.mubr.f32.gmra.mrb[0].mxu0 %v674
        %v1729 = vpop.f32.mrb[0].mxu0
        %v1730 = vadd.f32 %v1190, %v1729
        %v1731 = vpop.f32.mrb[0].mxu0
        %1732 = vmatprep.mubr.f32.mxu0 0.0
        %1733 = vmatmul.mubr.f32.gmra.mrb[0].mxu0 %v677
        %v1734 = vpop.f32.mrb[0].mxu0
        %v1735 = vadd.f32 %v1195, %v1734
        %v1736 = vpop.f32.mrb[0].mxu0
        %1737 = vmatprep.mubr.f32.mxu0 0.0
        %1738 = vmatmul.mubr.f32.gmra.mrb[0].mxu0 %v680
        %v1739 = vpop.f32.mrb[0].mxu0
        %v1740 = vadd.f32 %v1200, %v1739
        %v1741 = vpop.f32.mrb[0].mxu0
        %1742 = vmatprep.mubr.f32.mxu0 0.0
        %1743 = vmatmul.mubr.f32.gmra.mrb[0].mxu0 %v683
        %v1744 = vpop.f32.mrb[0].mxu0
        %v1745 = vadd.f32 %v1205, %v1744
        %v1746 = vpop.f32.mrb[0].mxu0
        %1747 = vmatprep.mubr.f32.mxu0 0.0
        %1748 = vmatmul.mubr.f32.gmra.mrb[0].mxu0 %v686
        %v1749 = vpop.f32.mrb[0].mxu0
        %v1750 = vadd.f32 %v1210, %v1749
        %v1751 = vpop.f32.mrb[0].mxu0
        %1752 = vmatprep.mubr.f32.mxu0 0.0
        %1753 = vmatmul.mubr.f32.gmra.mrb[0].mxu0 %v689
        %v1754 = vpop.f32.mrb[0].mxu0
        %v1755 = vadd.f32 %v1215, %v1754
        %v1756 = vpop.f32.mrb[0].mxu0
        %1757 = vmatprep.mubr.f32.mxu0 0.0
        %1758 = vmatmul.mubr.f32.gmra.mrb[0].mxu0 %v692
        %v1759 = vpop.f32.mrb[0].mxu0
        %v1760 = vadd.f32 %v1220, %v1759
        %v1761 = vpop.f32.mrb[0].mxu0
        %1762 = vmatprep.mubr.f32.mxu0 0.0
        %1763 = vmatmul.mubr.f32.gmra.mrb[0].mxu0 %v695
        %v1764 = vpop.f32.mrb[0].mxu0
        %v1765 = vadd.f32 %v1225, %v1764
        %v1766 = vpop.f32.mrb[0].mxu0
        %1767 = vmatprep.mubr.f32.mxu0 0.0
        %1768 = vmatmul.mubr.f32.gmra.mrb[0].mxu0 %v698
        %v1769 = vpop.f32.mrb[0].mxu0
        %v1770 = vadd.f32 %v1230, %v1769
        %v1771 = vpop.f32.mrb[0].mxu0
        %1772 = vmatprep.mubr.f32.mxu0 0.0
        %1773 = vmatmul.mubr.f32.gmra.mrb[0].mxu0 %v701
        %v1774 = vpop.f32.mrb[0].mxu0
        %v1775 = vadd.f32 %v1235, %v1774
        %v1776 = vpop.f32.mrb[0].mxu0
        %1777 = vmatprep.mubr.f32.mxu0 0.0
        %1778 = vmatmul.mubr.f32.gmra.mrb[0].mxu0 %v704
        %v1779 = vpop.f32.mrb[0].mxu0
        %v1780 = vadd.f32 %v1240, %v1779
        %v1781 = vpop.f32.mrb[0].mxu0
        %1782 = vmatprep.mubr.f32.mxu0 0.0
        %1783 = vmatmul.mubr.f32.gmra.mrb[0].mxu0 %v707
        %v1784 = vpop.f32.mrb[0].mxu0
        %v1785 = vadd.f32 %v1245, %v1784
        %v1786 = vpop.f32.mrb[0].mxu0
        %1787 = vmatprep.mubr.f32.mxu0 0.0
        %1788 = vmatmul.mubr.f32.gmra.mrb[0].mxu0 %v710
        %v1789 = vpop.f32.mrb[0].mxu0
        %v1790 = vadd.f32 %v1250, %v1789
        %v1791 = vpop.f32.mrb[0].mxu0
        %1792 = vdwg.mxu0
        %s1793 = scalar_lea.vmem %s1, 112
        %v1794 = vld [vmem:[%s1793] sm:$0xff]
        %v1795 = vld [vmem:[%s1793 + $0x8] sm:$0xff]
        %v1796 = vld [vmem:[%s1793 + $0x10] sm:$0xff]
        %v1797 = vld [vmem:[%s1793 + $0x18] sm:$0xff]
        %v1798 = vld [vmem:[%s1793 + $0x20] sm:$0xff]
        %v1799 = vld [vmem:[%s1793 + $0x28] sm:$0xff]
        %v1800 = vld [vmem:[%s1793 + $0x30] sm:$0x3f]
        %v1802 = vsel %vm447, %v428, 0
        %v1805 = vsel %vm447, %v429, 0
        %v1808 = vsel %vm447, %v430, 0
        %v1811 = vsel %vm447, %v431, 0
        %v1814 = vsel %vm724, %v1800, 0
        %1816 = vmatprep.subr.mxu0 0.0
        %1817 = vmatpush1.msra.mxu0 %v1794
        %1818 = vmatprep.subr.mxu0 0.0
        %1819 = vmatpush1.msra.mxu0 %v1795
        %1820 = vmatprep.subr.mxu0 0.0
        %1821 = vmatpush1.msra.mxu0 %v1796
        %1822 = vmatprep.subr.mxu0 0.0
        %1823 = vmatpush1.msra.mxu0 %v1797
        %1824 = vmatprep.subr.mxu0 0.0
        %1825 = vmatpush1.msra.mxu0 %v1798
        %1826 = vmatprep.subr.mxu0 0.0
        %1827 = vmatpush1.msra.mxu0 %v1799
        %1828 = vmatprep.subr.mxu0 0.0
        %1829 = vmatpush1.msra.mxu0 %v1814
        %1830 = vmatprep.subr.mxu0 0.0
        %1831 = vmatpush1.msra.mxu0 0.0
        %1832 = vmatprep.subr.mxu0 0.0
        %1833 = vmatpush1.msra.mxu0 0.0
        %1834 = vmatprep.subr.mxu0 0.0
        %1835 = vmatpush1.msra.mxu0 0.0
        %1836 = vmatprep.subr.mxu0 0.0
        %1837 = vmatpush1.msra.mxu0 0.0
        %1838 = vmatprep.subr.mxu0 0.0
        %1839 = vmatpush1.msra.mxu0 0.0
        %1840 = vmatprep.subr.mxu0 0.0
        %1841 = vmatpush1.msra.mxu0 0.0
        %1842 = vmatprep.subr.mxu0 0.0
        %1843 = vmatpush1.msra.mxu0 0.0
        %1844 = vmatprep.subr.mxu0 0.0
        %1845 = vmatpush1.msra.mxu0 0.0
        %1846 = vmatprep.subr.mxu0 0.0
        %1847 = vmatpush1.msra.mxu0 0.0
        %1848 = vmatprep.subr.mxu0 0.0
        %1849 = vmatpush1.msra.mxu0 0.0
        %1850 = vmatprep.subr.mxu0 0.0
        %1851 = vmatpush1.msra.mxu0 0.0
        %1852 = vmatprep.subr.mxu0 0.0
        %1853 = vmatpush1.msra.mxu0 0.0
        %1854 = vmatprep.subr.mxu0 0.0
        %1855 = vmatpush1.msra.mxu0 0.0
        %1856 = vmatprep.subr.mxu0 0.0
        %1857 = vmatpush1.msra.mxu0 0.0
        %1858 = vmatprep.subr.mxu0 0.0
        %1859 = vmatpush1.msra.mxu0 0.0
        %1860 = vmatprep.subr.mxu0 0.0
        %1861 = vmatpush1.msra.mxu0 0.0
        %1862 = vmatprep.subr.mxu0 0.0
        %1863 = vmatpush1.msra.mxu0 0.0
        %1864 = vmatprep.subr.mxu0 0.0
        %1865 = vmatpush1.msra.mxu0 0.0
        %1866 = vmatprep.subr.mxu0 0.0
        %1867 = vmatpush1.msra.mxu0 0.0
        %1868 = vmatprep.subr.mxu0 0.0
        %1869 = vmatpush1.msra.mxu0 0.0
        %1870 = vmatprep.subr.mxu0 0.0
        %1871 = vmatpush1.msra.mxu0 0.0
        %1872 = vmatprep.subr.mxu0 0.0
        %1873 = vmatpush1.msra.mxu0 0.0
        %1874 = vmatprep.subr.mxu0 0.0
        %1875 = vmatpush1.msra.mxu0 0.0
        %1876 = vmatprep.subr.mxu0 0.0
        %1877 = vmatpush1.msra.mxu0 0.0
        %1878 = vmatprep.subr.mxu0 0.0
        %1879 = vmatpush1.msra.mxu0 0.0
        %1880 = vmatprep.mubr.f32.mxu0 0.0
        %1881 = vmatmul.mubr.f32.gmra.mrb[0].mxu0 %v461
        %v1882 = vpop.f32.mrb[0].mxu0
        %v1883 = vadd.f32 0.0, %v1882
        %v1884 = vpop.f32.mrb[0].mxu0
        %1885 = vmatprep.mubr.f32.mxu0 0.0
        %1886 = vmatmul.mubr.f32.gmra.mrb[0].mxu0 %v464
        %v1887 = vpop.f32.mrb[0].mxu0
        %v1888 = vadd.f32 0.0, %v1887
        %v1889 = vpop.f32.mrb[0].mxu0
        %1890 = vmatprep.mubr.f32.mxu0 0.0
        %1891 = vmatmul.mubr.f32.gmra.mrb[0].mxu0 %v467
        %v1892 = vpop.f32.mrb[0].mxu0
        %v1893 = vadd.f32 0.0, %v1892
        %v1894 = vpop.f32.mrb[0].mxu0
        %1895 = vmatprep.mubr.f32.mxu0 0.0
        %1896 = vmatmul.mubr.f32.gmra.mrb[0].mxu0 %v470
        %v1897 = vpop.f32.mrb[0].mxu0
        %v1898 = vadd.f32 0.0, %v1897
        %v1899 = vpop.f32.mrb[0].mxu0
        %1900 = vmatprep.mubr.f32.mxu0 0.0
        %1901 = vmatmul.mubr.f32.gmra.mrb[0].mxu0 %v473
        %v1902 = vpop.f32.mrb[0].mxu0
        %v1903 = vadd.f32 0.0, %v1902
        %v1904 = vpop.f32.mrb[0].mxu0
        %1905 = vmatprep.mubr.f32.mxu0 0.0
        %1906 = vmatmul.mubr.f32.gmra.mrb[0].mxu0 %v476
        %v1907 = vpop.f32.mrb[0].mxu0
        %v1908 = vadd.f32 0.0, %v1907
        %v1909 = vpop.f32.mrb[0].mxu0
        %1910 = vmatprep.mubr.f32.mxu0 0.0
        %1911 = vmatmul.mubr.f32.gmra.mrb[0].mxu0 %v479
        %v1912 = vpop.f32.mrb[0].mxu0
        %v1913 = vadd.f32 0.0, %v1912
        %v1914 = vpop.f32.mrb[0].mxu0
        %1915 = vmatprep.mubr.f32.mxu0 0.0
        %1916 = vmatmul.mubr.f32.gmra.mrb[0].mxu0 %v482
        %v1917 = vpop.f32.mrb[0].mxu0
        %v1918 = vadd.f32 0.0, %v1917
        %v1919 = vpop.f32.mrb[0].mxu0
        %1920 = vmatprep.mubr.f32.mxu0 0.0
        %1921 = vmatmul.mubr.f32.gmra.mrb[0].mxu0 %v485
        %v1922 = vpop.f32.mrb[0].mxu0
        %v1923 = vadd.f32 0.0, %v1922
        %v1924 = vpop.f32.mrb[0].mxu0
        %1925 = vmatprep.mubr.f32.mxu0 0.0
        %1926 = vmatmul.mubr.f32.gmra.mrb[0].mxu0 %v488
        %v1927 = vpop.f32.mrb[0].mxu0
        %v1928 = vadd.f32 0.0, %v1927
        %v1929 = vpop.f32.mrb[0].mxu0
        %1930 = vmatprep.mubr.f32.mxu0 0.0
        %1931 = vmatmul.mubr.f32.gmra.mrb[0].mxu0 %v491
        %v1932 = vpop.f32.mrb[0].mxu0
        %v1933 = vadd.f32 0.0, %v1932
        %v1934 = vpop.f32.mrb[0].mxu0
        %1935 = vmatprep.mubr.f32.mxu0 0.0
        %1936 = vmatmul.mubr.f32.gmra.mrb[0].mxu0 %v494
        %v1937 = vpop.f32.mrb[0].mxu0
        %v1938 = vadd.f32 0.0, %v1937
        %v1939 = vpop.f32.mrb[0].mxu0
        %1940 = vmatprep.mubr.f32.mxu0 0.0
        %1941 = vmatmul.mubr.f32.gmra.mrb[0].mxu0 %v497
        %v1942 = vpop.f32.mrb[0].mxu0
        %v1943 = vadd.f32 0.0, %v1942
        %v1944 = vpop.f32.mrb[0].mxu0
        %1945 = vmatprep.mubr.f32.mxu0 0.0
        %1946 = vmatmul.mubr.f32.gmra.mrb[0].mxu0 %v500
        %v1947 = vpop.f32.mrb[0].mxu0
        %v1948 = vadd.f32 0.0, %v1947
        %v1949 = vpop.f32.mrb[0].mxu0
        %1950 = vmatprep.mubr.f32.mxu0 0.0
        %1951 = vmatmul.mubr.f32.gmra.mrb[0].mxu0 %v503
        %v1952 = vpop.f32.mrb[0].mxu0
        %v1953 = vadd.f32 0.0, %v1952
        %v1954 = vpop.f32.mrb[0].mxu0
        %1955 = vmatprep.mubr.f32.mxu0 0.0
        %1956 = vmatmul.mubr.f32.gmra.mrb[0].mxu0 %v506
        %v1957 = vpop.f32.mrb[0].mxu0
        %v1958 = vadd.f32 0.0, %v1957
        %v1959 = vpop.f32.mrb[0].mxu0
        %1960 = vmatprep.mubr.f32.mxu0 0.0
        %1961 = vmatmul.mubr.f32.gmra.mrb[0].mxu0 %v509
        %v1962 = vpop.f32.mrb[0].mxu0
        %v1963 = vadd.f32 0.0, %v1962
        %v1964 = vpop.f32.mrb[0].mxu0
        %1965 = vmatprep.mubr.f32.mxu0 0.0
        %1966 = vmatmul.mubr.f32.gmra.mrb[0].mxu0 %v512
        %v1967 = vpop.f32.mrb[0].mxu0
        %v1968 = vadd.f32 0.0, %v1967
        %v1969 = vpop.f32.mrb[0].mxu0
        %1970 = vmatprep.mubr.f32.mxu0 0.0
        %1971 = vmatmul.mubr.f32.gmra.mrb[0].mxu0 %v515
        %v1972 = vpop.f32.mrb[0].mxu0
        %v1973 = vadd.f32 0.0, %v1972
        %v1974 = vpop.f32.mrb[0].mxu0
        %1975 = vmatprep.mubr.f32.mxu0 0.0
        %1976 = vmatmul.mubr.f32.gmra.mrb[0].mxu0 %v518
        %v1977 = vpop.f32.mrb[0].mxu0
        %v1978 = vadd.f32 0.0, %v1977
        %v1979 = vpop.f32.mrb[0].mxu0
        %1980 = vmatprep.mubr.f32.mxu0 0.0
        %1981 = vmatmul.mubr.f32.gmra.mrb[0].mxu0 %v521
        %v1982 = vpop.f32.mrb[0].mxu0
        %v1983 = vadd.f32 0.0, %v1982
        %v1984 = vpop.f32.mrb[0].mxu0
        %1985 = vmatprep.mubr.f32.mxu0 0.0
        %1986 = vmatmul.mubr.f32.gmra.mrb[0].mxu0 %v524
        %v1987 = vpop.f32.mrb[0].mxu0
        %v1988 = vadd.f32 0.0, %v1987
        %v1989 = vpop.f32.mrb[0].mxu0
        %1990 = vmatprep.mubr.f32.mxu0 0.0
        %1991 = vmatmul.mubr.f32.gmra.mrb[0].mxu0 %v527
        %v1992 = vpop.f32.mrb[0].mxu0
        %v1993 = vadd.f32 0.0, %v1992
        %v1994 = vpop.f32.mrb[0].mxu0
        %1995 = vmatprep.mubr.f32.mxu0 0.0
        %1996 = vmatmul.mubr.f32.gmra.mrb[0].mxu0 %v530
        %v1997 = vpop.f32.mrb[0].mxu0
        %v1998 = vadd.f32 0.0, %v1997
        %v1999 = vpop.f32.mrb[0].mxu0
        %2000 = vmatprep.mubr.f32.mxu0 0.0
        %2001 = vmatmul.mubr.f32.gmra.mrb[0].mxu0 %v533
        %v2002 = vpop.f32.mrb[0].mxu0
        %v2003 = vadd.f32 0.0, %v2002
        %v2004 = vpop.f32.mrb[0].mxu0
        %2005 = vmatprep.mubr.f32.mxu0 0.0
        %2006 = vmatmul.mubr.f32.gmra.mrb[0].mxu0 %v536
        %v2007 = vpop.f32.mrb[0].mxu0
        %v2008 = vadd.f32 0.0, %v2007
        %v2009 = vpop.f32.mrb[0].mxu0
        %2010 = vmatprep.mubr.f32.mxu0 0.0
        %2011 = vmatmul.mubr.f32.gmra.mrb[0].mxu0 %v539
        %v2012 = vpop.f32.mrb[0].mxu0
        %v2013 = vadd.f32 0.0, %v2012
        %v2014 = vpop.f32.mrb[0].mxu0
        %2015 = vmatprep.mubr.f32.mxu0 0.0
        %2016 = vmatmul.mubr.f32.gmra.mrb[0].mxu0 %v542
        %v2017 = vpop.f32.mrb[0].mxu0
        %v2018 = vadd.f32 0.0, %v2017
        %v2019 = vpop.f32.mrb[0].mxu0
        %2020 = vmatprep.mubr.f32.mxu0 0.0
        %2021 = vmatmul.mubr.f32.gmra.mrb[0].mxu0 %v545
        %v2022 = vpop.f32.mrb[0].mxu0
        %v2023 = vadd.f32 0.0, %v2022
        %v2024 = vpop.f32.mrb[0].mxu0
        %2025 = vmatprep.mubr.f32.mxu0 0.0
        %2026 = vmatmul.mubr.f32.gmra.mrb[0].mxu0 %v548
        %v2027 = vpop.f32.mrb[0].mxu0
        %v2028 = vadd.f32 0.0, %v2027
        %v2029 = vpop.f32.mrb[0].mxu0
        %2030 = vmatprep.mubr.f32.mxu0 0.0
        %2031 = vmatmul.mubr.f32.gmra.mrb[0].mxu0 %v551
        %v2032 = vpop.f32.mrb[0].mxu0
        %v2033 = vadd.f32 0.0, %v2032
        %v2034 = vpop.f32.mrb[0].mxu0
        %2035 = vmatprep.mubr.f32.mxu0 0.0
        %2036 = vmatmul.mubr.f32.gmra.mrb[0].mxu0 %v554
        %v2037 = vpop.f32.mrb[0].mxu0
        %v2038 = vadd.f32 0.0, %v2037
        %v2039 = vpop.f32.mrb[0].mxu0
        %2040 = vmatprep.mubr.f32.mxu0 0.0
        %2041 = vmatmul.mubr.f32.gmra.mrb[0].mxu0 %v557
        %v2042 = vpop.f32.mrb[0].mxu0
        %v2043 = vadd.f32 0.0, %v2042
        %v2044 = vpop.f32.mrb[0].mxu0
        %2045 = vmatprep.mubr.f32.mxu0 0.0
        %2046 = vmatmul.mubr.f32.gmra.mrb[0].mxu0 %v560
        %v2047 = vpop.f32.mrb[0].mxu0
        %v2048 = vadd.f32 0.0, %v2047
        %v2049 = vpop.f32.mrb[0].mxu0
        %2050 = vmatprep.mubr.f32.mxu0 0.0
        %2051 = vmatmul.mubr.f32.gmra.mrb[0].mxu0 %v563
        %v2052 = vpop.f32.mrb[0].mxu0
        %v2053 = vadd.f32 0.0, %v2052
        %v2054 = vpop.f32.mrb[0].mxu0
        %2055 = vmatprep.mubr.f32.mxu0 0.0
        %2056 = vmatmul.mubr.f32.gmra.mrb[0].mxu0 %v566
        %v2057 = vpop.f32.mrb[0].mxu0
        %v2058 = vadd.f32 0.0, %v2057
        %v2059 = vpop.f32.mrb[0].mxu0
        %2060 = vmatprep.mubr.f32.mxu0 0.0
        %2061 = vmatmul.mubr.f32.gmra.mrb[0].mxu0 %v569
        %v2062 = vpop.f32.mrb[0].mxu0
        %v2063 = vadd.f32 0.0, %v2062
        %v2064 = vpop.f32.mrb[0].mxu0
        %2065 = vmatprep.mubr.f32.mxu0 0.0
        %2066 = vmatmul.mubr.f32.gmra.mrb[0].mxu0 %v572
        %v2067 = vpop.f32.mrb[0].mxu0
        %v2068 = vadd.f32 0.0, %v2067
        %v2069 = vpop.f32.mrb[0].mxu0
        %2070 = vmatprep.mubr.f32.mxu0 0.0
        %2071 = vmatmul.mubr.f32.gmra.mrb[0].mxu0 %v575
        %v2072 = vpop.f32.mrb[0].mxu0
        %v2073 = vadd.f32 0.0, %v2072
        %v2074 = vpop.f32.mrb[0].mxu0
        %2075 = vmatprep.mubr.f32.mxu0 0.0
        %2076 = vmatmul.mubr.f32.gmra.mrb[0].mxu0 %v578
        %v2077 = vpop.f32.mrb[0].mxu0
        %v2078 = vadd.f32 0.0, %v2077
        %v2079 = vpop.f32.mrb[0].mxu0
        %2080 = vmatprep.mubr.f32.mxu0 0.0
        %2081 = vmatmul.mubr.f32.gmra.mrb[0].mxu0 %v581
        %v2082 = vpop.f32.mrb[0].mxu0
        %v2083 = vadd.f32 0.0, %v2082
        %v2084 = vpop.f32.mrb[0].mxu0
        %2085 = vmatprep.mubr.f32.mxu0 0.0
        %2086 = vmatmul.mubr.f32.gmra.mrb[0].mxu0 %v584
        %v2087 = vpop.f32.mrb[0].mxu0
        %v2088 = vadd.f32 0.0, %v2087
        %v2089 = vpop.f32.mrb[0].mxu0
        %2090 = vmatprep.mubr.f32.mxu0 0.0
        %2091 = vmatmul.mubr.f32.gmra.mrb[0].mxu0 %v587
        %v2092 = vpop.f32.mrb[0].mxu0
        %v2093 = vadd.f32 0.0, %v2092
        %v2094 = vpop.f32.mrb[0].mxu0
        %2095 = vmatprep.mubr.f32.mxu0 0.0
        %2096 = vmatmul.mubr.f32.gmra.mrb[0].mxu0 %v590
        %v2097 = vpop.f32.mrb[0].mxu0
        %v2098 = vadd.f32 0.0, %v2097
        %v2099 = vpop.f32.mrb[0].mxu0
        %2100 = vmatprep.mubr.f32.mxu0 0.0
        %2101 = vmatmul.mubr.f32.gmra.mrb[0].mxu0 %v593
        %v2102 = vpop.f32.mrb[0].mxu0
        %v2103 = vadd.f32 0.0, %v2102
        %v2104 = vpop.f32.mrb[0].mxu0
        %2105 = vmatprep.mubr.f32.mxu0 0.0
        %2106 = vmatmul.mubr.f32.gmra.mrb[0].mxu0 %v596
        %v2107 = vpop.f32.mrb[0].mxu0
        %v2108 = vadd.f32 0.0, %v2107
        %v2109 = vpop.f32.mrb[0].mxu0
        %2110 = vmatprep.mubr.f32.mxu0 0.0
        %2111 = vmatmul.mubr.f32.gmra.mrb[0].mxu0 %v599
        %v2112 = vpop.f32.mrb[0].mxu0
        %v2113 = vadd.f32 0.0, %v2112
        %v2114 = vpop.f32.mrb[0].mxu0
        %2115 = vmatprep.mubr.f32.mxu0 0.0
        %2116 = vmatmul.mubr.f32.gmra.mrb[0].mxu0 %v602
        %v2117 = vpop.f32.mrb[0].mxu0
        %v2118 = vadd.f32 0.0, %v2117
        %v2119 = vpop.f32.mrb[0].mxu0
        %2120 = vmatprep.mubr.f32.mxu0 0.0
        %2121 = vmatmul.mubr.f32.gmra.mrb[0].mxu0 %v605
        %v2122 = vpop.f32.mrb[0].mxu0
        %v2123 = vadd.f32 0.0, %v2122
        %v2124 = vpop.f32.mrb[0].mxu0
        %2125 = vmatprep.mubr.f32.mxu0 0.0
        %2126 = vmatmul.mubr.f32.gmra.mrb[0].mxu0 %v608
        %v2127 = vpop.f32.mrb[0].mxu0
        %v2128 = vadd.f32 0.0, %v2127
        %v2129 = vpop.f32.mrb[0].mxu0
        %2130 = vmatprep.mubr.f32.mxu0 0.0
        %2131 = vmatmul.mubr.f32.gmra.mrb[0].mxu0 %v611
        %v2132 = vpop.f32.mrb[0].mxu0
        %v2133 = vadd.f32 0.0, %v2132
        %v2134 = vpop.f32.mrb[0].mxu0
        %2135 = vmatprep.mubr.f32.mxu0 0.0
        %2136 = vmatmul.mubr.f32.gmra.mrb[0].mxu0 %v614
        %v2137 = vpop.f32.mrb[0].mxu0
        %v2138 = vadd.f32 0.0, %v2137
        %v2139 = vpop.f32.mrb[0].mxu0
        %2140 = vmatprep.mubr.f32.mxu0 0.0
        %2141 = vmatmul.mubr.f32.gmra.mrb[0].mxu0 %v617
        %v2142 = vpop.f32.mrb[0].mxu0
        %v2143 = vadd.f32 0.0, %v2142
        %v2144 = vpop.f32.mrb[0].mxu0
        %2145 = vmatprep.mubr.f32.mxu0 0.0
        %2146 = vmatmul.mubr.f32.gmra.mrb[0].mxu0 %v620
        %v2147 = vpop.f32.mrb[0].mxu0
        %v2148 = vadd.f32 0.0, %v2147
        %v2149 = vpop.f32.mrb[0].mxu0
        %2150 = vmatprep.mubr.f32.mxu0 0.0
        %2151 = vmatmul.mubr.f32.gmra.mrb[0].mxu0 %v623
        %v2152 = vpop.f32.mrb[0].mxu0
        %v2153 = vadd.f32 0.0, %v2152
        %v2154 = vpop.f32.mrb[0].mxu0
        %2155 = vmatprep.mubr.f32.mxu0 0.0
        %2156 = vmatmul.mubr.f32.gmra.mrb[0].mxu0 %v626
        %v2157 = vpop.f32.mrb[0].mxu0
        %v2158 = vadd.f32 0.0, %v2157
        %v2159 = vpop.f32.mrb[0].mxu0
        %2160 = vmatprep.mubr.f32.mxu0 0.0
        %2161 = vmatmul.mubr.f32.gmra.mrb[0].mxu0 %v629
        %v2162 = vpop.f32.mrb[0].mxu0
        %v2163 = vadd.f32 0.0, %v2162
        %v2164 = vpop.f32.mrb[0].mxu0
        %2165 = vmatprep.mubr.f32.mxu0 0.0
        %2166 = vmatmul.mubr.f32.gmra.mrb[0].mxu0 %v632
        %v2167 = vpop.f32.mrb[0].mxu0
        %v2168 = vadd.f32 0.0, %v2167
        %v2169 = vpop.f32.mrb[0].mxu0
        %2170 = vmatprep.mubr.f32.mxu0 0.0
        %2171 = vmatmul.mubr.f32.gmra.mrb[0].mxu0 %v635
        %v2172 = vpop.f32.mrb[0].mxu0
        %v2173 = vadd.f32 0.0, %v2172
        %v2174 = vpop.f32.mrb[0].mxu0
        %2175 = vmatprep.mubr.f32.mxu0 0.0
        %2176 = vmatmul.mubr.f32.gmra.mrb[0].mxu0 %v638
        %v2177 = vpop.f32.mrb[0].mxu0
        %v2178 = vadd.f32 0.0, %v2177
        %v2179 = vpop.f32.mrb[0].mxu0
        %2180 = vmatprep.mubr.f32.mxu0 0.0
        %2181 = vmatmul.mubr.f32.gmra.mrb[0].mxu0 %v641
        %v2182 = vpop.f32.mrb[0].mxu0
        %v2183 = vadd.f32 0.0, %v2182
        %v2184 = vpop.f32.mrb[0].mxu0
        %2185 = vmatprep.mubr.f32.mxu0 0.0
        %2186 = vmatmul.mubr.f32.gmra.mrb[0].mxu0 %v644
        %v2187 = vpop.f32.mrb[0].mxu0
        %v2188 = vadd.f32 0.0, %v2187
        %v2189 = vpop.f32.mrb[0].mxu0
        %2190 = vmatprep.mubr.f32.mxu0 0.0
        %2191 = vmatmul.mubr.f32.gmra.mrb[0].mxu0 %v647
        %v2192 = vpop.f32.mrb[0].mxu0
        %v2193 = vadd.f32 0.0, %v2192
        %v2194 = vpop.f32.mrb[0].mxu0
        %2195 = vmatprep.mubr.f32.mxu0 0.0
        %2196 = vmatmul.mubr.f32.gmra.mrb[0].mxu0 %v650
        %v2197 = vpop.f32.mrb[0].mxu0
        %v2198 = vadd.f32 0.0, %v2197
        %v2199 = vpop.f32.mrb[0].mxu0
        %2200 = vmatprep.mubr.f32.mxu0 0.0
        %2201 = vmatmul.mubr.f32.gmra.mrb[0].mxu0 %v653
        %v2202 = vpop.f32.mrb[0].mxu0
        %v2203 = vadd.f32 0.0, %v2202
        %v2204 = vpop.f32.mrb[0].mxu0
        %2205 = vmatprep.mubr.f32.mxu0 0.0
        %2206 = vmatmul.mubr.f32.gmra.mrb[0].mxu0 %v656
        %v2207 = vpop.f32.mrb[0].mxu0
        %v2208 = vadd.f32 0.0, %v2207
        %v2209 = vpop.f32.mrb[0].mxu0
        %2210 = vmatprep.mubr.f32.mxu0 0.0
        %2211 = vmatmul.mubr.f32.gmra.mrb[0].mxu0 %v659
        %v2212 = vpop.f32.mrb[0].mxu0
        %v2213 = vadd.f32 0.0, %v2212
        %v2214 = vpop.f32.mrb[0].mxu0
        %2215 = vmatprep.mubr.f32.mxu0 0.0
        %2216 = vmatmul.mubr.f32.gmra.mrb[0].mxu0 %v662
        %v2217 = vpop.f32.mrb[0].mxu0
        %v2218 = vadd.f32 0.0, %v2217
        %v2219 = vpop.f32.mrb[0].mxu0
        %2220 = vmatprep.mubr.f32.mxu0 0.0
        %2221 = vmatmul.mubr.f32.gmra.mrb[0].mxu0 %v665
        %v2222 = vpop.f32.mrb[0].mxu0
        %v2223 = vadd.f32 0.0, %v2222
        %v2224 = vpop.f32.mrb[0].mxu0
        %2225 = vmatprep.mubr.f32.mxu0 0.0
        %2226 = vmatmul.mubr.f32.gmra.mrb[0].mxu0 %v668
        %v2227 = vpop.f32.mrb[0].mxu0
        %v2228 = vadd.f32 0.0, %v2227
        %v2229 = vpop.f32.mrb[0].mxu0
        %2230 = vmatprep.mubr.f32.mxu0 0.0
        %2231 = vmatmul.mubr.f32.gmra.mrb[0].mxu0 %v671
        %v2232 = vpop.f32.mrb[0].mxu0
        %v2233 = vadd.f32 0.0, %v2232
        %v2234 = vpop.f32.mrb[0].mxu0
        %2235 = vmatprep.mubr.f32.mxu0 0.0
        %2236 = vmatmul.mubr.f32.gmra.mrb[0].mxu0 %v674
        %v2237 = vpop.f32.mrb[0].mxu0
        %v2238 = vadd.f32 0.0, %v2237
        %v2239 = vpop.f32.mrb[0].mxu0
        %2240 = vmatprep.mubr.f32.mxu0 0.0
        %2241 = vmatmul.mubr.f32.gmra.mrb[0].mxu0 %v677
        %v2242 = vpop.f32.mrb[0].mxu0
        %v2243 = vadd.f32 0.0, %v2242
        %v2244 = vpop.f32.mrb[0].mxu0
        %2245 = vmatprep.mubr.f32.mxu0 0.0
        %2246 = vmatmul.mubr.f32.gmra.mrb[0].mxu0 %v680
        %v2247 = vpop.f32.mrb[0].mxu0
        %v2248 = vadd.f32 0.0, %v2247
        %v2249 = vpop.f32.mrb[0].mxu0
        %2250 = vmatprep.mubr.f32.mxu0 0.0
        %2251 = vmatmul.mubr.f32.gmra.mrb[0].mxu0 %v683
        %v2252 = vpop.f32.mrb[0].mxu0
        %v2253 = vadd.f32 0.0, %v2252
        %v2254 = vpop.f32.mrb[0].mxu0
        %2255 = vmatprep.mubr.f32.mxu0 0.0
        %2256 = vmatmul.mubr.f32.gmra.mrb[0].mxu0 %v686
        %v2257 = vpop.f32.mrb[0].mxu0
        %v2258 = vadd.f32 0.0, %v2257
        %v2259 = vpop.f32.mrb[0].mxu0
        %2260 = vmatprep.mubr.f32.mxu0 0.0
        %2261 = vmatmul.mubr.f32.gmra.mrb[0].mxu0 %v689
        %v2262 = vpop.f32.mrb[0].mxu0
        %v2263 = vadd.f32 0.0, %v2262
        %v2264 = vpop.f32.mrb[0].mxu0
        %2265 = vmatprep.mubr.f32.mxu0 0.0
        %2266 = vmatmul.mubr.f32.gmra.mrb[0].mxu0 %v692
        %v2267 = vpop.f32.mrb[0].mxu0
        %v2268 = vadd.f32 0.0, %v2267
        %v2269 = vpop.f32.mrb[0].mxu0
        %2270 = vmatprep.mubr.f32.mxu0 0.0
        %2271 = vmatmul.mubr.f32.gmra.mrb[0].mxu0 %v695
        %v2272 = vpop.f32.mrb[0].mxu0
        %v2273 = vadd.f32 0.0, %v2272
        %v2274 = vpop.f32.mrb[0].mxu0
        %2275 = vmatprep.mubr.f32.mxu0 0.0
        %2276 = vmatmul.mubr.f32.gmra.mrb[0].mxu0 %v698
        %v2277 = vpop.f32.mrb[0].mxu0
        %v2278 = vadd.f32 0.0, %v2277
        %v2279 = vpop.f32.mrb[0].mxu0
        %2280 = vmatprep.mubr.f32.mxu0 0.0
        %2281 = vmatmul.mubr.f32.gmra.mrb[0].mxu0 %v701
        %v2282 = vpop.f32.mrb[0].mxu0
        %v2283 = vadd.f32 0.0, %v2282
        %v2284 = vpop.f32.mrb[0].mxu0
        %2285 = vmatprep.mubr.f32.mxu0 0.0
        %2286 = vmatmul.mubr.f32.gmra.mrb[0].mxu0 %v704
        %v2287 = vpop.f32.mrb[0].mxu0
        %v2288 = vadd.f32 0.0, %v2287
        %v2289 = vpop.f32.mrb[0].mxu0
        %2290 = vmatprep.mubr.f32.mxu0 0.0
        %2291 = vmatmul.mubr.f32.gmra.mrb[0].mxu0 %v707
        %v2292 = vpop.f32.mrb[0].mxu0
        %v2293 = vadd.f32 0.0, %v2292
        %v2294 = vpop.f32.mrb[0].mxu0
        %2295 = vmatprep.mubr.f32.mxu0 0.0
        %2296 = vmatmul.mubr.f32.gmra.mrb[0].mxu0 %v710
        %v2297 = vpop.f32.mrb[0].mxu0
        %v2298 = vadd.f32 0.0, %v2297
        %v2299 = vpop.f32.mrb[0].mxu0
        %2300 = vmatprep.mubr.f32.mxu0 0.0
        %2301 = vmatmul.mubr.f32.gmra.mrb[0].mxu0 %v713
        %v2302 = vpop.f32.mrb[0].mxu0
        %v2303 = vadd.f32 0.0, %v2302
        %v2304 = vpop.f32.mrb[0].mxu0
        %2305 = vmatprep.mubr.f32.mxu0 0.0
        %2306 = vmatmul.mubr.f32.gmra.mrb[0].mxu0 %v716
        %v2307 = vpop.f32.mrb[0].mxu0
        %v2308 = vadd.f32 0.0, %v2307
        %v2309 = vpop.f32.mrb[0].mxu0
        %2310 = vmatprep.mubr.f32.mxu0 0.0
        %2311 = vmatmul.mubr.f32.gmra.mrb[0].mxu0 %v719
        %v2312 = vpop.f32.mrb[0].mxu0
        %v2313 = vadd.f32 0.0, %v2312
        %v2314 = vpop.f32.mrb[0].mxu0
        %2315 = vmatprep.mubr.f32.mxu0 0.0
        %2316 = vmatmul.mubr.f32.gmra.mrb[0].mxu0 %v722
        %v2317 = vpop.f32.mrb[0].mxu0
        %v2318 = vadd.f32 0.0, %v2317
        %v2319 = vpop.f32.mrb[0].mxu0
        %2320 = vmatprep.mubr.f32.mxu0 0.0
        %2321 = vmatmul.mubr.f32.gmra.mrb[0].mxu0 %v1802
        %v2322 = vpop.f32.mrb[0].mxu0
        %v2323 = vadd.f32 0.0, %v2322
        %v2324 = vpop.f32.mrb[0].mxu0
        %2325 = vmatprep.mubr.f32.mxu0 0.0
        %2326 = vmatmul.mubr.f32.gmra.mrb[0].mxu0 %v1805
        %v2327 = vpop.f32.mrb[0].mxu0
        %v2328 = vadd.f32 0.0, %v2327
        %v2329 = vpop.f32.mrb[0].mxu0
        %2330 = vmatprep.mubr.f32.mxu0 0.0
        %2331 = vmatmul.mubr.f32.gmra.mrb[0].mxu0 %v1808
        %v2332 = vpop.f32.mrb[0].mxu0
        %v2333 = vadd.f32 0.0, %v2332
        %v2334 = vpop.f32.mrb[0].mxu0
        %2335 = vmatprep.mubr.f32.mxu0 0.0
        %2336 = vmatmul.mubr.f32.gmra.mrb[0].mxu0 %v1811
        %v2337 = vpop.f32.mrb[0].mxu0
        %v2338 = vadd.f32 0.0, %v2337
        %v2339 = vpop.f32.mrb[0].mxu0
        %2340 = vdwg.mxu0
        %v2341 = vadd.f32 %v1335, %v1883
        %v2342 = vadd.f32 %v1340, %v1888
        %v2343 = vadd.f32 %v1345, %v1893
        %v2344 = vadd.f32 %v1350, %v1898
        %v2345 = vadd.f32 %v1355, %v1903
        %v2346 = vadd.f32 %v1360, %v1908
        %v2347 = vadd.f32 %v1365, %v1913
        %v2348 = vadd.f32 %v1370, %v1918
        %v2349 = vadd.f32 %v1375, %v1923
        %v2350 = vadd.f32 %v1380, %v1928
        %v2351 = vadd.f32 %v1385, %v1933
        %v2352 = vadd.f32 %v1390, %v1938
        %v2353 = vadd.f32 %v1395, %v1943
        %v2354 = vadd.f32 %v1400, %v1948
        %v2355 = vadd.f32 %v1405, %v1953
        %v2356 = vadd.f32 %v1410, %v1958
        %v2357 = vadd.f32 %v1415, %v1963
        %v2358 = vadd.f32 %v1420, %v1968
        %v2359 = vadd.f32 %v1425, %v1973
        %v2360 = vadd.f32 %v1430, %v1978
        %v2361 = vadd.f32 %v1435, %v1983
        %v2362 = vadd.f32 %v1440, %v1988
        %v2363 = vadd.f32 %v1445, %v1993
        %v2364 = vadd.f32 %v1450, %v1998
        %v2365 = vadd.f32 %v1455, %v2003
        %v2366 = vadd.f32 %v1460, %v2008
        %v2367 = vadd.f32 %v1465, %v2013
        %v2368 = vadd.f32 %v1470, %v2018
        %v2369 = vadd.f32 %v1475, %v2023
        %v2370 = vadd.f32 %v1480, %v2028
        %v2371 = vadd.f32 %v1485, %v2033
        %v2372 = vadd.f32 %v1490, %v2038
        %v2373 = vadd.f32 %v1495, %v2043
        %v2374 = vadd.f32 %v1500, %v2048
        %v2375 = vadd.f32 %v1505, %v2053
        %v2376 = vadd.f32 %v1510, %v2058
        %v2377 = vadd.f32 %v1515, %v2063
        %v2378 = vadd.f32 %v1520, %v2068
        %v2379 = vadd.f32 %v1525, %v2073
        %v2380 = vadd.f32 %v1530, %v2078
        %v2381 = vadd.f32 %v1535, %v2083
        %v2382 = vadd.f32 %v1540, %v2088
        %v2383 = vadd.f32 %v1545, %v2093
        %v2384 = vadd.f32 %v1550, %v2098
        %v2385 = vadd.f32 %v1555, %v2103
        %v2386 = vadd.f32 %v1560, %v2108
        %v2387 = vadd.f32 %v1565, %v2113
        %v2388 = vadd.f32 %v1570, %v2118
        %v2389 = vadd.f32 %v1575, %v2123
        %v2390 = vadd.f32 %v1580, %v2128
        %v2391 = vadd.f32 %v1585, %v2133
        %v2392 = vadd.f32 %v1590, %v2138
        %v2393 = vadd.f32 %v1595, %v2143
        %v2394 = vadd.f32 %v1600, %v2148
        %v2395 = vadd.f32 %v1605, %v2153
        %v2396 = vadd.f32 %v1610, %v2158
        %v2397 = vadd.f32 %v1615, %v2163
        %v2398 = vadd.f32 %v1620, %v2168
        %v2399 = vadd.f32 %v1625, %v2173
        %v2400 = vadd.f32 %v1630, %v2178
        %v2401 = vadd.f32 %v1635, %v2183
        %v2402 = vadd.f32 %v1640, %v2188
        %v2403 = vadd.f32 %v1645, %v2193
        %v2404 = vadd.f32 %v1650, %v2198
        %v2405 = vadd.f32 %v1655, %v2203
        %v2406 = vadd.f32 %v1660, %v2208
        %v2407 = vadd.f32 %v1665, %v2213
        %v2408 = vadd.f32 %v1670, %v2218
        %v2409 = vadd.f32 %v1675, %v2223
        %v2410 = vadd.f32 %v1680, %v2228
        %v2411 = vadd.f32 %v1685, %v2233
        %v2412 = vadd.f32 %v1690, %v2238
        %v2413 = vadd.f32 %v1695, %v2243
        %v2414 = vadd.f32 %v1700, %v2248
        %v2415 = vadd.f32 %v1705, %v2253
        %v2416 = vadd.f32 %v1710, %v2258
        %v2417 = vadd.f32 %v1715, %v2263
        %v2418 = vadd.f32 %v1720, %v2268
        %v2419 = vadd.f32 %v1725, %v2273
        %v2420 = vadd.f32 %v1730, %v2278
        %v2421 = vadd.f32 %v1735, %v2283
        %v2422 = vadd.f32 %v1740, %v2288
        %v2423 = vadd.f32 %v1745, %v2293
        %v2424 = vadd.f32 %v1750, %v2298
        %v2425 = vadd.f32 %v1755, %v2303
        %v2426 = vadd.f32 %v1760, %v2308
        %v2427 = vadd.f32 %v1765, %v2313
        %v2428 = vadd.f32 %v1770, %v2318
        %v2429 = vadd.f32 %v1775, %v2323
        %v2430 = vadd.f32 %v1780, %v2328
        %v2431 = vadd.f32 %v1785, %v2333
        %v2432 = vadd.f32 %v1790, %v2338
        %v2433 = vld [vmem:[%s2] sm:$0x1]
        %v2435 = vlaneseq
        %v2436 = vshrl.u32 %v2435, 7
        %v2437 = vsub.s32 0, %v2436
        %v2438 = vrot.slane %v2433, %v2437
        %v2440 = vadd.f32 %v2341, %v2438
        %v2441 = vadd.f32 %v2342, %v2438
        %v2442 = vadd.f32 %v2343, %v2438
        %v2443 = vadd.f32 %v2344, %v2438
        %v2444 = vadd.f32 %v2345, %v2438
        %v2445 = vadd.f32 %v2346, %v2438
        %v2446 = vadd.f32 %v2347, %v2438
        %v2447 = vadd.f32 %v2348, %v2438
        %v2448 = vadd.f32 %v2349, %v2438
        %v2449 = vadd.f32 %v2350, %v2438
        %v2450 = vadd.f32 %v2351, %v2438
        %v2451 = vadd.f32 %v2352, %v2438
        %v2452 = vadd.f32 %v2353, %v2438
        %v2453 = vadd.f32 %v2354, %v2438
        %v2454 = vadd.f32 %v2355, %v2438
        %v2455 = vadd.f32 %v2356, %v2438
        %v2456 = vadd.f32 %v2357, %v2438
        %v2457 = vadd.f32 %v2358, %v2438
        %v2458 = vadd.f32 %v2359, %v2438
        %v2459 = vadd.f32 %v2360, %v2438
        %v2460 = vadd.f32 %v2361, %v2438
        %v2461 = vadd.f32 %v2362, %v2438
        %v2462 = vadd.f32 %v2363, %v2438
        %v2463 = vadd.f32 %v2364, %v2438
        %v2464 = vadd.f32 %v2365, %v2438
        %v2465 = vadd.f32 %v2366, %v2438
        %v2466 = vadd.f32 %v2367, %v2438
        %v2467 = vadd.f32 %v2368, %v2438
        %v2468 = vadd.f32 %v2369, %v2438
        %v2469 = vadd.f32 %v2370, %v2438
        %v2470 = vadd.f32 %v2371, %v2438
        %v2471 = vadd.f32 %v2372, %v2438
        %v2472 = vadd.f32 %v2373, %v2438
        %v2473 = vadd.f32 %v2374, %v2438
        %v2474 = vadd.f32 %v2375, %v2438
        %v2475 = vadd.f32 %v2376, %v2438
        %v2476 = vadd.f32 %v2377, %v2438
        %v2477 = vadd.f32 %v2378, %v2438
        %v2478 = vadd.f32 %v2379, %v2438
        %v2479 = vadd.f32 %v2380, %v2438
        %v2480 = vadd.f32 %v2381, %v2438
        %v2481 = vadd.f32 %v2382, %v2438
        %v2482 = vadd.f32 %v2383, %v2438
        %v2483 = vadd.f32 %v2384, %v2438
        %v2484 = vadd.f32 %v2385, %v2438
        %v2485 = vadd.f32 %v2386, %v2438
        %v2486 = vadd.f32 %v2387, %v2438
        %v2487 = vadd.f32 %v2388, %v2438
        %v2488 = vadd.f32 %v2389, %v2438
        %v2489 = vadd.f32 %v2390, %v2438
        %v2490 = vadd.f32 %v2391, %v2438
        %v2491 = vadd.f32 %v2392, %v2438
        %v2492 = vadd.f32 %v2393, %v2438
        %v2493 = vadd.f32 %v2394, %v2438
        %v2494 = vadd.f32 %v2395, %v2438
        %v2495 = vadd.f32 %v2396, %v2438
        %v2496 = vadd.f32 %v2397, %v2438
        %v2497 = vadd.f32 %v2398, %v2438
        %v2498 = vadd.f32 %v2399, %v2438
        %v2499 = vadd.f32 %v2400, %v2438
        %v2500 = vadd.f32 %v2401, %v2438
        %v2501 = vadd.f32 %v2402, %v2438
        %v2502 = vadd.f32 %v2403, %v2438
        %v2503 = vadd.f32 %v2404, %v2438
        %v2504 = vadd.f32 %v2405, %v2438
        %v2505 = vadd.f32 %v2406, %v2438
        %v2506 = vadd.f32 %v2407, %v2438
        %v2507 = vadd.f32 %v2408, %v2438
        %v2508 = vadd.f32 %v2409, %v2438
        %v2509 = vadd.f32 %v2410, %v2438
        %v2510 = vadd.f32 %v2411, %v2438
        %v2511 = vadd.f32 %v2412, %v2438
        %v2512 = vadd.f32 %v2413, %v2438
        %v2513 = vadd.f32 %v2414, %v2438
        %v2514 = vadd.f32 %v2415, %v2438
        %v2515 = vadd.f32 %v2416, %v2438
        %v2516 = vadd.f32 %v2417, %v2438
        %v2517 = vadd.f32 %v2418, %v2438
        %v2518 = vadd.f32 %v2419, %v2438
        %v2519 = vadd.f32 %v2420, %v2438
        %v2520 = vadd.f32 %v2421, %v2438
        %v2521 = vadd.f32 %v2422, %v2438
        %v2522 = vadd.f32 %v2423, %v2438
        %v2523 = vadd.f32 %v2424, %v2438
        %v2524 = vadd.f32 %v2425, %v2438
        %v2525 = vadd.f32 %v2426, %v2438
        %v2526 = vadd.f32 %v2427, %v2438
        %v2527 = vadd.f32 %v2428, %v2438
        %v2528 = vadd.f32 %v2429, %v2438
        %v2529 = vadd.f32 %v2430, %v2438
        %v2530 = vadd.f32 %v2431, %v2438
        %v2531 = vadd.f32 %v2432, %v2438
        %vm2532 = vcmp.ge.f32.partialorder %v2440, 0.0
        %vm2533 = vcmp.ge.f32.partialorder %v2441, 0.0
        %vm2534 = vcmp.ge.f32.partialorder %v2442, 0.0
        %vm2535 = vcmp.ge.f32.partialorder %v2443, 0.0
        %vm2536 = vcmp.ge.f32.partialorder %v2444, 0.0
        %vm2537 = vcmp.ge.f32.partialorder %v2445, 0.0
        %vm2538 = vcmp.ge.f32.partialorder %v2446, 0.0
        %vm2539 = vcmp.ge.f32.partialorder %v2447, 0.0
        %vm2540 = vcmp.ge.f32.partialorder %v2448, 0.0
        %vm2541 = vcmp.ge.f32.partialorder %v2449, 0.0
        %vm2542 = vcmp.ge.f32.partialorder %v2450, 0.0
        %vm2543 = vcmp.ge.f32.partialorder %v2451, 0.0
        %vm2544 = vcmp.ge.f32.partialorder %v2452, 0.0
        %vm2545 = vcmp.ge.f32.partialorder %v2453, 0.0
        %vm2546 = vcmp.ge.f32.partialorder %v2454, 0.0
        %vm2547 = vcmp.ge.f32.partialorder %v2455, 0.0
        %vm2548 = vcmp.ge.f32.partialorder %v2456, 0.0
        %vm2549 = vcmp.ge.f32.partialorder %v2457, 0.0
        %vm2550 = vcmp.ge.f32.partialorder %v2458, 0.0
        %vm2551 = vcmp.ge.f32.partialorder %v2459, 0.0
        %vm2552 = vcmp.ge.f32.partialorder %v2460, 0.0
        %vm2553 = vcmp.ge.f32.partialorder %v2461, 0.0
        %vm2554 = vcmp.ge.f32.partialorder %v2462, 0.0
        %vm2555 = vcmp.ge.f32.partialorder %v2463, 0.0
        %vm2556 = vcmp.ge.f32.partialorder %v2464, 0.0
        %vm2557 = vcmp.ge.f32.partialorder %v2465, 0.0
        %vm2558 = vcmp.ge.f32.partialorder %v2466, 0.0
        %vm2559 = vcmp.ge.f32.partialorder %v2467, 0.0
        %vm2560 = vcmp.ge.f32.partialorder %v2468, 0.0
        %vm2561 = vcmp.ge.f32.partialorder %v2469, 0.0
        %vm2562 = vcmp.ge.f32.partialorder %v2470, 0.0
        %vm2563 = vcmp.ge.f32.partialorder %v2471, 0.0
        %vm2564 = vcmp.ge.f32.partialorder %v2472, 0.0
        %vm2565 = vcmp.ge.f32.partialorder %v2473, 0.0
        %vm2566 = vcmp.ge.f32.partialorder %v2474, 0.0
        %vm2567 = vcmp.ge.f32.partialorder %v2475, 0.0
        %vm2568 = vcmp.ge.f32.partialorder %v2476, 0.0
        %vm2569 = vcmp.ge.f32.partialorder %v2477, 0.0
        %vm2570 = vcmp.ge.f32.partialorder %v2478, 0.0
        %vm2571 = vcmp.ge.f32.partialorder %v2479, 0.0
        %vm2572 = vcmp.ge.f32.partialorder %v2480, 0.0
        %vm2573 = vcmp.ge.f32.partialorder %v2481, 0.0
        %vm2574 = vcmp.ge.f32.partialorder %v2482, 0.0
        %vm2575 = vcmp.ge.f32.partialorder %v2483, 0.0
        %vm2576 = vcmp.ge.f32.partialorder %v2484, 0.0
        %vm2577 = vcmp.ge.f32.partialorder %v2485, 0.0
        %vm2578 = vcmp.ge.f32.partialorder %v2486, 0.0
        %vm2579 = vcmp.ge.f32.partialorder %v2487, 0.0
        %vm2580 = vcmp.ge.f32.partialorder %v2488, 0.0
        %vm2581 = vcmp.ge.f32.partialorder %v2489, 0.0
        %vm2582 = vcmp.ge.f32.partialorder %v2490, 0.0
        %vm2583 = vcmp.ge.f32.partialorder %v2491, 0.0
        %vm2584 = vcmp.ge.f32.partialorder %v2492, 0.0
        %vm2585 = vcmp.ge.f32.partialorder %v2493, 0.0
        %vm2586 = vcmp.ge.f32.partialorder %v2494, 0.0
        %vm2587 = vcmp.ge.f32.partialorder %v2495, 0.0
        %vm2588 = vcmp.ge.f32.partialorder %v2496, 0.0
        %vm2589 = vcmp.ge.f32.partialorder %v2497, 0.0
        %vm2590 = vcmp.ge.f32.partialorder %v2498, 0.0
        %vm2591 = vcmp.ge.f32.partialorder %v2499, 0.0
        %vm2592 = vcmp.ge.f32.partialorder %v2500, 0.0
        %vm2593 = vcmp.ge.f32.partialorder %v2501, 0.0
        %vm2594 = vcmp.ge.f32.partialorder %v2502, 0.0
        %vm2595 = vcmp.ge.f32.partialorder %v2503, 0.0
        %vm2596 = vcmp.ge.f32.partialorder %v2504, 0.0
        %vm2597 = vcmp.ge.f32.partialorder %v2505, 0.0
        %vm2598 = vcmp.ge.f32.partialorder %v2506, 0.0
        %vm2599 = vcmp.ge.f32.partialorder %v2507, 0.0
        %vm2600 = vcmp.ge.f32.partialorder %v2508, 0.0
        %vm2601 = vcmp.ge.f32.partialorder %v2509, 0.0
        %vm2602 = vcmp.ge.f32.partialorder %v2510, 0.0
        %vm2603 = vcmp.ge.f32.partialorder %v2511, 0.0
        %vm2604 = vcmp.ge.f32.partialorder %v2512, 0.0
        %vm2605 = vcmp.ge.f32.partialorder %v2513, 0.0
        %vm2606 = vcmp.ge.f32.partialorder %v2514, 0.0
        %vm2607 = vcmp.ge.f32.partialorder %v2515, 0.0
        %vm2608 = vcmp.ge.f32.partialorder %v2516, 0.0
        %vm2609 = vcmp.ge.f32.partialorder %v2517, 0.0
        %vm2610 = vcmp.ge.f32.partialorder %v2518, 0.0
        %vm2611 = vcmp.ge.f32.partialorder %v2519, 0.0
        %vm2612 = vcmp.ge.f32.partialorder %v2520, 0.0
        %vm2613 = vcmp.ge.f32.partialorder %v2521, 0.0
        %vm2614 = vcmp.ge.f32.partialorder %v2522, 0.0
        %vm2615 = vcmp.ge.f32.partialorder %v2523, 0.0
        %vm2616 = vcmp.ge.f32.partialorder %v2524, 0.0
        %vm2617 = vcmp.ge.f32.partialorder %v2525, 0.0
        %vm2618 = vcmp.ge.f32.partialorder %v2526, 0.0
        %vm2619 = vcmp.ge.f32.partialorder %v2527, 0.0
        %vm2620 = vcmp.ge.f32.partialorder %v2528, 0.0
        %vm2621 = vcmp.ge.f32.partialorder %v2529, 0.0
        %vm2622 = vcmp.ge.f32.partialorder %v2530, 0.0
        %vm2623 = vcmp.ge.f32.partialorder %v2531, 0.0
        %v2624 = vmul.f32 %v2440, 0.01
        %v2625 = vmul.f32 %v2441, 0.01
        %v2626 = vmul.f32 %v2442, 0.01
        %v2627 = vmul.f32 %v2443, 0.01
        %v2628 = vmul.f32 %v2444, 0.01
        %v2629 = vmul.f32 %v2445, 0.01
        %v2630 = vmul.f32 %v2446, 0.01
        %v2631 = vmul.f32 %v2447, 0.01
        %v2632 = vmul.f32 %v2448, 0.01
        %v2633 = vmul.f32 %v2449, 0.01
        %v2634 = vmul.f32 %v2450, 0.01
        %v2635 = vmul.f32 %v2451, 0.01
        %v2636 = vmul.f32 %v2452, 0.01
        %v2637 = vmul.f32 %v2453, 0.01
        %v2638 = vmul.f32 %v2454, 0.01
        %v2639 = vmul.f32 %v2455, 0.01
        %v2640 = vmul.f32 %v2456, 0.01
        %v2641 = vmul.f32 %v2457, 0.01
        %v2642 = vmul.f32 %v2458, 0.01
        %v2643 = vmul.f32 %v2459, 0.01
        %v2644 = vmul.f32 %v2460, 0.01
        %v2645 = vmul.f32 %v2461, 0.01
        %v2646 = vmul.f32 %v2462, 0.01
        %v2647 = vmul.f32 %v2463, 0.01
        %v2648 = vmul.f32 %v2464, 0.01
        %v2649 = vmul.f32 %v2465, 0.01
        %v2650 = vmul.f32 %v2466, 0.01
        %v2651 = vmul.f32 %v2467, 0.01
        %v2652 = vmul.f32 %v2468, 0.01
        %v2653 = vmul.f32 %v2469, 0.01
        %v2654 = vmul.f32 %v2470, 0.01
        %v2655 = vmul.f32 %v2471, 0.01
        %v2656 = vmul.f32 %v2472, 0.01
        %v2657 = vmul.f32 %v2473, 0.01
        %v2658 = vmul.f32 %v2474, 0.01
        %v2659 = vmul.f32 %v2475, 0.01
        %v2660 = vmul.f32 %v2476, 0.01
        %v2661 = vmul.f32 %v2477, 0.01
        %v2662 = vmul.f32 %v2478, 0.01
        %v2663 = vmul.f32 %v2479, 0.01
        %v2664 = vmul.f32 %v2480, 0.01
        %v2665 = vmul.f32 %v2481, 0.01
        %v2666 = vmul.f32 %v2482, 0.01
        %v2667 = vmul.f32 %v2483, 0.01
        %v2668 = vmul.f32 %v2484, 0.01
        %v2669 = vmul.f32 %v2485, 0.01
        %v2670 = vmul.f32 %v2486, 0.01
        %v2671 = vmul.f32 %v2487, 0.01
        %v2672 = vmul.f32 %v2488, 0.01
        %v2673 = vmul.f32 %v2489, 0.01
        %v2674 = vmul.f32 %v2490, 0.01
        %v2675 = vmul.f32 %v2491, 0.01
        %v2676 = vmul.f32 %v2492, 0.01
        %v2677 = vmul.f32 %v2493, 0.01
        %v2678 = vmul.f32 %v2494, 0.01
        %v2679 = vmul.f32 %v2495, 0.01
        %v2680 = vmul.f32 %v2496, 0.01
        %v2681 = vmul.f32 %v2497, 0.01
        %v2682 = vmul.f32 %v2498, 0.01
        %v2683 = vmul.f32 %v2499, 0.01
        %v2684 = vmul.f32 %v2500, 0.01
        %v2685 = vmul.f32 %v2501, 0.01
        %v2686 = vmul.f32 %v2502, 0.01
        %v2687 = vmul.f32 %v2503, 0.01
        %v2688 = vmul.f32 %v2504, 0.01
        %v2689 = vmul.f32 %v2505, 0.01
        %v2690 = vmul.f32 %v2506, 0.01
        %v2691 = vmul.f32 %v2507, 0.01
        %v2692 = vmul.f32 %v2508, 0.01
        %v2693 = vmul.f32 %v2509, 0.01
        %v2694 = vmul.f32 %v2510, 0.01
        %v2695 = vmul.f32 %v2511, 0.01
        %v2696 = vmul.f32 %v2512, 0.01
        %v2697 = vmul.f32 %v2513, 0.01
        %v2698 = vmul.f32 %v2514, 0.01
        %v2699 = vmul.f32 %v2515, 0.01
        %v2700 = vmul.f32 %v2516, 0.01
        %v2701 = vmul.f32 %v2517, 0.01
        %v2702 = vmul.f32 %v2518, 0.01
        %v2703 = vmul.f32 %v2519, 0.01
        %v2704 = vmul.f32 %v2520, 0.01
        %v2705 = vmul.f32 %v2521, 0.01
        %v2706 = vmul.f32 %v2522, 0.01
        %v2707 = vmul.f32 %v2523, 0.01
        %v2708 = vmul.f32 %v2524, 0.01
        %v2709 = vmul.f32 %v2525, 0.01
        %v2710 = vmul.f32 %v2526, 0.01
        %v2711 = vmul.f32 %v2527, 0.01
        %v2712 = vmul.f32 %v2528, 0.01
        %v2713 = vmul.f32 %v2529, 0.01
        %v2714 = vmul.f32 %v2530, 0.01
        %v2715 = vmul.f32 %v2531, 0.01
        %v2716 = vsel %vm2532, %v2440, %v2624
        %v2717 = vsel %vm2533, %v2441, %v2625
        %v2718 = vsel %vm2534, %v2442, %v2626
        %v2719 = vsel %vm2535, %v2443, %v2627
        %v2720 = vsel %vm2536, %v2444, %v2628
        %v2721 = vsel %vm2537, %v2445, %v2629
        %v2722 = vsel %vm2538, %v2446, %v2630
        %v2723 = vsel %vm2539, %v2447, %v2631
        %v2724 = vsel %vm2540, %v2448, %v2632
        %v2725 = vsel %vm2541, %v2449, %v2633
        %v2726 = vsel %vm2542, %v2450, %v2634
        %v2727 = vsel %vm2543, %v2451, %v2635
        %v2728 = vsel %vm2544, %v2452, %v2636
        %v2729 = vsel %vm2545, %v2453, %v2637
        %v2730 = vsel %vm2546, %v2454, %v2638
        %v2731 = vsel %vm2547, %v2455, %v2639
        %v2732 = vsel %vm2548, %v2456, %v2640
        %v2733 = vsel %vm2549, %v2457, %v2641
        %v2734 = vsel %vm2550, %v2458, %v2642
        %v2735 = vsel %vm2551, %v2459, %v2643
        %v2736 = vsel %vm2552, %v2460, %v2644
        %v2737 = vsel %vm2553, %v2461, %v2645
        %v2738 = vsel %vm2554, %v2462, %v2646
        %v2739 = vsel %vm2555, %v2463, %v2647
        %v2740 = vsel %vm2556, %v2464, %v2648
        %v2741 = vsel %vm2557, %v2465, %v2649
        %v2742 = vsel %vm2558, %v2466, %v2650
        %v2743 = vsel %vm2559, %v2467, %v2651
        %v2744 = vsel %vm2560, %v2468, %v2652
        %v2745 = vsel %vm2561, %v2469, %v2653
        %v2746 = vsel %vm2562, %v2470, %v2654
        %v2747 = vsel %vm2563, %v2471, %v2655
        %v2748 = vsel %vm2564, %v2472, %v2656
        %v2749 = vsel %vm2565, %v2473, %v2657
        %v2750 = vsel %vm2566, %v2474, %v2658
        %v2751 = vsel %vm2567, %v2475, %v2659
        %v2752 = vsel %vm2568, %v2476, %v2660
        %v2753 = vsel %vm2569, %v2477, %v2661
        %v2754 = vsel %vm2570, %v2478, %v2662
        %v2755 = vsel %vm2571, %v2479, %v2663
        %v2756 = vsel %vm2572, %v2480, %v2664
        %v2757 = vsel %vm2573, %v2481, %v2665
        %v2758 = vsel %vm2574, %v2482, %v2666
        %v2759 = vsel %vm2575, %v2483, %v2667
        %v2760 = vsel %vm2576, %v2484, %v2668
        %v2761 = vsel %vm2577, %v2485, %v2669
        %v2762 = vsel %vm2578, %v2486, %v2670
        %v2763 = vsel %vm2579, %v2487, %v2671
        %v2764 = vsel %vm2580, %v2488, %v2672
        %v2765 = vsel %vm2581, %v2489, %v2673
        %v2766 = vsel %vm2582, %v2490, %v2674
        %v2767 = vsel %vm2583, %v2491, %v2675
        %v2768 = vsel %vm2584, %v2492, %v2676
        %v2769 = vsel %vm2585, %v2493, %v2677
        %v2770 = vsel %vm2586, %v2494, %v2678
        %v2771 = vsel %vm2587, %v2495, %v2679
        %v2772 = vsel %vm2588, %v2496, %v2680
        %v2773 = vsel %vm2589, %v2497, %v2681
        %v2774 = vsel %vm2590, %v2498, %v2682
        %v2775 = vsel %vm2591, %v2499, %v2683
        %v2776 = vsel %vm2592, %v2500, %v2684
        %v2777 = vsel %vm2593, %v2501, %v2685
        %v2778 = vsel %vm2594, %v2502, %v2686
        %v2779 = vsel %vm2595, %v2503, %v2687
        %v2780 = vsel %vm2596, %v2504, %v2688
        %v2781 = vsel %vm2597, %v2505, %v2689
        %v2782 = vsel %vm2598, %v2506, %v2690
        %v2783 = vsel %vm2599, %v2507, %v2691
        %v2784 = vsel %vm2600, %v2508, %v2692
        %v2785 = vsel %vm2601, %v2509, %v2693
        %v2786 = vsel %vm2602, %v2510, %v2694
        %v2787 = vsel %vm2603, %v2511, %v2695
        %v2788 = vsel %vm2604, %v2512, %v2696
        %v2789 = vsel %vm2605, %v2513, %v2697
        %v2790 = vsel %vm2606, %v2514, %v2698
        %v2791 = vsel %vm2607, %v2515, %v2699
        %v2792 = vsel %vm2608, %v2516, %v2700
        %v2793 = vsel %vm2609, %v2517, %v2701
        %v2794 = vsel %vm2610, %v2518, %v2702
        %v2795 = vsel %vm2611, %v2519, %v2703
        %v2796 = vsel %vm2612, %v2520, %v2704
        %v2797 = vsel %vm2613, %v2521, %v2705
        %v2798 = vsel %vm2614, %v2522, %v2706
        %v2799 = vsel %vm2615, %v2523, %v2707
        %v2800 = vsel %vm2616, %v2524, %v2708
        %v2801 = vsel %vm2617, %v2525, %v2709
        %v2802 = vsel %vm2618, %v2526, %v2710
        %v2803 = vsel %vm2619, %v2527, %v2711
        %v2804 = vsel %vm2620, %v2528, %v2712
        %v2805 = vsel %vm2621, %v2529, %v2713
        %v2806 = vsel %vm2622, %v2530, %v2714
        %v2807 = vsel %vm2623, %v2531, %v2715
        %v2808 = vld [vmem:[%s3] sm:$0xf]
        %v2809 = vld [vmem:[%s3 + $0x4] sm:$0xf]
        %v2810 = vld [vmem:[%s3 + $0x8] sm:$0xf]
        %v2811 = vld [vmem:[%s3 + $0xc] sm:$0xf]
        %v2812 = vld [vmem:[%s3 + $0x10] sm:$0xf]
        %v2813 = vld [vmem:[%s3 + $0x14] sm:$0xf]
        %v2814 = vld [vmem:[%s3 + $0x18] sm:$0xf]
        %v2815 = vld [vmem:[%s3 + $0x1c] sm:$0xf]
        %v2816 = vld [vmem:[%s3 + $0x20] sm:$0xf]
        %v2817 = vld [vmem:[%s3 + $0x24] sm:$0xf]
        %v2818 = vld [vmem:[%s3 + $0x28] sm:$0xf]
        %v2819 = vld [vmem:[%s3 + $0x2c] sm:$0xf]
        %v2820 = vunpack.c.l.bf16 %v2808
        %v2821 = vunpack.c.l.bf16 %v2809
        %v2822 = vunpack.c.l.bf16 %v2810
        %v2823 = vunpack.c.l.bf16 %v2811
        %v2824 = vunpack.c.l.bf16 %v2812
        %v2825 = vunpack.c.l.bf16 %v2813
        %v2826 = vunpack.c.l.bf16 %v2814
        %v2827 = vunpack.c.l.bf16 %v2815
        %v2828 = vunpack.c.l.bf16 %v2816
        %v2829 = vunpack.c.l.bf16 %v2817
        %v2830 = vunpack.c.l.bf16 %v2818
        %v2831 = vunpack.c.l.bf16 %v2819
        %s2832 = scalar_lea.vmem %s3, 48
        %v2833 = vld [vmem:[%s2832] sm:$0xf]
        %v2834 = vld [vmem:[%s2832 + $0x4] sm:$0xf]
        %v2835 = vld [vmem:[%s2832 + $0x8] sm:$0xf]
        %v2836 = vld [vmem:[%s2832 + $0xc] sm:$0xf]
        %v2837 = vld [vmem:[%s2832 + $0x10] sm:$0xf]
        %v2838 = vld [vmem:[%s2832 + $0x14] sm:$0xf]
        %v2839 = vld [vmem:[%s2832 + $0x18] sm:$0xf]
        %v2840 = vld [vmem:[%s2832 + $0x1c] sm:$0xf]
        %v2841 = vld [vmem:[%s2832 + $0x20] sm:$0xf]
        %v2842 = vld [vmem:[%s2832 + $0x24] sm:$0xf]
        %v2843 = vld [vmem:[%s2832 + $0x28] sm:$0xf]
        %v2844 = vld [vmem:[%s2832 + $0x2c] sm:$0xf]
        %v2845 = vunpack.c.l.bf16 %v2833
        %v2846 = vunpack.c.l.bf16 %v2834
        %v2847 = vunpack.c.l.bf16 %v2835
        %v2848 = vunpack.c.l.bf16 %v2836
        %v2849 = vunpack.c.l.bf16 %v2837
        %v2850 = vunpack.c.l.bf16 %v2838
        %v2851 = vunpack.c.l.bf16 %v2839
        %v2852 = vunpack.c.l.bf16 %v2840
        %v2853 = vunpack.c.l.bf16 %v2841
        %v2854 = vunpack.c.l.bf16 %v2842
        %v2855 = vunpack.c.l.bf16 %v2843
        %v2856 = vunpack.c.l.bf16 %v2844
        %vm2857 = vcmask 785408
        %v2859 = vsel %vm2857, %v2720, 0
        %v2862 = vsel %vm2857, %v2721, 0
        %v2865 = vsel %vm2857, %v2722, 0
        %v2868 = vsel %vm2857, %v2723, 0
        %2870 = vmatprep.subr.mxu0 0.0
        %2871 = vmatpush1.msra.mxu0 %v2845
        %2872 = vmatprep.subr.mxu0 0.0
        %2873 = vmatpush1.msra.mxu0 %v2846
        %2874 = vmatprep.subr.mxu0 0.0
        %2875 = vmatpush1.msra.mxu0 %v2847
        %2876 = vmatprep.subr.mxu0 0.0
        %2877 = vmatpush1.msra.mxu0 %v2848
        %2878 = vmatprep.subr.mxu0 0.0
        %2879 = vmatpush1.msra.mxu0 %v2849
        %2880 = vmatprep.subr.mxu0 0.0
        %2881 = vmatpush1.msra.mxu0 %v2850
        %2882 = vmatprep.subr.mxu0 0.0
        %2883 = vmatpush1.msra.mxu0 %v2851
        %2884 = vmatprep.subr.mxu0 0.0
        %2885 = vmatpush1.msra.mxu0 %v2852
        %2886 = vmatprep.subr.mxu0 0.0
        %2887 = vmatpush1.msra.mxu0 %v2853
        %2888 = vmatprep.subr.mxu0 0.0
        %2889 = vmatpush1.msra.mxu0 %v2854
        %2890 = vmatprep.subr.mxu0 0.0
        %2891 = vmatpush1.msra.mxu0 %v2855
        %2892 = vmatprep.subr.mxu0 0.0
        %2893 = vmatpush1.msra.mxu0 %v2856
        %2894 = vmatprep.subr.mxu0 0.0
        %2895 = vmatpush1.msra.mxu0 0.0
        %2896 = vmatprep.subr.mxu0 0.0
        %2897 = vmatpush1.msra.mxu0 0.0
        %2898 = vmatprep.subr.mxu0 0.0
        %2899 = vmatpush1.msra.mxu0 0.0
        %2900 = vmatprep.subr.mxu0 0.0
        %2901 = vmatpush1.msra.mxu0 0.0
        %2902 = vmatprep.subr.mxu0 0.0
        %2903 = vmatpush1.msra.mxu0 0.0
        %2904 = vmatprep.subr.mxu0 0.0
        %2905 = vmatpush1.msra.mxu0 0.0
        %2906 = vmatprep.subr.mxu0 0.0
        %2907 = vmatpush1.msra.mxu0 0.0
        %2908 = vmatprep.subr.mxu0 0.0
        %2909 = vmatpush1.msra.mxu0 0.0
        %2910 = vmatprep.subr.mxu0 0.0
        %2911 = vmatpush1.msra.mxu0 0.0
        %2912 = vmatprep.subr.mxu0 0.0
        %2913 = vmatpush1.msra.mxu0 0.0
        %2914 = vmatprep.subr.mxu0 0.0
        %2915 = vmatpush1.msra.mxu0 0.0
        %2916 = vmatprep.subr.mxu0 0.0
        %2917 = vmatpush1.msra.mxu0 0.0
        %2918 = vmatprep.subr.mxu0 0.0
        %2919 = vmatpush1.msra.mxu0 0.0
        %2920 = vmatprep.subr.mxu0 0.0
        %2921 = vmatpush1.msra.mxu0 0.0
        %2922 = vmatprep.subr.mxu0 0.0
        %2923 = vmatpush1.msra.mxu0 0.0
        %2924 = vmatprep.subr.mxu0 0.0
        %2925 = vmatpush1.msra.mxu0 0.0
        %2926 = vmatprep.subr.mxu0 0.0
        %2927 = vmatpush1.msra.mxu0 0.0
        %2928 = vmatprep.subr.mxu0 0.0
        %2929 = vmatpush1.msra.mxu0 0.0
        %2930 = vmatprep.subr.mxu0 0.0
        %2931 = vmatpush1.msra.mxu0 0.0
        %2932 = vmatprep.subr.mxu0 0.0
        %2933 = vmatpush1.msra.mxu0 0.0
        %2934 = vmatprep.mubr.f32.mxu0 0.0
        %2935 = vmatmul.mubr.f32.gmra.mrb[0].mxu0 %v2859
        %v2936 = vpop.f32.mrb[0].mxu0
        %v2937 = vadd.f32 0.0, %v2936
        %v2938 = vpop.f32.mrb[0].mxu0
        %2939 = vmatprep.mubr.f32.mxu0 0.0
        %2940 = vmatmul.mubr.f32.gmra.mrb[0].mxu0 %v2862
        %v2941 = vpop.f32.mrb[0].mxu0
        %v2942 = vadd.f32 0.0, %v2941
        %v2943 = vpop.f32.mrb[0].mxu0
        %2944 = vmatprep.mubr.f32.mxu0 0.0
        %2945 = vmatmul.mubr.f32.gmra.mrb[0].mxu0 %v2865
        %v2946 = vpop.f32.mrb[0].mxu0
        %v2947 = vadd.f32 0.0, %v2946
        %v2948 = vpop.f32.mrb[0].mxu0
        %2949 = vmatprep.mubr.f32.mxu0 0.0
        %2950 = vmatmul.mubr.f32.gmra.mrb[0].mxu0 %v2868
        %v2951 = vpop.f32.mrb[0].mxu0
        %v2952 = vadd.f32 0.0, %v2951
        %v2953 = vpop.f32.mrb[0].mxu0
        %2954 = vdwg.mxu0
        %v2956 = vsel %vm2857, %v2716, 0
        %v2959 = vsel %vm2857, %v2717, 0
        %v2962 = vsel %vm2857, %v2718, 0
        %v2965 = vsel %vm2857, %v2719, 0
        %2967 = vmatprep.subr.mxu0 0.0
        %2968 = vmatpush1.msra.mxu0 %v2820
        %2969 = vmatprep.subr.mxu0 0.0
        %2970 = vmatpush1.msra.mxu0 %v2821
        %2971 = vmatprep.subr.mxu0 0.0
        %2972 = vmatpush1.msra.mxu0 %v2822
        %2973 = vmatprep.subr.mxu0 0.0
        %2974 = vmatpush1.msra.mxu0 %v2823
        %2975 = vmatprep.subr.mxu0 0.0
        %2976 = vmatpush1.msra.mxu0 %v2824
        %2977 = vmatprep.subr.mxu0 0.0
        %2978 = vmatpush1.msra.mxu0 %v2825
        %2979 = vmatprep.subr.mxu0 0.0
        %2980 = vmatpush1.msra.mxu0 %v2826
        %2981 = vmatprep.subr.mxu0 0.0
        %2982 = vmatpush1.msra.mxu0 %v2827
        %2983 = vmatprep.subr.mxu0 0.0
        %2984 = vmatpush1.msra.mxu0 %v2828
        %2985 = vmatprep.subr.mxu0 0.0
        %2986 = vmatpush1.msra.mxu0 %v2829
        %2987 = vmatprep.subr.mxu0 0.0
        %2988 = vmatpush1.msra.mxu0 %v2830
        %2989 = vmatprep.subr.mxu0 0.0
        %2990 = vmatpush1.msra.mxu0 %v2831
        %2991 = vmatprep.subr.mxu0 0.0
        %2992 = vmatpush1.msra.mxu0 0.0
        %2993 = vmatprep.subr.mxu0 0.0
        %2994 = vmatpush1.msra.mxu0 0.0
        %2995 = vmatprep.subr.mxu0 0.0
        %2996 = vmatpush1.msra.mxu0 0.0
        %2997 = vmatprep.subr.mxu0 0.0
        %2998 = vmatpush1.msra.mxu0 0.0
        %2999 = vmatprep.subr.mxu0 0.0
        %3000 = vmatpush1.msra.mxu0 0.0
        %3001 = vmatprep.subr.mxu0 0.0
        %3002 = vmatpush1.msra.mxu0 0.0
        %3003 = vmatprep.subr.mxu0 0.0
        %3004 = vmatpush1.msra.mxu0 0.0
        %3005 = vmatprep.subr.mxu0 0.0
        %3006 = vmatpush1.msra.mxu0 0.0
        %3007 = vmatprep.subr.mxu0 0.0
        %3008 = vmatpush1.msra.mxu0 0.0
        %3009 = vmatprep.subr.mxu0 0.0
        %3010 = vmatpush1.msra.mxu0 0.0
        %3011 = vmatprep.subr.mxu0 0.0
        %3012 = vmatpush1.msra.mxu0 0.0
        %3013 = vmatprep.subr.mxu0 0.0
        %3014 = vmatpush1.msra.mxu0 0.0
        %3015 = vmatprep.subr.mxu0 0.0
        %3016 = vmatpush1.msra.mxu0 0.0
        %3017 = vmatprep.subr.mxu0 0.0
        %3018 = vmatpush1.msra.mxu0 0.0
        %3019 = vmatprep.subr.mxu0 0.0
        %3020 = vmatpush1.msra.mxu0 0.0
        %3021 = vmatprep.subr.mxu0 0.0
        %3022 = vmatpush1.msra.mxu0 0.0
        %3023 = vmatprep.subr.mxu0 0.0
        %3024 = vmatpush1.msra.mxu0 0.0
        %3025 = vmatprep.subr.mxu0 0.0
        %3026 = vmatpush1.msra.mxu0 0.0
        %3027 = vmatprep.subr.mxu0 0.0
        %3028 = vmatpush1.msra.mxu0 0.0
        %3029 = vmatprep.subr.mxu0 0.0
        %3030 = vmatpush1.msra.mxu0 0.0
        %3031 = vmatprep.mubr.f32.mxu0 0.0
        %3032 = vmatmul.mubr.f32.gmra.mrb[0].mxu0 %v2956
        %v3033 = vpop.f32.mrb[0].mxu0
        %v3034 = vadd.f32 %v2937, %v3033
        %v3035 = vpop.f32.mrb[0].mxu0
        %3036 = vmatprep.mubr.f32.mxu0 0.0
        %3037 = vmatmul.mubr.f32.gmra.mrb[0].mxu0 %v2959
        %v3038 = vpop.f32.mrb[0].mxu0
        %v3039 = vadd.f32 %v2942, %v3038
        %v3040 = vpop.f32.mrb[0].mxu0
        %3041 = vmatprep.mubr.f32.mxu0 0.0
        %3042 = vmatmul.mubr.f32.gmra.mrb[0].mxu0 %v2962
        %v3043 = vpop.f32.mrb[0].mxu0
        %v3044 = vadd.f32 %v2947, %v3043
        %v3045 = vpop.f32.mrb[0].mxu0
        %3046 = vmatprep.mubr.f32.mxu0 0.0
        %3047 = vmatmul.mubr.f32.gmra.mrb[0].mxu0 %v2965
        %v3048 = vpop.f32.mrb[0].mxu0
        %v3049 = vadd.f32 %v2952, %v3048
        %v3050 = vpop.f32.mrb[0].mxu0
        %3051 = vdwg.mxu0
        %s3052 = scalar_lea.vmem %s3, 96
        %v3053 = vld [vmem:[%s3052] sm:$0xf]
        %v3054 = vld [vmem:[%s3052 + $0x4] sm:$0xf]
        %v3055 = vld [vmem:[%s3052 + $0x8] sm:$0xf]
        %v3056 = vld [vmem:[%s3052 + $0xc] sm:$0xf]
        %v3057 = vld [vmem:[%s3052 + $0x10] sm:$0xf]
        %v3058 = vld [vmem:[%s3052 + $0x14] sm:$0xf]
        %v3059 = vld [vmem:[%s3052 + $0x18] sm:$0xf]
        %v3060 = vld [vmem:[%s3052 + $0x1c] sm:$0xf]
        %v3061 = vld [vmem:[%s3052 + $0x20] sm:$0xf]
        %v3062 = vld [vmem:[%s3052 + $0x24] sm:$0xf]
        %v3063 = vld [vmem:[%s3052 + $0x28] sm:$0xf]
        %v3064 = vld [vmem:[%s3052 + $0x2c] sm:$0xf]
        %v3065 = vunpack.c.l.bf16 %v3053
        %v3066 = vunpack.c.l.bf16 %v3054
        %v3067 = vunpack.c.l.bf16 %v3055
        %v3068 = vunpack.c.l.bf16 %v3056
        %v3069 = vunpack.c.l.bf16 %v3057
        %v3070 = vunpack.c.l.bf16 %v3058
        %v3071 = vunpack.c.l.bf16 %v3059
        %v3072 = vunpack.c.l.bf16 %v3060
        %v3073 = vunpack.c.l.bf16 %v3061
        %v3074 = vunpack.c.l.bf16 %v3062
        %v3075 = vunpack.c.l.bf16 %v3063
        %v3076 = vunpack.c.l.bf16 %v3064
        %v3078 = vsel %vm2857, %v2724, 0
        %v3081 = vsel %vm2857, %v2725, 0
        %v3084 = vsel %vm2857, %v2726, 0
        %v3087 = vsel %vm2857, %v2727, 0
        %3089 = vmatprep.subr.mxu0 0.0
        %3090 = vmatpush1.msra.mxu0 %v3065
        %3091 = vmatprep.subr.mxu0 0.0
        %3092 = vmatpush1.msra.mxu0 %v3066
        %3093 = vmatprep.subr.mxu0 0.0
        %3094 = vmatpush1.msra.mxu0 %v3067
        %3095 = vmatprep.subr.mxu0 0.0
        %3096 = vmatpush1.msra.mxu0 %v3068
        %3097 = vmatprep.subr.mxu0 0.0
        %3098 = vmatpush1.msra.mxu0 %v3069
        %3099 = vmatprep.subr.mxu0 0.0
        %3100 = vmatpush1.msra.mxu0 %v3070
        %3101 = vmatprep.subr.mxu0 0.0
        %3102 = vmatpush1.msra.mxu0 %v3071
        %3103 = vmatprep.subr.mxu0 0.0
        %3104 = vmatpush1.msra.mxu0 %v3072
        %3105 = vmatprep.subr.mxu0 0.0
        %3106 = vmatpush1.msra.mxu0 %v3073
        %3107 = vmatprep.subr.mxu0 0.0
        %3108 = vmatpush1.msra.mxu0 %v3074
        %3109 = vmatprep.subr.mxu0 0.0
        %3110 = vmatpush1.msra.mxu0 %v3075
        %3111 = vmatprep.subr.mxu0 0.0
        %3112 = vmatpush1.msra.mxu0 %v3076
        %3113 = vmatprep.subr.mxu0 0.0
        %3114 = vmatpush1.msra.mxu0 0.0
        %3115 = vmatprep.subr.mxu0 0.0
        %3116 = vmatpush1.msra.mxu0 0.0
        %3117 = vmatprep.subr.mxu0 0.0
        %3118 = vmatpush1.msra.mxu0 0.0
        %3119 = vmatprep.subr.mxu0 0.0
        %3120 = vmatpush1.msra.mxu0 0.0
        %3121 = vmatprep.subr.mxu0 0.0
        %3122 = vmatpush1.msra.mxu0 0.0
        %3123 = vmatprep.subr.mxu0 0.0
        %3124 = vmatpush1.msra.mxu0 0.0
        %3125 = vmatprep.subr.mxu0 0.0
        %3126 = vmatpush1.msra.mxu0 0.0
        %3127 = vmatprep.subr.mxu0 0.0
        %3128 = vmatpush1.msra.mxu0 0.0
        %3129 = vmatprep.subr.mxu0 0.0
        %3130 = vmatpush1.msra.mxu0 0.0
        %3131 = vmatprep.subr.mxu0 0.0
        %3132 = vmatpush1.msra.mxu0 0.0
        %3133 = vmatprep.subr.mxu0 0.0
        %3134 = vmatpush1.msra.mxu0 0.0
        %3135 = vmatprep.subr.mxu0 0.0
        %3136 = vmatpush1.msra.mxu0 0.0
        %3137 = vmatprep.subr.mxu0 0.0
        %3138 = vmatpush1.msra.mxu0 0.0
        %3139 = vmatprep.subr.mxu0 0.0
        %3140 = vmatpush1.msra.mxu0 0.0
        %3141 = vmatprep.subr.mxu0 0.0
        %3142 = vmatpush1.msra.mxu0 0.0
        %3143 = vmatprep.subr.mxu0 0.0
        %3144 = vmatpush1.msra.mxu0 0.0
        %3145 = vmatprep.subr.mxu0 0.0
        %3146 = vmatpush1.msra.mxu0 0.0
        %3147 = vmatprep.subr.mxu0 0.0
        %3148 = vmatpush1.msra.mxu0 0.0
        %3149 = vmatprep.subr.mxu0 0.0
        %3150 = vmatpush1.msra.mxu0 0.0
        %3151 = vmatprep.subr.mxu0 0.0
        %3152 = vmatpush1.msra.mxu0 0.0
        %3153 = vmatprep.mubr.f32.mxu0 0.0
        %3154 = vmatmul.mubr.f32.gmra.mrb[0].mxu0 %v3078
        %v3155 = vpop.f32.mrb[0].mxu0
        %v3156 = vadd.f32 0.0, %v3155
        %v3157 = vpop.f32.mrb[0].mxu0
        %3158 = vmatprep.mubr.f32.mxu0 0.0
        %3159 = vmatmul.mubr.f32.gmra.mrb[0].mxu0 %v3081
        %v3160 = vpop.f32.mrb[0].mxu0
        %v3161 = vadd.f32 0.0, %v3160
        %v3162 = vpop.f32.mrb[0].mxu0
        %3163 = vmatprep.mubr.f32.mxu0 0.0
        %3164 = vmatmul.mubr.f32.gmra.mrb[0].mxu0 %v3084
        %v3165 = vpop.f32.mrb[0].mxu0
        %v3166 = vadd.f32 0.0, %v3165
        %v3167 = vpop.f32.mrb[0].mxu0
        %3168 = vmatprep.mubr.f32.mxu0 0.0
        %3169 = vmatmul.mubr.f32.gmra.mrb[0].mxu0 %v3087
        %v3170 = vpop.f32.mrb[0].mxu0
        %v3171 = vadd.f32 0.0, %v3170
        %v3172 = vpop.f32.mrb[0].mxu0
        %3173 = vdwg.mxu0
        %v3174 = vadd.f32 %v3034, %v3156
        %v3175 = vadd.f32 %v3039, %v3161
        %v3176 = vadd.f32 %v3044, %v3166
        %v3177 = vadd.f32 %v3049, %v3171
        %s3178 = scalar_lea.vmem %s3, 144
        %v3179 = vld [vmem:[%s3178] sm:$0xf]
        %v3180 = vld [vmem:[%s3178 + $0x4] sm:$0xf]
        %v3181 = vld [vmem:[%s3178 + $0x8] sm:$0xf]
        %v3182 = vld [vmem:[%s3178 + $0xc] sm:$0xf]
        %v3183 = vld [vmem:[%s3178 + $0x10] sm:$0xf]
        %v3184 = vld [vmem:[%s3178 + $0x14] sm:$0xf]
        %v3185 = vld [vmem:[%s3178 + $0x18] sm:$0xf]
        %v3186 = vld [vmem:[%s3178 + $0x1c] sm:$0xf]
        %v3187 = vld [vmem:[%s3178 + $0x20] sm:$0xf]
        %v3188 = vld [vmem:[%s3178 + $0x24] sm:$0xf]
        %v3189 = vld [vmem:[%s3178 + $0x28] sm:$0xf]
        %v3190 = vld [vmem:[%s3178 + $0x2c] sm:$0xf]
        %v3191 = vunpack.c.l.bf16 %v3179
        %v3192 = vunpack.c.l.bf16 %v3180
        %v3193 = vunpack.c.l.bf16 %v3181
        %v3194 = vunpack.c.l.bf16 %v3182
        %v3195 = vunpack.c.l.bf16 %v3183
        %v3196 = vunpack.c.l.bf16 %v3184
        %v3197 = vunpack.c.l.bf16 %v3185
        %v3198 = vunpack.c.l.bf16 %v3186
        %v3199 = vunpack.c.l.bf16 %v3187
        %v3200 = vunpack.c.l.bf16 %v3188
        %v3201 = vunpack.c.l.bf16 %v3189
        %v3202 = vunpack.c.l.bf16 %v3190
        %v3204 = vsel %vm2857, %v2728, 0
        %v3207 = vsel %vm2857, %v2729, 0
        %v3210 = vsel %vm2857, %v2730, 0
        %v3213 = vsel %vm2857, %v2731, 0
        %3215 = vmatprep.subr.mxu0 0.0
        %3216 = vmatpush1.msra.mxu0 %v3191
        %3217 = vmatprep.subr.mxu0 0.0
        %3218 = vmatpush1.msra.mxu0 %v3192
        %3219 = vmatprep.subr.mxu0 0.0
        %3220 = vmatpush1.msra.mxu0 %v3193
        %3221 = vmatprep.subr.mxu0 0.0
        %3222 = vmatpush1.msra.mxu0 %v3194
        %3223 = vmatprep.subr.mxu0 0.0
        %3224 = vmatpush1.msra.mxu0 %v3195
        %3225 = vmatprep.subr.mxu0 0.0
        %3226 = vmatpush1.msra.mxu0 %v3196
        %3227 = vmatprep.subr.mxu0 0.0
        %3228 = vmatpush1.msra.mxu0 %v3197
        %3229 = vmatprep.subr.mxu0 0.0
        %3230 = vmatpush1.msra.mxu0 %v3198
        %3231 = vmatprep.subr.mxu0 0.0
        %3232 = vmatpush1.msra.mxu0 %v3199
        %3233 = vmatprep.subr.mxu0 0.0
        %3234 = vmatpush1.msra.mxu0 %v3200
        %3235 = vmatprep.subr.mxu0 0.0
        %3236 = vmatpush1.msra.mxu0 %v3201
        %3237 = vmatprep.subr.mxu0 0.0
        %3238 = vmatpush1.msra.mxu0 %v3202
        %3239 = vmatprep.subr.mxu0 0.0
        %3240 = vmatpush1.msra.mxu0 0.0
        %3241 = vmatprep.subr.mxu0 0.0
        %3242 = vmatpush1.msra.mxu0 0.0
        %3243 = vmatprep.subr.mxu0 0.0
        %3244 = vmatpush1.msra.mxu0 0.0
        %3245 = vmatprep.subr.mxu0 0.0
        %3246 = vmatpush1.msra.mxu0 0.0
        %3247 = vmatprep.subr.mxu0 0.0
        %3248 = vmatpush1.msra.mxu0 0.0
        %3249 = vmatprep.subr.mxu0 0.0
        %3250 = vmatpush1.msra.mxu0 0.0
        %3251 = vmatprep.subr.mxu0 0.0
        %3252 = vmatpush1.msra.mxu0 0.0
        %3253 = vmatprep.subr.mxu0 0.0
        %3254 = vmatpush1.msra.mxu0 0.0
        %3255 = vmatprep.subr.mxu0 0.0
        %3256 = vmatpush1.msra.mxu0 0.0
        %3257 = vmatprep.subr.mxu0 0.0
        %3258 = vmatpush1.msra.mxu0 0.0
        %3259 = vmatprep.subr.mxu0 0.0
        %3260 = vmatpush1.msra.mxu0 0.0
        %3261 = vmatprep.subr.mxu0 0.0
        %3262 = vmatpush1.msra.mxu0 0.0
        %3263 = vmatprep.subr.mxu0 0.0
        %3264 = vmatpush1.msra.mxu0 0.0
        %3265 = vmatprep.subr.mxu0 0.0
        %3266 = vmatpush1.msra.mxu0 0.0
        %3267 = vmatprep.subr.mxu0 0.0
        %3268 = vmatpush1.msra.mxu0 0.0
        %3269 = vmatprep.subr.mxu0 0.0
        %3270 = vmatpush1.msra.mxu0 0.0
        %3271 = vmatprep.subr.mxu0 0.0
        %3272 = vmatpush1.msra.mxu0 0.0
        %3273 = vmatprep.subr.mxu0 0.0
        %3274 = vmatpush1.msra.mxu0 0.0
        %3275 = vmatprep.subr.mxu0 0.0
        %3276 = vmatpush1.msra.mxu0 0.0
        %3277 = vmatprep.subr.mxu0 0.0
        %3278 = vmatpush1.msra.mxu0 0.0
        %3279 = vmatprep.mubr.f32.mxu0 0.0
        %3280 = vmatmul.mubr.f32.gmra.mrb[0].mxu0 %v3204
        %v3281 = vpop.f32.mrb[0].mxu0
        %v3282 = vadd.f32 0.0, %v3281
        %v3283 = vpop.f32.mrb[0].mxu0
        %3284 = vmatprep.mubr.f32.mxu0 0.0
        %3285 = vmatmul.mubr.f32.gmra.mrb[0].mxu0 %v3207
        %v3286 = vpop.f32.mrb[0].mxu0
        %v3287 = vadd.f32 0.0, %v3286
        %v3288 = vpop.f32.mrb[0].mxu0
        %3289 = vmatprep.mubr.f32.mxu0 0.0
        %3290 = vmatmul.mubr.f32.gmra.mrb[0].mxu0 %v3210
        %v3291 = vpop.f32.mrb[0].mxu0
        %v3292 = vadd.f32 0.0, %v3291
        %v3293 = vpop.f32.mrb[0].mxu0
        %3294 = vmatprep.mubr.f32.mxu0 0.0
        %3295 = vmatmul.mubr.f32.gmra.mrb[0].mxu0 %v3213
        %v3296 = vpop.f32.mrb[0].mxu0
        %v3297 = vadd.f32 0.0, %v3296
        %v3298 = vpop.f32.mrb[0].mxu0
        %3299 = vdwg.mxu0
        %v3300 = vadd.f32 %v3174, %v3282
        %v3301 = vadd.f32 %v3175, %v3287
        %v3302 = vadd.f32 %v3176, %v3292
        %v3303 = vadd.f32 %v3177, %v3297
        %s3304 = scalar_lea.vmem %s3, 192
        %v3305 = vld [vmem:[%s3304] sm:$0xf]
        %v3306 = vld [vmem:[%s3304 + $0x4] sm:$0xf]
        %v3307 = vld [vmem:[%s3304 + $0x8] sm:$0xf]
        %v3308 = vld [vmem:[%s3304 + $0xc] sm:$0xf]
        %v3309 = vld [vmem:[%s3304 + $0x10] sm:$0xf]
        %v3310 = vld [vmem:[%s3304 + $0x14] sm:$0xf]
        %v3311 = vld [vmem:[%s3304 + $0x18] sm:$0xf]
        %v3312 = vld [vmem:[%s3304 + $0x1c] sm:$0xf]
        %v3313 = vld [vmem:[%s3304 + $0x20] sm:$0xf]
        %v3314 = vld [vmem:[%s3304 + $0x24] sm:$0xf]
        %v3315 = vld [vmem:[%s3304 + $0x28] sm:$0xf]
        %v3316 = vld [vmem:[%s3304 + $0x2c] sm:$0xf]
        %v3317 = vunpack.c.l.bf16 %v3305
        %v3318 = vunpack.c.l.bf16 %v3306
        %v3319 = vunpack.c.l.bf16 %v3307
        %v3320 = vunpack.c.l.bf16 %v3308
        %v3321 = vunpack.c.l.bf16 %v3309
        %v3322 = vunpack.c.l.bf16 %v3310
        %v3323 = vunpack.c.l.bf16 %v3311
        %v3324 = vunpack.c.l.bf16 %v3312
        %v3325 = vunpack.c.l.bf16 %v3313
        %v3326 = vunpack.c.l.bf16 %v3314
        %v3327 = vunpack.c.l.bf16 %v3315
        %v3328 = vunpack.c.l.bf16 %v3316
        %v3330 = vsel %vm2857, %v2732, 0
        %v3333 = vsel %vm2857, %v2733, 0
        %v3336 = vsel %vm2857, %v2734, 0
        %v3339 = vsel %vm2857, %v2735, 0
        %3341 = vmatprep.subr.mxu0 0.0
        %3342 = vmatpush1.msra.mxu0 %v3317
        %3343 = vmatprep.subr.mxu0 0.0
        %3344 = vmatpush1.msra.mxu0 %v3318
        %3345 = vmatprep.subr.mxu0 0.0
        %3346 = vmatpush1.msra.mxu0 %v3319
        %3347 = vmatprep.subr.mxu0 0.0
        %3348 = vmatpush1.msra.mxu0 %v3320
        %3349 = vmatprep.subr.mxu0 0.0
        %3350 = vmatpush1.msra.mxu0 %v3321
        %3351 = vmatprep.subr.mxu0 0.0
        %3352 = vmatpush1.msra.mxu0 %v3322
        %3353 = vmatprep.subr.mxu0 0.0
        %3354 = vmatpush1.msra.mxu0 %v3323
        %3355 = vmatprep.subr.mxu0 0.0
        %3356 = vmatpush1.msra.mxu0 %v3324
        %3357 = vmatprep.subr.mxu0 0.0
        %3358 = vmatpush1.msra.mxu0 %v3325
        %3359 = vmatprep.subr.mxu0 0.0
        %3360 = vmatpush1.msra.mxu0 %v3326
        %3361 = vmatprep.subr.mxu0 0.0
        %3362 = vmatpush1.msra.mxu0 %v3327
        %3363 = vmatprep.subr.mxu0 0.0
        %3364 = vmatpush1.msra.mxu0 %v3328
        %3365 = vmatprep.subr.mxu0 0.0
        %3366 = vmatpush1.msra.mxu0 0.0
        %3367 = vmatprep.subr.mxu0 0.0
        %3368 = vmatpush1.msra.mxu0 0.0
        %3369 = vmatprep.subr.mxu0 0.0
        %3370 = vmatpush1.msra.mxu0 0.0
        %3371 = vmatprep.subr.mxu0 0.0
        %3372 = vmatpush1.msra.mxu0 0.0
        %3373 = vmatprep.subr.mxu0 0.0
        %3374 = vmatpush1.msra.mxu0 0.0
        %3375 = vmatprep.subr.mxu0 0.0
        %3376 = vmatpush1.msra.mxu0 0.0
        %3377 = vmatprep.subr.mxu0 0.0
        %3378 = vmatpush1.msra.mxu0 0.0
        %3379 = vmatprep.subr.mxu0 0.0
        %3380 = vmatpush1.msra.mxu0 0.0
        %3381 = vmatprep.subr.mxu0 0.0
        %3382 = vmatpush1.msra.mxu0 0.0
        %3383 = vmatprep.subr.mxu0 0.0
        %3384 = vmatpush1.msra.mxu0 0.0
        %3385 = vmatprep.subr.mxu0 0.0
        %3386 = vmatpush1.msra.mxu0 0.0
        %3387 = vmatprep.subr.mxu0 0.0
        %3388 = vmatpush1.msra.mxu0 0.0
        %3389 = vmatprep.subr.mxu0 0.0
        %3390 = vmatpush1.msra.mxu0 0.0
        %3391 = vmatprep.subr.mxu0 0.0
        %3392 = vmatpush1.msra.mxu0 0.0
        %3393 = vmatprep.subr.mxu0 0.0
        %3394 = vmatpush1.msra.mxu0 0.0
        %3395 = vmatprep.subr.mxu0 0.0
        %3396 = vmatpush1.msra.mxu0 0.0
        %3397 = vmatprep.subr.mxu0 0.0
        %3398 = vmatpush1.msra.mxu0 0.0
        %3399 = vmatprep.subr.mxu0 0.0
        %3400 = vmatpush1.msra.mxu0 0.0
        %3401 = vmatprep.subr.mxu0 0.0
        %3402 = vmatpush1.msra.mxu0 0.0
        %3403 = vmatprep.subr.mxu0 0.0
        %3404 = vmatpush1.msra.mxu0 0.0
        %3405 = vmatprep.mubr.f32.mxu0 0.0
        %3406 = vmatmul.mubr.f32.gmra.mrb[0].mxu0 %v3330
        %v3407 = vpop.f32.mrb[0].mxu0
        %v3408 = vadd.f32 0.0, %v3407
        %v3409 = vpop.f32.mrb[0].mxu0
        %3410 = vmatprep.mubr.f32.mxu0 0.0
        %3411 = vmatmul.mubr.f32.gmra.mrb[0].mxu0 %v3333
        %v3412 = vpop.f32.mrb[0].mxu0
        %v3413 = vadd.f32 0.0, %v3412
        %v3414 = vpop.f32.mrb[0].mxu0
        %3415 = vmatprep.mubr.f32.mxu0 0.0
        %3416 = vmatmul.mubr.f32.gmra.mrb[0].mxu0 %v3336
        %v3417 = vpop.f32.mrb[0].mxu0
        %v3418 = vadd.f32 0.0, %v3417
        %v3419 = vpop.f32.mrb[0].mxu0
        %3420 = vmatprep.mubr.f32.mxu0 0.0
        %3421 = vmatmul.mubr.f32.gmra.mrb[0].mxu0 %v3339
        %v3422 = vpop.f32.mrb[0].mxu0
        %v3423 = vadd.f32 0.0, %v3422
        %v3424 = vpop.f32.mrb[0].mxu0
        %3425 = vdwg.mxu0
        %v3426 = vadd.f32 %v3300, %v3408
        %v3427 = vadd.f32 %v3301, %v3413
        %v3428 = vadd.f32 %v3302, %v3418
        %v3429 = vadd.f32 %v3303, %v3423
        %s3430 = scalar_lea.vmem %s3, 240
        %v3431 = vld [vmem:[%s3430] sm:$0xf]
        %v3432 = vld [vmem:[%s3430 + $0x4] sm:$0xf]
        %v3433 = vld [vmem:[%s3430 + $0x8] sm:$0xf]
        %v3434 = vld [vmem:[%s3430 + $0xc] sm:$0xf]
        %v3435 = vld [vmem:[%s3430 + $0x10] sm:$0xf]
        %v3436 = vld [vmem:[%s3430 + $0x14] sm:$0xf]
        %v3437 = vld [vmem:[%s3430 + $0x18] sm:$0xf]
        %v3438 = vld [vmem:[%s3430 + $0x1c] sm:$0xf]
        %v3439 = vld [vmem:[%s3430 + $0x20] sm:$0xf]
        %v3440 = vld [vmem:[%s3430 + $0x24] sm:$0xf]
        %v3441 = vld [vmem:[%s3430 + $0x28] sm:$0xf]
        %v3442 = vld [vmem:[%s3430 + $0x2c] sm:$0xf]
        %v3443 = vunpack.c.l.bf16 %v3431
        %v3444 = vunpack.c.l.bf16 %v3432
        %v3445 = vunpack.c.l.bf16 %v3433
        %v3446 = vunpack.c.l.bf16 %v3434
        %v3447 = vunpack.c.l.bf16 %v3435
        %v3448 = vunpack.c.l.bf16 %v3436
        %v3449 = vunpack.c.l.bf16 %v3437
        %v3450 = vunpack.c.l.bf16 %v3438
        %v3451 = vunpack.c.l.bf16 %v3439
        %v3452 = vunpack.c.l.bf16 %v3440
        %v3453 = vunpack.c.l.bf16 %v3441
        %v3454 = vunpack.c.l.bf16 %v3442
        %v3456 = vsel %vm2857, %v2736, 0
        %v3459 = vsel %vm2857, %v2737, 0
        %v3462 = vsel %vm2857, %v2738, 0
        %v3465 = vsel %vm2857, %v2739, 0
        %3467 = vmatprep.subr.mxu0 0.0
        %3468 = vmatpush1.msra.mxu0 %v3443
        %3469 = vmatprep.subr.mxu0 0.0
        %3470 = vmatpush1.msra.mxu0 %v3444
        %3471 = vmatprep.subr.mxu0 0.0
        %3472 = vmatpush1.msra.mxu0 %v3445
        %3473 = vmatprep.subr.mxu0 0.0
        %3474 = vmatpush1.msra.mxu0 %v3446
        %3475 = vmatprep.subr.mxu0 0.0
        %3476 = vmatpush1.msra.mxu0 %v3447
        %3477 = vmatprep.subr.mxu0 0.0
        %3478 = vmatpush1.msra.mxu0 %v3448
        %3479 = vmatprep.subr.mxu0 0.0
        %3480 = vmatpush1.msra.mxu0 %v3449
        %3481 = vmatprep.subr.mxu0 0.0
        %3482 = vmatpush1.msra.mxu0 %v3450
        %3483 = vmatprep.subr.mxu0 0.0
        %3484 = vmatpush1.msra.mxu0 %v3451
        %3485 = vmatprep.subr.mxu0 0.0
        %3486 = vmatpush1.msra.mxu0 %v3452
        %3487 = vmatprep.subr.mxu0 0.0
        %3488 = vmatpush1.msra.mxu0 %v3453
        %3489 = vmatprep.subr.mxu0 0.0
        %3490 = vmatpush1.msra.mxu0 %v3454
        %3491 = vmatprep.subr.mxu0 0.0
        %3492 = vmatpush1.msra.mxu0 0.0
        %3493 = vmatprep.subr.mxu0 0.0
        %3494 = vmatpush1.msra.mxu0 0.0
        %3495 = vmatprep.subr.mxu0 0.0
        %3496 = vmatpush1.msra.mxu0 0.0
        %3497 = vmatprep.subr.mxu0 0.0
        %3498 = vmatpush1.msra.mxu0 0.0
        %3499 = vmatprep.subr.mxu0 0.0
        %3500 = vmatpush1.msra.mxu0 0.0
        %3501 = vmatprep.subr.mxu0 0.0
        %3502 = vmatpush1.msra.mxu0 0.0
        %3503 = vmatprep.subr.mxu0 0.0
        %3504 = vmatpush1.msra.mxu0 0.0
        %3505 = vmatprep.subr.mxu0 0.0
        %3506 = vmatpush1.msra.mxu0 0.0
        %3507 = vmatprep.subr.mxu0 0.0
        %3508 = vmatpush1.msra.mxu0 0.0
        %3509 = vmatprep.subr.mxu0 0.0
        %3510 = vmatpush1.msra.mxu0 0.0
        %3511 = vmatprep.subr.mxu0 0.0
        %3512 = vmatpush1.msra.mxu0 0.0
        %3513 = vmatprep.subr.mxu0 0.0
        %3514 = vmatpush1.msra.mxu0 0.0
        %3515 = vmatprep.subr.mxu0 0.0
        %3516 = vmatpush1.msra.mxu0 0.0
        %3517 = vmatprep.subr.mxu0 0.0
        %3518 = vmatpush1.msra.mxu0 0.0
        %3519 = vmatprep.subr.mxu0 0.0
        %3520 = vmatpush1.msra.mxu0 0.0
        %3521 = vmatprep.subr.mxu0 0.0
        %3522 = vmatpush1.msra.mxu0 0.0
        %3523 = vmatprep.subr.mxu0 0.0
        %3524 = vmatpush1.msra.mxu0 0.0
        %3525 = vmatprep.subr.mxu0 0.0
        %3526 = vmatpush1.msra.mxu0 0.0
        %3527 = vmatprep.subr.mxu0 0.0
        %3528 = vmatpush1.msra.mxu0 0.0
        %3529 = vmatprep.subr.mxu0 0.0
        %3530 = vmatpush1.msra.mxu0 0.0
        %3531 = vmatprep.mubr.f32.mxu0 0.0
        %3532 = vmatmul.mubr.f32.gmra.mrb[0].mxu0 %v3456
        %v3533 = vpop.f32.mrb[0].mxu0
        %v3534 = vadd.f32 0.0, %v3533
        %v3535 = vpop.f32.mrb[0].mxu0
        %3536 = vmatprep.mubr.f32.mxu0 0.0
        %3537 = vmatmul.mubr.f32.gmra.mrb[0].mxu0 %v3459
        %v3538 = vpop.f32.mrb[0].mxu0
        %v3539 = vadd.f32 0.0, %v3538
        %v3540 = vpop.f32.mrb[0].mxu0
        %3541 = vmatprep.mubr.f32.mxu0 0.0
        %3542 = vmatmul.mubr.f32.gmra.mrb[0].mxu0 %v3462
        %v3543 = vpop.f32.mrb[0].mxu0
        %v3544 = vadd.f32 0.0, %v3543
        %v3545 = vpop.f32.mrb[0].mxu0
        %3546 = vmatprep.mubr.f32.mxu0 0.0
        %3547 = vmatmul.mubr.f32.gmra.mrb[0].mxu0 %v3465
        %v3548 = vpop.f32.mrb[0].mxu0
        %v3549 = vadd.f32 0.0, %v3548
        %v3550 = vpop.f32.mrb[0].mxu0
        %3551 = vdwg.mxu0
        %v3552 = vadd.f32 %v3426, %v3534
        %v3553 = vadd.f32 %v3427, %v3539
        %v3554 = vadd.f32 %v3428, %v3544
        %v3555 = vadd.f32 %v3429, %v3549
        %s3556 = scalar_lea.vmem %s3, 288
        %v3557 = vld [vmem:[%s3556] sm:$0xf]
        %v3558 = vld [vmem:[%s3556 + $0x4] sm:$0xf]
        %v3559 = vld [vmem:[%s3556 + $0x8] sm:$0xf]
        %v3560 = vld [vmem:[%s3556 + $0xc] sm:$0xf]
        %v3561 = vld [vmem:[%s3556 + $0x10] sm:$0xf]
        %v3562 = vld [vmem:[%s3556 + $0x14] sm:$0xf]
        %v3563 = vld [vmem:[%s3556 + $0x18] sm:$0xf]
        %v3564 = vld [vmem:[%s3556 + $0x1c] sm:$0xf]
        %v3565 = vld [vmem:[%s3556 + $0x20] sm:$0xf]
        %v3566 = vld [vmem:[%s3556 + $0x24] sm:$0xf]
        %v3567 = vld [vmem:[%s3556 + $0x28] sm:$0xf]
        %v3568 = vld [vmem:[%s3556 + $0x2c] sm:$0xf]
        %v3569 = vunpack.c.l.bf16 %v3557
        %v3570 = vunpack.c.l.bf16 %v3558
        %v3571 = vunpack.c.l.bf16 %v3559
        %v3572 = vunpack.c.l.bf16 %v3560
        %v3573 = vunpack.c.l.bf16 %v3561
        %v3574 = vunpack.c.l.bf16 %v3562
        %v3575 = vunpack.c.l.bf16 %v3563
        %v3576 = vunpack.c.l.bf16 %v3564
        %v3577 = vunpack.c.l.bf16 %v3565
        %v3578 = vunpack.c.l.bf16 %v3566
        %v3579 = vunpack.c.l.bf16 %v3567
        %v3580 = vunpack.c.l.bf16 %v3568
        %v3582 = vsel %vm2857, %v2740, 0
        %v3585 = vsel %vm2857, %v2741, 0
        %v3588 = vsel %vm2857, %v2742, 0
        %v3591 = vsel %vm2857, %v2743, 0
        %3593 = vmatprep.subr.mxu0 0.0
        %3594 = vmatpush1.msra.mxu0 %v3569
        %3595 = vmatprep.subr.mxu0 0.0
        %3596 = vmatpush1.msra.mxu0 %v3570
        %3597 = vmatprep.subr.mxu0 0.0
        %3598 = vmatpush1.msra.mxu0 %v3571
        %3599 = vmatprep.subr.mxu0 0.0
        %3600 = vmatpush1.msra.mxu0 %v3572
        %3601 = vmatprep.subr.mxu0 0.0
        %3602 = vmatpush1.msra.mxu0 %v3573
        %3603 = vmatprep.subr.mxu0 0.0
        %3604 = vmatpush1.msra.mxu0 %v3574
        %3605 = vmatprep.subr.mxu0 0.0
        %3606 = vmatpush1.msra.mxu0 %v3575
        %3607 = vmatprep.subr.mxu0 0.0
        %3608 = vmatpush1.msra.mxu0 %v3576
        %3609 = vmatprep.subr.mxu0 0.0
        %3610 = vmatpush1.msra.mxu0 %v3577
        %3611 = vmatprep.subr.mxu0 0.0
        %3612 = vmatpush1.msra.mxu0 %v3578
        %3613 = vmatprep.subr.mxu0 0.0
        %3614 = vmatpush1.msra.mxu0 %v3579
        %3615 = vmatprep.subr.mxu0 0.0
        %3616 = vmatpush1.msra.mxu0 %v3580
        %3617 = vmatprep.subr.mxu0 0.0
        %3618 = vmatpush1.msra.mxu0 0.0
        %3619 = vmatprep.subr.mxu0 0.0
        %3620 = vmatpush1.msra.mxu0 0.0
        %3621 = vmatprep.subr.mxu0 0.0
        %3622 = vmatpush1.msra.mxu0 0.0
        %3623 = vmatprep.subr.mxu0 0.0
        %3624 = vmatpush1.msra.mxu0 0.0
        %3625 = vmatprep.subr.mxu0 0.0
        %3626 = vmatpush1.msra.mxu0 0.0
        %3627 = vmatprep.subr.mxu0 0.0
        %3628 = vmatpush1.msra.mxu0 0.0
        %3629 = vmatprep.subr.mxu0 0.0
        %3630 = vmatpush1.msra.mxu0 0.0
        %3631 = vmatprep.subr.mxu0 0.0
        %3632 = vmatpush1.msra.mxu0 0.0
        %3633 = vmatprep.subr.mxu0 0.0
        %3634 = vmatpush1.msra.mxu0 0.0
        %3635 = vmatprep.subr.mxu0 0.0
        %3636 = vmatpush1.msra.mxu0 0.0
        %3637 = vmatprep.subr.mxu0 0.0
        %3638 = vmatpush1.msra.mxu0 0.0
        %3639 = vmatprep.subr.mxu0 0.0
        %3640 = vmatpush1.msra.mxu0 0.0
        %3641 = vmatprep.subr.mxu0 0.0
        %3642 = vmatpush1.msra.mxu0 0.0
        %3643 = vmatprep.subr.mxu0 0.0
        %3644 = vmatpush1.msra.mxu0 0.0
        %3645 = vmatprep.subr.mxu0 0.0
        %3646 = vmatpush1.msra.mxu0 0.0
        %3647 = vmatprep.subr.mxu0 0.0
        %3648 = vmatpush1.msra.mxu0 0.0
        %3649 = vmatprep.subr.mxu0 0.0
        %3650 = vmatpush1.msra.mxu0 0.0
        %3651 = vmatprep.subr.mxu0 0.0
        %3652 = vmatpush1.msra.mxu0 0.0
        %3653 = vmatprep.subr.mxu0 0.0
        %3654 = vmatpush1.msra.mxu0 0.0
        %3655 = vmatprep.subr.mxu0 0.0
        %3656 = vmatpush1.msra.mxu0 0.0
        %3657 = vmatprep.mubr.f32.mxu0 0.0
        %3658 = vmatmul.mubr.f32.gmra.mrb[0].mxu0 %v3582
        %v3659 = vpop.f32.mrb[0].mxu0
        %v3660 = vadd.f32 0.0, %v3659
        %v3661 = vpop.f32.mrb[0].mxu0
        %3662 = vmatprep.mubr.f32.mxu0 0.0
        %3663 = vmatmul.mubr.f32.gmra.mrb[0].mxu0 %v3585
        %v3664 = vpop.f32.mrb[0].mxu0
        %v3665 = vadd.f32 0.0, %v3664
        %v3666 = vpop.f32.mrb[0].mxu0
        %3667 = vmatprep.mubr.f32.mxu0 0.0
        %3668 = vmatmul.mubr.f32.gmra.mrb[0].mxu0 %v3588
        %v3669 = vpop.f32.mrb[0].mxu0
        %v3670 = vadd.f32 0.0, %v3669
        %v3671 = vpop.f32.mrb[0].mxu0
        %3672 = vmatprep.mubr.f32.mxu0 0.0
        %3673 = vmatmul.mubr.f32.gmra.mrb[0].mxu0 %v3591
        %v3674 = vpop.f32.mrb[0].mxu0
        %v3675 = vadd.f32 0.0, %v3674
        %v3676 = vpop.f32.mrb[0].mxu0
        %3677 = vdwg.mxu0
        %v3678 = vadd.f32 %v3552, %v3660
        %v3679 = vadd.f32 %v3553, %v3665
        %v3680 = vadd.f32 %v3554, %v3670
        %v3681 = vadd.f32 %v3555, %v3675
        %s3682 = scalar_lea.vmem %s3, 336
        %v3683 = vld [vmem:[%s3682] sm:$0xf]
        %v3684 = vld [vmem:[%s3682 + $0x4] sm:$0xf]
        %v3685 = vld [vmem:[%s3682 + $0x8] sm:$0xf]
        %v3686 = vld [vmem:[%s3682 + $0xc] sm:$0xf]
        %v3687 = vld [vmem:[%s3682 + $0x10] sm:$0xf]
        %v3688 = vld [vmem:[%s3682 + $0x14] sm:$0xf]
        %v3689 = vld [vmem:[%s3682 + $0x18] sm:$0xf]
        %v3690 = vld [vmem:[%s3682 + $0x1c] sm:$0xf]
        %v3691 = vld [vmem:[%s3682 + $0x20] sm:$0xf]
        %v3692 = vld [vmem:[%s3682 + $0x24] sm:$0xf]
        %v3693 = vld [vmem:[%s3682 + $0x28] sm:$0xf]
        %v3694 = vld [vmem:[%s3682 + $0x2c] sm:$0xf]
        %v3695 = vunpack.c.l.bf16 %v3683
        %v3696 = vunpack.c.l.bf16 %v3684
        %v3697 = vunpack.c.l.bf16 %v3685
        %v3698 = vunpack.c.l.bf16 %v3686
        %v3699 = vunpack.c.l.bf16 %v3687
        %v3700 = vunpack.c.l.bf16 %v3688
        %v3701 = vunpack.c.l.bf16 %v3689
        %v3702 = vunpack.c.l.bf16 %v3690
        %v3703 = vunpack.c.l.bf16 %v3691
        %v3704 = vunpack.c.l.bf16 %v3692
        %v3705 = vunpack.c.l.bf16 %v3693
        %v3706 = vunpack.c.l.bf16 %v3694
        %v3708 = vsel %vm2857, %v2744, 0
        %v3711 = vsel %vm2857, %v2745, 0
        %v3714 = vsel %vm2857, %v2746, 0
        %v3717 = vsel %vm2857, %v2747, 0
        %3719 = vmatprep.subr.mxu0 0.0
        %3720 = vmatpush1.msra.mxu0 %v3695
        %3721 = vmatprep.subr.mxu0 0.0
        %3722 = vmatpush1.msra.mxu0 %v3696
        %3723 = vmatprep.subr.mxu0 0.0
        %3724 = vmatpush1.msra.mxu0 %v3697
        %3725 = vmatprep.subr.mxu0 0.0
        %3726 = vmatpush1.msra.mxu0 %v3698
        %3727 = vmatprep.subr.mxu0 0.0
        %3728 = vmatpush1.msra.mxu0 %v3699
        %3729 = vmatprep.subr.mxu0 0.0
        %3730 = vmatpush1.msra.mxu0 %v3700
        %3731 = vmatprep.subr.mxu0 0.0
        %3732 = vmatpush1.msra.mxu0 %v3701
        %3733 = vmatprep.subr.mxu0 0.0
        %3734 = vmatpush1.msra.mxu0 %v3702
        %3735 = vmatprep.subr.mxu0 0.0
        %3736 = vmatpush1.msra.mxu0 %v3703
        %3737 = vmatprep.subr.mxu0 0.0
        %3738 = vmatpush1.msra.mxu0 %v3704
        %3739 = vmatprep.subr.mxu0 0.0
        %3740 = vmatpush1.msra.mxu0 %v3705
        %3741 = vmatprep.subr.mxu0 0.0
        %3742 = vmatpush1.msra.mxu0 %v3706
        %3743 = vmatprep.subr.mxu0 0.0
        %3744 = vmatpush1.msra.mxu0 0.0
        %3745 = vmatprep.subr.mxu0 0.0
        %3746 = vmatpush1.msra.mxu0 0.0
        %3747 = vmatprep.subr.mxu0 0.0
        %3748 = vmatpush1.msra.mxu0 0.0
        %3749 = vmatprep.subr.mxu0 0.0
        %3750 = vmatpush1.msra.mxu0 0.0
        %3751 = vmatprep.subr.mxu0 0.0
        %3752 = vmatpush1.msra.mxu0 0.0
        %3753 = vmatprep.subr.mxu0 0.0
        %3754 = vmatpush1.msra.mxu0 0.0
        %3755 = vmatprep.subr.mxu0 0.0
        %3756 = vmatpush1.msra.mxu0 0.0
        %3757 = vmatprep.subr.mxu0 0.0
        %3758 = vmatpush1.msra.mxu0 0.0
        %3759 = vmatprep.subr.mxu0 0.0
        %3760 = vmatpush1.msra.mxu0 0.0
        %3761 = vmatprep.subr.mxu0 0.0
        %3762 = vmatpush1.msra.mxu0 0.0
        %3763 = vmatprep.subr.mxu0 0.0
        %3764 = vmatpush1.msra.mxu0 0.0
        %3765 = vmatprep.subr.mxu0 0.0
        %3766 = vmatpush1.msra.mxu0 0.0
        %3767 = vmatprep.subr.mxu0 0.0
        %3768 = vmatpush1.msra.mxu0 0.0
        %3769 = vmatprep.subr.mxu0 0.0
        %3770 = vmatpush1.msra.mxu0 0.0
        %3771 = vmatprep.subr.mxu0 0.0
        %3772 = vmatpush1.msra.mxu0 0.0
        %3773 = vmatprep.subr.mxu0 0.0
        %3774 = vmatpush1.msra.mxu0 0.0
        %3775 = vmatprep.subr.mxu0 0.0
        %3776 = vmatpush1.msra.mxu0 0.0
        %3777 = vmatprep.subr.mxu0 0.0
        %3778 = vmatpush1.msra.mxu0 0.0
        %3779 = vmatprep.subr.mxu0 0.0
        %3780 = vmatpush1.msra.mxu0 0.0
        %3781 = vmatprep.subr.mxu0 0.0
        %3782 = vmatpush1.msra.mxu0 0.0
        %3783 = vmatprep.mubr.f32.mxu0 0.0
        %3784 = vmatmul.mubr.f32.gmra.mrb[0].mxu0 %v3708
        %v3785 = vpop.f32.mrb[0].mxu0
        %v3786 = vadd.f32 0.0, %v3785
        %v3787 = vpop.f32.mrb[0].mxu0
        %3788 = vmatprep.mubr.f32.mxu0 0.0
        %3789 = vmatmul.mubr.f32.gmra.mrb[0].mxu0 %v3711
        %v3790 = vpop.f32.mrb[0].mxu0
        %v3791 = vadd.f32 0.0, %v3790
        %v3792 = vpop.f32.mrb[0].mxu0
        %3793 = vmatprep.mubr.f32.mxu0 0.0
        %3794 = vmatmul.mubr.f32.gmra.mrb[0].mxu0 %v3714
        %v3795 = vpop.f32.mrb[0].mxu0
        %v3796 = vadd.f32 0.0, %v3795
        %v3797 = vpop.f32.mrb[0].mxu0
        %3798 = vmatprep.mubr.f32.mxu0 0.0
        %3799 = vmatmul.mubr.f32.gmra.mrb[0].mxu0 %v3717
        %v3800 = vpop.f32.mrb[0].mxu0
        %v3801 = vadd.f32 0.0, %v3800
        %v3802 = vpop.f32.mrb[0].mxu0
        %3803 = vdwg.mxu0
        %v3804 = vadd.f32 %v3678, %v3786
        %v3805 = vadd.f32 %v3679, %v3791
        %v3806 = vadd.f32 %v3680, %v3796
        %v3807 = vadd.f32 %v3681, %v3801
        %s3808 = scalar_lea.vmem %s3, 384
        %v3809 = vld [vmem:[%s3808] sm:$0xf]
        %v3810 = vld [vmem:[%s3808 + $0x4] sm:$0xf]
        %v3811 = vld [vmem:[%s3808 + $0x8] sm:$0xf]
        %v3812 = vld [vmem:[%s3808 + $0xc] sm:$0xf]
        %v3813 = vld [vmem:[%s3808 + $0x10] sm:$0xf]
        %v3814 = vld [vmem:[%s3808 + $0x14] sm:$0xf]
        %v3815 = vld [vmem:[%s3808 + $0x18] sm:$0xf]
        %v3816 = vld [vmem:[%s3808 + $0x1c] sm:$0xf]
        %v3817 = vld [vmem:[%s3808 + $0x20] sm:$0xf]
        %v3818 = vld [vmem:[%s3808 + $0x24] sm:$0xf]
        %v3819 = vld [vmem:[%s3808 + $0x28] sm:$0xf]
        %v3820 = vld [vmem:[%s3808 + $0x2c] sm:$0xf]
        %v3821 = vunpack.c.l.bf16 %v3809
        %v3822 = vunpack.c.l.bf16 %v3810
        %v3823 = vunpack.c.l.bf16 %v3811
        %v3824 = vunpack.c.l.bf16 %v3812
        %v3825 = vunpack.c.l.bf16 %v3813
        %v3826 = vunpack.c.l.bf16 %v3814
        %v3827 = vunpack.c.l.bf16 %v3815
        %v3828 = vunpack.c.l.bf16 %v3816
        %v3829 = vunpack.c.l.bf16 %v3817
        %v3830 = vunpack.c.l.bf16 %v3818
        %v3831 = vunpack.c.l.bf16 %v3819
        %v3832 = vunpack.c.l.bf16 %v3820
        %v3834 = vsel %vm2857, %v2748, 0
        %v3837 = vsel %vm2857, %v2749, 0
        %v3840 = vsel %vm2857, %v2750, 0
        %v3843 = vsel %vm2857, %v2751, 0
        %3845 = vmatprep.subr.mxu0 0.0
        %3846 = vmatpush1.msra.mxu0 %v3821
        %3847 = vmatprep.subr.mxu0 0.0
        %3848 = vmatpush1.msra.mxu0 %v3822
        %3849 = vmatprep.subr.mxu0 0.0
        %3850 = vmatpush1.msra.mxu0 %v3823
        %3851 = vmatprep.subr.mxu0 0.0
        %3852 = vmatpush1.msra.mxu0 %v3824
        %3853 = vmatprep.subr.mxu0 0.0
        %3854 = vmatpush1.msra.mxu0 %v3825
        %3855 = vmatprep.subr.mxu0 0.0
        %3856 = vmatpush1.msra.mxu0 %v3826
        %3857 = vmatprep.subr.mxu0 0.0
        %3858 = vmatpush1.msra.mxu0 %v3827
        %3859 = vmatprep.subr.mxu0 0.0
        %3860 = vmatpush1.msra.mxu0 %v3828
        %3861 = vmatprep.subr.mxu0 0.0
        %3862 = vmatpush1.msra.mxu0 %v3829
        %3863 = vmatprep.subr.mxu0 0.0
        %3864 = vmatpush1.msra.mxu0 %v3830
        %3865 = vmatprep.subr.mxu0 0.0
        %3866 = vmatpush1.msra.mxu0 %v3831
        %3867 = vmatprep.subr.mxu0 0.0
        %3868 = vmatpush1.msra.mxu0 %v3832
        %3869 = vmatprep.subr.mxu0 0.0
        %3870 = vmatpush1.msra.mxu0 0.0
        %3871 = vmatprep.subr.mxu0 0.0
        %3872 = vmatpush1.msra.mxu0 0.0
        %3873 = vmatprep.subr.mxu0 0.0
        %3874 = vmatpush1.msra.mxu0 0.0
        %3875 = vmatprep.subr.mxu0 0.0
        %3876 = vmatpush1.msra.mxu0 0.0
        %3877 = vmatprep.subr.mxu0 0.0
        %3878 = vmatpush1.msra.mxu0 0.0
        %3879 = vmatprep.subr.mxu0 0.0
        %3880 = vmatpush1.msra.mxu0 0.0
        %3881 = vmatprep.subr.mxu0 0.0
        %3882 = vmatpush1.msra.mxu0 0.0
        %3883 = vmatprep.subr.mxu0 0.0
        %3884 = vmatpush1.msra.mxu0 0.0
        %3885 = vmatprep.subr.mxu0 0.0
        %3886 = vmatpush1.msra.mxu0 0.0
        %3887 = vmatprep.subr.mxu0 0.0
        %3888 = vmatpush1.msra.mxu0 0.0
        %3889 = vmatprep.subr.mxu0 0.0
        %3890 = vmatpush1.msra.mxu0 0.0
        %3891 = vmatprep.subr.mxu0 0.0
        %3892 = vmatpush1.msra.mxu0 0.0
        %3893 = vmatprep.subr.mxu0 0.0
        %3894 = vmatpush1.msra.mxu0 0.0
        %3895 = vmatprep.subr.mxu0 0.0
        %3896 = vmatpush1.msra.mxu0 0.0
        %3897 = vmatprep.subr.mxu0 0.0
        %3898 = vmatpush1.msra.mxu0 0.0
        %3899 = vmatprep.subr.mxu0 0.0
        %3900 = vmatpush1.msra.mxu0 0.0
        %3901 = vmatprep.subr.mxu0 0.0
        %3902 = vmatpush1.msra.mxu0 0.0
        %3903 = vmatprep.subr.mxu0 0.0
        %3904 = vmatpush1.msra.mxu0 0.0
        %3905 = vmatprep.subr.mxu0 0.0
        %3906 = vmatpush1.msra.mxu0 0.0
        %3907 = vmatprep.subr.mxu0 0.0
        %3908 = vmatpush1.msra.mxu0 0.0
        %3909 = vmatprep.mubr.f32.mxu0 0.0
        %3910 = vmatmul.mubr.f32.gmra.mrb[0].mxu0 %v3834
        %v3911 = vpop.f32.mrb[0].mxu0
        %v3912 = vadd.f32 0.0, %v3911
        %v3913 = vpop.f32.mrb[0].mxu0
        %3914 = vmatprep.mubr.f32.mxu0 0.0
        %3915 = vmatmul.mubr.f32.gmra.mrb[0].mxu0 %v3837
        %v3916 = vpop.f32.mrb[0].mxu0
        %v3917 = vadd.f32 0.0, %v3916
        %v3918 = vpop.f32.mrb[0].mxu0
        %3919 = vmatprep.mubr.f32.mxu0 0.0
        %3920 = vmatmul.mubr.f32.gmra.mrb[0].mxu0 %v3840
        %v3921 = vpop.f32.mrb[0].mxu0
        %v3922 = vadd.f32 0.0, %v3921
        %v3923 = vpop.f32.mrb[0].mxu0
        %3924 = vmatprep.mubr.f32.mxu0 0.0
        %3925 = vmatmul.mubr.f32.gmra.mrb[0].mxu0 %v3843
        %v3926 = vpop.f32.mrb[0].mxu0
        %v3927 = vadd.f32 0.0, %v3926
        %v3928 = vpop.f32.mrb[0].mxu0
        %3929 = vdwg.mxu0
        %v3930 = vadd.f32 %v3804, %v3912
        %v3931 = vadd.f32 %v3805, %v3917
        %v3932 = vadd.f32 %v3806, %v3922
        %v3933 = vadd.f32 %v3807, %v3927
        %s3934 = scalar_lea.vmem %s3, 432
        %v3935 = vld [vmem:[%s3934] sm:$0xf]
        %v3936 = vld [vmem:[%s3934 + $0x4] sm:$0xf]
        %v3937 = vld [vmem:[%s3934 + $0x8] sm:$0xf]
        %v3938 = vld [vmem:[%s3934 + $0xc] sm:$0xf]
        %v3939 = vld [vmem:[%s3934 + $0x10] sm:$0xf]
        %v3940 = vld [vmem:[%s3934 + $0x14] sm:$0xf]
        %v3941 = vld [vmem:[%s3934 + $0x18] sm:$0xf]
        %v3942 = vld [vmem:[%s3934 + $0x1c] sm:$0xf]
        %v3943 = vld [vmem:[%s3934 + $0x20] sm:$0xf]
        %v3944 = vld [vmem:[%s3934 + $0x24] sm:$0xf]
        %v3945 = vld [vmem:[%s3934 + $0x28] sm:$0xf]
        %v3946 = vld [vmem:[%s3934 + $0x2c] sm:$0xf]
        %v3947 = vunpack.c.l.bf16 %v3935
        %v3948 = vunpack.c.l.bf16 %v3936
        %v3949 = vunpack.c.l.bf16 %v3937
        %v3950 = vunpack.c.l.bf16 %v3938
        %v3951 = vunpack.c.l.bf16 %v3939
        %v3952 = vunpack.c.l.bf16 %v3940
        %v3953 = vunpack.c.l.bf16 %v3941
        %v3954 = vunpack.c.l.bf16 %v3942
        %v3955 = vunpack.c.l.bf16 %v3943
        %v3956 = vunpack.c.l.bf16 %v3944
        %v3957 = vunpack.c.l.bf16 %v3945
        %v3958 = vunpack.c.l.bf16 %v3946
        %v3960 = vsel %vm2857, %v2752, 0
        %v3963 = vsel %vm2857, %v2753, 0
        %v3966 = vsel %vm2857, %v2754, 0
        %v3969 = vsel %vm2857, %v2755, 0
        %3971 = vmatprep.subr.mxu0 0.0
        %3972 = vmatpush1.msra.mxu0 %v3947
        %3973 = vmatprep.subr.mxu0 0.0
        %3974 = vmatpush1.msra.mxu0 %v3948
        %3975 = vmatprep.subr.mxu0 0.0
        %3976 = vmatpush1.msra.mxu0 %v3949
        %3977 = vmatprep.subr.mxu0 0.0
        %3978 = vmatpush1.msra.mxu0 %v3950
        %3979 = vmatprep.subr.mxu0 0.0
        %3980 = vmatpush1.msra.mxu0 %v3951
        %3981 = vmatprep.subr.mxu0 0.0
        %3982 = vmatpush1.msra.mxu0 %v3952
        %3983 = vmatprep.subr.mxu0 0.0
        %3984 = vmatpush1.msra.mxu0 %v3953
        %3985 = vmatprep.subr.mxu0 0.0
        %3986 = vmatpush1.msra.mxu0 %v3954
        %3987 = vmatprep.subr.mxu0 0.0
        %3988 = vmatpush1.msra.mxu0 %v3955
        %3989 = vmatprep.subr.mxu0 0.0
        %3990 = vmatpush1.msra.mxu0 %v3956
        %3991 = vmatprep.subr.mxu0 0.0
        %3992 = vmatpush1.msra.mxu0 %v3957
        %3993 = vmatprep.subr.mxu0 0.0
        %3994 = vmatpush1.msra.mxu0 %v3958
        %3995 = vmatprep.subr.mxu0 0.0
        %3996 = vmatpush1.msra.mxu0 0.0
        %3997 = vmatprep.subr.mxu0 0.0
        %3998 = vmatpush1.msra.mxu0 0.0
        %3999 = vmatprep.subr.mxu0 0.0
        %4000 = vmatpush1.msra.mxu0 0.0
        %4001 = vmatprep.subr.mxu0 0.0
        %4002 = vmatpush1.msra.mxu0 0.0
        %4003 = vmatprep.subr.mxu0 0.0
        %4004 = vmatpush1.msra.mxu0 0.0
        %4005 = vmatprep.subr.mxu0 0.0
        %4006 = vmatpush1.msra.mxu0 0.0
        %4007 = vmatprep.subr.mxu0 0.0
        %4008 = vmatpush1.msra.mxu0 0.0
        %4009 = vmatprep.subr.mxu0 0.0
        %4010 = vmatpush1.msra.mxu0 0.0
        %4011 = vmatprep.subr.mxu0 0.0
        %4012 = vmatpush1.msra.mxu0 0.0
        %4013 = vmatprep.subr.mxu0 0.0
        %4014 = vmatpush1.msra.mxu0 0.0
        %4015 = vmatprep.subr.mxu0 0.0
        %4016 = vmatpush1.msra.mxu0 0.0
        %4017 = vmatprep.subr.mxu0 0.0
        %4018 = vmatpush1.msra.mxu0 0.0
        %4019 = vmatprep.subr.mxu0 0.0
        %4020 = vmatpush1.msra.mxu0 0.0
        %4021 = vmatprep.subr.mxu0 0.0
        %4022 = vmatpush1.msra.mxu0 0.0
        %4023 = vmatprep.subr.mxu0 0.0
        %4024 = vmatpush1.msra.mxu0 0.0
        %4025 = vmatprep.subr.mxu0 0.0
        %4026 = vmatpush1.msra.mxu0 0.0
        %4027 = vmatprep.subr.mxu0 0.0
        %4028 = vmatpush1.msra.mxu0 0.0
        %4029 = vmatprep.subr.mxu0 0.0
        %4030 = vmatpush1.msra.mxu0 0.0
        %4031 = vmatprep.subr.mxu0 0.0
        %4032 = vmatpush1.msra.mxu0 0.0
        %4033 = vmatprep.subr.mxu0 0.0
        %4034 = vmatpush1.msra.mxu0 0.0
        %4035 = vmatprep.mubr.f32.mxu0 0.0
        %4036 = vmatmul.mubr.f32.gmra.mrb[0].mxu0 %v3960
        %v4037 = vpop.f32.mrb[0].mxu0
        %v4038 = vadd.f32 0.0, %v4037
        %v4039 = vpop.f32.mrb[0].mxu0
        %4040 = vmatprep.mubr.f32.mxu0 0.0
        %4041 = vmatmul.mubr.f32.gmra.mrb[0].mxu0 %v3963
        %v4042 = vpop.f32.mrb[0].mxu0
        %v4043 = vadd.f32 0.0, %v4042
        %v4044 = vpop.f32.mrb[0].mxu0
        %4045 = vmatprep.mubr.f32.mxu0 0.0
        %4046 = vmatmul.mubr.f32.gmra.mrb[0].mxu0 %v3966
        %v4047 = vpop.f32.mrb[0].mxu0
        %v4048 = vadd.f32 0.0, %v4047
        %v4049 = vpop.f32.mrb[0].mxu0
        %4050 = vmatprep.mubr.f32.mxu0 0.0
        %4051 = vmatmul.mubr.f32.gmra.mrb[0].mxu0 %v3969
        %v4052 = vpop.f32.mrb[0].mxu0
        %v4053 = vadd.f32 0.0, %v4052
        %v4054 = vpop.f32.mrb[0].mxu0
        %4055 = vdwg.mxu0
        %v4056 = vadd.f32 %v3930, %v4038
        %v4057 = vadd.f32 %v3931, %v4043
        %v4058 = vadd.f32 %v3932, %v4048
        %v4059 = vadd.f32 %v3933, %v4053
        %s4060 = scalar_lea.vmem %s3, 480
        %v4061 = vld [vmem:[%s4060] sm:$0xf]
        %v4062 = vld [vmem:[%s4060 + $0x4] sm:$0xf]
        %v4063 = vld [vmem:[%s4060 + $0x8] sm:$0xf]
        %v4064 = vld [vmem:[%s4060 + $0xc] sm:$0xf]
        %v4065 = vld [vmem:[%s4060 + $0x10] sm:$0xf]
        %v4066 = vld [vmem:[%s4060 + $0x14] sm:$0xf]
        %v4067 = vld [vmem:[%s4060 + $0x18] sm:$0xf]
        %v4068 = vld [vmem:[%s4060 + $0x1c] sm:$0xf]
        %v4069 = vld [vmem:[%s4060 + $0x20] sm:$0xf]
        %v4070 = vld [vmem:[%s4060 + $0x24] sm:$0xf]
        %v4071 = vld [vmem:[%s4060 + $0x28] sm:$0xf]
        %v4072 = vld [vmem:[%s4060 + $0x2c] sm:$0xf]
        %v4073 = vunpack.c.l.bf16 %v4061
        %v4074 = vunpack.c.l.bf16 %v4062
        %v4075 = vunpack.c.l.bf16 %v4063
        %v4076 = vunpack.c.l.bf16 %v4064
        %v4077 = vunpack.c.l.bf16 %v4065
        %v4078 = vunpack.c.l.bf16 %v4066
        %v4079 = vunpack.c.l.bf16 %v4067
        %v4080 = vunpack.c.l.bf16 %v4068
        %v4081 = vunpack.c.l.bf16 %v4069
        %v4082 = vunpack.c.l.bf16 %v4070
        %v4083 = vunpack.c.l.bf16 %v4071
        %v4084 = vunpack.c.l.bf16 %v4072
        %v4086 = vsel %vm2857, %v2756, 0
        %v4089 = vsel %vm2857, %v2757, 0
        %v4092 = vsel %vm2857, %v2758, 0
        %v4095 = vsel %vm2857, %v2759, 0
        %4097 = vmatprep.subr.mxu0 0.0
        %4098 = vmatpush1.msra.mxu0 %v4073
        %4099 = vmatprep.subr.mxu0 0.0
        %4100 = vmatpush1.msra.mxu0 %v4074
        %4101 = vmatprep.subr.mxu0 0.0
        %4102 = vmatpush1.msra.mxu0 %v4075
        %4103 = vmatprep.subr.mxu0 0.0
        %4104 = vmatpush1.msra.mxu0 %v4076
        %4105 = vmatprep.subr.mxu0 0.0
        %4106 = vmatpush1.msra.mxu0 %v4077
        %4107 = vmatprep.subr.mxu0 0.0
        %4108 = vmatpush1.msra.mxu0 %v4078
        %4109 = vmatprep.subr.mxu0 0.0
        %4110 = vmatpush1.msra.mxu0 %v4079
        %4111 = vmatprep.subr.mxu0 0.0
        %4112 = vmatpush1.msra.mxu0 %v4080
        %4113 = vmatprep.subr.mxu0 0.0
        %4114 = vmatpush1.msra.mxu0 %v4081
        %4115 = vmatprep.subr.mxu0 0.0
        %4116 = vmatpush1.msra.mxu0 %v4082
        %4117 = vmatprep.subr.mxu0 0.0
        %4118 = vmatpush1.msra.mxu0 %v4083
        %4119 = vmatprep.subr.mxu0 0.0
        %4120 = vmatpush1.msra.mxu0 %v4084
        %4121 = vmatprep.subr.mxu0 0.0
        %4122 = vmatpush1.msra.mxu0 0.0
        %4123 = vmatprep.subr.mxu0 0.0
        %4124 = vmatpush1.msra.mxu0 0.0
        %4125 = vmatprep.subr.mxu0 0.0
        %4126 = vmatpush1.msra.mxu0 0.0
        %4127 = vmatprep.subr.mxu0 0.0
        %4128 = vmatpush1.msra.mxu0 0.0
        %4129 = vmatprep.subr.mxu0 0.0
        %4130 = vmatpush1.msra.mxu0 0.0
        %4131 = vmatprep.subr.mxu0 0.0
        %4132 = vmatpush1.msra.mxu0 0.0
        %4133 = vmatprep.subr.mxu0 0.0
        %4134 = vmatpush1.msra.mxu0 0.0
        %4135 = vmatprep.subr.mxu0 0.0
        %4136 = vmatpush1.msra.mxu0 0.0
        %4137 = vmatprep.subr.mxu0 0.0
        %4138 = vmatpush1.msra.mxu0 0.0
        %4139 = vmatprep.subr.mxu0 0.0
        %4140 = vmatpush1.msra.mxu0 0.0
        %4141 = vmatprep.subr.mxu0 0.0
        %4142 = vmatpush1.msra.mxu0 0.0
        %4143 = vmatprep.subr.mxu0 0.0
        %4144 = vmatpush1.msra.mxu0 0.0
        %4145 = vmatprep.subr.mxu0 0.0
        %4146 = vmatpush1.msra.mxu0 0.0
        %4147 = vmatprep.subr.mxu0 0.0
        %4148 = vmatpush1.msra.mxu0 0.0
        %4149 = vmatprep.subr.mxu0 0.0
        %4150 = vmatpush1.msra.mxu0 0.0
        %4151 = vmatprep.subr.mxu0 0.0
        %4152 = vmatpush1.msra.mxu0 0.0
        %4153 = vmatprep.subr.mxu0 0.0
        %4154 = vmatpush1.msra.mxu0 0.0
        %4155 = vmatprep.subr.mxu0 0.0
        %4156 = vmatpush1.msra.mxu0 0.0
        %4157 = vmatprep.subr.mxu0 0.0
        %4158 = vmatpush1.msra.mxu0 0.0
        %4159 = vmatprep.subr.mxu0 0.0
        %4160 = vmatpush1.msra.mxu0 0.0
        %4161 = vmatprep.mubr.f32.mxu0 0.0
        %4162 = vmatmul.mubr.f32.gmra.mrb[0].mxu0 %v4086
        %v4163 = vpop.f32.mrb[0].mxu0
        %v4164 = vadd.f32 0.0, %v4163
        %v4165 = vpop.f32.mrb[0].mxu0
        %4166 = vmatprep.mubr.f32.mxu0 0.0
        %4167 = vmatmul.mubr.f32.gmra.mrb[0].mxu0 %v4089
        %v4168 = vpop.f32.mrb[0].mxu0
        %v4169 = vadd.f32 0.0, %v4168
        %v4170 = vpop.f32.mrb[0].mxu0
        %4171 = vmatprep.mubr.f32.mxu0 0.0
        %4172 = vmatmul.mubr.f32.gmra.mrb[0].mxu0 %v4092
        %v4173 = vpop.f32.mrb[0].mxu0
        %v4174 = vadd.f32 0.0, %v4173
        %v4175 = vpop.f32.mrb[0].mxu0
        %4176 = vmatprep.mubr.f32.mxu0 0.0
        %4177 = vmatmul.mubr.f32.gmra.mrb[0].mxu0 %v4095
        %v4178 = vpop.f32.mrb[0].mxu0
        %v4179 = vadd.f32 0.0, %v4178
        %v4180 = vpop.f32.mrb[0].mxu0
        %4181 = vdwg.mxu0
        %v4182 = vadd.f32 %v4056, %v4164
        %v4183 = vadd.f32 %v4057, %v4169
        %v4184 = vadd.f32 %v4058, %v4174
        %v4185 = vadd.f32 %v4059, %v4179
        %s4186 = scalar_lea.vmem %s3, 528
        %v4187 = vld [vmem:[%s4186] sm:$0xf]
        %v4188 = vld [vmem:[%s4186 + $0x4] sm:$0xf]
        %v4189 = vld [vmem:[%s4186 + $0x8] sm:$0xf]
        %v4190 = vld [vmem:[%s4186 + $0xc] sm:$0xf]
        %v4191 = vld [vmem:[%s4186 + $0x10] sm:$0xf]
        %v4192 = vld [vmem:[%s4186 + $0x14] sm:$0xf]
        %v4193 = vld [vmem:[%s4186 + $0x18] sm:$0xf]
        %v4194 = vld [vmem:[%s4186 + $0x1c] sm:$0xf]
        %v4195 = vld [vmem:[%s4186 + $0x20] sm:$0xf]
        %v4196 = vld [vmem:[%s4186 + $0x24] sm:$0xf]
        %v4197 = vld [vmem:[%s4186 + $0x28] sm:$0xf]
        %v4198 = vld [vmem:[%s4186 + $0x2c] sm:$0xf]
        %v4199 = vunpack.c.l.bf16 %v4187
        %v4200 = vunpack.c.l.bf16 %v4188
        %v4201 = vunpack.c.l.bf16 %v4189
        %v4202 = vunpack.c.l.bf16 %v4190
        %v4203 = vunpack.c.l.bf16 %v4191
        %v4204 = vunpack.c.l.bf16 %v4192
        %v4205 = vunpack.c.l.bf16 %v4193
        %v4206 = vunpack.c.l.bf16 %v4194
        %v4207 = vunpack.c.l.bf16 %v4195
        %v4208 = vunpack.c.l.bf16 %v4196
        %v4209 = vunpack.c.l.bf16 %v4197
        %v4210 = vunpack.c.l.bf16 %v4198
        %v4212 = vsel %vm2857, %v2760, 0
        %v4215 = vsel %vm2857, %v2761, 0
        %v4218 = vsel %vm2857, %v2762, 0
        %v4221 = vsel %vm2857, %v2763, 0
        %4223 = vmatprep.subr.mxu0 0.0
        %4224 = vmatpush1.msra.mxu0 %v4199
        %4225 = vmatprep.subr.mxu0 0.0
        %4226 = vmatpush1.msra.mxu0 %v4200
        %4227 = vmatprep.subr.mxu0 0.0
        %4228 = vmatpush1.msra.mxu0 %v4201
        %4229 = vmatprep.subr.mxu0 0.0
        %4230 = vmatpush1.msra.mxu0 %v4202
        %4231 = vmatprep.subr.mxu0 0.0
        %4232 = vmatpush1.msra.mxu0 %v4203
        %4233 = vmatprep.subr.mxu0 0.0
        %4234 = vmatpush1.msra.mxu0 %v4204
        %4235 = vmatprep.subr.mxu0 0.0
        %4236 = vmatpush1.msra.mxu0 %v4205
        %4237 = vmatprep.subr.mxu0 0.0
        %4238 = vmatpush1.msra.mxu0 %v4206
        %4239 = vmatprep.subr.mxu0 0.0
        %4240 = vmatpush1.msra.mxu0 %v4207
        %4241 = vmatprep.subr.mxu0 0.0
        %4242 = vmatpush1.msra.mxu0 %v4208
        %4243 = vmatprep.subr.mxu0 0.0
        %4244 = vmatpush1.msra.mxu0 %v4209
        %4245 = vmatprep.subr.mxu0 0.0
        %4246 = vmatpush1.msra.mxu0 %v4210
        %4247 = vmatprep.subr.mxu0 0.0
        %4248 = vmatpush1.msra.mxu0 0.0
        %4249 = vmatprep.subr.mxu0 0.0
        %4250 = vmatpush1.msra.mxu0 0.0
        %4251 = vmatprep.subr.mxu0 0.0
        %4252 = vmatpush1.msra.mxu0 0.0
        %4253 = vmatprep.subr.mxu0 0.0
        %4254 = vmatpush1.msra.mxu0 0.0
        %4255 = vmatprep.subr.mxu0 0.0
        %4256 = vmatpush1.msra.mxu0 0.0
        %4257 = vmatprep.subr.mxu0 0.0
        %4258 = vmatpush1.msra.mxu0 0.0
        %4259 = vmatprep.subr.mxu0 0.0
        %4260 = vmatpush1.msra.mxu0 0.0
        %4261 = vmatprep.subr.mxu0 0.0
        %4262 = vmatpush1.msra.mxu0 0.0
        %4263 = vmatprep.subr.mxu0 0.0
        %4264 = vmatpush1.msra.mxu0 0.0
        %4265 = vmatprep.subr.mxu0 0.0
        %4266 = vmatpush1.msra.mxu0 0.0
        %4267 = vmatprep.subr.mxu0 0.0
        %4268 = vmatpush1.msra.mxu0 0.0
        %4269 = vmatprep.subr.mxu0 0.0
        %4270 = vmatpush1.msra.mxu0 0.0
        %4271 = vmatprep.subr.mxu0 0.0
        %4272 = vmatpush1.msra.mxu0 0.0
        %4273 = vmatprep.subr.mxu0 0.0
        %4274 = vmatpush1.msra.mxu0 0.0
        %4275 = vmatprep.subr.mxu0 0.0
        %4276 = vmatpush1.msra.mxu0 0.0
        %4277 = vmatprep.subr.mxu0 0.0
        %4278 = vmatpush1.msra.mxu0 0.0
        %4279 = vmatprep.subr.mxu0 0.0
        %4280 = vmatpush1.msra.mxu0 0.0
        %4281 = vmatprep.subr.mxu0 0.0
        %4282 = vmatpush1.msra.mxu0 0.0
        %4283 = vmatprep.subr.mxu0 0.0
        %4284 = vmatpush1.msra.mxu0 0.0
        %4285 = vmatprep.subr.mxu0 0.0
        %4286 = vmatpush1.msra.mxu0 0.0
        %4287 = vmatprep.mubr.f32.mxu0 0.0
        %4288 = vmatmul.mubr.f32.gmra.mrb[0].mxu0 %v4212
        %v4289 = vpop.f32.mrb[0].mxu0
        %v4290 = vadd.f32 0.0, %v4289
        %v4291 = vpop.f32.mrb[0].mxu0
        %4292 = vmatprep.mubr.f32.mxu0 0.0
        %4293 = vmatmul.mubr.f32.gmra.mrb[0].mxu0 %v4215
        %v4294 = vpop.f32.mrb[0].mxu0
        %v4295 = vadd.f32 0.0, %v4294
        %v4296 = vpop.f32.mrb[0].mxu0
        %4297 = vmatprep.mubr.f32.mxu0 0.0
        %4298 = vmatmul.mubr.f32.gmra.mrb[0].mxu0 %v4218
        %v4299 = vpop.f32.mrb[0].mxu0
        %v4300 = vadd.f32 0.0, %v4299
        %v4301 = vpop.f32.mrb[0].mxu0
        %4302 = vmatprep.mubr.f32.mxu0 0.0
        %4303 = vmatmul.mubr.f32.gmra.mrb[0].mxu0 %v4221
        %v4304 = vpop.f32.mrb[0].mxu0
        %v4305 = vadd.f32 0.0, %v4304
        %v4306 = vpop.f32.mrb[0].mxu0
        %4307 = vdwg.mxu0
        %v4308 = vadd.f32 %v4182, %v4290
        %v4309 = vadd.f32 %v4183, %v4295
        %v4310 = vadd.f32 %v4184, %v4300
        %v4311 = vadd.f32 %v4185, %v4305
        %s4312 = scalar_lea.vmem %s3, 576
        %v4313 = vld [vmem:[%s4312] sm:$0xf]
        %v4314 = vld [vmem:[%s4312 + $0x4] sm:$0xf]
        %v4315 = vld [vmem:[%s4312 + $0x8] sm:$0xf]
        %v4316 = vld [vmem:[%s4312 + $0xc] sm:$0xf]
        %v4317 = vld [vmem:[%s4312 + $0x10] sm:$0xf]
        %v4318 = vld [vmem:[%s4312 + $0x14] sm:$0xf]
        %v4319 = vld [vmem:[%s4312 + $0x18] sm:$0xf]
        %v4320 = vld [vmem:[%s4312 + $0x1c] sm:$0xf]
        %v4321 = vld [vmem:[%s4312 + $0x20] sm:$0xf]
        %v4322 = vld [vmem:[%s4312 + $0x24] sm:$0xf]
        %v4323 = vld [vmem:[%s4312 + $0x28] sm:$0xf]
        %v4324 = vld [vmem:[%s4312 + $0x2c] sm:$0xf]
        %v4325 = vunpack.c.l.bf16 %v4313
        %v4326 = vunpack.c.l.bf16 %v4314
        %v4327 = vunpack.c.l.bf16 %v4315
        %v4328 = vunpack.c.l.bf16 %v4316
        %v4329 = vunpack.c.l.bf16 %v4317
        %v4330 = vunpack.c.l.bf16 %v4318
        %v4331 = vunpack.c.l.bf16 %v4319
        %v4332 = vunpack.c.l.bf16 %v4320
        %v4333 = vunpack.c.l.bf16 %v4321
        %v4334 = vunpack.c.l.bf16 %v4322
        %v4335 = vunpack.c.l.bf16 %v4323
        %v4336 = vunpack.c.l.bf16 %v4324
        %v4338 = vsel %vm2857, %v2764, 0
        %v4341 = vsel %vm2857, %v2765, 0
        %v4344 = vsel %vm2857, %v2766, 0
        %v4347 = vsel %vm2857, %v2767, 0
        %4349 = vmatprep.subr.mxu0 0.0
        %4350 = vmatpush1.msra.mxu0 %v4325
        %4351 = vmatprep.subr.mxu0 0.0
        %4352 = vmatpush1.msra.mxu0 %v4326
        %4353 = vmatprep.subr.mxu0 0.0
        %4354 = vmatpush1.msra.mxu0 %v4327
        %4355 = vmatprep.subr.mxu0 0.0
        %4356 = vmatpush1.msra.mxu0 %v4328
        %4357 = vmatprep.subr.mxu0 0.0
        %4358 = vmatpush1.msra.mxu0 %v4329
        %4359 = vmatprep.subr.mxu0 0.0
        %4360 = vmatpush1.msra.mxu0 %v4330
        %4361 = vmatprep.subr.mxu0 0.0
        %4362 = vmatpush1.msra.mxu0 %v4331
        %4363 = vmatprep.subr.mxu0 0.0
        %4364 = vmatpush1.msra.mxu0 %v4332
        %4365 = vmatprep.subr.mxu0 0.0
        %4366 = vmatpush1.msra.mxu0 %v4333
        %4367 = vmatprep.subr.mxu0 0.0
        %4368 = vmatpush1.msra.mxu0 %v4334
        %4369 = vmatprep.subr.mxu0 0.0
        %4370 = vmatpush1.msra.mxu0 %v4335
        %4371 = vmatprep.subr.mxu0 0.0
        %4372 = vmatpush1.msra.mxu0 %v4336
        %4373 = vmatprep.subr.mxu0 0.0
        %4374 = vmatpush1.msra.mxu0 0.0
        %4375 = vmatprep.subr.mxu0 0.0
        %4376 = vmatpush1.msra.mxu0 0.0
        %4377 = vmatprep.subr.mxu0 0.0
        %4378 = vmatpush1.msra.mxu0 0.0
        %4379 = vmatprep.subr.mxu0 0.0
        %4380 = vmatpush1.msra.mxu0 0.0
        %4381 = vmatprep.subr.mxu0 0.0
        %4382 = vmatpush1.msra.mxu0 0.0
        %4383 = vmatprep.subr.mxu0 0.0
        %4384 = vmatpush1.msra.mxu0 0.0
        %4385 = vmatprep.subr.mxu0 0.0
        %4386 = vmatpush1.msra.mxu0 0.0
        %4387 = vmatprep.subr.mxu0 0.0
        %4388 = vmatpush1.msra.mxu0 0.0
        %4389 = vmatprep.subr.mxu0 0.0
        %4390 = vmatpush1.msra.mxu0 0.0
        %4391 = vmatprep.subr.mxu0 0.0
        %4392 = vmatpush1.msra.mxu0 0.0
        %4393 = vmatprep.subr.mxu0 0.0
        %4394 = vmatpush1.msra.mxu0 0.0
        %4395 = vmatprep.subr.mxu0 0.0
        %4396 = vmatpush1.msra.mxu0 0.0
        %4397 = vmatprep.subr.mxu0 0.0
        %4398 = vmatpush1.msra.mxu0 0.0
        %4399 = vmatprep.subr.mxu0 0.0
        %4400 = vmatpush1.msra.mxu0 0.0
        %4401 = vmatprep.subr.mxu0 0.0
        %4402 = vmatpush1.msra.mxu0 0.0
        %4403 = vmatprep.subr.mxu0 0.0
        %4404 = vmatpush1.msra.mxu0 0.0
        %4405 = vmatprep.subr.mxu0 0.0
        %4406 = vmatpush1.msra.mxu0 0.0
        %4407 = vmatprep.subr.mxu0 0.0
        %4408 = vmatpush1.msra.mxu0 0.0
        %4409 = vmatprep.subr.mxu0 0.0
        %4410 = vmatpush1.msra.mxu0 0.0
        %4411 = vmatprep.subr.mxu0 0.0
        %4412 = vmatpush1.msra.mxu0 0.0
        %4413 = vmatprep.mubr.f32.mxu0 0.0
        %4414 = vmatmul.mubr.f32.gmra.mrb[0].mxu0 %v4338
        %v4415 = vpop.f32.mrb[0].mxu0
        %v4416 = vadd.f32 0.0, %v4415
        %v4417 = vpop.f32.mrb[0].mxu0
        %4418 = vmatprep.mubr.f32.mxu0 0.0
        %4419 = vmatmul.mubr.f32.gmra.mrb[0].mxu0 %v4341
        %v4420 = vpop.f32.mrb[0].mxu0
        %v4421 = vadd.f32 0.0, %v4420
        %v4422 = vpop.f32.mrb[0].mxu0
        %4423 = vmatprep.mubr.f32.mxu0 0.0
        %4424 = vmatmul.mubr.f32.gmra.mrb[0].mxu0 %v4344
        %v4425 = vpop.f32.mrb[0].mxu0
        %v4426 = vadd.f32 0.0, %v4425
        %v4427 = vpop.f32.mrb[0].mxu0
        %4428 = vmatprep.mubr.f32.mxu0 0.0
        %4429 = vmatmul.mubr.f32.gmra.mrb[0].mxu0 %v4347
        %v4430 = vpop.f32.mrb[0].mxu0
        %v4431 = vadd.f32 0.0, %v4430
        %v4432 = vpop.f32.mrb[0].mxu0
        %4433 = vdwg.mxu0
        %v4434 = vadd.f32 %v4308, %v4416
        %v4435 = vadd.f32 %v4309, %v4421
        %v4436 = vadd.f32 %v4310, %v4426
        %v4437 = vadd.f32 %v4311, %v4431
        %s4438 = scalar_lea.vmem %s3, 624
        %v4439 = vld [vmem:[%s4438] sm:$0xf]
        %v4440 = vld [vmem:[%s4438 + $0x4] sm:$0xf]
        %v4441 = vld [vmem:[%s4438 + $0x8] sm:$0xf]
        %v4442 = vld [vmem:[%s4438 + $0xc] sm:$0xf]
        %v4443 = vld [vmem:[%s4438 + $0x10] sm:$0xf]
        %v4444 = vld [vmem:[%s4438 + $0x14] sm:$0xf]
        %v4445 = vld [vmem:[%s4438 + $0x18] sm:$0xf]
        %v4446 = vld [vmem:[%s4438 + $0x1c] sm:$0xf]
        %v4447 = vld [vmem:[%s4438 + $0x20] sm:$0xf]
        %v4448 = vld [vmem:[%s4438 + $0x24] sm:$0xf]
        %v4449 = vld [vmem:[%s4438 + $0x28] sm:$0xf]
        %v4450 = vld [vmem:[%s4438 + $0x2c] sm:$0xf]
        %v4451 = vunpack.c.l.bf16 %v4439
        %v4452 = vunpack.c.l.bf16 %v4440
        %v4453 = vunpack.c.l.bf16 %v4441
        %v4454 = vunpack.c.l.bf16 %v4442
        %v4455 = vunpack.c.l.bf16 %v4443
        %v4456 = vunpack.c.l.bf16 %v4444
        %v4457 = vunpack.c.l.bf16 %v4445
        %v4458 = vunpack.c.l.bf16 %v4446
        %v4459 = vunpack.c.l.bf16 %v4447
        %v4460 = vunpack.c.l.bf16 %v4448
        %v4461 = vunpack.c.l.bf16 %v4449
        %v4462 = vunpack.c.l.bf16 %v4450
        %v4464 = vsel %vm2857, %v2768, 0
        %v4467 = vsel %vm2857, %v2769, 0
        %v4470 = vsel %vm2857, %v2770, 0
        %v4473 = vsel %vm2857, %v2771, 0
        %4475 = vmatprep.subr.mxu0 0.0
        %4476 = vmatpush1.msra.mxu0 %v4451
        %4477 = vmatprep.subr.mxu0 0.0
        %4478 = vmatpush1.msra.mxu0 %v4452
        %4479 = vmatprep.subr.mxu0 0.0
        %4480 = vmatpush1.msra.mxu0 %v4453
        %4481 = vmatprep.subr.mxu0 0.0
        %4482 = vmatpush1.msra.mxu0 %v4454
        %4483 = vmatprep.subr.mxu0 0.0
        %4484 = vmatpush1.msra.mxu0 %v4455
        %4485 = vmatprep.subr.mxu0 0.0
        %4486 = vmatpush1.msra.mxu0 %v4456
        %4487 = vmatprep.subr.mxu0 0.0
        %4488 = vmatpush1.msra.mxu0 %v4457
        %4489 = vmatprep.subr.mxu0 0.0
        %4490 = vmatpush1.msra.mxu0 %v4458
        %4491 = vmatprep.subr.mxu0 0.0
        %4492 = vmatpush1.msra.mxu0 %v4459
        %4493 = vmatprep.subr.mxu0 0.0
        %4494 = vmatpush1.msra.mxu0 %v4460
        %4495 = vmatprep.subr.mxu0 0.0
        %4496 = vmatpush1.msra.mxu0 %v4461
        %4497 = vmatprep.subr.mxu0 0.0
        %4498 = vmatpush1.msra.mxu0 %v4462
        %4499 = vmatprep.subr.mxu0 0.0
        %4500 = vmatpush1.msra.mxu0 0.0
        %4501 = vmatprep.subr.mxu0 0.0
        %4502 = vmatpush1.msra.mxu0 0.0
        %4503 = vmatprep.subr.mxu0 0.0
        %4504 = vmatpush1.msra.mxu0 0.0
        %4505 = vmatprep.subr.mxu0 0.0
        %4506 = vmatpush1.msra.mxu0 0.0
        %4507 = vmatprep.subr.mxu0 0.0
        %4508 = vmatpush1.msra.mxu0 0.0
        %4509 = vmatprep.subr.mxu0 0.0
        %4510 = vmatpush1.msra.mxu0 0.0
        %4511 = vmatprep.subr.mxu0 0.0
        %4512 = vmatpush1.msra.mxu0 0.0
        %4513 = vmatprep.subr.mxu0 0.0
        %4514 = vmatpush1.msra.mxu0 0.0
        %4515 = vmatprep.subr.mxu0 0.0
        %4516 = vmatpush1.msra.mxu0 0.0
        %4517 = vmatprep.subr.mxu0 0.0
        %4518 = vmatpush1.msra.mxu0 0.0
        %4519 = vmatprep.subr.mxu0 0.0
        %4520 = vmatpush1.msra.mxu0 0.0
        %4521 = vmatprep.subr.mxu0 0.0
        %4522 = vmatpush1.msra.mxu0 0.0
        %4523 = vmatprep.subr.mxu0 0.0
        %4524 = vmatpush1.msra.mxu0 0.0
        %4525 = vmatprep.subr.mxu0 0.0
        %4526 = vmatpush1.msra.mxu0 0.0
        %4527 = vmatprep.subr.mxu0 0.0
        %4528 = vmatpush1.msra.mxu0 0.0
        %4529 = vmatprep.subr.mxu0 0.0
        %4530 = vmatpush1.msra.mxu0 0.0
        %4531 = vmatprep.subr.mxu0 0.0
        %4532 = vmatpush1.msra.mxu0 0.0
        %4533 = vmatprep.subr.mxu0 0.0
        %4534 = vmatpush1.msra.mxu0 0.0
        %4535 = vmatprep.subr.mxu0 0.0
        %4536 = vmatpush1.msra.mxu0 0.0
        %4537 = vmatprep.subr.mxu0 0.0
        %4538 = vmatpush1.msra.mxu0 0.0
        %4539 = vmatprep.mubr.f32.mxu0 0.0
        %4540 = vmatmul.mubr.f32.gmra.mrb[0].mxu0 %v4464
        %v4541 = vpop.f32.mrb[0].mxu0
        %v4542 = vadd.f32 0.0, %v4541
        %v4543 = vpop.f32.mrb[0].mxu0
        %4544 = vmatprep.mubr.f32.mxu0 0.0
        %4545 = vmatmul.mubr.f32.gmra.mrb[0].mxu0 %v4467
        %v4546 = vpop.f32.mrb[0].mxu0
        %v4547 = vadd.f32 0.0, %v4546
        %v4548 = vpop.f32.mrb[0].mxu0
        %4549 = vmatprep.mubr.f32.mxu0 0.0
        %4550 = vmatmul.mubr.f32.gmra.mrb[0].mxu0 %v4470
        %v4551 = vpop.f32.mrb[0].mxu0
        %v4552 = vadd.f32 0.0, %v4551
        %v4553 = vpop.f32.mrb[0].mxu0
        %4554 = vmatprep.mubr.f32.mxu0 0.0
        %4555 = vmatmul.mubr.f32.gmra.mrb[0].mxu0 %v4473
        %v4556 = vpop.f32.mrb[0].mxu0
        %v4557 = vadd.f32 0.0, %v4556
        %v4558 = vpop.f32.mrb[0].mxu0
        %4559 = vdwg.mxu0
        %v4560 = vadd.f32 %v4434, %v4542
        %v4561 = vadd.f32 %v4435, %v4547
        %v4562 = vadd.f32 %v4436, %v4552
        %v4563 = vadd.f32 %v4437, %v4557
        %s4564 = scalar_lea.vmem %s3, 672
        %v4565 = vld [vmem:[%s4564] sm:$0xf]
        %v4566 = vld [vmem:[%s4564 + $0x4] sm:$0xf]
        %v4567 = vld [vmem:[%s4564 + $0x8] sm:$0xf]
        %v4568 = vld [vmem:[%s4564 + $0xc] sm:$0xf]
        %v4569 = vld [vmem:[%s4564 + $0x10] sm:$0xf]
        %v4570 = vld [vmem:[%s4564 + $0x14] sm:$0xf]
        %v4571 = vld [vmem:[%s4564 + $0x18] sm:$0xf]
        %v4572 = vld [vmem:[%s4564 + $0x1c] sm:$0xf]
        %v4573 = vld [vmem:[%s4564 + $0x20] sm:$0xf]
        %v4574 = vld [vmem:[%s4564 + $0x24] sm:$0xf]
        %v4575 = vld [vmem:[%s4564 + $0x28] sm:$0xf]
        %v4576 = vld [vmem:[%s4564 + $0x2c] sm:$0xf]
        %v4577 = vunpack.c.l.bf16 %v4565
        %v4578 = vunpack.c.l.bf16 %v4566
        %v4579 = vunpack.c.l.bf16 %v4567
        %v4580 = vunpack.c.l.bf16 %v4568
        %v4581 = vunpack.c.l.bf16 %v4569
        %v4582 = vunpack.c.l.bf16 %v4570
        %v4583 = vunpack.c.l.bf16 %v4571
        %v4584 = vunpack.c.l.bf16 %v4572
        %v4585 = vunpack.c.l.bf16 %v4573
        %v4586 = vunpack.c.l.bf16 %v4574
        %v4587 = vunpack.c.l.bf16 %v4575
        %v4588 = vunpack.c.l.bf16 %v4576
        %v4590 = vsel %vm2857, %v2772, 0
        %v4593 = vsel %vm2857, %v2773, 0
        %v4596 = vsel %vm2857, %v2774, 0
        %v4599 = vsel %vm2857, %v2775, 0
        %4601 = vmatprep.subr.mxu0 0.0
        %4602 = vmatpush1.msra.mxu0 %v4577
        %4603 = vmatprep.subr.mxu0 0.0
        %4604 = vmatpush1.msra.mxu0 %v4578
        %4605 = vmatprep.subr.mxu0 0.0
        %4606 = vmatpush1.msra.mxu0 %v4579
        %4607 = vmatprep.subr.mxu0 0.0
        %4608 = vmatpush1.msra.mxu0 %v4580
        %4609 = vmatprep.subr.mxu0 0.0
        %4610 = vmatpush1.msra.mxu0 %v4581
        %4611 = vmatprep.subr.mxu0 0.0
        %4612 = vmatpush1.msra.mxu0 %v4582
        %4613 = vmatprep.subr.mxu0 0.0
        %4614 = vmatpush1.msra.mxu0 %v4583
        %4615 = vmatprep.subr.mxu0 0.0
        %4616 = vmatpush1.msra.mxu0 %v4584
        %4617 = vmatprep.subr.mxu0 0.0
        %4618 = vmatpush1.msra.mxu0 %v4585
        %4619 = vmatprep.subr.mxu0 0.0
        %4620 = vmatpush1.msra.mxu0 %v4586
        %4621 = vmatprep.subr.mxu0 0.0
        %4622 = vmatpush1.msra.mxu0 %v4587
        %4623 = vmatprep.subr.mxu0 0.0
        %4624 = vmatpush1.msra.mxu0 %v4588
        %4625 = vmatprep.subr.mxu0 0.0
        %4626 = vmatpush1.msra.mxu0 0.0
        %4627 = vmatprep.subr.mxu0 0.0
        %4628 = vmatpush1.msra.mxu0 0.0
        %4629 = vmatprep.subr.mxu0 0.0
        %4630 = vmatpush1.msra.mxu0 0.0
        %4631 = vmatprep.subr.mxu0 0.0
        %4632 = vmatpush1.msra.mxu0 0.0
        %4633 = vmatprep.subr.mxu0 0.0
        %4634 = vmatpush1.msra.mxu0 0.0
        %4635 = vmatprep.subr.mxu0 0.0
        %4636 = vmatpush1.msra.mxu0 0.0
        %4637 = vmatprep.subr.mxu0 0.0
        %4638 = vmatpush1.msra.mxu0 0.0
        %4639 = vmatprep.subr.mxu0 0.0
        %4640 = vmatpush1.msra.mxu0 0.0
        %4641 = vmatprep.subr.mxu0 0.0
        %4642 = vmatpush1.msra.mxu0 0.0
        %4643 = vmatprep.subr.mxu0 0.0
        %4644 = vmatpush1.msra.mxu0 0.0
        %4645 = vmatprep.subr.mxu0 0.0
        %4646 = vmatpush1.msra.mxu0 0.0
        %4647 = vmatprep.subr.mxu0 0.0
        %4648 = vmatpush1.msra.mxu0 0.0
        %4649 = vmatprep.subr.mxu0 0.0
        %4650 = vmatpush1.msra.mxu0 0.0
        %4651 = vmatprep.subr.mxu0 0.0
        %4652 = vmatpush1.msra.mxu0 0.0
        %4653 = vmatprep.subr.mxu0 0.0
        %4654 = vmatpush1.msra.mxu0 0.0
        %4655 = vmatprep.subr.mxu0 0.0
        %4656 = vmatpush1.msra.mxu0 0.0
        %4657 = vmatprep.subr.mxu0 0.0
        %4658 = vmatpush1.msra.mxu0 0.0
        %4659 = vmatprep.subr.mxu0 0.0
        %4660 = vmatpush1.msra.mxu0 0.0
        %4661 = vmatprep.subr.mxu0 0.0
        %4662 = vmatpush1.msra.mxu0 0.0
        %4663 = vmatprep.subr.mxu0 0.0
        %4664 = vmatpush1.msra.mxu0 0.0
        %4665 = vmatprep.mubr.f32.mxu0 0.0
        %4666 = vmatmul.mubr.f32.gmra.mrb[0].mxu0 %v4590
        %v4667 = vpop.f32.mrb[0].mxu0
        %v4668 = vadd.f32 0.0, %v4667
        %v4669 = vpop.f32.mrb[0].mxu0
        %4670 = vmatprep.mubr.f32.mxu0 0.0
        %4671 = vmatmul.mubr.f32.gmra.mrb[0].mxu0 %v4593
        %v4672 = vpop.f32.mrb[0].mxu0
        %v4673 = vadd.f32 0.0, %v4672
        %v4674 = vpop.f32.mrb[0].mxu0
        %4675 = vmatprep.mubr.f32.mxu0 0.0
        %4676 = vmatmul.mubr.f32.gmra.mrb[0].mxu0 %v4596
        %v4677 = vpop.f32.mrb[0].mxu0
        %v4678 = vadd.f32 0.0, %v4677
        %v4679 = vpop.f32.mrb[0].mxu0
        %4680 = vmatprep.mubr.f32.mxu0 0.0
        %4681 = vmatmul.mubr.f32.gmra.mrb[0].mxu0 %v4599
        %v4682 = vpop.f32.mrb[0].mxu0
        %v4683 = vadd.f32 0.0, %v4682
        %v4684 = vpop.f32.mrb[0].mxu0
        %4685 = vdwg.mxu0
        %v4686 = vadd.f32 %v4560, %v4668
        %v4687 = vadd.f32 %v4561, %v4673
        %v4688 = vadd.f32 %v4562, %v4678
        %v4689 = vadd.f32 %v4563, %v4683
        %s4690 = scalar_lea.vmem %s3, 720
        %v4691 = vld [vmem:[%s4690] sm:$0xf]
        %v4692 = vld [vmem:[%s4690 + $0x4] sm:$0xf]
        %v4693 = vld [vmem:[%s4690 + $0x8] sm:$0xf]
        %v4694 = vld [vmem:[%s4690 + $0xc] sm:$0xf]
        %v4695 = vld [vmem:[%s4690 + $0x10] sm:$0xf]
        %v4696 = vld [vmem:[%s4690 + $0x14] sm:$0xf]
        %v4697 = vld [vmem:[%s4690 + $0x18] sm:$0xf]
        %v4698 = vld [vmem:[%s4690 + $0x1c] sm:$0xf]
        %v4699 = vld [vmem:[%s4690 + $0x20] sm:$0xf]
        %v4700 = vld [vmem:[%s4690 + $0x24] sm:$0xf]
        %v4701 = vld [vmem:[%s4690 + $0x28] sm:$0xf]
        %v4702 = vld [vmem:[%s4690 + $0x2c] sm:$0xf]
        %v4703 = vunpack.c.l.bf16 %v4691
        %v4704 = vunpack.c.l.bf16 %v4692
        %v4705 = vunpack.c.l.bf16 %v4693
        %v4706 = vunpack.c.l.bf16 %v4694
        %v4707 = vunpack.c.l.bf16 %v4695
        %v4708 = vunpack.c.l.bf16 %v4696
        %v4709 = vunpack.c.l.bf16 %v4697
        %v4710 = vunpack.c.l.bf16 %v4698
        %v4711 = vunpack.c.l.bf16 %v4699
        %v4712 = vunpack.c.l.bf16 %v4700
        %v4713 = vunpack.c.l.bf16 %v4701
        %v4714 = vunpack.c.l.bf16 %v4702
        %v4716 = vsel %vm2857, %v2776, 0
        %v4719 = vsel %vm2857, %v2777, 0
        %v4722 = vsel %vm2857, %v2778, 0
        %v4725 = vsel %vm2857, %v2779, 0
        %4727 = vmatprep.subr.mxu0 0.0
        %4728 = vmatpush1.msra.mxu0 %v4703
        %4729 = vmatprep.subr.mxu0 0.0
        %4730 = vmatpush1.msra.mxu0 %v4704
        %4731 = vmatprep.subr.mxu0 0.0
        %4732 = vmatpush1.msra.mxu0 %v4705
        %4733 = vmatprep.subr.mxu0 0.0
        %4734 = vmatpush1.msra.mxu0 %v4706
        %4735 = vmatprep.subr.mxu0 0.0
        %4736 = vmatpush1.msra.mxu0 %v4707
        %4737 = vmatprep.subr.mxu0 0.0
        %4738 = vmatpush1.msra.mxu0 %v4708
        %4739 = vmatprep.subr.mxu0 0.0
        %4740 = vmatpush1.msra.mxu0 %v4709
        %4741 = vmatprep.subr.mxu0 0.0
        %4742 = vmatpush1.msra.mxu0 %v4710
        %4743 = vmatprep.subr.mxu0 0.0
        %4744 = vmatpush1.msra.mxu0 %v4711
        %4745 = vmatprep.subr.mxu0 0.0
        %4746 = vmatpush1.msra.mxu0 %v4712
        %4747 = vmatprep.subr.mxu0 0.0
        %4748 = vmatpush1.msra.mxu0 %v4713
        %4749 = vmatprep.subr.mxu0 0.0
        %4750 = vmatpush1.msra.mxu0 %v4714
        %4751 = vmatprep.subr.mxu0 0.0
        %4752 = vmatpush1.msra.mxu0 0.0
        %4753 = vmatprep.subr.mxu0 0.0
        %4754 = vmatpush1.msra.mxu0 0.0
        %4755 = vmatprep.subr.mxu0 0.0
        %4756 = vmatpush1.msra.mxu0 0.0
        %4757 = vmatprep.subr.mxu0 0.0
        %4758 = vmatpush1.msra.mxu0 0.0
        %4759 = vmatprep.subr.mxu0 0.0
        %4760 = vmatpush1.msra.mxu0 0.0
        %4761 = vmatprep.subr.mxu0 0.0
        %4762 = vmatpush1.msra.mxu0 0.0
        %4763 = vmatprep.subr.mxu0 0.0
        %4764 = vmatpush1.msra.mxu0 0.0
        %4765 = vmatprep.subr.mxu0 0.0
        %4766 = vmatpush1.msra.mxu0 0.0
        %4767 = vmatprep.subr.mxu0 0.0
        %4768 = vmatpush1.msra.mxu0 0.0
        %4769 = vmatprep.subr.mxu0 0.0
        %4770 = vmatpush1.msra.mxu0 0.0
        %4771 = vmatprep.subr.mxu0 0.0
        %4772 = vmatpush1.msra.mxu0 0.0
        %4773 = vmatprep.subr.mxu0 0.0
        %4774 = vmatpush1.msra.mxu0 0.0
        %4775 = vmatprep.subr.mxu0 0.0
        %4776 = vmatpush1.msra.mxu0 0.0
        %4777 = vmatprep.subr.mxu0 0.0
        %4778 = vmatpush1.msra.mxu0 0.0
        %4779 = vmatprep.subr.mxu0 0.0
        %4780 = vmatpush1.msra.mxu0 0.0
        %4781 = vmatprep.subr.mxu0 0.0
        %4782 = vmatpush1.msra.mxu0 0.0
        %4783 = vmatprep.subr.mxu0 0.0
        %4784 = vmatpush1.msra.mxu0 0.0
        %4785 = vmatprep.subr.mxu0 0.0
        %4786 = vmatpush1.msra.mxu0 0.0
        %4787 = vmatprep.subr.mxu0 0.0
        %4788 = vmatpush1.msra.mxu0 0.0
        %4789 = vmatprep.subr.mxu0 0.0
        %4790 = vmatpush1.msra.mxu0 0.0
        %4791 = vmatprep.mubr.f32.mxu0 0.0
        %4792 = vmatmul.mubr.f32.gmra.mrb[0].mxu0 %v4716
        %v4793 = vpop.f32.mrb[0].mxu0
        %v4794 = vadd.f32 0.0, %v4793
        %v4795 = vpop.f32.mrb[0].mxu0
        %4796 = vmatprep.mubr.f32.mxu0 0.0
        %4797 = vmatmul.mubr.f32.gmra.mrb[0].mxu0 %v4719
        %v4798 = vpop.f32.mrb[0].mxu0
        %v4799 = vadd.f32 0.0, %v4798
        %v4800 = vpop.f32.mrb[0].mxu0
        %4801 = vmatprep.mubr.f32.mxu0 0.0
        %4802 = vmatmul.mubr.f32.gmra.mrb[0].mxu0 %v4722
        %v4803 = vpop.f32.mrb[0].mxu0
        %v4804 = vadd.f32 0.0, %v4803
        %v4805 = vpop.f32.mrb[0].mxu0
        %4806 = vmatprep.mubr.f32.mxu0 0.0
        %4807 = vmatmul.mubr.f32.gmra.mrb[0].mxu0 %v4725
        %v4808 = vpop.f32.mrb[0].mxu0
        %v4809 = vadd.f32 0.0, %v4808
        %v4810 = vpop.f32.mrb[0].mxu0
        %4811 = vdwg.mxu0
        %v4812 = vadd.f32 %v4686, %v4794
        %v4813 = vadd.f32 %v4687, %v4799
        %v4814 = vadd.f32 %v4688, %v4804
        %v4815 = vadd.f32 %v4689, %v4809
        %s4816 = scalar_lea.vmem %s3, 768
        %v4817 = vld [vmem:[%s4816] sm:$0xf]
        %v4818 = vld [vmem:[%s4816 + $0x4] sm:$0xf]
        %v4819 = vld [vmem:[%s4816 + $0x8] sm:$0xf]
        %v4820 = vld [vmem:[%s4816 + $0xc] sm:$0xf]
        %v4821 = vld [vmem:[%s4816 + $0x10] sm:$0xf]
        %v4822 = vld [vmem:[%s4816 + $0x14] sm:$0xf]
        %v4823 = vld [vmem:[%s4816 + $0x18] sm:$0xf]
        %v4824 = vld [vmem:[%s4816 + $0x1c] sm:$0xf]
        %v4825 = vld [vmem:[%s4816 + $0x20] sm:$0xf]
        %v4826 = vld [vmem:[%s4816 + $0x24] sm:$0xf]
        %v4827 = vld [vmem:[%s4816 + $0x28] sm:$0xf]
        %v4828 = vld [vmem:[%s4816 + $0x2c] sm:$0xf]
        %v4829 = vunpack.c.l.bf16 %v4817
        %v4830 = vunpack.c.l.bf16 %v4818
        %v4831 = vunpack.c.l.bf16 %v4819
        %v4832 = vunpack.c.l.bf16 %v4820
        %v4833 = vunpack.c.l.bf16 %v4821
        %v4834 = vunpack.c.l.bf16 %v4822
        %v4835 = vunpack.c.l.bf16 %v4823
        %v4836 = vunpack.c.l.bf16 %v4824
        %v4837 = vunpack.c.l.bf16 %v4825
        %v4838 = vunpack.c.l.bf16 %v4826
        %v4839 = vunpack.c.l.bf16 %v4827
        %v4840 = vunpack.c.l.bf16 %v4828
        %v4842 = vsel %vm2857, %v2780, 0
        %v4845 = vsel %vm2857, %v2781, 0
        %v4848 = vsel %vm2857, %v2782, 0
        %v4851 = vsel %vm2857, %v2783, 0
        %4853 = vmatprep.subr.mxu0 0.0
        %4854 = vmatpush1.msra.mxu0 %v4829
        %4855 = vmatprep.subr.mxu0 0.0
        %4856 = vmatpush1.msra.mxu0 %v4830
        %4857 = vmatprep.subr.mxu0 0.0
        %4858 = vmatpush1.msra.mxu0 %v4831
        %4859 = vmatprep.subr.mxu0 0.0
        %4860 = vmatpush1.msra.mxu0 %v4832
        %4861 = vmatprep.subr.mxu0 0.0
        %4862 = vmatpush1.msra.mxu0 %v4833
        %4863 = vmatprep.subr.mxu0 0.0
        %4864 = vmatpush1.msra.mxu0 %v4834
        %4865 = vmatprep.subr.mxu0 0.0
        %4866 = vmatpush1.msra.mxu0 %v4835
        %4867 = vmatprep.subr.mxu0 0.0
        %4868 = vmatpush1.msra.mxu0 %v4836
        %4869 = vmatprep.subr.mxu0 0.0
        %4870 = vmatpush1.msra.mxu0 %v4837
        %4871 = vmatprep.subr.mxu0 0.0
        %4872 = vmatpush1.msra.mxu0 %v4838
        %4873 = vmatprep.subr.mxu0 0.0
        %4874 = vmatpush1.msra.mxu0 %v4839
        %4875 = vmatprep.subr.mxu0 0.0
        %4876 = vmatpush1.msra.mxu0 %v4840
        %4877 = vmatprep.subr.mxu0 0.0
        %4878 = vmatpush1.msra.mxu0 0.0
        %4879 = vmatprep.subr.mxu0 0.0
        %4880 = vmatpush1.msra.mxu0 0.0
        %4881 = vmatprep.subr.mxu0 0.0
        %4882 = vmatpush1.msra.mxu0 0.0
        %4883 = vmatprep.subr.mxu0 0.0
        %4884 = vmatpush1.msra.mxu0 0.0
        %4885 = vmatprep.subr.mxu0 0.0
        %4886 = vmatpush1.msra.mxu0 0.0
        %4887 = vmatprep.subr.mxu0 0.0
        %4888 = vmatpush1.msra.mxu0 0.0
        %4889 = vmatprep.subr.mxu0 0.0
        %4890 = vmatpush1.msra.mxu0 0.0
        %4891 = vmatprep.subr.mxu0 0.0
        %4892 = vmatpush1.msra.mxu0 0.0
        %4893 = vmatprep.subr.mxu0 0.0
        %4894 = vmatpush1.msra.mxu0 0.0
        %4895 = vmatprep.subr.mxu0 0.0
        %4896 = vmatpush1.msra.mxu0 0.0
        %4897 = vmatprep.subr.mxu0 0.0
        %4898 = vmatpush1.msra.mxu0 0.0
        %4899 = vmatprep.subr.mxu0 0.0
        %4900 = vmatpush1.msra.mxu0 0.0
        %4901 = vmatprep.subr.mxu0 0.0
        %4902 = vmatpush1.msra.mxu0 0.0
        %4903 = vmatprep.subr.mxu0 0.0
        %4904 = vmatpush1.msra.mxu0 0.0
        %4905 = vmatprep.subr.mxu0 0.0
        %4906 = vmatpush1.msra.mxu0 0.0
        %4907 = vmatprep.subr.mxu0 0.0
        %4908 = vmatpush1.msra.mxu0 0.0
        %4909 = vmatprep.subr.mxu0 0.0
        %4910 = vmatpush1.msra.mxu0 0.0
        %4911 = vmatprep.subr.mxu0 0.0
        %4912 = vmatpush1.msra.mxu0 0.0
        %4913 = vmatprep.subr.mxu0 0.0
        %4914 = vmatpush1.msra.mxu0 0.0
        %4915 = vmatprep.subr.mxu0 0.0
        %4916 = vmatpush1.msra.mxu0 0.0
        %4917 = vmatprep.mubr.f32.mxu0 0.0
        %4918 = vmatmul.mubr.f32.gmra.mrb[0].mxu0 %v4842
        %v4919 = vpop.f32.mrb[0].mxu0
        %v4920 = vadd.f32 0.0, %v4919
        %v4921 = vpop.f32.mrb[0].mxu0
        %4922 = vmatprep.mubr.f32.mxu0 0.0
        %4923 = vmatmul.mubr.f32.gmra.mrb[0].mxu0 %v4845
        %v4924 = vpop.f32.mrb[0].mxu0
        %v4925 = vadd.f32 0.0, %v4924
        %v4926 = vpop.f32.mrb[0].mxu0
        %4927 = vmatprep.mubr.f32.mxu0 0.0
        %4928 = vmatmul.mubr.f32.gmra.mrb[0].mxu0 %v4848
        %v4929 = vpop.f32.mrb[0].mxu0
        %v4930 = vadd.f32 0.0, %v4929
        %v4931 = vpop.f32.mrb[0].mxu0
        %4932 = vmatprep.mubr.f32.mxu0 0.0
        %4933 = vmatmul.mubr.f32.gmra.mrb[0].mxu0 %v4851
        %v4934 = vpop.f32.mrb[0].mxu0
        %v4935 = vadd.f32 0.0, %v4934
        %v4936 = vpop.f32.mrb[0].mxu0
        %4937 = vdwg.mxu0
        %v4938 = vadd.f32 %v4812, %v4920
        %v4939 = vadd.f32 %v4813, %v4925
        %v4940 = vadd.f32 %v4814, %v4930
        %v4941 = vadd.f32 %v4815, %v4935
        %s4942 = scalar_lea.vmem %s3, 816
        %v4943 = vld [vmem:[%s4942] sm:$0xf]
        %v4944 = vld [vmem:[%s4942 + $0x4] sm:$0xf]
        %v4945 = vld [vmem:[%s4942 + $0x8] sm:$0xf]
        %v4946 = vld [vmem:[%s4942 + $0xc] sm:$0xf]
        %v4947 = vld [vmem:[%s4942 + $0x10] sm:$0xf]
        %v4948 = vld [vmem:[%s4942 + $0x14] sm:$0xf]
        %v4949 = vld [vmem:[%s4942 + $0x18] sm:$0xf]
        %v4950 = vld [vmem:[%s4942 + $0x1c] sm:$0xf]
        %v4951 = vld [vmem:[%s4942 + $0x20] sm:$0xf]
        %v4952 = vld [vmem:[%s4942 + $0x24] sm:$0xf]
        %v4953 = vld [vmem:[%s4942 + $0x28] sm:$0xf]
        %v4954 = vld [vmem:[%s4942 + $0x2c] sm:$0xf]
        %v4955 = vunpack.c.l.bf16 %v4943
        %v4956 = vunpack.c.l.bf16 %v4944
        %v4957 = vunpack.c.l.bf16 %v4945
        %v4958 = vunpack.c.l.bf16 %v4946
        %v4959 = vunpack.c.l.bf16 %v4947
        %v4960 = vunpack.c.l.bf16 %v4948
        %v4961 = vunpack.c.l.bf16 %v4949
        %v4962 = vunpack.c.l.bf16 %v4950
        %v4963 = vunpack.c.l.bf16 %v4951
        %v4964 = vunpack.c.l.bf16 %v4952
        %v4965 = vunpack.c.l.bf16 %v4953
        %v4966 = vunpack.c.l.bf16 %v4954
        %v4968 = vsel %vm2857, %v2784, 0
        %v4971 = vsel %vm2857, %v2785, 0
        %v4974 = vsel %vm2857, %v2786, 0
        %v4977 = vsel %vm2857, %v2787, 0
        %4979 = vmatprep.subr.mxu0 0.0
        %4980 = vmatpush1.msra.mxu0 %v4955
        %4981 = vmatprep.subr.mxu0 0.0
        %4982 = vmatpush1.msra.mxu0 %v4956
        %4983 = vmatprep.subr.mxu0 0.0
        %4984 = vmatpush1.msra.mxu0 %v4957
        %4985 = vmatprep.subr.mxu0 0.0
        %4986 = vmatpush1.msra.mxu0 %v4958
        %4987 = vmatprep.subr.mxu0 0.0
        %4988 = vmatpush1.msra.mxu0 %v4959
        %4989 = vmatprep.subr.mxu0 0.0
        %4990 = vmatpush1.msra.mxu0 %v4960
        %4991 = vmatprep.subr.mxu0 0.0
        %4992 = vmatpush1.msra.mxu0 %v4961
        %4993 = vmatprep.subr.mxu0 0.0
        %4994 = vmatpush1.msra.mxu0 %v4962
        %4995 = vmatprep.subr.mxu0 0.0
        %4996 = vmatpush1.msra.mxu0 %v4963
        %4997 = vmatprep.subr.mxu0 0.0
        %4998 = vmatpush1.msra.mxu0 %v4964
        %4999 = vmatprep.subr.mxu0 0.0
        %5000 = vmatpush1.msra.mxu0 %v4965
        %5001 = vmatprep.subr.mxu0 0.0
        %5002 = vmatpush1.msra.mxu0 %v4966
        %5003 = vmatprep.subr.mxu0 0.0
        %5004 = vmatpush1.msra.mxu0 0.0
        %5005 = vmatprep.subr.mxu0 0.0
        %5006 = vmatpush1.msra.mxu0 0.0
        %5007 = vmatprep.subr.mxu0 0.0
        %5008 = vmatpush1.msra.mxu0 0.0
        %5009 = vmatprep.subr.mxu0 0.0
        %5010 = vmatpush1.msra.mxu0 0.0
        %5011 = vmatprep.subr.mxu0 0.0
        %5012 = vmatpush1.msra.mxu0 0.0
        %5013 = vmatprep.subr.mxu0 0.0
        %5014 = vmatpush1.msra.mxu0 0.0
        %5015 = vmatprep.subr.mxu0 0.0
        %5016 = vmatpush1.msra.mxu0 0.0
        %5017 = vmatprep.subr.mxu0 0.0
        %5018 = vmatpush1.msra.mxu0 0.0
        %5019 = vmatprep.subr.mxu0 0.0
        %5020 = vmatpush1.msra.mxu0 0.0
        %5021 = vmatprep.subr.mxu0 0.0
        %5022 = vmatpush1.msra.mxu0 0.0
        %5023 = vmatprep.subr.mxu0 0.0
        %5024 = vmatpush1.msra.mxu0 0.0
        %5025 = vmatprep.subr.mxu0 0.0
        %5026 = vmatpush1.msra.mxu0 0.0
        %5027 = vmatprep.subr.mxu0 0.0
        %5028 = vmatpush1.msra.mxu0 0.0
        %5029 = vmatprep.subr.mxu0 0.0
        %5030 = vmatpush1.msra.mxu0 0.0
        %5031 = vmatprep.subr.mxu0 0.0
        %5032 = vmatpush1.msra.mxu0 0.0
        %5033 = vmatprep.subr.mxu0 0.0
        %5034 = vmatpush1.msra.mxu0 0.0
        %5035 = vmatprep.subr.mxu0 0.0
        %5036 = vmatpush1.msra.mxu0 0.0
        %5037 = vmatprep.subr.mxu0 0.0
        %5038 = vmatpush1.msra.mxu0 0.0
        %5039 = vmatprep.subr.mxu0 0.0
        %5040 = vmatpush1.msra.mxu0 0.0
        %5041 = vmatprep.subr.mxu0 0.0
        %5042 = vmatpush1.msra.mxu0 0.0
        %5043 = vmatprep.mubr.f32.mxu0 0.0
        %5044 = vmatmul.mubr.f32.gmra.mrb[0].mxu0 %v4968
        %v5045 = vpop.f32.mrb[0].mxu0
        %v5046 = vadd.f32 0.0, %v5045
        %v5047 = vpop.f32.mrb[0].mxu0
        %5048 = vmatprep.mubr.f32.mxu0 0.0
        %5049 = vmatmul.mubr.f32.gmra.mrb[0].mxu0 %v4971
        %v5050 = vpop.f32.mrb[0].mxu0
        %v5051 = vadd.f32 0.0, %v5050
        %v5052 = vpop.f32.mrb[0].mxu0
        %5053 = vmatprep.mubr.f32.mxu0 0.0
        %5054 = vmatmul.mubr.f32.gmra.mrb[0].mxu0 %v4974
        %v5055 = vpop.f32.mrb[0].mxu0
        %v5056 = vadd.f32 0.0, %v5055
        %v5057 = vpop.f32.mrb[0].mxu0
        %5058 = vmatprep.mubr.f32.mxu0 0.0
        %5059 = vmatmul.mubr.f32.gmra.mrb[0].mxu0 %v4977
        %v5060 = vpop.f32.mrb[0].mxu0
        %v5061 = vadd.f32 0.0, %v5060
        %v5062 = vpop.f32.mrb[0].mxu0
        %5063 = vdwg.mxu0
        %v5064 = vadd.f32 %v4938, %v5046
        %v5065 = vadd.f32 %v4939, %v5051
        %v5066 = vadd.f32 %v4940, %v5056
        %v5067 = vadd.f32 %v4941, %v5061
        %s5068 = scalar_lea.vmem %s3, 864
        %v5069 = vld [vmem:[%s5068] sm:$0xf]
        %v5070 = vld [vmem:[%s5068 + $0x4] sm:$0xf]
        %v5071 = vld [vmem:[%s5068 + $0x8] sm:$0xf]
        %v5072 = vld [vmem:[%s5068 + $0xc] sm:$0xf]
        %v5073 = vld [vmem:[%s5068 + $0x10] sm:$0xf]
        %v5074 = vld [vmem:[%s5068 + $0x14] sm:$0xf]
        %v5075 = vld [vmem:[%s5068 + $0x18] sm:$0xf]
        %v5076 = vld [vmem:[%s5068 + $0x1c] sm:$0xf]
        %v5077 = vld [vmem:[%s5068 + $0x20] sm:$0xf]
        %v5078 = vld [vmem:[%s5068 + $0x24] sm:$0xf]
        %v5079 = vld [vmem:[%s5068 + $0x28] sm:$0xf]
        %v5080 = vld [vmem:[%s5068 + $0x2c] sm:$0xf]
        %v5081 = vunpack.c.l.bf16 %v5069
        %v5082 = vunpack.c.l.bf16 %v5070
        %v5083 = vunpack.c.l.bf16 %v5071
        %v5084 = vunpack.c.l.bf16 %v5072
        %v5085 = vunpack.c.l.bf16 %v5073
        %v5086 = vunpack.c.l.bf16 %v5074
        %v5087 = vunpack.c.l.bf16 %v5075
        %v5088 = vunpack.c.l.bf16 %v5076
        %v5089 = vunpack.c.l.bf16 %v5077
        %v5090 = vunpack.c.l.bf16 %v5078
        %v5091 = vunpack.c.l.bf16 %v5079
        %v5092 = vunpack.c.l.bf16 %v5080
        %v5094 = vsel %vm2857, %v2788, 0
        %v5097 = vsel %vm2857, %v2789, 0
        %v5100 = vsel %vm2857, %v2790, 0
        %v5103 = vsel %vm2857, %v2791, 0
        %5105 = vmatprep.subr.mxu0 0.0
        %5106 = vmatpush1.msra.mxu0 %v5081
        %5107 = vmatprep.subr.mxu0 0.0
        %5108 = vmatpush1.msra.mxu0 %v5082
        %5109 = vmatprep.subr.mxu0 0.0
        %5110 = vmatpush1.msra.mxu0 %v5083
        %5111 = vmatprep.subr.mxu0 0.0
        %5112 = vmatpush1.msra.mxu0 %v5084
        %5113 = vmatprep.subr.mxu0 0.0
        %5114 = vmatpush1.msra.mxu0 %v5085
        %5115 = vmatprep.subr.mxu0 0.0
        %5116 = vmatpush1.msra.mxu0 %v5086
        %5117 = vmatprep.subr.mxu0 0.0
        %5118 = vmatpush1.msra.mxu0 %v5087
        %5119 = vmatprep.subr.mxu0 0.0
        %5120 = vmatpush1.msra.mxu0 %v5088
        %5121 = vmatprep.subr.mxu0 0.0
        %5122 = vmatpush1.msra.mxu0 %v5089
        %5123 = vmatprep.subr.mxu0 0.0
        %5124 = vmatpush1.msra.mxu0 %v5090
        %5125 = vmatprep.subr.mxu0 0.0
        %5126 = vmatpush1.msra.mxu0 %v5091
        %5127 = vmatprep.subr.mxu0 0.0
        %5128 = vmatpush1.msra.mxu0 %v5092
        %5129 = vmatprep.subr.mxu0 0.0
        %5130 = vmatpush1.msra.mxu0 0.0
        %5131 = vmatprep.subr.mxu0 0.0
        %5132 = vmatpush1.msra.mxu0 0.0
        %5133 = vmatprep.subr.mxu0 0.0
        %5134 = vmatpush1.msra.mxu0 0.0
        %5135 = vmatprep.subr.mxu0 0.0
        %5136 = vmatpush1.msra.mxu0 0.0
        %5137 = vmatprep.subr.mxu0 0.0
        %5138 = vmatpush1.msra.mxu0 0.0
        %5139 = vmatprep.subr.mxu0 0.0
        %5140 = vmatpush1.msra.mxu0 0.0
        %5141 = vmatprep.subr.mxu0 0.0
        %5142 = vmatpush1.msra.mxu0 0.0
        %5143 = vmatprep.subr.mxu0 0.0
        %5144 = vmatpush1.msra.mxu0 0.0
        %5145 = vmatprep.subr.mxu0 0.0
        %5146 = vmatpush1.msra.mxu0 0.0
        %5147 = vmatprep.subr.mxu0 0.0
        %5148 = vmatpush1.msra.mxu0 0.0
        %5149 = vmatprep.subr.mxu0 0.0
        %5150 = vmatpush1.msra.mxu0 0.0
        %5151 = vmatprep.subr.mxu0 0.0
        %5152 = vmatpush1.msra.mxu0 0.0
        %5153 = vmatprep.subr.mxu0 0.0
        %5154 = vmatpush1.msra.mxu0 0.0
        %5155 = vmatprep.subr.mxu0 0.0
        %5156 = vmatpush1.msra.mxu0 0.0
        %5157 = vmatprep.subr.mxu0 0.0
        %5158 = vmatpush1.msra.mxu0 0.0
        %5159 = vmatprep.subr.mxu0 0.0
        %5160 = vmatpush1.msra.mxu0 0.0
        %5161 = vmatprep.subr.mxu0 0.0
        %5162 = vmatpush1.msra.mxu0 0.0
        %5163 = vmatprep.subr.mxu0 0.0
        %5164 = vmatpush1.msra.mxu0 0.0
        %5165 = vmatprep.subr.mxu0 0.0
        %5166 = vmatpush1.msra.mxu0 0.0
        %5167 = vmatprep.subr.mxu0 0.0
        %5168 = vmatpush1.msra.mxu0 0.0
        %5169 = vmatprep.mubr.f32.mxu0 0.0
        %5170 = vmatmul.mubr.f32.gmra.mrb[0].mxu0 %v5094
        %v5171 = vpop.f32.mrb[0].mxu0
        %v5172 = vadd.f32 0.0, %v5171
        %v5173 = vpop.f32.mrb[0].mxu0
        %5174 = vmatprep.mubr.f32.mxu0 0.0
        %5175 = vmatmul.mubr.f32.gmra.mrb[0].mxu0 %v5097
        %v5176 = vpop.f32.mrb[0].mxu0
        %v5177 = vadd.f32 0.0, %v5176
        %v5178 = vpop.f32.mrb[0].mxu0
        %5179 = vmatprep.mubr.f32.mxu0 0.0
        %5180 = vmatmul.mubr.f32.gmra.mrb[0].mxu0 %v5100
        %v5181 = vpop.f32.mrb[0].mxu0
        %v5182 = vadd.f32 0.0, %v5181
        %v5183 = vpop.f32.mrb[0].mxu0
        %5184 = vmatprep.mubr.f32.mxu0 0.0
        %5185 = vmatmul.mubr.f32.gmra.mrb[0].mxu0 %v5103
        %v5186 = vpop.f32.mrb[0].mxu0
        %v5187 = vadd.f32 0.0, %v5186
        %v5188 = vpop.f32.mrb[0].mxu0
        %5189 = vdwg.mxu0
        %v5190 = vadd.f32 %v5064, %v5172
        %v5191 = vadd.f32 %v5065, %v5177
        %v5192 = vadd.f32 %v5066, %v5182
        %v5193 = vadd.f32 %v5067, %v5187
        %s5194 = scalar_lea.vmem %s3, 912
        %v5195 = vld [vmem:[%s5194] sm:$0xf]
        %v5196 = vld [vmem:[%s5194 + $0x4] sm:$0xf]
        %v5197 = vld [vmem:[%s5194 + $0x8] sm:$0xf]
        %v5198 = vld [vmem:[%s5194 + $0xc] sm:$0xf]
        %v5199 = vld [vmem:[%s5194 + $0x10] sm:$0xf]
        %v5200 = vld [vmem:[%s5194 + $0x14] sm:$0xf]
        %v5201 = vld [vmem:[%s5194 + $0x18] sm:$0xf]
        %v5202 = vld [vmem:[%s5194 + $0x1c] sm:$0xf]
        %v5203 = vld [vmem:[%s5194 + $0x20] sm:$0xf]
        %v5204 = vld [vmem:[%s5194 + $0x24] sm:$0xf]
        %v5205 = vld [vmem:[%s5194 + $0x28] sm:$0xf]
        %v5206 = vld [vmem:[%s5194 + $0x2c] sm:$0xf]
        %v5207 = vunpack.c.l.bf16 %v5195
        %v5208 = vunpack.c.l.bf16 %v5196
        %v5209 = vunpack.c.l.bf16 %v5197
        %v5210 = vunpack.c.l.bf16 %v5198
        %v5211 = vunpack.c.l.bf16 %v5199
        %v5212 = vunpack.c.l.bf16 %v5200
        %v5213 = vunpack.c.l.bf16 %v5201
        %v5214 = vunpack.c.l.bf16 %v5202
        %v5215 = vunpack.c.l.bf16 %v5203
        %v5216 = vunpack.c.l.bf16 %v5204
        %v5217 = vunpack.c.l.bf16 %v5205
        %v5218 = vunpack.c.l.bf16 %v5206
        %v5220 = vsel %vm2857, %v2792, 0
        %v5223 = vsel %vm2857, %v2793, 0
        %v5226 = vsel %vm2857, %v2794, 0
        %v5229 = vsel %vm2857, %v2795, 0
        %5231 = vmatprep.subr.mxu0 0.0
        %5232 = vmatpush1.msra.mxu0 %v5207
        %5233 = vmatprep.subr.mxu0 0.0
        %5234 = vmatpush1.msra.mxu0 %v5208
        %5235 = vmatprep.subr.mxu0 0.0
        %5236 = vmatpush1.msra.mxu0 %v5209
        %5237 = vmatprep.subr.mxu0 0.0
        %5238 = vmatpush1.msra.mxu0 %v5210
        %5239 = vmatprep.subr.mxu0 0.0
        %5240 = vmatpush1.msra.mxu0 %v5211
        %5241 = vmatprep.subr.mxu0 0.0
        %5242 = vmatpush1.msra.mxu0 %v5212
        %5243 = vmatprep.subr.mxu0 0.0
        %5244 = vmatpush1.msra.mxu0 %v5213
        %5245 = vmatprep.subr.mxu0 0.0
        %5246 = vmatpush1.msra.mxu0 %v5214
        %5247 = vmatprep.subr.mxu0 0.0
        %5248 = vmatpush1.msra.mxu0 %v5215
        %5249 = vmatprep.subr.mxu0 0.0
        %5250 = vmatpush1.msra.mxu0 %v5216
        %5251 = vmatprep.subr.mxu0 0.0
        %5252 = vmatpush1.msra.mxu0 %v5217
        %5253 = vmatprep.subr.mxu0 0.0
        %5254 = vmatpush1.msra.mxu0 %v5218
        %5255 = vmatprep.subr.mxu0 0.0
        %5256 = vmatpush1.msra.mxu0 0.0
        %5257 = vmatprep.subr.mxu0 0.0
        %5258 = vmatpush1.msra.mxu0 0.0
        %5259 = vmatprep.subr.mxu0 0.0
        %5260 = vmatpush1.msra.mxu0 0.0
        %5261 = vmatprep.subr.mxu0 0.0
        %5262 = vmatpush1.msra.mxu0 0.0
        %5263 = vmatprep.subr.mxu0 0.0
        %5264 = vmatpush1.msra.mxu0 0.0
        %5265 = vmatprep.subr.mxu0 0.0
        %5266 = vmatpush1.msra.mxu0 0.0
        %5267 = vmatprep.subr.mxu0 0.0
        %5268 = vmatpush1.msra.mxu0 0.0
        %5269 = vmatprep.subr.mxu0 0.0
        %5270 = vmatpush1.msra.mxu0 0.0
        %5271 = vmatprep.subr.mxu0 0.0
        %5272 = vmatpush1.msra.mxu0 0.0
        %5273 = vmatprep.subr.mxu0 0.0
        %5274 = vmatpush1.msra.mxu0 0.0
        %5275 = vmatprep.subr.mxu0 0.0
        %5276 = vmatpush1.msra.mxu0 0.0
        %5277 = vmatprep.subr.mxu0 0.0
        %5278 = vmatpush1.msra.mxu0 0.0
        %5279 = vmatprep.subr.mxu0 0.0
        %5280 = vmatpush1.msra.mxu0 0.0
        %5281 = vmatprep.subr.mxu0 0.0
        %5282 = vmatpush1.msra.mxu0 0.0
        %5283 = vmatprep.subr.mxu0 0.0
        %5284 = vmatpush1.msra.mxu0 0.0
        %5285 = vmatprep.subr.mxu0 0.0
        %5286 = vmatpush1.msra.mxu0 0.0
        %5287 = vmatprep.subr.mxu0 0.0
        %5288 = vmatpush1.msra.mxu0 0.0
        %5289 = vmatprep.subr.mxu0 0.0
        %5290 = vmatpush1.msra.mxu0 0.0
        %5291 = vmatprep.subr.mxu0 0.0
        %5292 = vmatpush1.msra.mxu0 0.0
        %5293 = vmatprep.subr.mxu0 0.0
        %5294 = vmatpush1.msra.mxu0 0.0
        %5295 = vmatprep.mubr.f32.mxu0 0.0
        %5296 = vmatmul.mubr.f32.gmra.mrb[0].mxu0 %v5220
        %v5297 = vpop.f32.mrb[0].mxu0
        %v5298 = vadd.f32 0.0, %v5297
        %v5299 = vpop.f32.mrb[0].mxu0
        %5300 = vmatprep.mubr.f32.mxu0 0.0
        %5301 = vmatmul.mubr.f32.gmra.mrb[0].mxu0 %v5223
        %v5302 = vpop.f32.mrb[0].mxu0
        %v5303 = vadd.f32 0.0, %v5302
        %v5304 = vpop.f32.mrb[0].mxu0
        %5305 = vmatprep.mubr.f32.mxu0 0.0
        %5306 = vmatmul.mubr.f32.gmra.mrb[0].mxu0 %v5226
        %v5307 = vpop.f32.mrb[0].mxu0
        %v5308 = vadd.f32 0.0, %v5307
        %v5309 = vpop.f32.mrb[0].mxu0
        %5310 = vmatprep.mubr.f32.mxu0 0.0
        %5311 = vmatmul.mubr.f32.gmra.mrb[0].mxu0 %v5229
        %v5312 = vpop.f32.mrb[0].mxu0
        %v5313 = vadd.f32 0.0, %v5312
        %v5314 = vpop.f32.mrb[0].mxu0
        %5315 = vdwg.mxu0
        %v5316 = vadd.f32 %v5190, %v5298
        %v5317 = vadd.f32 %v5191, %v5303
        %v5318 = vadd.f32 %v5192, %v5308
        %v5319 = vadd.f32 %v5193, %v5313
        %s5320 = scalar_lea.vmem %s3, 960
        %v5321 = vld [vmem:[%s5320] sm:$0xf]
        %v5322 = vld [vmem:[%s5320 + $0x4] sm:$0xf]
        %v5323 = vld [vmem:[%s5320 + $0x8] sm:$0xf]
        %v5324 = vld [vmem:[%s5320 + $0xc] sm:$0xf]
        %v5325 = vld [vmem:[%s5320 + $0x10] sm:$0xf]
        %v5326 = vld [vmem:[%s5320 + $0x14] sm:$0xf]
        %v5327 = vld [vmem:[%s5320 + $0x18] sm:$0xf]
        %v5328 = vld [vmem:[%s5320 + $0x1c] sm:$0xf]
        %v5329 = vld [vmem:[%s5320 + $0x20] sm:$0xf]
        %v5330 = vld [vmem:[%s5320 + $0x24] sm:$0xf]
        %v5331 = vld [vmem:[%s5320 + $0x28] sm:$0xf]
        %v5332 = vld [vmem:[%s5320 + $0x2c] sm:$0xf]
        %v5333 = vunpack.c.l.bf16 %v5321
        %v5334 = vunpack.c.l.bf16 %v5322
        %v5335 = vunpack.c.l.bf16 %v5323
        %v5336 = vunpack.c.l.bf16 %v5324
        %v5337 = vunpack.c.l.bf16 %v5325
        %v5338 = vunpack.c.l.bf16 %v5326
        %v5339 = vunpack.c.l.bf16 %v5327
        %v5340 = vunpack.c.l.bf16 %v5328
        %v5341 = vunpack.c.l.bf16 %v5329
        %v5342 = vunpack.c.l.bf16 %v5330
        %v5343 = vunpack.c.l.bf16 %v5331
        %v5344 = vunpack.c.l.bf16 %v5332
        %v5346 = vsel %vm2857, %v2796, 0
        %v5349 = vsel %vm2857, %v2797, 0
        %v5352 = vsel %vm2857, %v2798, 0
        %v5355 = vsel %vm2857, %v2799, 0
        %5357 = vmatprep.subr.mxu0 0.0
        %5358 = vmatpush1.msra.mxu0 %v5333
        %5359 = vmatprep.subr.mxu0 0.0
        %5360 = vmatpush1.msra.mxu0 %v5334
        %5361 = vmatprep.subr.mxu0 0.0
        %5362 = vmatpush1.msra.mxu0 %v5335
        %5363 = vmatprep.subr.mxu0 0.0
        %5364 = vmatpush1.msra.mxu0 %v5336
        %5365 = vmatprep.subr.mxu0 0.0
        %5366 = vmatpush1.msra.mxu0 %v5337
        %5367 = vmatprep.subr.mxu0 0.0
        %5368 = vmatpush1.msra.mxu0 %v5338
        %5369 = vmatprep.subr.mxu0 0.0
        %5370 = vmatpush1.msra.mxu0 %v5339
        %5371 = vmatprep.subr.mxu0 0.0
        %5372 = vmatpush1.msra.mxu0 %v5340
        %5373 = vmatprep.subr.mxu0 0.0
        %5374 = vmatpush1.msra.mxu0 %v5341
        %5375 = vmatprep.subr.mxu0 0.0
        %5376 = vmatpush1.msra.mxu0 %v5342
        %5377 = vmatprep.subr.mxu0 0.0
        %5378 = vmatpush1.msra.mxu0 %v5343
        %5379 = vmatprep.subr.mxu0 0.0
        %5380 = vmatpush1.msra.mxu0 %v5344
        %5381 = vmatprep.subr.mxu0 0.0
        %5382 = vmatpush1.msra.mxu0 0.0
        %5383 = vmatprep.subr.mxu0 0.0
        %5384 = vmatpush1.msra.mxu0 0.0
        %5385 = vmatprep.subr.mxu0 0.0
        %5386 = vmatpush1.msra.mxu0 0.0
        %5387 = vmatprep.subr.mxu0 0.0
        %5388 = vmatpush1.msra.mxu0 0.0
        %5389 = vmatprep.subr.mxu0 0.0
        %5390 = vmatpush1.msra.mxu0 0.0
        %5391 = vmatprep.subr.mxu0 0.0
        %5392 = vmatpush1.msra.mxu0 0.0
        %5393 = vmatprep.subr.mxu0 0.0
        %5394 = vmatpush1.msra.mxu0 0.0
        %5395 = vmatprep.subr.mxu0 0.0
        %5396 = vmatpush1.msra.mxu0 0.0
        %5397 = vmatprep.subr.mxu0 0.0
        %5398 = vmatpush1.msra.mxu0 0.0
        %5399 = vmatprep.subr.mxu0 0.0
        %5400 = vmatpush1.msra.mxu0 0.0
        %5401 = vmatprep.subr.mxu0 0.0
        %5402 = vmatpush1.msra.mxu0 0.0
        %5403 = vmatprep.subr.mxu0 0.0
        %5404 = vmatpush1.msra.mxu0 0.0
        %5405 = vmatprep.subr.mxu0 0.0
        %5406 = vmatpush1.msra.mxu0 0.0
        %5407 = vmatprep.subr.mxu0 0.0
        %5408 = vmatpush1.msra.mxu0 0.0
        %5409 = vmatprep.subr.mxu0 0.0
        %5410 = vmatpush1.msra.mxu0 0.0
        %5411 = vmatprep.subr.mxu0 0.0
        %5412 = vmatpush1.msra.mxu0 0.0
        %5413 = vmatprep.subr.mxu0 0.0
        %5414 = vmatpush1.msra.mxu0 0.0
        %5415 = vmatprep.subr.mxu0 0.0
        %5416 = vmatpush1.msra.mxu0 0.0
        %5417 = vmatprep.subr.mxu0 0.0
        %5418 = vmatpush1.msra.mxu0 0.0
        %5419 = vmatprep.subr.mxu0 0.0
        %5420 = vmatpush1.msra.mxu0 0.0
        %5421 = vmatprep.mubr.f32.mxu0 0.0
        %5422 = vmatmul.mubr.f32.gmra.mrb[0].mxu0 %v5346
        %v5423 = vpop.f32.mrb[0].mxu0
        %v5424 = vadd.f32 0.0, %v5423
        %v5425 = vpop.f32.mrb[0].mxu0
        %5426 = vmatprep.mubr.f32.mxu0 0.0
        %5427 = vmatmul.mubr.f32.gmra.mrb[0].mxu0 %v5349
        %v5428 = vpop.f32.mrb[0].mxu0
        %v5429 = vadd.f32 0.0, %v5428
        %v5430 = vpop.f32.mrb[0].mxu0
        %5431 = vmatprep.mubr.f32.mxu0 0.0
        %5432 = vmatmul.mubr.f32.gmra.mrb[0].mxu0 %v5352
        %v5433 = vpop.f32.mrb[0].mxu0
        %v5434 = vadd.f32 0.0, %v5433
        %v5435 = vpop.f32.mrb[0].mxu0
        %5436 = vmatprep.mubr.f32.mxu0 0.0
        %5437 = vmatmul.mubr.f32.gmra.mrb[0].mxu0 %v5355
        %v5438 = vpop.f32.mrb[0].mxu0
        %v5439 = vadd.f32 0.0, %v5438
        %v5440 = vpop.f32.mrb[0].mxu0
        %5441 = vdwg.mxu0
        %v5442 = vadd.f32 %v5316, %v5424
        %v5443 = vadd.f32 %v5317, %v5429
        %v5444 = vadd.f32 %v5318, %v5434
        %v5445 = vadd.f32 %v5319, %v5439
        %s5446 = scalar_lea.vmem %s3, 1008
        %v5447 = vld [vmem:[%s5446] sm:$0xf]
        %v5448 = vld [vmem:[%s5446 + $0x4] sm:$0xf]
        %v5449 = vld [vmem:[%s5446 + $0x8] sm:$0xf]
        %v5450 = vld [vmem:[%s5446 + $0xc] sm:$0xf]
        %v5451 = vld [vmem:[%s5446 + $0x10] sm:$0xf]
        %v5452 = vld [vmem:[%s5446 + $0x14] sm:$0xf]
        %v5453 = vld [vmem:[%s5446 + $0x18] sm:$0xf]
        %v5454 = vld [vmem:[%s5446 + $0x1c] sm:$0xf]
        %v5455 = vld [vmem:[%s5446 + $0x20] sm:$0xf]
        %v5456 = vld [vmem:[%s5446 + $0x24] sm:$0xf]
        %v5457 = vld [vmem:[%s5446 + $0x28] sm:$0xf]
        %v5458 = vld [vmem:[%s5446 + $0x2c] sm:$0xf]
        %v5459 = vunpack.c.l.bf16 %v5447
        %v5460 = vunpack.c.l.bf16 %v5448
        %v5461 = vunpack.c.l.bf16 %v5449
        %v5462 = vunpack.c.l.bf16 %v5450
        %v5463 = vunpack.c.l.bf16 %v5451
        %v5464 = vunpack.c.l.bf16 %v5452
        %v5465 = vunpack.c.l.bf16 %v5453
        %v5466 = vunpack.c.l.bf16 %v5454
        %v5467 = vunpack.c.l.bf16 %v5455
        %v5468 = vunpack.c.l.bf16 %v5456
        %v5469 = vunpack.c.l.bf16 %v5457
        %v5470 = vunpack.c.l.bf16 %v5458
        %v5472 = vsel %vm2857, %v2800, 0
        %v5475 = vsel %vm2857, %v2801, 0
        %v5478 = vsel %vm2857, %v2802, 0
        %v5481 = vsel %vm2857, %v2803, 0
        %5483 = vmatprep.subr.mxu0 0.0
        %5484 = vmatpush1.msra.mxu0 %v5459
        %5485 = vmatprep.subr.mxu0 0.0
        %5486 = vmatpush1.msra.mxu0 %v5460
        %5487 = vmatprep.subr.mxu0 0.0
        %5488 = vmatpush1.msra.mxu0 %v5461
        %5489 = vmatprep.subr.mxu0 0.0
        %5490 = vmatpush1.msra.mxu0 %v5462
        %5491 = vmatprep.subr.mxu0 0.0
        %5492 = vmatpush1.msra.mxu0 %v5463
        %5493 = vmatprep.subr.mxu0 0.0
        %5494 = vmatpush1.msra.mxu0 %v5464
        %5495 = vmatprep.subr.mxu0 0.0
        %5496 = vmatpush1.msra.mxu0 %v5465
        %5497 = vmatprep.subr.mxu0 0.0
        %5498 = vmatpush1.msra.mxu0 %v5466
        %5499 = vmatprep.subr.mxu0 0.0
        %5500 = vmatpush1.msra.mxu0 %v5467
        %5501 = vmatprep.subr.mxu0 0.0
        %5502 = vmatpush1.msra.mxu0 %v5468
        %5503 = vmatprep.subr.mxu0 0.0
        %5504 = vmatpush1.msra.mxu0 %v5469
        %5505 = vmatprep.subr.mxu0 0.0
        %5506 = vmatpush1.msra.mxu0 %v5470
        %5507 = vmatprep.subr.mxu0 0.0
        %5508 = vmatpush1.msra.mxu0 0.0
        %5509 = vmatprep.subr.mxu0 0.0
        %5510 = vmatpush1.msra.mxu0 0.0
        %5511 = vmatprep.subr.mxu0 0.0
        %5512 = vmatpush1.msra.mxu0 0.0
        %5513 = vmatprep.subr.mxu0 0.0
        %5514 = vmatpush1.msra.mxu0 0.0
        %5515 = vmatprep.subr.mxu0 0.0
        %5516 = vmatpush1.msra.mxu0 0.0
        %5517 = vmatprep.subr.mxu0 0.0
        %5518 = vmatpush1.msra.mxu0 0.0
        %5519 = vmatprep.subr.mxu0 0.0
        %5520 = vmatpush1.msra.mxu0 0.0
        %5521 = vmatprep.subr.mxu0 0.0
        %5522 = vmatpush1.msra.mxu0 0.0
        %5523 = vmatprep.subr.mxu0 0.0
        %5524 = vmatpush1.msra.mxu0 0.0
        %5525 = vmatprep.subr.mxu0 0.0
        %5526 = vmatpush1.msra.mxu0 0.0
        %5527 = vmatprep.subr.mxu0 0.0
        %5528 = vmatpush1.msra.mxu0 0.0
        %5529 = vmatprep.subr.mxu0 0.0
        %5530 = vmatpush1.msra.mxu0 0.0
        %5531 = vmatprep.subr.mxu0 0.0
        %5532 = vmatpush1.msra.mxu0 0.0
        %5533 = vmatprep.subr.mxu0 0.0
        %5534 = vmatpush1.msra.mxu0 0.0
        %5535 = vmatprep.subr.mxu0 0.0
        %5536 = vmatpush1.msra.mxu0 0.0
        %5537 = vmatprep.subr.mxu0 0.0
        %5538 = vmatpush1.msra.mxu0 0.0
        %5539 = vmatprep.subr.mxu0 0.0
        %5540 = vmatpush1.msra.mxu0 0.0
        %5541 = vmatprep.subr.mxu0 0.0
        %5542 = vmatpush1.msra.mxu0 0.0
        %5543 = vmatprep.subr.mxu0 0.0
        %5544 = vmatpush1.msra.mxu0 0.0
        %5545 = vmatprep.subr.mxu0 0.0
        %5546 = vmatpush1.msra.mxu0 0.0
        %5547 = vmatprep.mubr.f32.mxu0 0.0
        %5548 = vmatmul.mubr.f32.gmra.mrb[0].mxu0 %v5472
        %v5549 = vpop.f32.mrb[0].mxu0
        %v5550 = vadd.f32 0.0, %v5549
        %v5551 = vpop.f32.mrb[0].mxu0
        %5552 = vmatprep.mubr.f32.mxu0 0.0
        %5553 = vmatmul.mubr.f32.gmra.mrb[0].mxu0 %v5475
        %v5554 = vpop.f32.mrb[0].mxu0
        %v5555 = vadd.f32 0.0, %v5554
        %v5556 = vpop.f32.mrb[0].mxu0
        %5557 = vmatprep.mubr.f32.mxu0 0.0
        %5558 = vmatmul.mubr.f32.gmra.mrb[0].mxu0 %v5478
        %v5559 = vpop.f32.mrb[0].mxu0
        %v5560 = vadd.f32 0.0, %v5559
        %v5561 = vpop.f32.mrb[0].mxu0
        %5562 = vmatprep.mubr.f32.mxu0 0.0
        %5563 = vmatmul.mubr.f32.gmra.mrb[0].mxu0 %v5481
        %v5564 = vpop.f32.mrb[0].mxu0
        %v5565 = vadd.f32 0.0, %v5564
        %v5566 = vpop.f32.mrb[0].mxu0
        %5567 = vdwg.mxu0
        %v5568 = vadd.f32 %v5442, %v5550
        %v5569 = vadd.f32 %v5443, %v5555
        %v5570 = vadd.f32 %v5444, %v5560
        %v5571 = vadd.f32 %v5445, %v5565
        %s5572 = scalar_lea.vmem %s3, 1056
        %v5573 = vld [vmem:[%s5572] sm:$0xf]
        %v5574 = vld [vmem:[%s5572 + $0x4] sm:$0xf]
        %v5575 = vld [vmem:[%s5572 + $0x8] sm:$0xf]
        %v5576 = vld [vmem:[%s5572 + $0xc] sm:$0xf]
        %v5577 = vld [vmem:[%s5572 + $0x10] sm:$0xf]
        %v5578 = vld [vmem:[%s5572 + $0x14] sm:$0xf]
        %v5579 = vld [vmem:[%s5572 + $0x18] sm:$0xf]
        %v5580 = vld [vmem:[%s5572 + $0x1c] sm:$0xf]
        %v5581 = vld [vmem:[%s5572 + $0x20] sm:$0xf]
        %v5582 = vld [vmem:[%s5572 + $0x24] sm:$0xf]
        %v5583 = vld [vmem:[%s5572 + $0x28] sm:$0xf]
        %v5584 = vld [vmem:[%s5572 + $0x2c] sm:$0xf]
        %v5585 = vunpack.c.l.bf16 %v5573
        %v5586 = vunpack.c.l.bf16 %v5574
        %v5587 = vunpack.c.l.bf16 %v5575
        %v5588 = vunpack.c.l.bf16 %v5576
        %v5589 = vunpack.c.l.bf16 %v5577
        %v5590 = vunpack.c.l.bf16 %v5578
        %v5591 = vunpack.c.l.bf16 %v5579
        %v5592 = vunpack.c.l.bf16 %v5580
        %v5593 = vunpack.c.l.bf16 %v5581
        %v5594 = vunpack.c.l.bf16 %v5582
        %v5595 = vunpack.c.l.bf16 %v5583
        %v5596 = vunpack.c.l.bf16 %v5584
        %v5598 = vsel %vm2857, %v2804, 0
        %v5601 = vsel %vm2857, %v2805, 0
        %v5604 = vsel %vm2857, %v2806, 0
        %v5607 = vsel %vm2857, %v2807, 0
        %5609 = vmatprep.subr.mxu0 0.0
        %5610 = vmatpush1.msra.mxu0 %v5585
        %5611 = vmatprep.subr.mxu0 0.0
        %5612 = vmatpush1.msra.mxu0 %v5586
        %5613 = vmatprep.subr.mxu0 0.0
        %5614 = vmatpush1.msra.mxu0 %v5587
        %5615 = vmatprep.subr.mxu0 0.0
        %5616 = vmatpush1.msra.mxu0 %v5588
        %5617 = vmatprep.subr.mxu0 0.0
        %5618 = vmatpush1.msra.mxu0 %v5589
        %5619 = vmatprep.subr.mxu0 0.0
        %5620 = vmatpush1.msra.mxu0 %v5590
        %5621 = vmatprep.subr.mxu0 0.0
        %5622 = vmatpush1.msra.mxu0 %v5591
        %5623 = vmatprep.subr.mxu0 0.0
        %5624 = vmatpush1.msra.mxu0 %v5592
        %5625 = vmatprep.subr.mxu0 0.0
        %5626 = vmatpush1.msra.mxu0 %v5593
        %5627 = vmatprep.subr.mxu0 0.0
        %5628 = vmatpush1.msra.mxu0 %v5594
        %5629 = vmatprep.subr.mxu0 0.0
        %5630 = vmatpush1.msra.mxu0 %v5595
        %5631 = vmatprep.subr.mxu0 0.0
        %5632 = vmatpush1.msra.mxu0 %v5596
        %5633 = vmatprep.subr.mxu0 0.0
        %5634 = vmatpush1.msra.mxu0 0.0
        %5635 = vmatprep.subr.mxu0 0.0
        %5636 = vmatpush1.msra.mxu0 0.0
        %5637 = vmatprep.subr.mxu0 0.0
        %5638 = vmatpush1.msra.mxu0 0.0
        %5639 = vmatprep.subr.mxu0 0.0
        %5640 = vmatpush1.msra.mxu0 0.0
        %5641 = vmatprep.subr.mxu0 0.0
        %5642 = vmatpush1.msra.mxu0 0.0
        %5643 = vmatprep.subr.mxu0 0.0
        %5644 = vmatpush1.msra.mxu0 0.0
        %5645 = vmatprep.subr.mxu0 0.0
        %5646 = vmatpush1.msra.mxu0 0.0
        %5647 = vmatprep.subr.mxu0 0.0
        %5648 = vmatpush1.msra.mxu0 0.0
        %5649 = vmatprep.subr.mxu0 0.0
        %5650 = vmatpush1.msra.mxu0 0.0
        %5651 = vmatprep.subr.mxu0 0.0
        %5652 = vmatpush1.msra.mxu0 0.0
        %5653 = vmatprep.subr.mxu0 0.0
        %5654 = vmatpush1.msra.mxu0 0.0
        %5655 = vmatprep.subr.mxu0 0.0
        %5656 = vmatpush1.msra.mxu0 0.0
        %5657 = vmatprep.subr.mxu0 0.0
        %5658 = vmatpush1.msra.mxu0 0.0
        %5659 = vmatprep.subr.mxu0 0.0
        %5660 = vmatpush1.msra.mxu0 0.0
        %5661 = vmatprep.subr.mxu0 0.0
        %5662 = vmatpush1.msra.mxu0 0.0
        %5663 = vmatprep.subr.mxu0 0.0
        %5664 = vmatpush1.msra.mxu0 0.0
        %5665 = vmatprep.subr.mxu0 0.0
        %5666 = vmatpush1.msra.mxu0 0.0
        %5667 = vmatprep.subr.mxu0 0.0
        %5668 = vmatpush1.msra.mxu0 0.0
        %5669 = vmatprep.subr.mxu0 0.0
        %5670 = vmatpush1.msra.mxu0 0.0
        %5671 = vmatprep.subr.mxu0 0.0
        %5672 = vmatpush1.msra.mxu0 0.0
        %5673 = vmatprep.mubr.f32.mxu0 0.0
        %5674 = vmatmul.mubr.f32.gmra.mrb[0].mxu0 %v5598
        %v5675 = vpop.f32.mrb[0].mxu0
        %v5676 = vadd.f32 0.0, %v5675
        %v5677 = vpop.f32.mrb[0].mxu0
        %5678 = vmatprep.mubr.f32.mxu0 0.0
        %5679 = vmatmul.mubr.f32.gmra.mrb[0].mxu0 %v5601
        %v5680 = vpop.f32.mrb[0].mxu0
        %v5681 = vadd.f32 0.0, %v5680
        %v5682 = vpop.f32.mrb[0].mxu0
        %5683 = vmatprep.mubr.f32.mxu0 0.0
        %5684 = vmatmul.mubr.f32.gmra.mrb[0].mxu0 %v5604
        %v5685 = vpop.f32.mrb[0].mxu0
        %v5686 = vadd.f32 0.0, %v5685
        %v5687 = vpop.f32.mrb[0].mxu0
        %5688 = vmatprep.mubr.f32.mxu0 0.0
        %5689 = vmatmul.mubr.f32.gmra.mrb[0].mxu0 %v5607
        %v5690 = vpop.f32.mrb[0].mxu0
        %v5691 = vadd.f32 0.0, %v5690
        %v5692 = vpop.f32.mrb[0].mxu0
        %5693 = vdwg.mxu0
        %v5694 = vadd.f32 %v5568, %v5676
        %v5695 = vadd.f32 %v5569, %v5681
        %v5696 = vadd.f32 %v5570, %v5686
        %v5697 = vadd.f32 %v5571, %v5691
        %v5698 = vld [vmem:[%s4] sm:$0x1]
        %v5700 = vlaneseq
        %v5701 = vshrl.u32 %v5700, 7
        %v5702 = vsub.s32 0, %v5701
        %v5703 = vrot.slane %v5698, %v5702
        %v5705 = vadd.f32 %v5694, %v5703
        %v5706 = vadd.f32 %v5695, %v5703
        %v5707 = vadd.f32 %v5696, %v5703
        %v5708 = vadd.f32 %v5697, %v5703
        %vm5709 = vcmp.ge.f32.partialorder %v5705, 0.0
        %vm5710 = vcmp.ge.f32.partialorder %v5706, 0.0
        %vm5711 = vcmp.ge.f32.partialorder %v5707, 0.0
        %vm5712 = vcmp.ge.f32.partialorder %v5708, 0.0
        %v5713 = vmul.f32 %v5705, 0.01
        %v5714 = vmul.f32 %v5706, 0.01
        %v5715 = vmul.f32 %v5707, 0.01
        %v5716 = vmul.f32 %v5708, 0.01
        %v5717 = vsel %vm5709, %v5705, %v5713
        %v5718 = vsel %vm5710, %v5706, %v5714
        %v5719 = vsel %vm5711, %v5707, %v5715
        %v5720 = vsel %vm5712, %v5708, %v5716
        %v5721 = vld [vmem:[%s5] sm:$0xff]
        %v5722 = vld [vmem:[%s5 + $0x8] sm:$0xff]
        %v5723 = vld [vmem:[%s5 + $0x10] sm:$0xff]
        %v5724 = vld [vmem:[%s5 + $0x18] sm:$0xff]
        %v5725 = vld [vmem:[%s5 + $0x20] sm:$0xff]
        %v5726 = vld [vmem:[%s5 + $0x28] sm:$0xff]
        %v5727 = vld [vmem:[%s5 + $0x30] sm:$0xff]
        %v5728 = vld [vmem:[%s5 + $0x38] sm:$0xff]
        %v5729 = vld [vmem:[%s5 + $0x40] sm:$0xff]
        %v5730 = vld [vmem:[%s5 + $0x48] sm:$0xff]
        %v5731 = vld [vmem:[%s5 + $0x50] sm:$0xff]
        %v5732 = vld [vmem:[%s5 + $0x58] sm:$0xff]
        %v5733 = vld [vmem:[%s5 + $0x60] sm:$0xff]
        %v5734 = vld [vmem:[%s5 + $0x68] sm:$0xff]
        %v5735 = vld [vmem:[%s5 + $0x70] sm:$0xff]
        %v5736 = vld [vmem:[%s5 + $0x78] sm:$0xff]
        %v5737 = vld [vmem:[%s6] sm:$0x1]
        %v5739 = vlaneseq
        %v5740 = vshrl.u32 %v5739, 7
        %v5741 = vsub.s32 0, %v5740
        %v5742 = vrot.slane %v5737, %v5741
        %5744 = vmatprep.subr.mxu0 0.0
        %5745 = vmatpush1.msra.mxu0 %v5721
        %5746 = vmatprep.subr.mxu0 0.0
        %5747 = vmatpush1.msra.mxu0 %v5722
        %5748 = vmatprep.subr.mxu0 0.0
        %5749 = vmatpush1.msra.mxu0 %v5723
        %5750 = vmatprep.subr.mxu0 0.0
        %5751 = vmatpush1.msra.mxu0 %v5724
        %5752 = vmatprep.subr.mxu0 0.0
        %5753 = vmatpush1.msra.mxu0 %v5725
        %5754 = vmatprep.subr.mxu0 0.0
        %5755 = vmatpush1.msra.mxu0 %v5726
        %5756 = vmatprep.subr.mxu0 0.0
        %5757 = vmatpush1.msra.mxu0 %v5727
        %5758 = vmatprep.subr.mxu0 0.0
        %5759 = vmatpush1.msra.mxu0 %v5728
        %5760 = vmatprep.subr.mxu0 0.0
        %5761 = vmatpush1.msra.mxu0 %v5729
        %5762 = vmatprep.subr.mxu0 0.0
        %5763 = vmatpush1.msra.mxu0 %v5730
        %5764 = vmatprep.subr.mxu0 0.0
        %5765 = vmatpush1.msra.mxu0 %v5731
        %5766 = vmatprep.subr.mxu0 0.0
        %5767 = vmatpush1.msra.mxu0 %v5732
        %5768 = vmatprep.subr.mxu0 0.0
        %5769 = vmatpush1.msra.mxu0 %v5733
        %5770 = vmatprep.subr.mxu0 0.0
        %5771 = vmatpush1.msra.mxu0 %v5734
        %5772 = vmatprep.subr.mxu0 0.0
        %5773 = vmatpush1.msra.mxu0 %v5735
        %5774 = vmatprep.subr.mxu0 0.0
        %5775 = vmatpush1.msra.mxu0 %v5736
        %5776 = vmatprep.subr.mxu0 0.0
        %5777 = vmatpush1.msra.mxu0 0.0
        %5778 = vmatprep.subr.mxu0 0.0
        %5779 = vmatpush1.msra.mxu0 0.0
        %5780 = vmatprep.subr.mxu0 0.0
        %5781 = vmatpush1.msra.mxu0 0.0
        %5782 = vmatprep.subr.mxu0 0.0
        %5783 = vmatpush1.msra.mxu0 0.0
        %5784 = vmatprep.subr.mxu0 0.0
        %5785 = vmatpush1.msra.mxu0 0.0
        %5786 = vmatprep.subr.mxu0 0.0
        %5787 = vmatpush1.msra.mxu0 0.0
        %5788 = vmatprep.subr.mxu0 0.0
        %5789 = vmatpush1.msra.mxu0 0.0
        %5790 = vmatprep.subr.mxu0 0.0
        %5791 = vmatpush1.msra.mxu0 0.0
        %5792 = vmatprep.subr.mxu0 0.0
        %5793 = vmatpush1.msra.mxu0 0.0
        %5794 = vmatprep.subr.mxu0 0.0
        %5795 = vmatpush1.msra.mxu0 0.0
        %5796 = vmatprep.subr.mxu0 0.0
        %5797 = vmatpush1.msra.mxu0 0.0
        %5798 = vmatprep.subr.mxu0 0.0
        %5799 = vmatpush1.msra.mxu0 0.0
        %5800 = vmatprep.subr.mxu0 0.0
        %5801 = vmatpush1.msra.mxu0 0.0
        %5802 = vmatprep.subr.mxu0 0.0
        %5803 = vmatpush1.msra.mxu0 0.0
        %5804 = vmatprep.subr.mxu0 0.0
        %5805 = vmatpush1.msra.mxu0 0.0
        %5806 = vmatprep.subr.mxu0 0.0
        %5807 = vmatpush1.msra.mxu0 0.0
        %5808 = vmatprep.mubr.f32.mxu0 0.0
        %5809 = vmatmul.mubr.f32.gmra.mrb[0].mxu0 %v5717
        %v5810 = vpop.f32.mrb[0].mxu0
        %v5811 = vadd.f32 %v5742, %v5810
        %v5812 = vpop.f32.mrb[0].mxu0
        %5813 = vmatprep.mubr.f32.mxu0 0.0
        %5814 = vmatmul.mubr.f32.gmra.mrb[0].mxu0 %v5718
        %v5815 = vpop.f32.mrb[0].mxu0
        %v5816 = vadd.f32 %v5742, %v5815
        %v5817 = vpop.f32.mrb[0].mxu0
        %5818 = vmatprep.mubr.f32.mxu0 0.0
        %5819 = vmatmul.mubr.f32.gmra.mrb[0].mxu0 %v5719
        %v5820 = vpop.f32.mrb[0].mxu0
        %v5821 = vadd.f32 %v5742, %v5820
        %v5822 = vpop.f32.mrb[0].mxu0
        %5823 = vmatprep.mubr.f32.mxu0 0.0
        %5824 = vmatmul.mubr.f32.gmra.mrb[0].mxu0 %v5720
        %v5825 = vpop.f32.mrb[0].mxu0
        %v5826 = vadd.f32 %v5742, %v5825
        %v5827 = vpop.f32.mrb[0].mxu0
        %5828 = vdwg.mxu0
        %vm5829 = vcmp.ge.f32.partialorder %v5811, 0.0
        %vm5830 = vcmp.ge.f32.partialorder %v5816, 0.0
        %vm5831 = vcmp.ge.f32.partialorder %v5821, 0.0
        %vm5832 = vcmp.ge.f32.partialorder %v5826, 0.0
        %v5833 = vmul.f32 %v5811, 0.01
        %v5834 = vmul.f32 %v5816, 0.01
        %v5835 = vmul.f32 %v5821, 0.01
        %v5836 = vmul.f32 %v5826, 0.01
        %v5837 = vsel %vm5829, %v5811, %v5833
        %v5838 = vsel %vm5830, %v5816, %v5834
        %v5839 = vsel %vm5831, %v5821, %v5835
        %v5840 = vsel %vm5832, %v5826, %v5836
        %v5841 = vld [vmem:[%s7] sm:$0xff]
        %v5842 = vld [vmem:[%s7 + $0x8] sm:$0xff]
        %v5843 = vld [vmem:[%s7 + $0x10] sm:$0xff]
        %v5844 = vld [vmem:[%s7 + $0x18] sm:$0xff]
        %v5845 = vld [vmem:[%s8] sm:$0x1]
        %v5847 = vlaneseq
        %v5848 = vshrl.u32 %v5847, 7
        %v5849 = vsub.s32 0, %v5848
        %v5850 = vrot.slane %v5845, %v5849
        %vm5852 = vcmask 261120
        %v5854 = vsel %vm5852, %v5837, 0
        %v5857 = vsel %vm5852, %v5838, 0
        %v5860 = vsel %vm5852, %v5839, 0
        %v5863 = vsel %vm5852, %v5840, 0
        %5865 = vmatprep.subr.mxu0 0.0
        %5866 = vmatpush1.msra.mxu0 %v5841
        %5867 = vmatprep.subr.mxu0 0.0
        %5868 = vmatpush1.msra.mxu0 %v5842
        %5869 = vmatprep.subr.mxu0 0.0
        %5870 = vmatpush1.msra.mxu0 %v5843
        %5871 = vmatprep.subr.mxu0 0.0
        %5872 = vmatpush1.msra.mxu0 %v5844
        %5873 = vmatprep.subr.mxu0 0.0
        %5874 = vmatpush1.msra.mxu0 0.0
        %5875 = vmatprep.subr.mxu0 0.0
        %5876 = vmatpush1.msra.mxu0 0.0
        %5877 = vmatprep.subr.mxu0 0.0
        %5878 = vmatpush1.msra.mxu0 0.0
        %5879 = vmatprep.subr.mxu0 0.0
        %5880 = vmatpush1.msra.mxu0 0.0
        %5881 = vmatprep.subr.mxu0 0.0
        %5882 = vmatpush1.msra.mxu0 0.0
        %5883 = vmatprep.subr.mxu0 0.0
        %5884 = vmatpush1.msra.mxu0 0.0
        %5885 = vmatprep.subr.mxu0 0.0
        %5886 = vmatpush1.msra.mxu0 0.0
        %5887 = vmatprep.subr.mxu0 0.0
        %5888 = vmatpush1.msra.mxu0 0.0
        %5889 = vmatprep.subr.mxu0 0.0
        %5890 = vmatpush1.msra.mxu0 0.0
        %5891 = vmatprep.subr.mxu0 0.0
        %5892 = vmatpush1.msra.mxu0 0.0
        %5893 = vmatprep.subr.mxu0 0.0
        %5894 = vmatpush1.msra.mxu0 0.0
        %5895 = vmatprep.subr.mxu0 0.0
        %5896 = vmatpush1.msra.mxu0 0.0
        %5897 = vmatprep.subr.mxu0 0.0
        %5898 = vmatpush1.msra.mxu0 0.0
        %5899 = vmatprep.subr.mxu0 0.0
        %5900 = vmatpush1.msra.mxu0 0.0
        %5901 = vmatprep.subr.mxu0 0.0
        %5902 = vmatpush1.msra.mxu0 0.0
        %5903 = vmatprep.subr.mxu0 0.0
        %5904 = vmatpush1.msra.mxu0 0.0
        %5905 = vmatprep.subr.mxu0 0.0
        %5906 = vmatpush1.msra.mxu0 0.0
        %5907 = vmatprep.subr.mxu0 0.0
        %5908 = vmatpush1.msra.mxu0 0.0
        %5909 = vmatprep.subr.mxu0 0.0
        %5910 = vmatpush1.msra.mxu0 0.0
        %5911 = vmatprep.subr.mxu0 0.0
        %5912 = vmatpush1.msra.mxu0 0.0
        %5913 = vmatprep.subr.mxu0 0.0
        %5914 = vmatpush1.msra.mxu0 0.0
        %5915 = vmatprep.subr.mxu0 0.0
        %5916 = vmatpush1.msra.mxu0 0.0
        %5917 = vmatprep.subr.mxu0 0.0
        %5918 = vmatpush1.msra.mxu0 0.0
        %5919 = vmatprep.subr.mxu0 0.0
        %5920 = vmatpush1.msra.mxu0 0.0
        %5921 = vmatprep.subr.mxu0 0.0
        %5922 = vmatpush1.msra.mxu0 0.0
        %5923 = vmatprep.subr.mxu0 0.0
        %5924 = vmatpush1.msra.mxu0 0.0
        %5925 = vmatprep.subr.mxu0 0.0
        %5926 = vmatpush1.msra.mxu0 0.0
        %5927 = vmatprep.subr.mxu0 0.0
        %5928 = vmatpush1.msra.mxu0 0.0
        %5929 = vmatprep.mubr.f32.mxu0 0.0
        %5930 = vmatmul.mubr.f32.gmra.mrb[0].mxu0 %v5854
        %v5931 = vpop.f32.mrb[0].mxu0
        %v5932 = vadd.f32 %v5850, %v5931
        %v5933 = vpop.f32.mrb[0].mxu0
        %5934 = vmatprep.mubr.f32.mxu0 0.0
        %5935 = vmatmul.mubr.f32.gmra.mrb[0].mxu0 %v5857
        %v5936 = vpop.f32.mrb[0].mxu0
        %v5937 = vadd.f32 %v5850, %v5936
        %v5938 = vpop.f32.mrb[0].mxu0
        %5939 = vmatprep.mubr.f32.mxu0 0.0
        %5940 = vmatmul.mubr.f32.gmra.mrb[0].mxu0 %v5860
        %v5941 = vpop.f32.mrb[0].mxu0
        %v5942 = vadd.f32 %v5850, %v5941
        %v5943 = vpop.f32.mrb[0].mxu0
        %5944 = vmatprep.mubr.f32.mxu0 0.0
        %5945 = vmatmul.mubr.f32.gmra.mrb[0].mxu0 %v5863
        %v5946 = vpop.f32.mrb[0].mxu0
        %v5947 = vadd.f32 %v5850, %v5946
        %v5948 = vpop.f32.mrb[0].mxu0
        %5949 = vdwg.mxu0
        %5950 = vst.msk [vmem:[%s325] sm:$0xff] %vm5852, %v5932
        %5951 = vst.msk [vmem:[%s325 + $0x8] sm:$0xff] %vm5852, %v5937
        %5952 = vst.msk [vmem:[%s325 + $0x10] sm:$0xff] %vm5852, %v5942
        %5953 = vst.msk [vmem:[%s325 + $0x18] sm:$0xff] %vm5852, %v5947
        %s5954 = sand.u32 %s225, 1
        %s5955 = scalar_lea.sflag [#allocation3], %s5954
        %s5956 = sand.u32 %s225, 1
        %s5957 = smul.addr %s5956, 32
        %s5958 = scalar_lea.vmem [#allocation2], %s5957
        // Predicated region
        $region57: #{critic_forward.1} parent=55 // pred_check
          %p5959 = pneg %p235
        $region58: #{critic_forward.1} parent=55 // pred_check_branch
          %5961 = sbr.rel (%p5959) target = $region60
        $region59: #{critic_forward.1} parent=55 // pred_region
          %s5962 = smul.u32 4, %s23
          %s5964 = ssub.s32 512, 512
          %5965 = vsyncadd %s5955, %s5964
          %s5966 = smul.addr %s5962, 128
          %s5967 = scalar_lea.hbm %s9, %s5966
          %s5968 = sshll.u32 %s5958, 4
          %s5969 = int_to_ptr.vmem [resolvable:$true] %s5968
          %5974 = dma.vmem_to_hbm [thread:$0]  %s5969, 512, %s5967, %s5955, 128, 128, 8
        $region60: #{critic_forward.1} parent=55 // pred_fallthru
          _
      $region56: #{critic_forward.1} parent=5 // pred_fallthru
        _
      %p5975 = scmp.le.s32.totalorder 2, %s18
      // Predicated region
      $region61: #{critic_forward.1} parent=5 // pred_check
        %p5976 = pneg %p5975
      $region62: #{critic_forward.1} parent=5 // pred_check_branch
        %5978 = sbr.rel (%p5976) target = $region64
      $region63: #{critic_forward.1} parent=5 // pred_region
        %s5979 = ssub.s32 %s18, 2
        // Predicated region
        $region65: #{critic_forward.1} parent=63 // pred_check
          %p5980 = pneg %p241
        $region66: #{critic_forward.1} parent=63 // pred_check_branch
          %5982 = sbr.rel (%p5980) target = $region68
        $region67: #{critic_forward.1} parent=63 // pred_region
          %s5983 = sand.u32 %s226, 1
          %s5984 = scalar_lea.sflag [#allocation3], %s5983
          %s5985 = sand.u32 %s226, 1
          %s5986 = smul.addr %s5985, 32
          %s5987 = scalar_lea.vmem [#allocation2], %s5986
          %5988 = dma.done %s5984, 512
        $region68: #{critic_forward.1} parent=63 // pred_fallthru
          _
      $region64: #{critic_forward.1} parent=5 // pred_fallthru
        _
    $region6: #{critic_forward.1} parent=1 // loop_footer
      %s22 = sadd.s32 1, %s18
    $region7: #{critic_forward.1} parent=1 // loop_footer_branch
      %17 = sbr.rel target = $region3
    $region8: #{critic_forward.1} parent=1 // loop_exit
      _
    %5989 = vsyncpa [#allocation3], 1
    %s5990 = scalar_lea.sflag [#allocation3], 1
    %5991 = vsyncpa %s5990, 1

</llo_original>
